<compile_context>
chip_gen: v7x
topology: tpu7x:2x2x1
jax: 0.10.0
libtpu: 0.0.40
codegen_flags: <defaults>
</compile_context>

<pallas_src>
import functools

import numpy as np

import jax
import jax.numpy as jnp
from jax import lax
from jax.experimental import pallas as pl
from jax.experimental.pallas import tpu as pltpu


# ----------------------------------------------------------------------------
# Fused Pallas kernel: full DeepUnfolding forward for one image (all iterations)
# ----------------------------------------------------------------------------
def _du_fused_kernel(x_ref, b_ref, masks_ref, grT_ref, giT_ref,
                     head_w_ref, head_b_ref, mid_w_ref, mid_b_ref,
                     tail_w_ref, tail_b_ref, o_ref, *,
                     iterations, n_resblocks, res_scale, gamma, mu, W):
    M = x_ref.shape[1]                    # flattened image size H*W (lane axis)
    masks = masks_ref[...]                # (9, M) 1/0 neighbour-validity masks
    grT = grT_ref[0]                      # (M, M) Re(A^H A)^T for this image
    giT = giT_ref[0]                      # (M, M) Im(A^H A)^T for this image
    b = b_ref[...]                        # (2, M)  A^H y  (x-independent)
    head_w = head_w_ref[...]
    head_b = head_b_ref[...]
    tail_w = tail_w_ref[...]
    tail_b = tail_b_ref[...]

    shifts = [dh * W + dw for dh in (-1, 0, 1) for dw in (-1, 0, 1)]

    def conv3x3(xv, w_packed, bias):
        # xv: (Cin, M); w_packed: (Cout, 9*Cin) tap-major; bias: (Cout, 1).
        # One MXU matmul over a stack of 9 rolled+masked copies of xv.
        taps = []
        for k, s in enumerate(shifts):
            t = xv if s == 0 else pltpu.roll(xv, shift=(-s) % M, axis=1)
            if s != 0:
                t = t * masks[k:k + 1]          # zero row / image wrap-around
            taps.append(t)
        stack = jnp.concatenate(taps, axis=0)   # (9*Cin, M)
        # TODO(synk): cast stack/w_packed to bf16 once spatial tiling makes the
        #             matmul throughput-bound; kept f32 here for fidelity.
        return jnp.dot(w_packed, stack,
                       preferred_element_type=jnp.float32) + bias

    def edsr(xv):                               # EDSR prior, all VMEM-resident
        h0 = conv3x3(xv, head_w, head_b)
        h = h0
        for r in range(n_resblocks):
            t = jnp.maximum(conv3x3(h, mid_w_ref[2 * r], mid_b_ref[2 * r]), 0.0)
            h = conv3x3(t, mid_w_ref[2 * r + 1], mid_b_ref[2 * r + 1]) * res_scale + h
        hb = conv3x3(h, mid_w_ref[2 * n_resblocks], mid_b_ref[2 * n_resblocks]) + h0
        return conv3x3(hb, tail_w, tail_b)

    x = x_ref[...]                              # (2, M)  [real; imag]
    for _ in range(iterations):
        # dc = A^H A x - A^H y via the precomputed real/imag composite matrices.
        ag = jnp.dot(x, grT, preferred_element_type=jnp.float32)   # (2, M)
        ai = jnp.dot(x, giT, preferred_element_type=jnp.float32)   # (2, M)
        dc = jnp.concatenate([ag[0:1] - ai[1:2],
                              ag[1:2] + ai[0:1]], axis=0) - b
        x1 = x - gamma * dc
        prior = edsr(x1)
        x = x1 - gamma * (dc + mu * (prior - x1))
    o_ref[...] = x


def _dft_matrix(n):
    k = jnp.arange(n)
    return jnp.exp((-2j * jnp.pi / n) * jnp.outer(k, k)).astype(jnp.complex64)


def deep_unfolding_pallas(x0_nchw, P, y_meas, kparams, *, iterations,
                          n_resblocks, res_scale, gamma, mu):
    N, C, H, W = x0_nchw.shape
    HW = H * W
    masks, head_w, head_b, mid_w, mid_b, tail_w, tail_b = kparams
    n_feats = head_w.shape[0]

    # ---- one-time (per call, x-independent) precompute in XLA ---------------
    # dc = ifft2((fft2(x)*P - y)*P) = G x - b with
    #   G = conj(W2) @ diag(P^2) @ W2 / (H*W)   (exact for any P), b = ifft2(P*y)
    W2 = jnp.kron(_dft_matrix(H), _dft_matrix(W))                  # (HW, HW)
    pw2 = (P * P).reshape(N, HW, 1).astype(jnp.complex64) * W2[None]
    G = jnp.einsum('ab,nbc->nac', jnp.conj(W2), pw2,
                   precision=lax.Precision.HIGHEST) / (H * W)      # (N, HW, HW)
    grT = jnp.transpose(jnp.real(G), (0, 2, 1)).astype(jnp.float32)
    giT = jnp.transpose(jnp.imag(G), (0, 2, 1)).astype(jnp.float32)
    bc = jnp.fft.ifft2(P * y_meas)                                 # A^H y
    b_flat = jnp.stack([jnp.real(bc).reshape(-1),
                        jnp.imag(bc).reshape(-1)], axis=0)         # (2, N*HW)

    x_flat = jnp.transpose(x0_nchw, (1, 0, 2, 3)).reshape(C, N * HW)

    kernel = functools.partial(
        _du_fused_kernel, iterations=iterations, n_resblocks=n_resblocks,
        res_scale=float(res_scale), gamma=float(gamma), mu=float(mu), W=W)

    def const_spec(a):          # whole array, same block for every grid step
        return pl.BlockSpec(a.shape, lambda n: (0,) * a.ndim)

    conv_fl = lambda ci, co: 2 * co * 9 * ci * HW
    per_img = (2 * (2 * C * HW * HW)
               + conv_fl(C, n_feats)
               + (2 * n_resblocks + 1) * conv_fl(n_feats, n_feats)
               + conv_fl(n_feats, C))
    flops = iterations * N * per_img
    bytes_acc = 4 * (2 * x_flat.size + b_flat.size + masks.size + grT.size
                     + giT.size + head_w.size + head_b.size + mid_w.size
                     + mid_b.size + tail_w.size + tail_b.size)

    out = pl.pallas_call(
        kernel,
        out_shape=jax.ShapeDtypeStruct((C, N * HW), jnp.float32),
        grid=(N,),
        in_specs=[pl.BlockSpec((C, HW), lambda n: (0, n)),          # x
                  pl.BlockSpec((C, HW), lambda n: (0, n)),          # A^H y
                  const_spec(masks),
                  pl.BlockSpec((1, HW, HW), lambda n: (n, 0, 0)),   # Re G^T
                  pl.BlockSpec((1, HW, HW), lambda n: (n, 0, 0)),   # Im G^T
                  const_spec(head_w), const_spec(head_b),
                  const_spec(mid_w), const_spec(mid_b),
                  const_spec(tail_w), const_spec(tail_b)],
        out_specs=pl.BlockSpec((C, HW), lambda n: (0, n)),
        input_output_aliases={0: 0},               # x is dead after the call
        compiler_params=pltpu.CompilerParams(
            dimension_semantics=("parallel",)),    # both TensorCores on v7x
        cost_estimate=pl.CostEstimate(flops=int(flops), transcendentals=0,
                                      bytes_accessed=int(bytes_acc)),
    )(x_flat, b_flat, masks, grT, giT, head_w, head_b, mid_w, mid_b,
      tail_w, tail_b)
    return jnp.transpose(out.reshape(C, N, H, W), (1, 0, 2, 3))


# ----------------------------------------------------------------------------
# Parameter packing / masks (host side, done once)
# ----------------------------------------------------------------------------
def _shift_masks(H, W):
    idx = np.arange(H * W)
    h, w = idx // W, idx % W
    rows = []
    for dh in (-1, 0, 1):
        for dw in (-1, 0, 1):
            ok = (h + dh >= 0) & (h + dh < H) & (w + dw >= 0) & (w + dw < W)
            rows.append(ok.astype(np.float32))
    return jnp.asarray(np.stack(rows))              # (9, H*W)


def pack_edsr_params_for_kernel(head, blocks, body_end, tail, H, W):
    def pack_w(w_hwio):     # (3,3,cin,cout) -> (cout, 9*cin), tap-major rows
        return jnp.transpose(w_hwio, (3, 0, 1, 2)).reshape(w_hwio.shape[3], -1)

    head_w, head_b = pack_w(head[0]), head[1].reshape(-1, 1)
    mid_w, mid_b = [], []
    for (w1, b1, w2, b2) in blocks:
        mid_w += [pack_w(w1), pack_w(w2)]
        mid_b += [b1.reshape(-1, 1), b2.reshape(-1, 1)]
    mid_w.append(pack_w(body_end[0]))
    mid_b.append(body_end[1].reshape(-1, 1))
    tail_w, tail_b = pack_w(tail[0]), tail[1].reshape(-1, 1)
    return (_shift_masks(H, W), head_w, head_b,
            jnp.stack(mid_w), jnp.stack(mid_b), tail_w, tail_b)


# ----------------------------------------------------------------------------
# Pure-JAX reference (correctness check only) — mirrors the PyTorch module
# ----------------------------------------------------------------------------
def data_consistency_nchw(x_nchw, P, y_meas):
    xc = x_nchw[:, 0] + 1j * x_nchw[:, 1]
    resid = (jnp.fft.fft2(xc) * P - y_meas) * P
    d = jnp.fft.ifft2(resid)
    return jnp.stack([jnp.real(d), jnp.imag(d)], axis=1)


def _conv_ref(x_nchw, w_hwio, b):
    x = jnp.transpose(x_nchw, (0, 2, 3, 1))
    y = lax.conv_general_dilated(x, w_hwio, (1, 1), "SAME",
                                 dimension_numbers=("NHWC", "HWIO", "NHWC"),
                                 precision=lax.Precision.HIGHEST)
    y = y + b[None, None, None, :]
    return jnp.transpose(y, (0, 3, 1, 2))


def edsr_ref(x_nchw, head, blocks, body_end, tail, res_scale):
    h0 = _conv_ref(x_nchw, *head)
    h = h0
    for (w1, b1, w2, b2) in blocks:
        t = jax.nn.relu(_conv_ref(h, w1, b1))
        h = _conv_ref(t, w2, b2) * res_scale + h
    hb = _conv_ref(h, *body_end) + h0
    return _conv_ref(hb, *tail)


def deep_unfolding_ref(x0_nchw, P, y_meas, head, blocks, body_end, tail, *,
                       iterations, res_scale, gamma, mu):
    x = x0_nchw
    for _ in range(iterations):
        dc = data_consistency_nchw(x, P, y_meas)
        x1 = x - gamma * dc
        prior = edsr_ref(x1, head, blocks, body_end, tail, res_scale)
        x = x1 - gamma * (dc + mu * (prior - x1))
    return x


# ----------------------------------------------------------------------------
# Deterministic parameter init (stands in for the torch.load'ed EDSR prior)
# ----------------------------------------------------------------------------
def init_conv(key, cin, cout):
    kw, kb = jax.random.split(key)
    w = jax.random.normal(kw, (3, 3, cin, cout), jnp.float32) / jnp.sqrt(9 * cin)
    b = 0.01 * jax.random.normal(kb, (cout,), jnp.float32)
    return w, b


if __name__ == "__main__":
    # DeepUnfolding(iterations=3, mu=0.5, gamma=0.5, recon_module_type='DU'),
    # config: du_weightsharing=True, multi_coil=False, non-trainable scalars,
    # EDSR(dimension=2, n_resblocks=2, n_feats=8, res_scale=0.1, in/out=2).
    N, H, W = 2, 16, 16
    in_ch, out_ch, n_feats, n_resblocks = 2, 2, 8, 2
    res_scale, gamma, mu, iterations = 0.1, 0.5, 0.5, 3

    key = jax.random.PRNGKey(0)
    (k_x, k_p, k_t1, k_t2, k_head, k_body, k_bend, k_tail) = jax.random.split(key, 8)

    # initial estimate x (real/imag as 2 channels, NCHW like the PyTorch code)
    x0 = jax.random.normal(k_x, (N, in_ch, H, W), jnp.float32)
    # k-space sampling mask P and simulated single-coil measurement y
    P = (jax.random.uniform(k_p, (N, H, W)) < 0.4).astype(jnp.float32)
    x_true = (jax.random.normal(k_t1, (N, H, W), jnp.float32)
              + 1j * jax.random.normal(k_t2, (N, H, W), jnp.float32))
    y_meas = jnp.fft.fft2(x_true) * P

    # EDSR prior weights (HWIO) — deterministic random init
    head = init_conv(k_head, in_ch, n_feats)
    bkeys = jax.random.split(k_body, 2 * n_resblocks)
    blocks = []
    for i in range(n_resblocks):
        blocks.append(init_conv(bkeys[2 * i], n_feats, n_feats)
                      + init_conv(bkeys[2 * i + 1], n_feats, n_feats))
    body_end = init_conv(k_bend, n_feats, n_feats)
    tail = init_conv(k_tail, n_feats, out_ch)

    kparams = pack_edsr_params_for_kernel(head, blocks, body_end, tail, H, W)

    fwd = jax.jit(functools.partial(
        deep_unfolding_pallas, iterations=iterations, n_resblocks=n_resblocks,
        res_scale=res_scale, gamma=gamma, mu=mu))
    y = jax.block_until_ready(fwd(x0, P, y_meas, kparams))
    assert y.shape == (N, out_ch, H, W)

    y_ref = deep_unfolding_ref(x0, P, y_meas, head, blocks, body_end, tail,
                               iterations=iterations, res_scale=res_scale,
                               gamma=gamma, mu=mu)
    err = float(jnp.max(jnp.abs(y - y_ref)))
    tol = max(5e-3, 1e-3 * float(jnp.max(jnp.abs(y_ref))))
    assert err < tol, f"mismatch vs reference: {err} (tol {tol})"

    print("KERNEL_OK")
</pallas_src>

<mosaic_0001>
module attributes {stable_mosaic.version = 11 : i64} {
  func.func @_du_fused_kernel(%arg0: i32, %arg1: memref<2x256xf32, #tpu.memory_space<vmem>>, %arg2: memref<2x256xf32, #tpu.memory_space<vmem>>, %arg3: memref<9x256xf32, #tpu.memory_space<vmem>>, %arg4: memref<1x256x256xf32, #tpu.memory_space<vmem>>, %arg5: memref<1x256x256xf32, #tpu.memory_space<vmem>>, %arg6: memref<8x18xf32, #tpu.memory_space<vmem>>, %arg7: memref<8x1xf32, #tpu.memory_space<vmem>>, %arg8: memref<5x8x72xf32, #tpu.memory_space<vmem>>, %arg9: memref<5x8x1xf32, #tpu.memory_space<vmem>>, %arg10: memref<2x72xf32, #tpu.memory_space<vmem>>, %arg11: memref<2x1xf32, #tpu.memory_space<vmem>>, %arg12: memref<2x256xf32, #tpu.memory_space<vmem>>) attributes {dimension_semantics = [#tpu.dimension_semantics<parallel>], iteration_bounds = array<i64: 2>, scalar_prefetch = 0 : i64, scratch_operands = 0 : i64, tpu.core_type = #tpu.core_type<tc>, window_params = [{transform_indices = @transform_0, window_bounds = array<i64: 2, 256>}, {transform_indices = @transform_1, window_bounds = array<i64: 2, 256>}, {pipeline_mode = #tpu.pipeline_mode<synchronous>, transform_indices = @transform_2, window_bounds = array<i64: 9, 256>}, {transform_indices = @transform_3, window_bounds = array<i64: 1, 256, 256>}, {transform_indices = @transform_4, window_bounds = array<i64: 1, 256, 256>}, {pipeline_mode = #tpu.pipeline_mode<synchronous>, transform_indices = @transform_5, window_bounds = array<i64: 8, 18>}, {pipeline_mode = #tpu.pipeline_mode<synchronous>, transform_indices = @transform_6, window_bounds = array<i64: 8, 1>}, {pipeline_mode = #tpu.pipeline_mode<synchronous>, transform_indices = @transform_7, window_bounds = array<i64: 5, 8, 72>}, {pipeline_mode = #tpu.pipeline_mode<synchronous>, transform_indices = @transform_8, window_bounds = array<i64: 5, 8, 1>}, {pipeline_mode = #tpu.pipeline_mode<synchronous>, transform_indices = @transform_9, window_bounds = array<i64: 2, 72>}, {pipeline_mode = #tpu.pipeline_mode<synchronous>, transform_indices = @transform_10, window_bounds = array<i64: 2, 1>}, {transform_indices = @transform_11, window_bounds = array<i64: 2, 256>}]} {
    %c0 = arith.constant 0 : index
    %c0_0 = arith.constant 0 : index
    %0 = vector.load %arg3[%c0, %c0_0] : memref<9x256xf32, #tpu.memory_space<vmem>>, vector<9x256xf32>
    %c0_1 = arith.constant 0 : index
    %c0_2 = arith.constant 0 : index
    %c0_3 = arith.constant 0 : index
    %1 = vector.load %arg4[%c0_1, %c0_2, %c0_3] : memref<1x256x256xf32, #tpu.memory_space<vmem>>, vector<1x256x256xf32>
    %2 = vector.shape_cast %1 : vector<1x256x256xf32> to vector<256x256xf32>
    %c0_4 = arith.constant 0 : index
    %c0_5 = arith.constant 0 : index
    %c0_6 = arith.constant 0 : index
    %3 = vector.load %arg5[%c0_4, %c0_5, %c0_6] : memref<1x256x256xf32, #tpu.memory_space<vmem>>, vector<1x256x256xf32>
    %4 = vector.shape_cast %3 : vector<1x256x256xf32> to vector<256x256xf32>
    %c0_7 = arith.constant 0 : index
    %c0_8 = arith.constant 0 : index
    %5 = vector.load %arg2[%c0_7, %c0_8] : memref<2x256xf32, #tpu.memory_space<vmem>>, vector<2x256xf32>
    %c0_9 = arith.constant 0 : index
    %c0_10 = arith.constant 0 : index
    %6 = vector.load %arg6[%c0_9, %c0_10] : memref<8x18xf32, #tpu.memory_space<vmem>>, vector<8x18xf32>
    %c0_11 = arith.constant 0 : index
    %c0_12 = arith.constant 0 : index
    %7 = vector.load %arg7[%c0_11, %c0_12] : memref<8x1xf32, #tpu.memory_space<vmem>>, vector<8x1xf32>
    %c0_13 = arith.constant 0 : index
    %c0_14 = arith.constant 0 : index
    %8 = vector.load %arg10[%c0_13, %c0_14] : memref<2x72xf32, #tpu.memory_space<vmem>>, vector<2x72xf32>
    %c0_15 = arith.constant 0 : index
    %c0_16 = arith.constant 0 : index
    %9 = vector.load %arg11[%c0_15, %c0_16] : memref<2x1xf32, #tpu.memory_space<vmem>>, vector<2x1xf32>
    %c0_17 = arith.constant 0 : index
    %c0_18 = arith.constant 0 : index
    %10 = vector.load %arg1[%c0_17, %c0_18] : memref<2x256xf32, #tpu.memory_space<vmem>>, vector<2x256xf32>
    %cst = arith.constant dense<0.000000e+00> : vector<2x256xf32>
    %11 = tpu.matmul %10, %2, %cst {dimension_numbers = #tpu.dot_dimension_numbers<[1], [0], [0], [1], [0, 0, 1, 1], [], []>} : vector<2x256xf32>, vector<256x256xf32>, vector<2x256xf32> -> vector<2x256xf32>
    %cst_19 = arith.constant dense<0.000000e+00> : vector<2x256xf32>
    %12 = tpu.matmul %10, %4, %cst_19 {dimension_numbers = #tpu.dot_dimension_numbers<[1], [0], [0], [1], [0, 0, 1, 1], [], []>} : vector<2x256xf32>, vector<256x256xf32>, vector<2x256xf32> -> vector<2x256xf32>
    %13 = vector.extract_strided_slice %11 {offsets = [0, 0], sizes = [1, 256], strides = [1, 1]} : vector<2x256xf32> to vector<1x256xf32>
    %14 = vector.extract_strided_slice %12 {offsets = [1, 0], sizes = [1, 256], strides = [1, 1]} : vector<2x256xf32> to vector<1x256xf32>
    %15 = arith.subf %13, %14 : vector<1x256xf32>
    %16 = vector.extract_strided_slice %11 {offsets = [1, 0], sizes = [1, 256], strides = [1, 1]} : vector<2x256xf32> to vector<1x256xf32>
    %17 = vector.extract_strided_slice %12 {offsets = [0, 0], sizes = [1, 256], strides = [1, 1]} : vector<2x256xf32> to vector<1x256xf32>
    %18 = arith.addf %16, %17 : vector<1x256xf32>
    %19 = tpu.concatenate %15, %18 in 0 : vector<1x256xf32>, vector<1x256xf32> -> vector<2x256xf32>
    %20 = arith.subf %19, %5 : vector<2x256xf32>
    %cst_20 = arith.constant 5.000000e-01 : f32
    %21 = vector.broadcast %cst_20 : f32 to vector<2x256xf32>
    %22 = arith.mulf %21, %20 : vector<2x256xf32>
    %23 = arith.subf %10, %22 : vector<2x256xf32>
    %c17_i32 = arith.constant 17 : i32
    %24 = tpu.dynamic_rotate %23 by %c17_i32 dim 1 : vector<2x256xf32>, i32 -> vector<2x256xf32>
    %25 = vector.extract_strided_slice %0 {offsets = [0, 0], sizes = [1, 256], strides = [1, 1]} : vector<9x256xf32> to vector<1x256xf32>
    %26 = vector.broadcast %25 : vector<1x256xf32> to vector<2x256xf32>
    %27 = arith.mulf %24, %26 : vector<2x256xf32>
    %c16_i32 = arith.constant 16 : i32
    %28 = tpu.dynamic_rotate %23 by %c16_i32 dim 1 : vector<2x256xf32>, i32 -> vector<2x256xf32>
    %29 = vector.extract_strided_slice %0 {offsets = [1, 0], sizes = [1, 256], strides = [1, 1]} : vector<9x256xf32> to vector<1x256xf32>
    %30 = vector.broadcast %29 : vector<1x256xf32> to vector<2x256xf32>
    %31 = arith.mulf %28, %30 : vector<2x256xf32>
    %c15_i32 = arith.constant 15 : i32
    %32 = tpu.dynamic_rotate %23 by %c15_i32 dim 1 : vector<2x256xf32>, i32 -> vector<2x256xf32>
    %33 = vector.extract_strided_slice %0 {offsets = [2, 0], sizes = [1, 256], strides = [1, 1]} : vector<9x256xf32> to vector<1x256xf32>
    %34 = vector.broadcast %33 : vector<1x256xf32> to vector<2x256xf32>
    %35 = arith.mulf %32, %34 : vector<2x256xf32>
    %c1_i32 = arith.constant 1 : i32
    %36 = tpu.dynamic_rotate %23 by %c1_i32 dim 1 : vector<2x256xf32>, i32 -> vector<2x256xf32>
    %37 = vector.extract_strided_slice %0 {offsets = [3, 0], sizes = [1, 256], strides = [1, 1]} : vector<9x256xf32> to vector<1x256xf32>
    %38 = vector.broadcast %37 : vector<1x256xf32> to vector<2x256xf32>
    %39 = arith.mulf %36, %38 : vector<2x256xf32>
    %c255_i32 = arith.constant 255 : i32
    %40 = tpu.dynamic_rotate %23 by %c255_i32 dim 1 : vector<2x256xf32>, i32 -> vector<2x256xf32>
    %41 = vector.extract_strided_slice %0 {offsets = [5, 0], sizes = [1, 256], strides = [1, 1]} : vector<9x256xf32> to vector<1x256xf32>
    %42 = vector.broadcast %41 : vector<1x256xf32> to vector<2x256xf32>
    %43 = arith.mulf %40, %42 : vector<2x256xf32>
    %c241_i32 = arith.constant 241 : i32
    %44 = tpu.dynamic_rotate %23 by %c241_i32 dim 1 : vector<2x256xf32>, i32 -> vector<2x256xf32>
    %45 = vector.extract_strided_slice %0 {offsets = [6, 0], sizes = [1, 256], strides = [1, 1]} : vector<9x256xf32> to vector<1x256xf32>
    %46 = vector.broadcast %45 : vector<1x256xf32> to vector<2x256xf32>
    %47 = arith.mulf %44, %46 : vector<2x256xf32>
    %c240_i32 = arith.constant 240 : i32
    %48 = tpu.dynamic_rotate %23 by %c240_i32 dim 1 : vector<2x256xf32>, i32 -> vector<2x256xf32>
    %49 = vector.extract_strided_slice %0 {offsets = [7, 0], sizes = [1, 256], strides = [1, 1]} : vector<9x256xf32> to vector<1x256xf32>
    %50 = vector.broadcast %49 : vector<1x256xf32> to vector<2x256xf32>
    %51 = arith.mulf %48, %50 : vector<2x256xf32>
    %c239_i32 = arith.constant 239 : i32
    %52 = tpu.dynamic_rotate %23 by %c239_i32 dim 1 : vector<2x256xf32>, i32 -> vector<2x256xf32>
    %53 = vector.extract_strided_slice %0 {offsets = [8, 0], sizes = [1, 256], strides = [1, 1]} : vector<9x256xf32> to vector<1x256xf32>
    %54 = vector.broadcast %53 : vector<1x256xf32> to vector<2x256xf32>
    %55 = arith.mulf %52, %54 : vector<2x256xf32>
    %56 = tpu.concatenate %27, %31, %35, %39, %23, %43, %47, %51, %55 in 0 : vector<2x256xf32>, vector<2x256xf32>, vector<2x256xf32>, vector<2x256xf32>, vector<2x256xf32>, vector<2x256xf32>, vector<2x256xf32>, vector<2x256xf32>, vector<2x256xf32> -> vector<18x256xf32>
    %cst_21 = arith.constant dense<0.000000e+00> : vector<8x256xf32>
    %57 = tpu.matmul %6, %56, %cst_21 {dimension_numbers = #tpu.dot_dimension_numbers<[1], [0], [0], [1], [0, 0, 1, 1], [], []>} : vector<8x18xf32>, vector<18x256xf32>, vector<8x256xf32> -> vector<8x256xf32>
    %58 = vector.broadcast %7 : vector<8x1xf32> to vector<8x256xf32>
    %59 = arith.addf %57, %58 : vector<8x256xf32>
    %c0_22 = arith.constant 0 : index
    %c0_23 = arith.constant 0 : index
    %c0_24 = arith.constant 0 : index
    %60 = vector.load %arg8[%c0_22, %c0_23, %c0_24] : memref<5x8x72xf32, #tpu.memory_space<vmem>>, vector<1x8x72xf32>
    %61 = vector.shape_cast %60 : vector<1x8x72xf32> to vector<8x72xf32>
    %c0_25 = arith.constant 0 : index
    %c0_26 = arith.constant 0 : index
    %c0_27 = arith.constant 0 : index
    %62 = vector.load %arg9[%c0_25, %c0_26, %c0_27] : memref<5x8x1xf32, #tpu.memory_space<vmem>>, vector<1x8x1xf32>
    %63 = vector.shape_cast %62 : vector<1x8x1xf32> to vector<8x1xf32>
    %c17_i32_28 = arith.constant 17 : i32
    %64 = tpu.dynamic_rotate %59 by %c17_i32_28 dim 1 : vector<8x256xf32>, i32 -> vector<8x256xf32>
    %65 = vector.extract_strided_slice %0 {offsets = [0, 0], sizes = [1, 256], strides = [1, 1]} : vector<9x256xf32> to vector<1x256xf32>
    %66 = vector.broadcast %65 : vector<1x256xf32> to vector<8x256xf32>
    %67 = arith.mulf %64, %66 : vector<8x256xf32>
    %c16_i32_29 = arith.constant 16 : i32
    %68 = tpu.dynamic_rotate %59 by %c16_i32_29 dim 1 : vector<8x256xf32>, i32 -> vector<8x256xf32>
    %69 = vector.extract_strided_slice %0 {offsets = [1, 0], sizes = [1, 256], strides = [1, 1]} : vector<9x256xf32> to vector<1x256xf32>
    %70 = vector.broadcast %69 : vector<1x256xf32> to vector<8x256xf32>
    %71 = arith.mulf %68, %70 : vector<8x256xf32>
    %c15_i32_30 = arith.constant 15 : i32
    %72 = tpu.dynamic_rotate %59 by %c15_i32_30 dim 1 : vector<8x256xf32>, i32 -> vector<8x256xf32>
    %73 = vector.extract_strided_slice %0 {offsets = [2, 0], sizes = [1, 256], strides = [1, 1]} : vector<9x256xf32> to vector<1x256xf32>
    %74 = vector.broadcast %73 : vector<1x256xf32> to vector<8x256xf32>
    %75 = arith.mulf %72, %74 : vector<8x256xf32>
    %c1_i32_31 = arith.constant 1 : i32
    %76 = tpu.dynamic_rotate %59 by %c1_i32_31 dim 1 : vector<8x256xf32>, i32 -> vector<8x256xf32>
    %77 = vector.extract_strided_slice %0 {offsets = [3, 0], sizes = [1, 256], strides = [1, 1]} : vector<9x256xf32> to vector<1x256xf32>
    %78 = vector.broadcast %77 : vector<1x256xf32> to vector<8x256xf32>
    %79 = arith.mulf %76, %78 : vector<8x256xf32>
    %c255_i32_32 = arith.constant 255 : i32
    %80 = tpu.dynamic_rotate %59 by %c255_i32_32 dim 1 : vector<8x256xf32>, i32 -> vector<8x256xf32>
    %81 = vector.extract_strided_slice %0 {offsets = [5, 0], sizes = [1, 256], strides = [1, 1]} : vector<9x256xf32> to vector<1x256xf32>
    %82 = vector.broadcast %81 : vector<1x256xf32> to vector<8x256xf32>
    %83 = arith.mulf %80, %82 : vector<8x256xf32>
    %c241_i32_33 = arith.constant 241 : i32
    %84 = tpu.dynamic_rotate %59 by %c241_i32_33 dim 1 : vector<8x256xf32>, i32 -> vector<8x256xf32>
    %85 = vector.extract_strided_slice %0 {offsets = [6, 0], sizes = [1, 256], strides = [1, 1]} : vector<9x256xf32> to vector<1x256xf32>
    %86 = vector.broadcast %85 : vector<1x256xf32> to vector<8x256xf32>
    %87 = arith.mulf %84, %86 : vector<8x256xf32>
    %c240_i32_34 = arith.constant 240 : i32
    %88 = tpu.dynamic_rotate %59 by %c240_i32_34 dim 1 : vector<8x256xf32>, i32 -> vector<8x256xf32>
    %89 = vector.extract_strided_slice %0 {offsets = [7, 0], sizes = [1, 256], strides = [1, 1]} : vector<9x256xf32> to vector<1x256xf32>
    %90 = vector.broadcast %89 : vector<1x256xf32> to vector<8x256xf32>
    %91 = arith.mulf %88, %90 : vector<8x256xf32>
    %c239_i32_35 = arith.constant 239 : i32
    %92 = tpu.dynamic_rotate %59 by %c239_i32_35 dim 1 : vector<8x256xf32>, i32 -> vector<8x256xf32>
    %93 = vector.extract_strided_slice %0 {offsets = [8, 0], sizes = [1, 256], strides = [1, 1]} : vector<9x256xf32> to vector<1x256xf32>
    %94 = vector.broadcast %93 : vector<1x256xf32> to vector<8x256xf32>
    %95 = arith.mulf %92, %94 : vector<8x256xf32>
    %96 = tpu.concatenate %67, %71, %75, %79, %59, %83, %87, %91, %95 in 0 : vector<8x256xf32>, vector<8x256xf32>, vector<8x256xf32>, vector<8x256xf32>, vector<8x256xf32>, vector<8x256xf32>, vector<8x256xf32>, vector<8x256xf32>, vector<8x256xf32> -> vector<72x256xf32>
    %cst_36 = arith.constant dense<0.000000e+00> : vector<8x256xf32>
    %97 = tpu.matmul %61, %96, %cst_36 {dimension_numbers = #tpu.dot_dimension_numbers<[1], [0], [0], [1], [0, 0, 1, 1], [], []>} : vector<8x72xf32>, vector<72x256xf32>, vector<8x256xf32> -> vector<8x256xf32>
    %98 = vector.broadcast %63 : vector<8x1xf32> to vector<8x256xf32>
    %99 = arith.addf %97, %98 : vector<8x256xf32>
    %cst_37 = arith.constant 0.000000e+00 : f32
    %100 = vector.broadcast %cst_37 : f32 to vector<8x256xf32>
    %101 = arith.maximumf %99, %100 : vector<8x256xf32>
    %c1 = arith.constant 1 : index
    %c0_38 = arith.constant 0 : index
    %c0_39 = arith.constant 0 : index
    %102 = vector.load %arg8[%c1, %c0_38, %c0_39] : memref<5x8x72xf32, #tpu.memory_space<vmem>>, vector<1x8x72xf32>
    %103 = vector.shape_cast %102 : vector<1x8x72xf32> to vector<8x72xf32>
    %c1_40 = arith.constant 1 : index
    %c0_41 = arith.constant 0 : index
    %c0_42 = arith.constant 0 : index
    %104 = vector.load %arg9[%c1_40, %c0_41, %c0_42] : memref<5x8x1xf32, #tpu.memory_space<vmem>>, vector<1x8x1xf32>
    %105 = vector.shape_cast %104 : vector<1x8x1xf32> to vector<8x1xf32>
    %c17_i32_43 = arith.constant 17 : i32
    %106 = tpu.dynamic_rotate %101 by %c17_i32_43 dim 1 : vector<8x256xf32>, i32 -> vector<8x256xf32>
    %107 = vector.extract_strided_slice %0 {offsets = [0, 0], sizes = [1, 256], strides = [1, 1]} : vector<9x256xf32> to vector<1x256xf32>
    %108 = vector.broadcast %107 : vector<1x256xf32> to vector<8x256xf32>
    %109 = arith.mulf %106, %108 : vector<8x256xf32>
    %c16_i32_44 = arith.constant 16 : i32
    %110 = tpu.dynamic_rotate %101 by %c16_i32_44 dim 1 : vector<8x256xf32>, i32 -> vector<8x256xf32>
    %111 = vector.extract_strided_slice %0 {offsets = [1, 0], sizes = [1, 256], strides = [1, 1]} : vector<9x256xf32> to vector<1x256xf32>
    %112 = vector.broadcast %111 : vector<1x256xf32> to vector<8x256xf32>
    %113 = arith.mulf %110, %112 : vector<8x256xf32>
    %c15_i32_45 = arith.constant 15 : i32
    %114 = tpu.dynamic_rotate %101 by %c15_i32_45 dim 1 : vector<8x256xf32>, i32 -> vector<8x256xf32>
    %115 = vector.extract_strided_slice %0 {offsets = [2, 0], sizes = [1, 256], strides = [1, 1]} : vector<9x256xf32> to vector<1x256xf32>
    %116 = vector.broadcast %115 : vector<1x256xf32> to vector<8x256xf32>
    %117 = arith.mulf %114, %116 : vector<8x256xf32>
    %c1_i32_46 = arith.constant 1 : i32
    %118 = tpu.dynamic_rotate %101 by %c1_i32_46 dim 1 : vector<8x256xf32>, i32 -> vector<8x256xf32>
    %119 = vector.extract_strided_slice %0 {offsets = [3, 0], sizes = [1, 256], strides = [1, 1]} : vector<9x256xf32> to vector<1x256xf32>
    %120 = vector.broadcast %119 : vector<1x256xf32> to vector<8x256xf32>
    %121 = arith.mulf %118, %120 : vector<8x256xf32>
    %c255_i32_47 = arith.constant 255 : i32
    %122 = tpu.dynamic_rotate %101 by %c255_i32_47 dim 1 : vector<8x256xf32>, i32 -> vector<8x256xf32>
    %123 = vector.extract_strided_slice %0 {offsets = [5, 0], sizes = [1, 256], strides = [1, 1]} : vector<9x256xf32> to vector<1x256xf32>
    %124 = vector.broadcast %123 : vector<1x256xf32> to vector<8x256xf32>
    %125 = arith.mulf %122, %124 : vector<8x256xf32>
    %c241_i32_48 = arith.constant 241 : i32
    %126 = tpu.dynamic_rotate %101 by %c241_i32_48 dim 1 : vector<8x256xf32>, i32 -> vector<8x256xf32>
    %127 = vector.extract_strided_slice %0 {offsets = [6, 0], sizes = [1, 256], strides = [1, 1]} : vector<9x256xf32> to vector<1x256xf32>
    %128 = vector.broadcast %127 : vector<1x256xf32> to vector<8x256xf32>
    %129 = arith.mulf %126, %128 : vector<8x256xf32>
    %c240_i32_49 = arith.constant 240 : i32
    %130 = tpu.dynamic_rotate %101 by %c240_i32_49 dim 1 : vector<8x256xf32>, i32 -> vector<8x256xf32>
    %131 = vector.extract_strided_slice %0 {offsets = [7, 0], sizes = [1, 256], strides = [1, 1]} : vector<9x256xf32> to vector<1x256xf32>
    %132 = vector.broadcast %131 : vector<1x256xf32> to vector<8x256xf32>
    %133 = arith.mulf %130, %132 : vector<8x256xf32>
    %c239_i32_50 = arith.constant 239 : i32
    %134 = tpu.dynamic_rotate %101 by %c239_i32_50 dim 1 : vector<8x256xf32>, i32 -> vector<8x256xf32>
    %135 = vector.extract_strided_slice %0 {offsets = [8, 0], sizes = [1, 256], strides = [1, 1]} : vector<9x256xf32> to vector<1x256xf32>
    %136 = vector.broadcast %135 : vector<1x256xf32> to vector<8x256xf32>
    %137 = arith.mulf %134, %136 : vector<8x256xf32>
    %138 = tpu.concatenate %109, %113, %117, %121, %101, %125, %129, %133, %137 in 0 : vector<8x256xf32>, vector<8x256xf32>, vector<8x256xf32>, vector<8x256xf32>, vector<8x256xf32>, vector<8x256xf32>, vector<8x256xf32>, vector<8x256xf32>, vector<8x256xf32> -> vector<72x256xf32>
    %cst_51 = arith.constant dense<0.000000e+00> : vector<8x256xf32>
    %139 = tpu.matmul %103, %138, %cst_51 {dimension_numbers = #tpu.dot_dimension_numbers<[1], [0], [0], [1], [0, 0, 1, 1], [], []>} : vector<8x72xf32>, vector<72x256xf32>, vector<8x256xf32> -> vector<8x256xf32>
    %140 = vector.broadcast %105 : vector<8x1xf32> to vector<8x256xf32>
    %141 = arith.addf %139, %140 : vector<8x256xf32>
    %cst_52 = arith.constant 1.000000e-01 : f32
    %142 = vector.broadcast %cst_52 : f32 to vector<8x256xf32>
    %143 = arith.mulf %141, %142 : vector<8x256xf32>
    %144 = arith.addf %143, %59 : vector<8x256xf32>
    %c2 = arith.constant 2 : index
    %c0_53 = arith.constant 0 : index
    %c0_54 = arith.constant 0 : index
    %145 = vector.load %arg8[%c2, %c0_53, %c0_54] : memref<5x8x72xf32, #tpu.memory_space<vmem>>, vector<1x8x72xf32>
    %146 = vector.shape_cast %145 : vector<1x8x72xf32> to vector<8x72xf32>
    %c2_55 = arith.constant 2 : index
    %c0_56 = arith.constant 0 : index
    %c0_57 = arith.constant 0 : index
    %147 = vector.load %arg9[%c2_55, %c0_56, %c0_57] : memref<5x8x1xf32, #tpu.memory_space<vmem>>, vector<1x8x1xf32>
    %148 = vector.shape_cast %147 : vector<1x8x1xf32> to vector<8x1xf32>
    %c17_i32_58 = arith.constant 17 : i32
    %149 = tpu.dynamic_rotate %144 by %c17_i32_58 dim 1 : vector<8x256xf32>, i32 -> vector<8x256xf32>
    %150 = vector.extract_strided_slice %0 {offsets = [0, 0], sizes = [1, 256], strides = [1, 1]} : vector<9x256xf32> to vector<1x256xf32>
    %151 = vector.broadcast %150 : vector<1x256xf32> to vector<8x256xf32>
    %152 = arith.mulf %149, %151 : vector<8x256xf32>
    %c16_i32_59 = arith.constant 16 : i32
    %153 = tpu.dynamic_rotate %144 by %c16_i32_59 dim 1 : vector<8x256xf32>, i32 -> vector<8x256xf32>
    %154 = vector.extract_strided_slice %0 {offsets = [1, 0], sizes = [1, 256], strides = [1, 1]} : vector<9x256xf32> to vector<1x256xf32>
    %155 = vector.broadcast %154 : vector<1x256xf32> to vector<8x256xf32>
    %156 = arith.mulf %153, %155 : vector<8x256xf32>
    %c15_i32_60 = arith.constant 15 : i32
    %157 = tpu.dynamic_rotate %144 by %c15_i32_60 dim 1 : vector<8x256xf32>, i32 -> vector<8x256xf32>
    %158 = vector.extract_strided_slice %0 {offsets = [2, 0], sizes = [1, 256], strides = [1, 1]} : vector<9x256xf32> to vector<1x256xf32>
    %159 = vector.broadcast %158 : vector<1x256xf32> to vector<8x256xf32>
    %160 = arith.mulf %157, %159 : vector<8x256xf32>
    %c1_i32_61 = arith.constant 1 : i32
    %161 = tpu.dynamic_rotate %144 by %c1_i32_61 dim 1 : vector<8x256xf32>, i32 -> vector<8x256xf32>
    %162 = vector.extract_strided_slice %0 {offsets = [3, 0], sizes = [1, 256], strides = [1, 1]} : vector<9x256xf32> to vector<1x256xf32>
    %163 = vector.broadcast %162 : vector<1x256xf32> to vector<8x256xf32>
    %164 = arith.mulf %161, %163 : vector<8x256xf32>
    %c255_i32_62 = arith.constant 255 : i32
    %165 = tpu.dynamic_rotate %144 by %c255_i32_62 dim 1 : vector<8x256xf32>, i32 -> vector<8x256xf32>
    %166 = vector.extract_strided_slice %0 {offsets = [5, 0], sizes = [1, 256], strides = [1, 1]} : vector<9x256xf32> to vector<1x256xf32>
    %167 = vector.broadcast %166 : vector<1x256xf32> to vector<8x256xf32>
    %168 = arith.mulf %165, %167 : vector<8x256xf32>
    %c241_i32_63 = arith.constant 241 : i32
    %169 = tpu.dynamic_rotate %144 by %c241_i32_63 dim 1 : vector<8x256xf32>, i32 -> vector<8x256xf32>
    %170 = vector.extract_strided_slice %0 {offsets = [6, 0], sizes = [1, 256], strides = [1, 1]} : vector<9x256xf32> to vector<1x256xf32>
    %171 = vector.broadcast %170 : vector<1x256xf32> to vector<8x256xf32>
    %172 = arith.mulf %169, %171 : vector<8x256xf32>
    %c240_i32_64 = arith.constant 240 : i32
    %173 = tpu.dynamic_rotate %144 by %c240_i32_64 dim 1 : vector<8x256xf32>, i32 -> vector<8x256xf32>
    %174 = vector.extract_strided_slice %0 {offsets = [7, 0], sizes = [1, 256], strides = [1, 1]} : vector<9x256xf32> to vector<1x256xf32>
    %175 = vector.broadcast %174 : vector<1x256xf32> to vector<8x256xf32>
    %176 = arith.mulf %173, %175 : vector<8x256xf32>
    %c239_i32_65 = arith.constant 239 : i32
    %177 = tpu.dynamic_rotate %144 by %c239_i32_65 dim 1 : vector<8x256xf32>, i32 -> vector<8x256xf32>
    %178 = vector.extract_strided_slice %0 {offsets = [8, 0], sizes = [1, 256], strides = [1, 1]} : vector<9x256xf32> to vector<1x256xf32>
    %179 = vector.broadcast %178 : vector<1x256xf32> to vector<8x256xf32>
    %180 = arith.mulf %177, %179 : vector<8x256xf32>
    %181 = tpu.concatenate %152, %156, %160, %164, %144, %168, %172, %176, %180 in 0 : vector<8x256xf32>, vector<8x256xf32>, vector<8x256xf32>, vector<8x256xf32>, vector<8x256xf32>, vector<8x256xf32>, vector<8x256xf32>, vector<8x256xf32>, vector<8x256xf32> -> vector<72x256xf32>
    %cst_66 = arith.constant dense<0.000000e+00> : vector<8x256xf32>
    %182 = tpu.matmul %146, %181, %cst_66 {dimension_numbers = #tpu.dot_dimension_numbers<[1], [0], [0], [1], [0, 0, 1, 1], [], []>} : vector<8x72xf32>, vector<72x256xf32>, vector<8x256xf32> -> vector<8x256xf32>
    %183 = vector.broadcast %148 : vector<8x1xf32> to vector<8x256xf32>
    %184 = arith.addf %182, %183 : vector<8x256xf32>
    %cst_67 = arith.constant 0.000000e+00 : f32
    %185 = vector.broadcast %cst_67 : f32 to vector<8x256xf32>
    %186 = arith.maximumf %184, %185 : vector<8x256xf32>
    %c3 = arith.constant 3 : index
    %c0_68 = arith.constant 0 : index
    %c0_69 = arith.constant 0 : index
    %187 = vector.load %arg8[%c3, %c0_68, %c0_69] : memref<5x8x72xf32, #tpu.memory_space<vmem>>, vector<1x8x72xf32>
    %188 = vector.shape_cast %187 : vector<1x8x72xf32> to vector<8x72xf32>
    %c3_70 = arith.constant 3 : index
    %c0_71 = arith.constant 0 : index
    %c0_72 = arith.constant 0 : index
    %189 = vector.load %arg9[%c3_70, %c0_71, %c0_72] : memref<5x8x1xf32, #tpu.memory_space<vmem>>, vector<1x8x1xf32>
    %190 = vector.shape_cast %189 : vector<1x8x1xf32> to vector<8x1xf32>
    %c17_i32_73 = arith.constant 17 : i32
    %191 = tpu.dynamic_rotate %186 by %c17_i32_73 dim 1 : vector<8x256xf32>, i32 -> vector<8x256xf32>
    %192 = vector.extract_strided_slice %0 {offsets = [0, 0], sizes = [1, 256], strides = [1, 1]} : vector<9x256xf32> to vector<1x256xf32>
    %193 = vector.broadcast %192 : vector<1x256xf32> to vector<8x256xf32>
    %194 = arith.mulf %191, %193 : vector<8x256xf32>
    %c16_i32_74 = arith.constant 16 : i32
    %195 = tpu.dynamic_rotate %186 by %c16_i32_74 dim 1 : vector<8x256xf32>, i32 -> vector<8x256xf32>
    %196 = vector.extract_strided_slice %0 {offsets = [1, 0], sizes = [1, 256], strides = [1, 1]} : vector<9x256xf32> to vector<1x256xf32>
    %197 = vector.broadcast %196 : vector<1x256xf32> to vector<8x256xf32>
    %198 = arith.mulf %195, %197 : vector<8x256xf32>
    %c15_i32_75 = arith.constant 15 : i32
    %199 = tpu.dynamic_rotate %186 by %c15_i32_75 dim 1 : vector<8x256xf32>, i32 -> vector<8x256xf32>
    %200 = vector.extract_strided_slice %0 {offsets = [2, 0], sizes = [1, 256], strides = [1, 1]} : vector<9x256xf32> to vector<1x256xf32>
    %201 = vector.broadcast %200 : vector<1x256xf32> to vector<8x256xf32>
    %202 = arith.mulf %199, %201 : vector<8x256xf32>
    %c1_i32_76 = arith.constant 1 : i32
    %203 = tpu.dynamic_rotate %186 by %c1_i32_76 dim 1 : vector<8x256xf32>, i32 -> vector<8x256xf32>
    %204 = vector.extract_strided_slice %0 {offsets = [3, 0], sizes = [1, 256], strides = [1, 1]} : vector<9x256xf32> to vector<1x256xf32>
    %205 = vector.broadcast %204 : vector<1x256xf32> to vector<8x256xf32>
    %206 = arith.mulf %203, %205 : vector<8x256xf32>
    %c255_i32_77 = arith.constant 255 : i32
    %207 = tpu.dynamic_rotate %186 by %c255_i32_77 dim 1 : vector<8x256xf32>, i32 -> vector<8x256xf32>
    %208 = vector.extract_strided_slice %0 {offsets = [5, 0], sizes = [1, 256], strides = [1, 1]} : vector<9x256xf32> to vector<1x256xf32>
    %209 = vector.broadcast %208 : vector<1x256xf32> to vector<8x256xf32>
    %210 = arith.mulf %207, %209 : vector<8x256xf32>
    %c241_i32_78 = arith.constant 241 : i32
    %211 = tpu.dynamic_rotate %186 by %c241_i32_78 dim 1 : vector<8x256xf32>, i32 -> vector<8x256xf32>
    %212 = vector.extract_strided_slice %0 {offsets = [6, 0], sizes = [1, 256], strides = [1, 1]} : vector<9x256xf32> to vector<1x256xf32>
    %213 = vector.broadcast %212 : vector<1x256xf32> to vector<8x256xf32>
    %214 = arith.mulf %211, %213 : vector<8x256xf32>
    %c240_i32_79 = arith.constant 240 : i32
    %215 = tpu.dynamic_rotate %186 by %c240_i32_79 dim 1 : vector<8x256xf32>, i32 -> vector<8x256xf32>
    %216 = vector.extract_strided_slice %0 {offsets = [7, 0], sizes = [1, 256], strides = [1, 1]} : vector<9x256xf32> to vector<1x256xf32>
    %217 = vector.broadcast %216 : vector<1x256xf32> to vector<8x256xf32>
    %218 = arith.mulf %215, %217 : vector<8x256xf32>
    %c239_i32_80 = arith.constant 239 : i32
    %219 = tpu.dynamic_rotate %186 by %c239_i32_80 dim 1 : vector<8x256xf32>, i32 -> vector<8x256xf32>
    %220 = vector.extract_strided_slice %0 {offsets = [8, 0], sizes = [1, 256], strides = [1, 1]} : vector<9x256xf32> to vector<1x256xf32>
    %221 = vector.broadcast %220 : vector<1x256xf32> to vector<8x256xf32>
    %222 = arith.mulf %219, %221 : vector<8x256xf32>
    %223 = tpu.concatenate %194, %198, %202, %206, %186, %210, %214, %218, %222 in 0 : vector<8x256xf32>, vector<8x256xf32>, vector<8x256xf32>, vector<8x256xf32>, vector<8x256xf32>, vector<8x256xf32>, vector<8x256xf32>, vector<8x256xf32>, vector<8x256xf32> -> vector<72x256xf32>
    %cst_81 = arith.constant dense<0.000000e+00> : vector<8x256xf32>
    %224 = tpu.matmul %188, %223, %cst_81 {dimension_numbers = #tpu.dot_dimension_numbers<[1], [0], [0], [1], [0, 0, 1, 1], [], []>} : vector<8x72xf32>, vector<72x256xf32>, vector<8x256xf32> -> vector<8x256xf32>
    %225 = vector.broadcast %190 : vector<8x1xf32> to vector<8x256xf32>
    %226 = arith.addf %224, %225 : vector<8x256xf32>
    %cst_82 = arith.constant 1.000000e-01 : f32
    %227 = vector.broadcast %cst_82 : f32 to vector<8x256xf32>
    %228 = arith.mulf %226, %227 : vector<8x256xf32>
    %229 = arith.addf %228, %144 : vector<8x256xf32>
    %c4 = arith.constant 4 : index
    %c0_83 = arith.constant 0 : index
    %c0_84 = arith.constant 0 : index
    %230 = vector.load %arg8[%c4, %c0_83, %c0_84] : memref<5x8x72xf32, #tpu.memory_space<vmem>>, vector<1x8x72xf32>
    %231 = vector.shape_cast %230 : vector<1x8x72xf32> to vector<8x72xf32>
    %c4_85 = arith.constant 4 : index
    %c0_86 = arith.constant 0 : index
    %c0_87 = arith.constant 0 : index
    %232 = vector.load %arg9[%c4_85, %c0_86, %c0_87] : memref<5x8x1xf32, #tpu.memory_space<vmem>>, vector<1x8x1xf32>
    %233 = vector.shape_cast %232 : vector<1x8x1xf32> to vector<8x1xf32>
    %c17_i32_88 = arith.constant 17 : i32
    %234 = tpu.dynamic_rotate %229 by %c17_i32_88 dim 1 : vector<8x256xf32>, i32 -> vector<8x256xf32>
    %235 = vector.extract_strided_slice %0 {offsets = [0, 0], sizes = [1, 256], strides = [1, 1]} : vector<9x256xf32> to vector<1x256xf32>
    %236 = vector.broadcast %235 : vector<1x256xf32> to vector<8x256xf32>
    %237 = arith.mulf %234, %236 : vector<8x256xf32>
    %c16_i32_89 = arith.constant 16 : i32
    %238 = tpu.dynamic_rotate %229 by %c16_i32_89 dim 1 : vector<8x256xf32>, i32 -> vector<8x256xf32>
    %239 = vector.extract_strided_slice %0 {offsets = [1, 0], sizes = [1, 256], strides = [1, 1]} : vector<9x256xf32> to vector<1x256xf32>
    %240 = vector.broadcast %239 : vector<1x256xf32> to vector<8x256xf32>
    %241 = arith.mulf %238, %240 : vector<8x256xf32>
    %c15_i32_90 = arith.constant 15 : i32
    %242 = tpu.dynamic_rotate %229 by %c15_i32_90 dim 1 : vector<8x256xf32>, i32 -> vector<8x256xf32>
    %243 = vector.extract_strided_slice %0 {offsets = [2, 0], sizes = [1, 256], strides = [1, 1]} : vector<9x256xf32> to vector<1x256xf32>
    %244 = vector.broadcast %243 : vector<1x256xf32> to vector<8x256xf32>
    %245 = arith.mulf %242, %244 : vector<8x256xf32>
    %c1_i32_91 = arith.constant 1 : i32
    %246 = tpu.dynamic_rotate %229 by %c1_i32_91 dim 1 : vector<8x256xf32>, i32 -> vector<8x256xf32>
    %247 = vector.extract_strided_slice %0 {offsets = [3, 0], sizes = [1, 256], strides = [1, 1]} : vector<9x256xf32> to vector<1x256xf32>
    %248 = vector.broadcast %247 : vector<1x256xf32> to vector<8x256xf32>
    %249 = arith.mulf %246, %248 : vector<8x256xf32>
    %c255_i32_92 = arith.constant 255 : i32
    %250 = tpu.dynamic_rotate %229 by %c255_i32_92 dim 1 : vector<8x256xf32>, i32 -> vector<8x256xf32>
    %251 = vector.extract_strided_slice %0 {offsets = [5, 0], sizes = [1, 256], strides = [1, 1]} : vector<9x256xf32> to vector<1x256xf32>
    %252 = vector.broadcast %251 : vector<1x256xf32> to vector<8x256xf32>
    %253 = arith.mulf %250, %252 : vector<8x256xf32>
    %c241_i32_93 = arith.constant 241 : i32
    %254 = tpu.dynamic_rotate %229 by %c241_i32_93 dim 1 : vector<8x256xf32>, i32 -> vector<8x256xf32>
    %255 = vector.extract_strided_slice %0 {offsets = [6, 0], sizes = [1, 256], strides = [1, 1]} : vector<9x256xf32> to vector<1x256xf32>
    %256 = vector.broadcast %255 : vector<1x256xf32> to vector<8x256xf32>
    %257 = arith.mulf %254, %256 : vector<8x256xf32>
    %c240_i32_94 = arith.constant 240 : i32
    %258 = tpu.dynamic_rotate %229 by %c240_i32_94 dim 1 : vector<8x256xf32>, i32 -> vector<8x256xf32>
    %259 = vector.extract_strided_slice %0 {offsets = [7, 0], sizes = [1, 256], strides = [1, 1]} : vector<9x256xf32> to vector<1x256xf32>
    %260 = vector.broadcast %259 : vector<1x256xf32> to vector<8x256xf32>
    %261 = arith.mulf %258, %260 : vector<8x256xf32>
    %c239_i32_95 = arith.constant 239 : i32
    %262 = tpu.dynamic_rotate %229 by %c239_i32_95 dim 1 : vector<8x256xf32>, i32 -> vector<8x256xf32>
    %263 = vector.extract_strided_slice %0 {offsets = [8, 0], sizes = [1, 256], strides = [1, 1]} : vector<9x256xf32> to vector<1x256xf32>
    %264 = vector.broadcast %263 : vector<1x256xf32> to vector<8x256xf32>
    %265 = arith.mulf %262, %264 : vector<8x256xf32>
    %266 = tpu.concatenate %237, %241, %245, %249, %229, %253, %257, %261, %265 in 0 : vector<8x256xf32>, vector<8x256xf32>, vector<8x256xf32>, vector<8x256xf32>, vector<8x256xf32>, vector<8x256xf32>, vector<8x256xf32>, vector<8x256xf32>, vector<8x256xf32> -> vector<72x256xf32>
    %cst_96 = arith.constant dense<0.000000e+00> : vector<8x256xf32>
    %267 = tpu.matmul %231, %266, %cst_96 {dimension_numbers = #tpu.dot_dimension_numbers<[1], [0], [0], [1], [0, 0, 1, 1], [], []>} : vector<8x72xf32>, vector<72x256xf32>, vector<8x256xf32> -> vector<8x256xf32>
    %268 = vector.broadcast %233 : vector<8x1xf32> to vector<8x256xf32>
    %269 = arith.addf %267, %268 : vector<8x256xf32>
    %270 = arith.addf %269, %59 : vector<8x256xf32>
    %c17_i32_97 = arith.constant 17 : i32
    %271 = tpu.dynamic_rotate %270 by %c17_i32_97 dim 1 : vector<8x256xf32>, i32 -> vector<8x256xf32>
    %272 = vector.extract_strided_slice %0 {offsets = [0, 0], sizes = [1, 256], strides = [1, 1]} : vector<9x256xf32> to vector<1x256xf32>
    %273 = vector.broadcast %272 : vector<1x256xf32> to vector<8x256xf32>
    %274 = arith.mulf %271, %273 : vector<8x256xf32>
    %c16_i32_98 = arith.constant 16 : i32
    %275 = tpu.dynamic_rotate %270 by %c16_i32_98 dim 1 : vector<8x256xf32>, i32 -> vector<8x256xf32>
    %276 = vector.extract_strided_slice %0 {offsets = [1, 0], sizes = [1, 256], strides = [1, 1]} : vector<9x256xf32> to vector<1x256xf32>
    %277 = vector.broadcast %276 : vector<1x256xf32> to vector<8x256xf32>
    %278 = arith.mulf %275, %277 : vector<8x256xf32>
    %c15_i32_99 = arith.constant 15 : i32
    %279 = tpu.dynamic_rotate %270 by %c15_i32_99 dim 1 : vector<8x256xf32>, i32 -> vector<8x256xf32>
    %280 = vector.extract_strided_slice %0 {offsets = [2, 0], sizes = [1, 256], strides = [1, 1]} : vector<9x256xf32> to vector<1x256xf32>
    %281 = vector.broadcast %280 : vector<1x256xf32> to vector<8x256xf32>
    %282 = arith.mulf %279, %281 : vector<8x256xf32>
    %c1_i32_100 = arith.constant 1 : i32
    %283 = tpu.dynamic_rotate %270 by %c1_i32_100 dim 1 : vector<8x256xf32>, i32 -> vector<8x256xf32>
    %284 = vector.extract_strided_slice %0 {offsets = [3, 0], sizes = [1, 256], strides = [1, 1]} : vector<9x256xf32> to vector<1x256xf32>
    %285 = vector.broadcast %284 : vector<1x256xf32> to vector<8x256xf32>
    %286 = arith.mulf %283, %285 : vector<8x256xf32>
    %c255_i32_101 = arith.constant 255 : i32
    %287 = tpu.dynamic_rotate %270 by %c255_i32_101 dim 1 : vector<8x256xf32>, i32 -> vector<8x256xf32>
    %288 = vector.extract_strided_slice %0 {offsets = [5, 0], sizes = [1, 256], strides = [1, 1]} : vector<9x256xf32> to vector<1x256xf32>
    %289 = vector.broadcast %288 : vector<1x256xf32> to vector<8x256xf32>
    %290 = arith.mulf %287, %289 : vector<8x256xf32>
    %c241_i32_102 = arith.constant 241 : i32
    %291 = tpu.dynamic_rotate %270 by %c241_i32_102 dim 1 : vector<8x256xf32>, i32 -> vector<8x256xf32>
    %292 = vector.extract_strided_slice %0 {offsets = [6, 0], sizes = [1, 256], strides = [1, 1]} : vector<9x256xf32> to vector<1x256xf32>
    %293 = vector.broadcast %292 : vector<1x256xf32> to vector<8x256xf32>
    %294 = arith.mulf %291, %293 : vector<8x256xf32>
    %c240_i32_103 = arith.constant 240 : i32
    %295 = tpu.dynamic_rotate %270 by %c240_i32_103 dim 1 : vector<8x256xf32>, i32 -> vector<8x256xf32>
    %296 = vector.extract_strided_slice %0 {offsets = [7, 0], sizes = [1, 256], strides = [1, 1]} : vector<9x256xf32> to vector<1x256xf32>
    %297 = vector.broadcast %296 : vector<1x256xf32> to vector<8x256xf32>
    %298 = arith.mulf %295, %297 : vector<8x256xf32>
    %c239_i32_104 = arith.constant 239 : i32
    %299 = tpu.dynamic_rotate %270 by %c239_i32_104 dim 1 : vector<8x256xf32>, i32 -> vector<8x256xf32>
    %300 = vector.extract_strided_slice %0 {offsets = [8, 0], sizes = [1, 256], strides = [1, 1]} : vector<9x256xf32> to vector<1x256xf32>
    %301 = vector.broadcast %300 : vector<1x256xf32> to vector<8x256xf32>
    %302 = arith.mulf %299, %301 : vector<8x256xf32>
    %303 = tpu.concatenate %274, %278, %282, %286, %270, %290, %294, %298, %302 in 0 : vector<8x256xf32>, vector<8x256xf32>, vector<8x256xf32>, vector<8x256xf32>, vector<8x256xf32>, vector<8x256xf32>, vector<8x256xf32>, vector<8x256xf32>, vector<8x256xf32> -> vector<72x256xf32>
    %cst_105 = arith.constant dense<0.000000e+00> : vector<2x256xf32>
    %304 = tpu.matmul %8, %303, %cst_105 {dimension_numbers = #tpu.dot_dimension_numbers<[1], [0], [0], [1], [0, 0, 1, 1], [], []>} : vector<2x72xf32>, vector<72x256xf32>, vector<2x256xf32> -> vector<2x256xf32>
    %305 = vector.broadcast %9 : vector<2x1xf32> to vector<2x256xf32>
    %306 = arith.addf %304, %305 : vector<2x256xf32>
    %307 = arith.subf %306, %23 : vector<2x256xf32>
    %cst_106 = arith.constant 5.000000e-01 : f32
    %308 = vector.broadcast %cst_106 : f32 to vector<2x256xf32>
    %309 = arith.mulf %308, %307 : vector<2x256xf32>
    %310 = arith.addf %20, %309 : vector<2x256xf32>
    %cst_107 = arith.constant 5.000000e-01 : f32
    %311 = vector.broadcast %cst_107 : f32 to vector<2x256xf32>
    %312 = arith.mulf %311, %310 : vector<2x256xf32>
    %313 = arith.subf %23, %312 : vector<2x256xf32>
    %cst_108 = arith.constant dense<0.000000e+00> : vector<2x256xf32>
    %314 = tpu.matmul %313, %2, %cst_108 {dimension_numbers = #tpu.dot_dimension_numbers<[1], [0], [0], [1], [0, 0, 1, 1], [], []>} : vector<2x256xf32>, vector<256x256xf32>, vector<2x256xf32> -> vector<2x256xf32>
    %cst_109 = arith.constant dense<0.000000e+00> : vector<2x256xf32>
    %315 = tpu.matmul %313, %4, %cst_109 {dimension_numbers = #tpu.dot_dimension_numbers<[1], [0], [0], [1], [0, 0, 1, 1], [], []>} : vector<2x256xf32>, vector<256x256xf32>, vector<2x256xf32> -> vector<2x256xf32>
    %316 = vector.extract_strided_slice %314 {offsets = [0, 0], sizes = [1, 256], strides = [1, 1]} : vector<2x256xf32> to vector<1x256xf32>
    %317 = vector.extract_strided_slice %315 {offsets = [1, 0], sizes = [1, 256], strides = [1, 1]} : vector<2x256xf32> to vector<1x256xf32>
    %318 = arith.subf %316, %317 : vector<1x256xf32>
    %319 = vector.extract_strided_slice %314 {offsets = [1, 0], sizes = [1, 256], strides = [1, 1]} : vector<2x256xf32> to vector<1x256xf32>
    %320 = vector.extract_strided_slice %315 {offsets = [0, 0], sizes = [1, 256], strides = [1, 1]} : vector<2x256xf32> to vector<1x256xf32>
    %321 = arith.addf %319, %320 : vector<1x256xf32>
    %322 = tpu.concatenate %318, %321 in 0 : vector<1x256xf32>, vector<1x256xf32> -> vector<2x256xf32>
    %323 = arith.subf %322, %5 : vector<2x256xf32>
    %cst_110 = arith.constant 5.000000e-01 : f32
    %324 = vector.broadcast %cst_110 : f32 to vector<2x256xf32>
    %325 = arith.mulf %324, %323 : vector<2x256xf32>
    %326 = arith.subf %313, %325 : vector<2x256xf32>
    %c17_i32_111 = arith.constant 17 : i32
    %327 = tpu.dynamic_rotate %326 by %c17_i32_111 dim 1 : vector<2x256xf32>, i32 -> vector<2x256xf32>
    %328 = vector.extract_strided_slice %0 {offsets = [0, 0], sizes = [1, 256], strides = [1, 1]} : vector<9x256xf32> to vector<1x256xf32>
    %329 = vector.broadcast %328 : vector<1x256xf32> to vector<2x256xf32>
    %330 = arith.mulf %327, %329 : vector<2x256xf32>
    %c16_i32_112 = arith.constant 16 : i32
    %331 = tpu.dynamic_rotate %326 by %c16_i32_112 dim 1 : vector<2x256xf32>, i32 -> vector<2x256xf32>
    %332 = vector.extract_strided_slice %0 {offsets = [1, 0], sizes = [1, 256], strides = [1, 1]} : vector<9x256xf32> to vector<1x256xf32>
    %333 = vector.broadcast %332 : vector<1x256xf32> to vector<2x256xf32>
    %334 = arith.mulf %331, %333 : vector<2x256xf32>
    %c15_i32_113 = arith.constant 15 : i32
    %335 = tpu.dynamic_rotate %326 by %c15_i32_113 dim 1 : vector<2x256xf32>, i32 -> vector<2x256xf32>
    %336 = vector.extract_strided_slice %0 {offsets = [2, 0], sizes = [1, 256], strides = [1, 1]} : vector<9x256xf32> to vector<1x256xf32>
    %337 = vector.broadcast %336 : vector<1x256xf32> to vector<2x256xf32>
    %338 = arith.mulf %335, %337 : vector<2x256xf32>
    %c1_i32_114 = arith.constant 1 : i32
    %339 = tpu.dynamic_rotate %326 by %c1_i32_114 dim 1 : vector<2x256xf32>, i32 -> vector<2x256xf32>
    %340 = vector.extract_strided_slice %0 {offsets = [3, 0], sizes = [1, 256], strides = [1, 1]} : vector<9x256xf32> to vector<1x256xf32>
    %341 = vector.broadcast %340 : vector<1x256xf32> to vector<2x256xf32>
    %342 = arith.mulf %339, %341 : vector<2x256xf32>
    %c255_i32_115 = arith.constant 255 : i32
    %343 = tpu.dynamic_rotate %326 by %c255_i32_115 dim 1 : vector<2x256xf32>, i32 -> vector<2x256xf32>
    %344 = vector.extract_strided_slice %0 {offsets = [5, 0], sizes = [1, 256], strides = [1, 1]} : vector<9x256xf32> to vector<1x256xf32>
    %345 = vector.broadcast %344 : vector<1x256xf32> to vector<2x256xf32>
    %346 = arith.mulf %343, %345 : vector<2x256xf32>
    %c241_i32_116 = arith.constant 241 : i32
    %347 = tpu.dynamic_rotate %326 by %c241_i32_116 dim 1 : vector<2x256xf32>, i32 -> vector<2x256xf32>
    %348 = vector.extract_strided_slice %0 {offsets = [6, 0], sizes = [1, 256], strides = [1, 1]} : vector<9x256xf32> to vector<1x256xf32>
    %349 = vector.broadcast %348 : vector<1x256xf32> to vector<2x256xf32>
    %350 = arith.mulf %347, %349 : vector<2x256xf32>
    %c240_i32_117 = arith.constant 240 : i32
    %351 = tpu.dynamic_rotate %326 by %c240_i32_117 dim 1 : vector<2x256xf32>, i32 -> vector<2x256xf32>
    %352 = vector.extract_strided_slice %0 {offsets = [7, 0], sizes = [1, 256], strides = [1, 1]} : vector<9x256xf32> to vector<1x256xf32>
    %353 = vector.broadcast %352 : vector<1x256xf32> to vector<2x256xf32>
    %354 = arith.mulf %351, %353 : vector<2x256xf32>
    %c239_i32_118 = arith.constant 239 : i32
    %355 = tpu.dynamic_rotate %326 by %c239_i32_118 dim 1 : vector<2x256xf32>, i32 -> vector<2x256xf32>
    %356 = vector.extract_strided_slice %0 {offsets = [8, 0], sizes = [1, 256], strides = [1, 1]} : vector<9x256xf32> to vector<1x256xf32>
    %357 = vector.broadcast %356 : vector<1x256xf32> to vector<2x256xf32>
    %358 = arith.mulf %355, %357 : vector<2x256xf32>
    %359 = tpu.concatenate %330, %334, %338, %342, %326, %346, %350, %354, %358 in 0 : vector<2x256xf32>, vector<2x256xf32>, vector<2x256xf32>, vector<2x256xf32>, vector<2x256xf32>, vector<2x256xf32>, vector<2x256xf32>, vector<2x256xf32>, vector<2x256xf32> -> vector<18x256xf32>
    %cst_119 = arith.constant dense<0.000000e+00> : vector<8x256xf32>
    %360 = tpu.matmul %6, %359, %cst_119 {dimension_numbers = #tpu.dot_dimension_numbers<[1], [0], [0], [1], [0, 0, 1, 1], [], []>} : vector<8x18xf32>, vector<18x256xf32>, vector<8x256xf32> -> vector<8x256xf32>
    %361 = vector.broadcast %7 : vector<8x1xf32> to vector<8x256xf32>
    %362 = arith.addf %360, %361 : vector<8x256xf32>
    %c0_120 = arith.constant 0 : index
    %c0_121 = arith.constant 0 : index
    %c0_122 = arith.constant 0 : index
    %363 = vector.load %arg8[%c0_120, %c0_121, %c0_122] : memref<5x8x72xf32, #tpu.memory_space<vmem>>, vector<1x8x72xf32>
    %364 = vector.shape_cast %363 : vector<1x8x72xf32> to vector<8x72xf32>
    %c0_123 = arith.constant 0 : index
    %c0_124 = arith.constant 0 : index
    %c0_125 = arith.constant 0 : index
    %365 = vector.load %arg9[%c0_123, %c0_124, %c0_125] : memref<5x8x1xf32, #tpu.memory_space<vmem>>, vector<1x8x1xf32>
    %366 = vector.shape_cast %365 : vector<1x8x1xf32> to vector<8x1xf32>
    %c17_i32_126 = arith.constant 17 : i32
    %367 = tpu.dynamic_rotate %362 by %c17_i32_126 dim 1 : vector<8x256xf32>, i32 -> vector<8x256xf32>
    %368 = vector.extract_strided_slice %0 {offsets = [0, 0], sizes = [1, 256], strides = [1, 1]} : vector<9x256xf32> to vector<1x256xf32>
    %369 = vector.broadcast %368 : vector<1x256xf32> to vector<8x256xf32>
    %370 = arith.mulf %367, %369 : vector<8x256xf32>
    %c16_i32_127 = arith.constant 16 : i32
    %371 = tpu.dynamic_rotate %362 by %c16_i32_127 dim 1 : vector<8x256xf32>, i32 -> vector<8x256xf32>
    %372 = vector.extract_strided_slice %0 {offsets = [1, 0], sizes = [1, 256], strides = [1, 1]} : vector<9x256xf32> to vector<1x256xf32>
    %373 = vector.broadcast %372 : vector<1x256xf32> to vector<8x256xf32>
    %374 = arith.mulf %371, %373 : vector<8x256xf32>
    %c15_i32_128 = arith.constant 15 : i32
    %375 = tpu.dynamic_rotate %362 by %c15_i32_128 dim 1 : vector<8x256xf32>, i32 -> vector<8x256xf32>
    %376 = vector.extract_strided_slice %0 {offsets = [2, 0], sizes = [1, 256], strides = [1, 1]} : vector<9x256xf32> to vector<1x256xf32>
    %377 = vector.broadcast %376 : vector<1x256xf32> to vector<8x256xf32>
    %378 = arith.mulf %375, %377 : vector<8x256xf32>
    %c1_i32_129 = arith.constant 1 : i32
    %379 = tpu.dynamic_rotate %362 by %c1_i32_129 dim 1 : vector<8x256xf32>, i32 -> vector<8x256xf32>
    %380 = vector.extract_strided_slice %0 {offsets = [3, 0], sizes = [1, 256], strides = [1, 1]} : vector<9x256xf32> to vector<1x256xf32>
    %381 = vector.broadcast %380 : vector<1x256xf32> to vector<8x256xf32>
    %382 = arith.mulf %379, %381 : vector<8x256xf32>
    %c255_i32_130 = arith.constant 255 : i32
    %383 = tpu.dynamic_rotate %362 by %c255_i32_130 dim 1 : vector<8x256xf32>, i32 -> vector<8x256xf32>
    %384 = vector.extract_strided_slice %0 {offsets = [5, 0], sizes = [1, 256], strides = [1, 1]} : vector<9x256xf32> to vector<1x256xf32>
    %385 = vector.broadcast %384 : vector<1x256xf32> to vector<8x256xf32>
    %386 = arith.mulf %383, %385 : vector<8x256xf32>
    %c241_i32_131 = arith.constant 241 : i32
    %387 = tpu.dynamic_rotate %362 by %c241_i32_131 dim 1 : vector<8x256xf32>, i32 -> vector<8x256xf32>
    %388 = vector.extract_strided_slice %0 {offsets = [6, 0], sizes = [1, 256], strides = [1, 1]} : vector<9x256xf32> to vector<1x256xf32>
    %389 = vector.broadcast %388 : vector<1x256xf32> to vector<8x256xf32>
    %390 = arith.mulf %387, %389 : vector<8x256xf32>
    %c240_i32_132 = arith.constant 240 : i32
    %391 = tpu.dynamic_rotate %362 by %c240_i32_132 dim 1 : vector<8x256xf32>, i32 -> vector<8x256xf32>
    %392 = vector.extract_strided_slice %0 {offsets = [7, 0], sizes = [1, 256], strides = [1, 1]} : vector<9x256xf32> to vector<1x256xf32>
    %393 = vector.broadcast %392 : vector<1x256xf32> to vector<8x256xf32>
    %394 = arith.mulf %391, %393 : vector<8x256xf32>
    %c239_i32_133 = arith.constant 239 : i32
    %395 = tpu.dynamic_rotate %362 by %c239_i32_133 dim 1 : vector<8x256xf32>, i32 -> vector<8x256xf32>
    %396 = vector.extract_strided_slice %0 {offsets = [8, 0], sizes = [1, 256], strides = [1, 1]} : vector<9x256xf32> to vector<1x256xf32>
    %397 = vector.broadcast %396 : vector<1x256xf32> to vector<8x256xf32>
    %398 = arith.mulf %395, %397 : vector<8x256xf32>
    %399 = tpu.concatenate %370, %374, %378, %382, %362, %386, %390, %394, %398 in 0 : vector<8x256xf32>, vector<8x256xf32>, vector<8x256xf32>, vector<8x256xf32>, vector<8x256xf32>, vector<8x256xf32>, vector<8x256xf32>, vector<8x256xf32>, vector<8x256xf32> -> vector<72x256xf32>
    %cst_134 = arith.constant dense<0.000000e+00> : vector<8x256xf32>
    %400 = tpu.matmul %364, %399, %cst_134 {dimension_numbers = #tpu.dot_dimension_numbers<[1], [0], [0], [1], [0, 0, 1, 1], [], []>} : vector<8x72xf32>, vector<72x256xf32>, vector<8x256xf32> -> vector<8x256xf32>
    %401 = vector.broadcast %366 : vector<8x1xf32> to vector<8x256xf32>
    %402 = arith.addf %400, %401 : vector<8x256xf32>
    %cst_135 = arith.constant 0.000000e+00 : f32
    %403 = vector.broadcast %cst_135 : f32 to vector<8x256xf32>
    %404 = arith.maximumf %402, %403 : vector<8x256xf32>
    %c1_136 = arith.constant 1 : index
    %c0_137 = arith.constant 0 : index
    %c0_138 = arith.constant 0 : index
    %405 = vector.load %arg8[%c1_136, %c0_137, %c0_138] : memref<5x8x72xf32, #tpu.memory_space<vmem>>, vector<1x8x72xf32>
    %406 = vector.shape_cast %405 : vector<1x8x72xf32> to vector<8x72xf32>
    %c1_139 = arith.constant 1 : index
    %c0_140 = arith.constant 0 : index
    %c0_141 = arith.constant 0 : index
    %407 = vector.load %arg9[%c1_139, %c0_140, %c0_141] : memref<5x8x1xf32, #tpu.memory_space<vmem>>, vector<1x8x1xf32>
    %408 = vector.shape_cast %407 : vector<1x8x1xf32> to vector<8x1xf32>
    %c17_i32_142 = arith.constant 17 : i32
    %409 = tpu.dynamic_rotate %404 by %c17_i32_142 dim 1 : vector<8x256xf32>, i32 -> vector<8x256xf32>
    %410 = vector.extract_strided_slice %0 {offsets = [0, 0], sizes = [1, 256], strides = [1, 1]} : vector<9x256xf32> to vector<1x256xf32>
    %411 = vector.broadcast %410 : vector<1x256xf32> to vector<8x256xf32>
    %412 = arith.mulf %409, %411 : vector<8x256xf32>
    %c16_i32_143 = arith.constant 16 : i32
    %413 = tpu.dynamic_rotate %404 by %c16_i32_143 dim 1 : vector<8x256xf32>, i32 -> vector<8x256xf32>
    %414 = vector.extract_strided_slice %0 {offsets = [1, 0], sizes = [1, 256], strides = [1, 1]} : vector<9x256xf32> to vector<1x256xf32>
    %415 = vector.broadcast %414 : vector<1x256xf32> to vector<8x256xf32>
    %416 = arith.mulf %413, %415 : vector<8x256xf32>
    %c15_i32_144 = arith.constant 15 : i32
    %417 = tpu.dynamic_rotate %404 by %c15_i32_144 dim 1 : vector<8x256xf32>, i32 -> vector<8x256xf32>
    %418 = vector.extract_strided_slice %0 {offsets = [2, 0], sizes = [1, 256], strides = [1, 1]} : vector<9x256xf32> to vector<1x256xf32>
    %419 = vector.broadcast %418 : vector<1x256xf32> to vector<8x256xf32>
    %420 = arith.mulf %417, %419 : vector<8x256xf32>
    %c1_i32_145 = arith.constant 1 : i32
    %421 = tpu.dynamic_rotate %404 by %c1_i32_145 dim 1 : vector<8x256xf32>, i32 -> vector<8x256xf32>
    %422 = vector.extract_strided_slice %0 {offsets = [3, 0], sizes = [1, 256], strides = [1, 1]} : vector<9x256xf32> to vector<1x256xf32>
    %423 = vector.broadcast %422 : vector<1x256xf32> to vector<8x256xf32>
    %424 = arith.mulf %421, %423 : vector<8x256xf32>
    %c255_i32_146 = arith.constant 255 : i32
    %425 = tpu.dynamic_rotate %404 by %c255_i32_146 dim 1 : vector<8x256xf32>, i32 -> vector<8x256xf32>
    %426 = vector.extract_strided_slice %0 {offsets = [5, 0], sizes = [1, 256], strides = [1, 1]} : vector<9x256xf32> to vector<1x256xf32>
    %427 = vector.broadcast %426 : vector<1x256xf32> to vector<8x256xf32>
    %428 = arith.mulf %425, %427 : vector<8x256xf32>
    %c241_i32_147 = arith.constant 241 : i32
    %429 = tpu.dynamic_rotate %404 by %c241_i32_147 dim 1 : vector<8x256xf32>, i32 -> vector<8x256xf32>
    %430 = vector.extract_strided_slice %0 {offsets = [6, 0], sizes = [1, 256], strides = [1, 1]} : vector<9x256xf32> to vector<1x256xf32>
    %431 = vector.broadcast %430 : vector<1x256xf32> to vector<8x256xf32>
    %432 = arith.mulf %429, %431 : vector<8x256xf32>
    %c240_i32_148 = arith.constant 240 : i32
    %433 = tpu.dynamic_rotate %404 by %c240_i32_148 dim 1 : vector<8x256xf32>, i32 -> vector<8x256xf32>
    %434 = vector.extract_strided_slice %0 {offsets = [7, 0], sizes = [1, 256], strides = [1, 1]} : vector<9x256xf32> to vector<1x256xf32>
    %435 = vector.broadcast %434 : vector<1x256xf32> to vector<8x256xf32>
    %436 = arith.mulf %433, %435 : vector<8x256xf32>
    %c239_i32_149 = arith.constant 239 : i32
    %437 = tpu.dynamic_rotate %404 by %c239_i32_149 dim 1 : vector<8x256xf32>, i32 -> vector<8x256xf32>
    %438 = vector.extract_strided_slice %0 {offsets = [8, 0], sizes = [1, 256], strides = [1, 1]} : vector<9x256xf32> to vector<1x256xf32>
    %439 = vector.broadcast %438 : vector<1x256xf32> to vector<8x256xf32>
    %440 = arith.mulf %437, %439 : vector<8x256xf32>
    %441 = tpu.concatenate %412, %416, %420, %424, %404, %428, %432, %436, %440 in 0 : vector<8x256xf32>, vector<8x256xf32>, vector<8x256xf32>, vector<8x256xf32>, vector<8x256xf32>, vector<8x256xf32>, vector<8x256xf32>, vector<8x256xf32>, vector<8x256xf32> -> vector<72x256xf32>
    %cst_150 = arith.constant dense<0.000000e+00> : vector<8x256xf32>
    %442 = tpu.matmul %406, %441, %cst_150 {dimension_numbers = #tpu.dot_dimension_numbers<[1], [0], [0], [1], [0, 0, 1, 1], [], []>} : vector<8x72xf32>, vector<72x256xf32>, vector<8x256xf32> -> vector<8x256xf32>
    %443 = vector.broadcast %408 : vector<8x1xf32> to vector<8x256xf32>
    %444 = arith.addf %442, %443 : vector<8x256xf32>
    %cst_151 = arith.constant 1.000000e-01 : f32
    %445 = vector.broadcast %cst_151 : f32 to vector<8x256xf32>
    %446 = arith.mulf %444, %445 : vector<8x256xf32>
    %447 = arith.addf %446, %362 : vector<8x256xf32>
    %c2_152 = arith.constant 2 : index
    %c0_153 = arith.constant 0 : index
    %c0_154 = arith.constant 0 : index
    %448 = vector.load %arg8[%c2_152, %c0_153, %c0_154] : memref<5x8x72xf32, #tpu.memory_space<vmem>>, vector<1x8x72xf32>
    %449 = vector.shape_cast %448 : vector<1x8x72xf32> to vector<8x72xf32>
    %c2_155 = arith.constant 2 : index
    %c0_156 = arith.constant 0 : index
    %c0_157 = arith.constant 0 : index
    %450 = vector.load %arg9[%c2_155, %c0_156, %c0_157] : memref<5x8x1xf32, #tpu.memory_space<vmem>>, vector<1x8x1xf32>
    %451 = vector.shape_cast %450 : vector<1x8x1xf32> to vector<8x1xf32>
    %c17_i32_158 = arith.constant 17 : i32
    %452 = tpu.dynamic_rotate %447 by %c17_i32_158 dim 1 : vector<8x256xf32>, i32 -> vector<8x256xf32>
    %453 = vector.extract_strided_slice %0 {offsets = [0, 0], sizes = [1, 256], strides = [1, 1]} : vector<9x256xf32> to vector<1x256xf32>
    %454 = vector.broadcast %453 : vector<1x256xf32> to vector<8x256xf32>
    %455 = arith.mulf %452, %454 : vector<8x256xf32>
    %c16_i32_159 = arith.constant 16 : i32
    %456 = tpu.dynamic_rotate %447 by %c16_i32_159 dim 1 : vector<8x256xf32>, i32 -> vector<8x256xf32>
    %457 = vector.extract_strided_slice %0 {offsets = [1, 0], sizes = [1, 256], strides = [1, 1]} : vector<9x256xf32> to vector<1x256xf32>
    %458 = vector.broadcast %457 : vector<1x256xf32> to vector<8x256xf32>
    %459 = arith.mulf %456, %458 : vector<8x256xf32>
    %c15_i32_160 = arith.constant 15 : i32
    %460 = tpu.dynamic_rotate %447 by %c15_i32_160 dim 1 : vector<8x256xf32>, i32 -> vector<8x256xf32>
    %461 = vector.extract_strided_slice %0 {offsets = [2, 0], sizes = [1, 256], strides = [1, 1]} : vector<9x256xf32> to vector<1x256xf32>
    %462 = vector.broadcast %461 : vector<1x256xf32> to vector<8x256xf32>
    %463 = arith.mulf %460, %462 : vector<8x256xf32>
    %c1_i32_161 = arith.constant 1 : i32
    %464 = tpu.dynamic_rotate %447 by %c1_i32_161 dim 1 : vector<8x256xf32>, i32 -> vector<8x256xf32>
    %465 = vector.extract_strided_slice %0 {offsets = [3, 0], sizes = [1, 256], strides = [1, 1]} : vector<9x256xf32> to vector<1x256xf32>
    %466 = vector.broadcast %465 : vector<1x256xf32> to vector<8x256xf32>
    %467 = arith.mulf %464, %466 : vector<8x256xf32>
    %c255_i32_162 = arith.constant 255 : i32
    %468 = tpu.dynamic_rotate %447 by %c255_i32_162 dim 1 : vector<8x256xf32>, i32 -> vector<8x256xf32>
    %469 = vector.extract_strided_slice %0 {offsets = [5, 0], sizes = [1, 256], strides = [1, 1]} : vector<9x256xf32> to vector<1x256xf32>
    %470 = vector.broadcast %469 : vector<1x256xf32> to vector<8x256xf32>
    %471 = arith.mulf %468, %470 : vector<8x256xf32>
    %c241_i32_163 = arith.constant 241 : i32
    %472 = tpu.dynamic_rotate %447 by %c241_i32_163 dim 1 : vector<8x256xf32>, i32 -> vector<8x256xf32>
    %473 = vector.extract_strided_slice %0 {offsets = [6, 0], sizes = [1, 256], strides = [1, 1]} : vector<9x256xf32> to vector<1x256xf32>
    %474 = vector.broadcast %473 : vector<1x256xf32> to vector<8x256xf32>
    %475 = arith.mulf %472, %474 : vector<8x256xf32>
    %c240_i32_164 = arith.constant 240 : i32
    %476 = tpu.dynamic_rotate %447 by %c240_i32_164 dim 1 : vector<8x256xf32>, i32 -> vector<8x256xf32>
    %477 = vector.extract_strided_slice %0 {offsets = [7, 0], sizes = [1, 256], strides = [1, 1]} : vector<9x256xf32> to vector<1x256xf32>
    %478 = vector.broadcast %477 : vector<1x256xf32> to vector<8x256xf32>
    %479 = arith.mulf %476, %478 : vector<8x256xf32>
    %c239_i32_165 = arith.constant 239 : i32
    %480 = tpu.dynamic_rotate %447 by %c239_i32_165 dim 1 : vector<8x256xf32>, i32 -> vector<8x256xf32>
    %481 = vector.extract_strided_slice %0 {offsets = [8, 0], sizes = [1, 256], strides = [1, 1]} : vector<9x256xf32> to vector<1x256xf32>
    %482 = vector.broadcast %481 : vector<1x256xf32> to vector<8x256xf32>
    %483 = arith.mulf %480, %482 : vector<8x256xf32>
    %484 = tpu.concatenate %455, %459, %463, %467, %447, %471, %475, %479, %483 in 0 : vector<8x256xf32>, vector<8x256xf32>, vector<8x256xf32>, vector<8x256xf32>, vector<8x256xf32>, vector<8x256xf32>, vector<8x256xf32>, vector<8x256xf32>, vector<8x256xf32> -> vector<72x256xf32>
    %cst_166 = arith.constant dense<0.000000e+00> : vector<8x256xf32>
    %485 = tpu.matmul %449, %484, %cst_166 {dimension_numbers = #tpu.dot_dimension_numbers<[1], [0], [0], [1], [0, 0, 1, 1], [], []>} : vector<8x72xf32>, vector<72x256xf32>, vector<8x256xf32> -> vector<8x256xf32>
    %486 = vector.broadcast %451 : vector<8x1xf32> to vector<8x256xf32>
    %487 = arith.addf %485, %486 : vector<8x256xf32>
    %cst_167 = arith.constant 0.000000e+00 : f32
    %488 = vector.broadcast %cst_167 : f32 to vector<8x256xf32>
    %489 = arith.maximumf %487, %488 : vector<8x256xf32>
    %c3_168 = arith.constant 3 : index
    %c0_169 = arith.constant 0 : index
    %c0_170 = arith.constant 0 : index
    %490 = vector.load %arg8[%c3_168, %c0_169, %c0_170] : memref<5x8x72xf32, #tpu.memory_space<vmem>>, vector<1x8x72xf32>
    %491 = vector.shape_cast %490 : vector<1x8x72xf32> to vector<8x72xf32>
    %c3_171 = arith.constant 3 : index
    %c0_172 = arith.constant 0 : index
    %c0_173 = arith.constant 0 : index
    %492 = vector.load %arg9[%c3_171, %c0_172, %c0_173] : memref<5x8x1xf32, #tpu.memory_space<vmem>>, vector<1x8x1xf32>
    %493 = vector.shape_cast %492 : vector<1x8x1xf32> to vector<8x1xf32>
    %c17_i32_174 = arith.constant 17 : i32
    %494 = tpu.dynamic_rotate %489 by %c17_i32_174 dim 1 : vector<8x256xf32>, i32 -> vector<8x256xf32>
    %495 = vector.extract_strided_slice %0 {offsets = [0, 0], sizes = [1, 256], strides = [1, 1]} : vector<9x256xf32> to vector<1x256xf32>
    %496 = vector.broadcast %495 : vector<1x256xf32> to vector<8x256xf32>
    %497 = arith.mulf %494, %496 : vector<8x256xf32>
    %c16_i32_175 = arith.constant 16 : i32
    %498 = tpu.dynamic_rotate %489 by %c16_i32_175 dim 1 : vector<8x256xf32>, i32 -> vector<8x256xf32>
    %499 = vector.extract_strided_slice %0 {offsets = [1, 0], sizes = [1, 256], strides = [1, 1]} : vector<9x256xf32> to vector<1x256xf32>
    %500 = vector.broadcast %499 : vector<1x256xf32> to vector<8x256xf32>
    %501 = arith.mulf %498, %500 : vector<8x256xf32>
    %c15_i32_176 = arith.constant 15 : i32
    %502 = tpu.dynamic_rotate %489 by %c15_i32_176 dim 1 : vector<8x256xf32>, i32 -> vector<8x256xf32>
    %503 = vector.extract_strided_slice %0 {offsets = [2, 0], sizes = [1, 256], strides = [1, 1]} : vector<9x256xf32> to vector<1x256xf32>
    %504 = vector.broadcast %503 : vector<1x256xf32> to vector<8x256xf32>
    %505 = arith.mulf %502, %504 : vector<8x256xf32>
    %c1_i32_177 = arith.constant 1 : i32
    %506 = tpu.dynamic_rotate %489 by %c1_i32_177 dim 1 : vector<8x256xf32>, i32 -> vector<8x256xf32>
    %507 = vector.extract_strided_slice %0 {offsets = [3, 0], sizes = [1, 256], strides = [1, 1]} : vector<9x256xf32> to vector<1x256xf32>
    %508 = vector.broadcast %507 : vector<1x256xf32> to vector<8x256xf32>
    %509 = arith.mulf %506, %508 : vector<8x256xf32>
    %c255_i32_178 = arith.constant 255 : i32
    %510 = tpu.dynamic_rotate %489 by %c255_i32_178 dim 1 : vector<8x256xf32>, i32 -> vector<8x256xf32>
    %511 = vector.extract_strided_slice %0 {offsets = [5, 0], sizes = [1, 256], strides = [1, 1]} : vector<9x256xf32> to vector<1x256xf32>
    %512 = vector.broadcast %511 : vector<1x256xf32> to vector<8x256xf32>
    %513 = arith.mulf %510, %512 : vector<8x256xf32>
    %c241_i32_179 = arith.constant 241 : i32
    %514 = tpu.dynamic_rotate %489 by %c241_i32_179 dim 1 : vector<8x256xf32>, i32 -> vector<8x256xf32>
    %515 = vector.extract_strided_slice %0 {offsets = [6, 0], sizes = [1, 256], strides = [1, 1]} : vector<9x256xf32> to vector<1x256xf32>
    %516 = vector.broadcast %515 : vector<1x256xf32> to vector<8x256xf32>
    %517 = arith.mulf %514, %516 : vector<8x256xf32>
    %c240_i32_180 = arith.constant 240 : i32
    %518 = tpu.dynamic_rotate %489 by %c240_i32_180 dim 1 : vector<8x256xf32>, i32 -> vector<8x256xf32>
    %519 = vector.extract_strided_slice %0 {offsets = [7, 0], sizes = [1, 256], strides = [1, 1]} : vector<9x256xf32> to vector<1x256xf32>
    %520 = vector.broadcast %519 : vector<1x256xf32> to vector<8x256xf32>
    %521 = arith.mulf %518, %520 : vector<8x256xf32>
    %c239_i32_181 = arith.constant 239 : i32
    %522 = tpu.dynamic_rotate %489 by %c239_i32_181 dim 1 : vector<8x256xf32>, i32 -> vector<8x256xf32>
    %523 = vector.extract_strided_slice %0 {offsets = [8, 0], sizes = [1, 256], strides = [1, 1]} : vector<9x256xf32> to vector<1x256xf32>
    %524 = vector.broadcast %523 : vector<1x256xf32> to vector<8x256xf32>
    %525 = arith.mulf %522, %524 : vector<8x256xf32>
    %526 = tpu.concatenate %497, %501, %505, %509, %489, %513, %517, %521, %525 in 0 : vector<8x256xf32>, vector<8x256xf32>, vector<8x256xf32>, vector<8x256xf32>, vector<8x256xf32>, vector<8x256xf32>, vector<8x256xf32>, vector<8x256xf32>, vector<8x256xf32> -> vector<72x256xf32>
    %cst_182 = arith.constant dense<0.000000e+00> : vector<8x256xf32>
    %527 = tpu.matmul %491, %526, %cst_182 {dimension_numbers = #tpu.dot_dimension_numbers<[1], [0], [0], [1], [0, 0, 1, 1], [], []>} : vector<8x72xf32>, vector<72x256xf32>, vector<8x256xf32> -> vector<8x256xf32>
    %528 = vector.broadcast %493 : vector<8x1xf32> to vector<8x256xf32>
    %529 = arith.addf %527, %528 : vector<8x256xf32>
    %cst_183 = arith.constant 1.000000e-01 : f32
    %530 = vector.broadcast %cst_183 : f32 to vector<8x256xf32>
    %531 = arith.mulf %529, %530 : vector<8x256xf32>
    %532 = arith.addf %531, %447 : vector<8x256xf32>
    %c4_184 = arith.constant 4 : index
    %c0_185 = arith.constant 0 : index
    %c0_186 = arith.constant 0 : index
    %533 = vector.load %arg8[%c4_184, %c0_185, %c0_186] : memref<5x8x72xf32, #tpu.memory_space<vmem>>, vector<1x8x72xf32>
    %534 = vector.shape_cast %533 : vector<1x8x72xf32> to vector<8x72xf32>
    %c4_187 = arith.constant 4 : index
    %c0_188 = arith.constant 0 : index
    %c0_189 = arith.constant 0 : index
    %535 = vector.load %arg9[%c4_187, %c0_188, %c0_189] : memref<5x8x1xf32, #tpu.memory_space<vmem>>, vector<1x8x1xf32>
    %536 = vector.shape_cast %535 : vector<1x8x1xf32> to vector<8x1xf32>
    %c17_i32_190 = arith.constant 17 : i32
    %537 = tpu.dynamic_rotate %532 by %c17_i32_190 dim 1 : vector<8x256xf32>, i32 -> vector<8x256xf32>
    %538 = vector.extract_strided_slice %0 {offsets = [0, 0], sizes = [1, 256], strides = [1, 1]} : vector<9x256xf32> to vector<1x256xf32>
    %539 = vector.broadcast %538 : vector<1x256xf32> to vector<8x256xf32>
    %540 = arith.mulf %537, %539 : vector<8x256xf32>
    %c16_i32_191 = arith.constant 16 : i32
    %541 = tpu.dynamic_rotate %532 by %c16_i32_191 dim 1 : vector<8x256xf32>, i32 -> vector<8x256xf32>
    %542 = vector.extract_strided_slice %0 {offsets = [1, 0], sizes = [1, 256], strides = [1, 1]} : vector<9x256xf32> to vector<1x256xf32>
    %543 = vector.broadcast %542 : vector<1x256xf32> to vector<8x256xf32>
    %544 = arith.mulf %541, %543 : vector<8x256xf32>
    %c15_i32_192 = arith.constant 15 : i32
    %545 = tpu.dynamic_rotate %532 by %c15_i32_192 dim 1 : vector<8x256xf32>, i32 -> vector<8x256xf32>
    %546 = vector.extract_strided_slice %0 {offsets = [2, 0], sizes = [1, 256], strides = [1, 1]} : vector<9x256xf32> to vector<1x256xf32>
    %547 = vector.broadcast %546 : vector<1x256xf32> to vector<8x256xf32>
    %548 = arith.mulf %545, %547 : vector<8x256xf32>
    %c1_i32_193 = arith.constant 1 : i32
    %549 = tpu.dynamic_rotate %532 by %c1_i32_193 dim 1 : vector<8x256xf32>, i32 -> vector<8x256xf32>
    %550 = vector.extract_strided_slice %0 {offsets = [3, 0], sizes = [1, 256], strides = [1, 1]} : vector<9x256xf32> to vector<1x256xf32>
    %551 = vector.broadcast %550 : vector<1x256xf32> to vector<8x256xf32>
    %552 = arith.mulf %549, %551 : vector<8x256xf32>
    %c255_i32_194 = arith.constant 255 : i32
    %553 = tpu.dynamic_rotate %532 by %c255_i32_194 dim 1 : vector<8x256xf32>, i32 -> vector<8x256xf32>
    %554 = vector.extract_strided_slice %0 {offsets = [5, 0], sizes = [1, 256], strides = [1, 1]} : vector<9x256xf32> to vector<1x256xf32>
    %555 = vector.broadcast %554 : vector<1x256xf32> to vector<8x256xf32>
    %556 = arith.mulf %553, %555 : vector<8x256xf32>
    %c241_i32_195 = arith.constant 241 : i32
    %557 = tpu.dynamic_rotate %532 by %c241_i32_195 dim 1 : vector<8x256xf32>, i32 -> vector<8x256xf32>
    %558 = vector.extract_strided_slice %0 {offsets = [6, 0], sizes = [1, 256], strides = [1, 1]} : vector<9x256xf32> to vector<1x256xf32>
    %559 = vector.broadcast %558 : vector<1x256xf32> to vector<8x256xf32>
    %560 = arith.mulf %557, %559 : vector<8x256xf32>
    %c240_i32_196 = arith.constant 240 : i32
    %561 = tpu.dynamic_rotate %532 by %c240_i32_196 dim 1 : vector<8x256xf32>, i32 -> vector<8x256xf32>
    %562 = vector.extract_strided_slice %0 {offsets = [7, 0], sizes = [1, 256], strides = [1, 1]} : vector<9x256xf32> to vector<1x256xf32>
    %563 = vector.broadcast %562 : vector<1x256xf32> to vector<8x256xf32>
    %564 = arith.mulf %561, %563 : vector<8x256xf32>
    %c239_i32_197 = arith.constant 239 : i32
    %565 = tpu.dynamic_rotate %532 by %c239_i32_197 dim 1 : vector<8x256xf32>, i32 -> vector<8x256xf32>
    %566 = vector.extract_strided_slice %0 {offsets = [8, 0], sizes = [1, 256], strides = [1, 1]} : vector<9x256xf32> to vector<1x256xf32>
    %567 = vector.broadcast %566 : vector<1x256xf32> to vector<8x256xf32>
    %568 = arith.mulf %565, %567 : vector<8x256xf32>
    %569 = tpu.concatenate %540, %544, %548, %552, %532, %556, %560, %564, %568 in 0 : vector<8x256xf32>, vector<8x256xf32>, vector<8x256xf32>, vector<8x256xf32>, vector<8x256xf32>, vector<8x256xf32>, vector<8x256xf32>, vector<8x256xf32>, vector<8x256xf32> -> vector<72x256xf32>
    %cst_198 = arith.constant dense<0.000000e+00> : vector<8x256xf32>
    %570 = tpu.matmul %534, %569, %cst_198 {dimension_numbers = #tpu.dot_dimension_numbers<[1], [0], [0], [1], [0, 0, 1, 1], [], []>} : vector<8x72xf32>, vector<72x256xf32>, vector<8x256xf32> -> vector<8x256xf32>
    %571 = vector.broadcast %536 : vector<8x1xf32> to vector<8x256xf32>
    %572 = arith.addf %570, %571 : vector<8x256xf32>
    %573 = arith.addf %572, %362 : vector<8x256xf32>
    %c17_i32_199 = arith.constant 17 : i32
    %574 = tpu.dynamic_rotate %573 by %c17_i32_199 dim 1 : vector<8x256xf32>, i32 -> vector<8x256xf32>
    %575 = vector.extract_strided_slice %0 {offsets = [0, 0], sizes = [1, 256], strides = [1, 1]} : vector<9x256xf32> to vector<1x256xf32>
    %576 = vector.broadcast %575 : vector<1x256xf32> to vector<8x256xf32>
    %577 = arith.mulf %574, %576 : vector<8x256xf32>
    %c16_i32_200 = arith.constant 16 : i32
    %578 = tpu.dynamic_rotate %573 by %c16_i32_200 dim 1 : vector<8x256xf32>, i32 -> vector<8x256xf32>
    %579 = vector.extract_strided_slice %0 {offsets = [1, 0], sizes = [1, 256], strides = [1, 1]} : vector<9x256xf32> to vector<1x256xf32>
    %580 = vector.broadcast %579 : vector<1x256xf32> to vector<8x256xf32>
    %581 = arith.mulf %578, %580 : vector<8x256xf32>
    %c15_i32_201 = arith.constant 15 : i32
    %582 = tpu.dynamic_rotate %573 by %c15_i32_201 dim 1 : vector<8x256xf32>, i32 -> vector<8x256xf32>
    %583 = vector.extract_strided_slice %0 {offsets = [2, 0], sizes = [1, 256], strides = [1, 1]} : vector<9x256xf32> to vector<1x256xf32>
    %584 = vector.broadcast %583 : vector<1x256xf32> to vector<8x256xf32>
    %585 = arith.mulf %582, %584 : vector<8x256xf32>
    %c1_i32_202 = arith.constant 1 : i32
    %586 = tpu.dynamic_rotate %573 by %c1_i32_202 dim 1 : vector<8x256xf32>, i32 -> vector<8x256xf32>
    %587 = vector.extract_strided_slice %0 {offsets = [3, 0], sizes = [1, 256], strides = [1, 1]} : vector<9x256xf32> to vector<1x256xf32>
    %588 = vector.broadcast %587 : vector<1x256xf32> to vector<8x256xf32>
    %589 = arith.mulf %586, %588 : vector<8x256xf32>
    %c255_i32_203 = arith.constant 255 : i32
    %590 = tpu.dynamic_rotate %573 by %c255_i32_203 dim 1 : vector<8x256xf32>, i32 -> vector<8x256xf32>
    %591 = vector.extract_strided_slice %0 {offsets = [5, 0], sizes = [1, 256], strides = [1, 1]} : vector<9x256xf32> to vector<1x256xf32>
    %592 = vector.broadcast %591 : vector<1x256xf32> to vector<8x256xf32>
    %593 = arith.mulf %590, %592 : vector<8x256xf32>
    %c241_i32_204 = arith.constant 241 : i32
    %594 = tpu.dynamic_rotate %573 by %c241_i32_204 dim 1 : vector<8x256xf32>, i32 -> vector<8x256xf32>
    %595 = vector.extract_strided_slice %0 {offsets = [6, 0], sizes = [1, 256], strides = [1, 1]} : vector<9x256xf32> to vector<1x256xf32>
    %596 = vector.broadcast %595 : vector<1x256xf32> to vector<8x256xf32>
    %597 = arith.mulf %594, %596 : vector<8x256xf32>
    %c240_i32_205 = arith.constant 240 : i32
    %598 = tpu.dynamic_rotate %573 by %c240_i32_205 dim 1 : vector<8x256xf32>, i32 -> vector<8x256xf32>
    %599 = vector.extract_strided_slice %0 {offsets = [7, 0], sizes = [1, 256], strides = [1, 1]} : vector<9x256xf32> to vector<1x256xf32>
    %600 = vector.broadcast %599 : vector<1x256xf32> to vector<8x256xf32>
    %601 = arith.mulf %598, %600 : vector<8x256xf32>
    %c239_i32_206 = arith.constant 239 : i32
    %602 = tpu.dynamic_rotate %573 by %c239_i32_206 dim 1 : vector<8x256xf32>, i32 -> vector<8x256xf32>
    %603 = vector.extract_strided_slice %0 {offsets = [8, 0], sizes = [1, 256], strides = [1, 1]} : vector<9x256xf32> to vector<1x256xf32>
    %604 = vector.broadcast %603 : vector<1x256xf32> to vector<8x256xf32>
    %605 = arith.mulf %602, %604 : vector<8x256xf32>
    %606 = tpu.concatenate %577, %581, %585, %589, %573, %593, %597, %601, %605 in 0 : vector<8x256xf32>, vector<8x256xf32>, vector<8x256xf32>, vector<8x256xf32>, vector<8x256xf32>, vector<8x256xf32>, vector<8x256xf32>, vector<8x256xf32>, vector<8x256xf32> -> vector<72x256xf32>
    %cst_207 = arith.constant dense<0.000000e+00> : vector<2x256xf32>
    %607 = tpu.matmul %8, %606, %cst_207 {dimension_numbers = #tpu.dot_dimension_numbers<[1], [0], [0], [1], [0, 0, 1, 1], [], []>} : vector<2x72xf32>, vector<72x256xf32>, vector<2x256xf32> -> vector<2x256xf32>
    %608 = vector.broadcast %9 : vector<2x1xf32> to vector<2x256xf32>
    %609 = arith.addf %607, %608 : vector<2x256xf32>
    %610 = arith.subf %609, %326 : vector<2x256xf32>
    %cst_208 = arith.constant 5.000000e-01 : f32
    %611 = vector.broadcast %cst_208 : f32 to vector<2x256xf32>
    %612 = arith.mulf %611, %610 : vector<2x256xf32>
    %613 = arith.addf %323, %612 : vector<2x256xf32>
    %cst_209 = arith.constant 5.000000e-01 : f32
    %614 = vector.broadcast %cst_209 : f32 to vector<2x256xf32>
    %615 = arith.mulf %614, %613 : vector<2x256xf32>
    %616 = arith.subf %326, %615 : vector<2x256xf32>
    %cst_210 = arith.constant dense<0.000000e+00> : vector<2x256xf32>
    %617 = tpu.matmul %616, %2, %cst_210 {dimension_numbers = #tpu.dot_dimension_numbers<[1], [0], [0], [1], [0, 0, 1, 1], [], []>} : vector<2x256xf32>, vector<256x256xf32>, vector<2x256xf32> -> vector<2x256xf32>
    %cst_211 = arith.constant dense<0.000000e+00> : vector<2x256xf32>
    %618 = tpu.matmul %616, %4, %cst_211 {dimension_numbers = #tpu.dot_dimension_numbers<[1], [0], [0], [1], [0, 0, 1, 1], [], []>} : vector<2x256xf32>, vector<256x256xf32>, vector<2x256xf32> -> vector<2x256xf32>
    %619 = vector.extract_strided_slice %617 {offsets = [0, 0], sizes = [1, 256], strides = [1, 1]} : vector<2x256xf32> to vector<1x256xf32>
    %620 = vector.extract_strided_slice %618 {offsets = [1, 0], sizes = [1, 256], strides = [1, 1]} : vector<2x256xf32> to vector<1x256xf32>
    %621 = arith.subf %619, %620 : vector<1x256xf32>
    %622 = vector.extract_strided_slice %617 {offsets = [1, 0], sizes = [1, 256], strides = [1, 1]} : vector<2x256xf32> to vector<1x256xf32>
    %623 = vector.extract_strided_slice %618 {offsets = [0, 0], sizes = [1, 256], strides = [1, 1]} : vector<2x256xf32> to vector<1x256xf32>
    %624 = arith.addf %622, %623 : vector<1x256xf32>
    %625 = tpu.concatenate %621, %624 in 0 : vector<1x256xf32>, vector<1x256xf32> -> vector<2x256xf32>
    %626 = arith.subf %625, %5 : vector<2x256xf32>
    %cst_212 = arith.constant 5.000000e-01 : f32
    %627 = vector.broadcast %cst_212 : f32 to vector<2x256xf32>
    %628 = arith.mulf %627, %626 : vector<2x256xf32>
    %629 = arith.subf %616, %628 : vector<2x256xf32>
    %c17_i32_213 = arith.constant 17 : i32
    %630 = tpu.dynamic_rotate %629 by %c17_i32_213 dim 1 : vector<2x256xf32>, i32 -> vector<2x256xf32>
    %631 = vector.extract_strided_slice %0 {offsets = [0, 0], sizes = [1, 256], strides = [1, 1]} : vector<9x256xf32> to vector<1x256xf32>
    %632 = vector.broadcast %631 : vector<1x256xf32> to vector<2x256xf32>
    %633 = arith.mulf %630, %632 : vector<2x256xf32>
    %c16_i32_214 = arith.constant 16 : i32
    %634 = tpu.dynamic_rotate %629 by %c16_i32_214 dim 1 : vector<2x256xf32>, i32 -> vector<2x256xf32>
    %635 = vector.extract_strided_slice %0 {offsets = [1, 0], sizes = [1, 256], strides = [1, 1]} : vector<9x256xf32> to vector<1x256xf32>
    %636 = vector.broadcast %635 : vector<1x256xf32> to vector<2x256xf32>
    %637 = arith.mulf %634, %636 : vector<2x256xf32>
    %c15_i32_215 = arith.constant 15 : i32
    %638 = tpu.dynamic_rotate %629 by %c15_i32_215 dim 1 : vector<2x256xf32>, i32 -> vector<2x256xf32>
    %639 = vector.extract_strided_slice %0 {offsets = [2, 0], sizes = [1, 256], strides = [1, 1]} : vector<9x256xf32> to vector<1x256xf32>
    %640 = vector.broadcast %639 : vector<1x256xf32> to vector<2x256xf32>
    %641 = arith.mulf %638, %640 : vector<2x256xf32>
    %c1_i32_216 = arith.constant 1 : i32
    %642 = tpu.dynamic_rotate %629 by %c1_i32_216 dim 1 : vector<2x256xf32>, i32 -> vector<2x256xf32>
    %643 = vector.extract_strided_slice %0 {offsets = [3, 0], sizes = [1, 256], strides = [1, 1]} : vector<9x256xf32> to vector<1x256xf32>
    %644 = vector.broadcast %643 : vector<1x256xf32> to vector<2x256xf32>
    %645 = arith.mulf %642, %644 : vector<2x256xf32>
    %c255_i32_217 = arith.constant 255 : i32
    %646 = tpu.dynamic_rotate %629 by %c255_i32_217 dim 1 : vector<2x256xf32>, i32 -> vector<2x256xf32>
    %647 = vector.extract_strided_slice %0 {offsets = [5, 0], sizes = [1, 256], strides = [1, 1]} : vector<9x256xf32> to vector<1x256xf32>
    %648 = vector.broadcast %647 : vector<1x256xf32> to vector<2x256xf32>
    %649 = arith.mulf %646, %648 : vector<2x256xf32>
    %c241_i32_218 = arith.constant 241 : i32
    %650 = tpu.dynamic_rotate %629 by %c241_i32_218 dim 1 : vector<2x256xf32>, i32 -> vector<2x256xf32>
    %651 = vector.extract_strided_slice %0 {offsets = [6, 0], sizes = [1, 256], strides = [1, 1]} : vector<9x256xf32> to vector<1x256xf32>
    %652 = vector.broadcast %651 : vector<1x256xf32> to vector<2x256xf32>
    %653 = arith.mulf %650, %652 : vector<2x256xf32>
    %c240_i32_219 = arith.constant 240 : i32
    %654 = tpu.dynamic_rotate %629 by %c240_i32_219 dim 1 : vector<2x256xf32>, i32 -> vector<2x256xf32>
    %655 = vector.extract_strided_slice %0 {offsets = [7, 0], sizes = [1, 256], strides = [1, 1]} : vector<9x256xf32> to vector<1x256xf32>
    %656 = vector.broadcast %655 : vector<1x256xf32> to vector<2x256xf32>
    %657 = arith.mulf %654, %656 : vector<2x256xf32>
    %c239_i32_220 = arith.constant 239 : i32
    %658 = tpu.dynamic_rotate %629 by %c239_i32_220 dim 1 : vector<2x256xf32>, i32 -> vector<2x256xf32>
    %659 = vector.extract_strided_slice %0 {offsets = [8, 0], sizes = [1, 256], strides = [1, 1]} : vector<9x256xf32> to vector<1x256xf32>
    %660 = vector.broadcast %659 : vector<1x256xf32> to vector<2x256xf32>
    %661 = arith.mulf %658, %660 : vector<2x256xf32>
    %662 = tpu.concatenate %633, %637, %641, %645, %629, %649, %653, %657, %661 in 0 : vector<2x256xf32>, vector<2x256xf32>, vector<2x256xf32>, vector<2x256xf32>, vector<2x256xf32>, vector<2x256xf32>, vector<2x256xf32>, vector<2x256xf32>, vector<2x256xf32> -> vector<18x256xf32>
    %cst_221 = arith.constant dense<0.000000e+00> : vector<8x256xf32>
    %663 = tpu.matmul %6, %662, %cst_221 {dimension_numbers = #tpu.dot_dimension_numbers<[1], [0], [0], [1], [0, 0, 1, 1], [], []>} : vector<8x18xf32>, vector<18x256xf32>, vector<8x256xf32> -> vector<8x256xf32>
    %664 = vector.broadcast %7 : vector<8x1xf32> to vector<8x256xf32>
    %665 = arith.addf %663, %664 : vector<8x256xf32>
    %c0_222 = arith.constant 0 : index
    %c0_223 = arith.constant 0 : index
    %c0_224 = arith.constant 0 : index
    %666 = vector.load %arg8[%c0_222, %c0_223, %c0_224] : memref<5x8x72xf32, #tpu.memory_space<vmem>>, vector<1x8x72xf32>
    %667 = vector.shape_cast %666 : vector<1x8x72xf32> to vector<8x72xf32>
    %c0_225 = arith.constant 0 : index
    %c0_226 = arith.constant 0 : index
    %c0_227 = arith.constant 0 : index
    %668 = vector.load %arg9[%c0_225, %c0_226, %c0_227] : memref<5x8x1xf32, #tpu.memory_space<vmem>>, vector<1x8x1xf32>
    %669 = vector.shape_cast %668 : vector<1x8x1xf32> to vector<8x1xf32>
    %c17_i32_228 = arith.constant 17 : i32
    %670 = tpu.dynamic_rotate %665 by %c17_i32_228 dim 1 : vector<8x256xf32>, i32 -> vector<8x256xf32>
    %671 = vector.extract_strided_slice %0 {offsets = [0, 0], sizes = [1, 256], strides = [1, 1]} : vector<9x256xf32> to vector<1x256xf32>
    %672 = vector.broadcast %671 : vector<1x256xf32> to vector<8x256xf32>
    %673 = arith.mulf %670, %672 : vector<8x256xf32>
    %c16_i32_229 = arith.constant 16 : i32
    %674 = tpu.dynamic_rotate %665 by %c16_i32_229 dim 1 : vector<8x256xf32>, i32 -> vector<8x256xf32>
    %675 = vector.extract_strided_slice %0 {offsets = [1, 0], sizes = [1, 256], strides = [1, 1]} : vector<9x256xf32> to vector<1x256xf32>
    %676 = vector.broadcast %675 : vector<1x256xf32> to vector<8x256xf32>
    %677 = arith.mulf %674, %676 : vector<8x256xf32>
    %c15_i32_230 = arith.constant 15 : i32
    %678 = tpu.dynamic_rotate %665 by %c15_i32_230 dim 1 : vector<8x256xf32>, i32 -> vector<8x256xf32>
    %679 = vector.extract_strided_slice %0 {offsets = [2, 0], sizes = [1, 256], strides = [1, 1]} : vector<9x256xf32> to vector<1x256xf32>
    %680 = vector.broadcast %679 : vector<1x256xf32> to vector<8x256xf32>
    %681 = arith.mulf %678, %680 : vector<8x256xf32>
    %c1_i32_231 = arith.constant 1 : i32
    %682 = tpu.dynamic_rotate %665 by %c1_i32_231 dim 1 : vector<8x256xf32>, i32 -> vector<8x256xf32>
    %683 = vector.extract_strided_slice %0 {offsets = [3, 0], sizes = [1, 256], strides = [1, 1]} : vector<9x256xf32> to vector<1x256xf32>
    %684 = vector.broadcast %683 : vector<1x256xf32> to vector<8x256xf32>
    %685 = arith.mulf %682, %684 : vector<8x256xf32>
    %c255_i32_232 = arith.constant 255 : i32
    %686 = tpu.dynamic_rotate %665 by %c255_i32_232 dim 1 : vector<8x256xf32>, i32 -> vector<8x256xf32>
    %687 = vector.extract_strided_slice %0 {offsets = [5, 0], sizes = [1, 256], strides = [1, 1]} : vector<9x256xf32> to vector<1x256xf32>
    %688 = vector.broadcast %687 : vector<1x256xf32> to vector<8x256xf32>
    %689 = arith.mulf %686, %688 : vector<8x256xf32>
    %c241_i32_233 = arith.constant 241 : i32
    %690 = tpu.dynamic_rotate %665 by %c241_i32_233 dim 1 : vector<8x256xf32>, i32 -> vector<8x256xf32>
    %691 = vector.extract_strided_slice %0 {offsets = [6, 0], sizes = [1, 256], strides = [1, 1]} : vector<9x256xf32> to vector<1x256xf32>
    %692 = vector.broadcast %691 : vector<1x256xf32> to vector<8x256xf32>
    %693 = arith.mulf %690, %692 : vector<8x256xf32>
    %c240_i32_234 = arith.constant 240 : i32
    %694 = tpu.dynamic_rotate %665 by %c240_i32_234 dim 1 : vector<8x256xf32>, i32 -> vector<8x256xf32>
    %695 = vector.extract_strided_slice %0 {offsets = [7, 0], sizes = [1, 256], strides = [1, 1]} : vector<9x256xf32> to vector<1x256xf32>
    %696 = vector.broadcast %695 : vector<1x256xf32> to vector<8x256xf32>
    %697 = arith.mulf %694, %696 : vector<8x256xf32>
    %c239_i32_235 = arith.constant 239 : i32
    %698 = tpu.dynamic_rotate %665 by %c239_i32_235 dim 1 : vector<8x256xf32>, i32 -> vector<8x256xf32>
    %699 = vector.extract_strided_slice %0 {offsets = [8, 0], sizes = [1, 256], strides = [1, 1]} : vector<9x256xf32> to vector<1x256xf32>
    %700 = vector.broadcast %699 : vector<1x256xf32> to vector<8x256xf32>
    %701 = arith.mulf %698, %700 : vector<8x256xf32>
    %702 = tpu.concatenate %673, %677, %681, %685, %665, %689, %693, %697, %701 in 0 : vector<8x256xf32>, vector<8x256xf32>, vector<8x256xf32>, vector<8x256xf32>, vector<8x256xf32>, vector<8x256xf32>, vector<8x256xf32>, vector<8x256xf32>, vector<8x256xf32> -> vector<72x256xf32>
    %cst_236 = arith.constant dense<0.000000e+00> : vector<8x256xf32>
    %703 = tpu.matmul %667, %702, %cst_236 {dimension_numbers = #tpu.dot_dimension_numbers<[1], [0], [0], [1], [0, 0, 1, 1], [], []>} : vector<8x72xf32>, vector<72x256xf32>, vector<8x256xf32> -> vector<8x256xf32>
    %704 = vector.broadcast %669 : vector<8x1xf32> to vector<8x256xf32>
    %705 = arith.addf %703, %704 : vector<8x256xf32>
    %cst_237 = arith.constant 0.000000e+00 : f32
    %706 = vector.broadcast %cst_237 : f32 to vector<8x256xf32>
    %707 = arith.maximumf %705, %706 : vector<8x256xf32>
    %c1_238 = arith.constant 1 : index
    %c0_239 = arith.constant 0 : index
    %c0_240 = arith.constant 0 : index
    %708 = vector.load %arg8[%c1_238, %c0_239, %c0_240] : memref<5x8x72xf32, #tpu.memory_space<vmem>>, vector<1x8x72xf32>
    %709 = vector.shape_cast %708 : vector<1x8x72xf32> to vector<8x72xf32>
    %c1_241 = arith.constant 1 : index
    %c0_242 = arith.constant 0 : index
    %c0_243 = arith.constant 0 : index
    %710 = vector.load %arg9[%c1_241, %c0_242, %c0_243] : memref<5x8x1xf32, #tpu.memory_space<vmem>>, vector<1x8x1xf32>
    %711 = vector.shape_cast %710 : vector<1x8x1xf32> to vector<8x1xf32>
    %c17_i32_244 = arith.constant 17 : i32
    %712 = tpu.dynamic_rotate %707 by %c17_i32_244 dim 1 : vector<8x256xf32>, i32 -> vector<8x256xf32>
    %713 = vector.extract_strided_slice %0 {offsets = [0, 0], sizes = [1, 256], strides = [1, 1]} : vector<9x256xf32> to vector<1x256xf32>
    %714 = vector.broadcast %713 : vector<1x256xf32> to vector<8x256xf32>
    %715 = arith.mulf %712, %714 : vector<8x256xf32>
    %c16_i32_245 = arith.constant 16 : i32
    %716 = tpu.dynamic_rotate %707 by %c16_i32_245 dim 1 : vector<8x256xf32>, i32 -> vector<8x256xf32>
    %717 = vector.extract_strided_slice %0 {offsets = [1, 0], sizes = [1, 256], strides = [1, 1]} : vector<9x256xf32> to vector<1x256xf32>
    %718 = vector.broadcast %717 : vector<1x256xf32> to vector<8x256xf32>
    %719 = arith.mulf %716, %718 : vector<8x256xf32>
    %c15_i32_246 = arith.constant 15 : i32
    %720 = tpu.dynamic_rotate %707 by %c15_i32_246 dim 1 : vector<8x256xf32>, i32 -> vector<8x256xf32>
    %721 = vector.extract_strided_slice %0 {offsets = [2, 0], sizes = [1, 256], strides = [1, 1]} : vector<9x256xf32> to vector<1x256xf32>
    %722 = vector.broadcast %721 : vector<1x256xf32> to vector<8x256xf32>
    %723 = arith.mulf %720, %722 : vector<8x256xf32>
    %c1_i32_247 = arith.constant 1 : i32
    %724 = tpu.dynamic_rotate %707 by %c1_i32_247 dim 1 : vector<8x256xf32>, i32 -> vector<8x256xf32>
    %725 = vector.extract_strided_slice %0 {offsets = [3, 0], sizes = [1, 256], strides = [1, 1]} : vector<9x256xf32> to vector<1x256xf32>
    %726 = vector.broadcast %725 : vector<1x256xf32> to vector<8x256xf32>
    %727 = arith.mulf %724, %726 : vector<8x256xf32>
    %c255_i32_248 = arith.constant 255 : i32
    %728 = tpu.dynamic_rotate %707 by %c255_i32_248 dim 1 : vector<8x256xf32>, i32 -> vector<8x256xf32>
    %729 = vector.extract_strided_slice %0 {offsets = [5, 0], sizes = [1, 256], strides = [1, 1]} : vector<9x256xf32> to vector<1x256xf32>
    %730 = vector.broadcast %729 : vector<1x256xf32> to vector<8x256xf32>
    %731 = arith.mulf %728, %730 : vector<8x256xf32>
    %c241_i32_249 = arith.constant 241 : i32
    %732 = tpu.dynamic_rotate %707 by %c241_i32_249 dim 1 : vector<8x256xf32>, i32 -> vector<8x256xf32>
    %733 = vector.extract_strided_slice %0 {offsets = [6, 0], sizes = [1, 256], strides = [1, 1]} : vector<9x256xf32> to vector<1x256xf32>
    %734 = vector.broadcast %733 : vector<1x256xf32> to vector<8x256xf32>
    %735 = arith.mulf %732, %734 : vector<8x256xf32>
    %c240_i32_250 = arith.constant 240 : i32
    %736 = tpu.dynamic_rotate %707 by %c240_i32_250 dim 1 : vector<8x256xf32>, i32 -> vector<8x256xf32>
    %737 = vector.extract_strided_slice %0 {offsets = [7, 0], sizes = [1, 256], strides = [1, 1]} : vector<9x256xf32> to vector<1x256xf32>
    %738 = vector.broadcast %737 : vector<1x256xf32> to vector<8x256xf32>
    %739 = arith.mulf %736, %738 : vector<8x256xf32>
    %c239_i32_251 = arith.constant 239 : i32
    %740 = tpu.dynamic_rotate %707 by %c239_i32_251 dim 1 : vector<8x256xf32>, i32 -> vector<8x256xf32>
    %741 = vector.extract_strided_slice %0 {offsets = [8, 0], sizes = [1, 256], strides = [1, 1]} : vector<9x256xf32> to vector<1x256xf32>
    %742 = vector.broadcast %741 : vector<1x256xf32> to vector<8x256xf32>
    %743 = arith.mulf %740, %742 : vector<8x256xf32>
    %744 = tpu.concatenate %715, %719, %723, %727, %707, %731, %735, %739, %743 in 0 : vector<8x256xf32>, vector<8x256xf32>, vector<8x256xf32>, vector<8x256xf32>, vector<8x256xf32>, vector<8x256xf32>, vector<8x256xf32>, vector<8x256xf32>, vector<8x256xf32> -> vector<72x256xf32>
    %cst_252 = arith.constant dense<0.000000e+00> : vector<8x256xf32>
    %745 = tpu.matmul %709, %744, %cst_252 {dimension_numbers = #tpu.dot_dimension_numbers<[1], [0], [0], [1], [0, 0, 1, 1], [], []>} : vector<8x72xf32>, vector<72x256xf32>, vector<8x256xf32> -> vector<8x256xf32>
    %746 = vector.broadcast %711 : vector<8x1xf32> to vector<8x256xf32>
    %747 = arith.addf %745, %746 : vector<8x256xf32>
    %cst_253 = arith.constant 1.000000e-01 : f32
    %748 = vector.broadcast %cst_253 : f32 to vector<8x256xf32>
    %749 = arith.mulf %747, %748 : vector<8x256xf32>
    %750 = arith.addf %749, %665 : vector<8x256xf32>
    %c2_254 = arith.constant 2 : index
    %c0_255 = arith.constant 0 : index
    %c0_256 = arith.constant 0 : index
    %751 = vector.load %arg8[%c2_254, %c0_255, %c0_256] : memref<5x8x72xf32, #tpu.memory_space<vmem>>, vector<1x8x72xf32>
    %752 = vector.shape_cast %751 : vector<1x8x72xf32> to vector<8x72xf32>
    %c2_257 = arith.constant 2 : index
    %c0_258 = arith.constant 0 : index
    %c0_259 = arith.constant 0 : index
    %753 = vector.load %arg9[%c2_257, %c0_258, %c0_259] : memref<5x8x1xf32, #tpu.memory_space<vmem>>, vector<1x8x1xf32>
    %754 = vector.shape_cast %753 : vector<1x8x1xf32> to vector<8x1xf32>
    %c17_i32_260 = arith.constant 17 : i32
    %755 = tpu.dynamic_rotate %750 by %c17_i32_260 dim 1 : vector<8x256xf32>, i32 -> vector<8x256xf32>
    %756 = vector.extract_strided_slice %0 {offsets = [0, 0], sizes = [1, 256], strides = [1, 1]} : vector<9x256xf32> to vector<1x256xf32>
    %757 = vector.broadcast %756 : vector<1x256xf32> to vector<8x256xf32>
    %758 = arith.mulf %755, %757 : vector<8x256xf32>
    %c16_i32_261 = arith.constant 16 : i32
    %759 = tpu.dynamic_rotate %750 by %c16_i32_261 dim 1 : vector<8x256xf32>, i32 -> vector<8x256xf32>
    %760 = vector.extract_strided_slice %0 {offsets = [1, 0], sizes = [1, 256], strides = [1, 1]} : vector<9x256xf32> to vector<1x256xf32>
    %761 = vector.broadcast %760 : vector<1x256xf32> to vector<8x256xf32>
    %762 = arith.mulf %759, %761 : vector<8x256xf32>
    %c15_i32_262 = arith.constant 15 : i32
    %763 = tpu.dynamic_rotate %750 by %c15_i32_262 dim 1 : vector<8x256xf32>, i32 -> vector<8x256xf32>
    %764 = vector.extract_strided_slice %0 {offsets = [2, 0], sizes = [1, 256], strides = [1, 1]} : vector<9x256xf32> to vector<1x256xf32>
    %765 = vector.broadcast %764 : vector<1x256xf32> to vector<8x256xf32>
    %766 = arith.mulf %763, %765 : vector<8x256xf32>
    %c1_i32_263 = arith.constant 1 : i32
    %767 = tpu.dynamic_rotate %750 by %c1_i32_263 dim 1 : vector<8x256xf32>, i32 -> vector<8x256xf32>
    %768 = vector.extract_strided_slice %0 {offsets = [3, 0], sizes = [1, 256], strides = [1, 1]} : vector<9x256xf32> to vector<1x256xf32>
    %769 = vector.broadcast %768 : vector<1x256xf32> to vector<8x256xf32>
    %770 = arith.mulf %767, %769 : vector<8x256xf32>
    %c255_i32_264 = arith.constant 255 : i32
    %771 = tpu.dynamic_rotate %750 by %c255_i32_264 dim 1 : vector<8x256xf32>, i32 -> vector<8x256xf32>
    %772 = vector.extract_strided_slice %0 {offsets = [5, 0], sizes = [1, 256], strides = [1, 1]} : vector<9x256xf32> to vector<1x256xf32>
    %773 = vector.broadcast %772 : vector<1x256xf32> to vector<8x256xf32>
    %774 = arith.mulf %771, %773 : vector<8x256xf32>
    %c241_i32_265 = arith.constant 241 : i32
    %775 = tpu.dynamic_rotate %750 by %c241_i32_265 dim 1 : vector<8x256xf32>, i32 -> vector<8x256xf32>
    %776 = vector.extract_strided_slice %0 {offsets = [6, 0], sizes = [1, 256], strides = [1, 1]} : vector<9x256xf32> to vector<1x256xf32>
    %777 = vector.broadcast %776 : vector<1x256xf32> to vector<8x256xf32>
    %778 = arith.mulf %775, %777 : vector<8x256xf32>
    %c240_i32_266 = arith.constant 240 : i32
    %779 = tpu.dynamic_rotate %750 by %c240_i32_266 dim 1 : vector<8x256xf32>, i32 -> vector<8x256xf32>
    %780 = vector.extract_strided_slice %0 {offsets = [7, 0], sizes = [1, 256], strides = [1, 1]} : vector<9x256xf32> to vector<1x256xf32>
    %781 = vector.broadcast %780 : vector<1x256xf32> to vector<8x256xf32>
    %782 = arith.mulf %779, %781 : vector<8x256xf32>
    %c239_i32_267 = arith.constant 239 : i32
    %783 = tpu.dynamic_rotate %750 by %c239_i32_267 dim 1 : vector<8x256xf32>, i32 -> vector<8x256xf32>
    %784 = vector.extract_strided_slice %0 {offsets = [8, 0], sizes = [1, 256], strides = [1, 1]} : vector<9x256xf32> to vector<1x256xf32>
    %785 = vector.broadcast %784 : vector<1x256xf32> to vector<8x256xf32>
    %786 = arith.mulf %783, %785 : vector<8x256xf32>
    %787 = tpu.concatenate %758, %762, %766, %770, %750, %774, %778, %782, %786 in 0 : vector<8x256xf32>, vector<8x256xf32>, vector<8x256xf32>, vector<8x256xf32>, vector<8x256xf32>, vector<8x256xf32>, vector<8x256xf32>, vector<8x256xf32>, vector<8x256xf32> -> vector<72x256xf32>
    %cst_268 = arith.constant dense<0.000000e+00> : vector<8x256xf32>
    %788 = tpu.matmul %752, %787, %cst_268 {dimension_numbers = #tpu.dot_dimension_numbers<[1], [0], [0], [1], [0, 0, 1, 1], [], []>} : vector<8x72xf32>, vector<72x256xf32>, vector<8x256xf32> -> vector<8x256xf32>
    %789 = vector.broadcast %754 : vector<8x1xf32> to vector<8x256xf32>
    %790 = arith.addf %788, %789 : vector<8x256xf32>
    %cst_269 = arith.constant 0.000000e+00 : f32
    %791 = vector.broadcast %cst_269 : f32 to vector<8x256xf32>
    %792 = arith.maximumf %790, %791 : vector<8x256xf32>
    %c3_270 = arith.constant 3 : index
    %c0_271 = arith.constant 0 : index
    %c0_272 = arith.constant 0 : index
    %793 = vector.load %arg8[%c3_270, %c0_271, %c0_272] : memref<5x8x72xf32, #tpu.memory_space<vmem>>, vector<1x8x72xf32>
    %794 = vector.shape_cast %793 : vector<1x8x72xf32> to vector<8x72xf32>
    %c3_273 = arith.constant 3 : index
    %c0_274 = arith.constant 0 : index
    %c0_275 = arith.constant 0 : index
    %795 = vector.load %arg9[%c3_273, %c0_274, %c0_275] : memref<5x8x1xf32, #tpu.memory_space<vmem>>, vector<1x8x1xf32>
    %796 = vector.shape_cast %795 : vector<1x8x1xf32> to vector<8x1xf32>
    %c17_i32_276 = arith.constant 17 : i32
    %797 = tpu.dynamic_rotate %792 by %c17_i32_276 dim 1 : vector<8x256xf32>, i32 -> vector<8x256xf32>
    %798 = vector.extract_strided_slice %0 {offsets = [0, 0], sizes = [1, 256], strides = [1, 1]} : vector<9x256xf32> to vector<1x256xf32>
    %799 = vector.broadcast %798 : vector<1x256xf32> to vector<8x256xf32>
    %800 = arith.mulf %797, %799 : vector<8x256xf32>
    %c16_i32_277 = arith.constant 16 : i32
    %801 = tpu.dynamic_rotate %792 by %c16_i32_277 dim 1 : vector<8x256xf32>, i32 -> vector<8x256xf32>
    %802 = vector.extract_strided_slice %0 {offsets = [1, 0], sizes = [1, 256], strides = [1, 1]} : vector<9x256xf32> to vector<1x256xf32>
    %803 = vector.broadcast %802 : vector<1x256xf32> to vector<8x256xf32>
    %804 = arith.mulf %801, %803 : vector<8x256xf32>
    %c15_i32_278 = arith.constant 15 : i32
    %805 = tpu.dynamic_rotate %792 by %c15_i32_278 dim 1 : vector<8x256xf32>, i32 -> vector<8x256xf32>
    %806 = vector.extract_strided_slice %0 {offsets = [2, 0], sizes = [1, 256], strides = [1, 1]} : vector<9x256xf32> to vector<1x256xf32>
    %807 = vector.broadcast %806 : vector<1x256xf32> to vector<8x256xf32>
    %808 = arith.mulf %805, %807 : vector<8x256xf32>
    %c1_i32_279 = arith.constant 1 : i32
    %809 = tpu.dynamic_rotate %792 by %c1_i32_279 dim 1 : vector<8x256xf32>, i32 -> vector<8x256xf32>
    %810 = vector.extract_strided_slice %0 {offsets = [3, 0], sizes = [1, 256], strides = [1, 1]} : vector<9x256xf32> to vector<1x256xf32>
    %811 = vector.broadcast %810 : vector<1x256xf32> to vector<8x256xf32>
    %812 = arith.mulf %809, %811 : vector<8x256xf32>
    %c255_i32_280 = arith.constant 255 : i32
    %813 = tpu.dynamic_rotate %792 by %c255_i32_280 dim 1 : vector<8x256xf32>, i32 -> vector<8x256xf32>
    %814 = vector.extract_strided_slice %0 {offsets = [5, 0], sizes = [1, 256], strides = [1, 1]} : vector<9x256xf32> to vector<1x256xf32>
    %815 = vector.broadcast %814 : vector<1x256xf32> to vector<8x256xf32>
    %816 = arith.mulf %813, %815 : vector<8x256xf32>
    %c241_i32_281 = arith.constant 241 : i32
    %817 = tpu.dynamic_rotate %792 by %c241_i32_281 dim 1 : vector<8x256xf32>, i32 -> vector<8x256xf32>
    %818 = vector.extract_strided_slice %0 {offsets = [6, 0], sizes = [1, 256], strides = [1, 1]} : vector<9x256xf32> to vector<1x256xf32>
    %819 = vector.broadcast %818 : vector<1x256xf32> to vector<8x256xf32>
    %820 = arith.mulf %817, %819 : vector<8x256xf32>
    %c240_i32_282 = arith.constant 240 : i32
    %821 = tpu.dynamic_rotate %792 by %c240_i32_282 dim 1 : vector<8x256xf32>, i32 -> vector<8x256xf32>
    %822 = vector.extract_strided_slice %0 {offsets = [7, 0], sizes = [1, 256], strides = [1, 1]} : vector<9x256xf32> to vector<1x256xf32>
    %823 = vector.broadcast %822 : vector<1x256xf32> to vector<8x256xf32>
    %824 = arith.mulf %821, %823 : vector<8x256xf32>
    %c239_i32_283 = arith.constant 239 : i32
    %825 = tpu.dynamic_rotate %792 by %c239_i32_283 dim 1 : vector<8x256xf32>, i32 -> vector<8x256xf32>
    %826 = vector.extract_strided_slice %0 {offsets = [8, 0], sizes = [1, 256], strides = [1, 1]} : vector<9x256xf32> to vector<1x256xf32>
    %827 = vector.broadcast %826 : vector<1x256xf32> to vector<8x256xf32>
    %828 = arith.mulf %825, %827 : vector<8x256xf32>
    %829 = tpu.concatenate %800, %804, %808, %812, %792, %816, %820, %824, %828 in 0 : vector<8x256xf32>, vector<8x256xf32>, vector<8x256xf32>, vector<8x256xf32>, vector<8x256xf32>, vector<8x256xf32>, vector<8x256xf32>, vector<8x256xf32>, vector<8x256xf32> -> vector<72x256xf32>
    %cst_284 = arith.constant dense<0.000000e+00> : vector<8x256xf32>
    %830 = tpu.matmul %794, %829, %cst_284 {dimension_numbers = #tpu.dot_dimension_numbers<[1], [0], [0], [1], [0, 0, 1, 1], [], []>} : vector<8x72xf32>, vector<72x256xf32>, vector<8x256xf32> -> vector<8x256xf32>
    %831 = vector.broadcast %796 : vector<8x1xf32> to vector<8x256xf32>
    %832 = arith.addf %830, %831 : vector<8x256xf32>
    %cst_285 = arith.constant 1.000000e-01 : f32
    %833 = vector.broadcast %cst_285 : f32 to vector<8x256xf32>
    %834 = arith.mulf %832, %833 : vector<8x256xf32>
    %835 = arith.addf %834, %750 : vector<8x256xf32>
    %c4_286 = arith.constant 4 : index
    %c0_287 = arith.constant 0 : index
    %c0_288 = arith.constant 0 : index
    %836 = vector.load %arg8[%c4_286, %c0_287, %c0_288] : memref<5x8x72xf32, #tpu.memory_space<vmem>>, vector<1x8x72xf32>
    %837 = vector.shape_cast %836 : vector<1x8x72xf32> to vector<8x72xf32>
    %c4_289 = arith.constant 4 : index
    %c0_290 = arith.constant 0 : index
    %c0_291 = arith.constant 0 : index
    %838 = vector.load %arg9[%c4_289, %c0_290, %c0_291] : memref<5x8x1xf32, #tpu.memory_space<vmem>>, vector<1x8x1xf32>
    %839 = vector.shape_cast %838 : vector<1x8x1xf32> to vector<8x1xf32>
    %c17_i32_292 = arith.constant 17 : i32
    %840 = tpu.dynamic_rotate %835 by %c17_i32_292 dim 1 : vector<8x256xf32>, i32 -> vector<8x256xf32>
    %841 = vector.extract_strided_slice %0 {offsets = [0, 0], sizes = [1, 256], strides = [1, 1]} : vector<9x256xf32> to vector<1x256xf32>
    %842 = vector.broadcast %841 : vector<1x256xf32> to vector<8x256xf32>
    %843 = arith.mulf %840, %842 : vector<8x256xf32>
    %c16_i32_293 = arith.constant 16 : i32
    %844 = tpu.dynamic_rotate %835 by %c16_i32_293 dim 1 : vector<8x256xf32>, i32 -> vector<8x256xf32>
    %845 = vector.extract_strided_slice %0 {offsets = [1, 0], sizes = [1, 256], strides = [1, 1]} : vector<9x256xf32> to vector<1x256xf32>
    %846 = vector.broadcast %845 : vector<1x256xf32> to vector<8x256xf32>
    %847 = arith.mulf %844, %846 : vector<8x256xf32>
    %c15_i32_294 = arith.constant 15 : i32
    %848 = tpu.dynamic_rotate %835 by %c15_i32_294 dim 1 : vector<8x256xf32>, i32 -> vector<8x256xf32>
    %849 = vector.extract_strided_slice %0 {offsets = [2, 0], sizes = [1, 256], strides = [1, 1]} : vector<9x256xf32> to vector<1x256xf32>
    %850 = vector.broadcast %849 : vector<1x256xf32> to vector<8x256xf32>
    %851 = arith.mulf %848, %850 : vector<8x256xf32>
    %c1_i32_295 = arith.constant 1 : i32
    %852 = tpu.dynamic_rotate %835 by %c1_i32_295 dim 1 : vector<8x256xf32>, i32 -> vector<8x256xf32>
    %853 = vector.extract_strided_slice %0 {offsets = [3, 0], sizes = [1, 256], strides = [1, 1]} : vector<9x256xf32> to vector<1x256xf32>
    %854 = vector.broadcast %853 : vector<1x256xf32> to vector<8x256xf32>
    %855 = arith.mulf %852, %854 : vector<8x256xf32>
    %c255_i32_296 = arith.constant 255 : i32
    %856 = tpu.dynamic_rotate %835 by %c255_i32_296 dim 1 : vector<8x256xf32>, i32 -> vector<8x256xf32>
    %857 = vector.extract_strided_slice %0 {offsets = [5, 0], sizes = [1, 256], strides = [1, 1]} : vector<9x256xf32> to vector<1x256xf32>
    %858 = vector.broadcast %857 : vector<1x256xf32> to vector<8x256xf32>
    %859 = arith.mulf %856, %858 : vector<8x256xf32>
    %c241_i32_297 = arith.constant 241 : i32
    %860 = tpu.dynamic_rotate %835 by %c241_i32_297 dim 1 : vector<8x256xf32>, i32 -> vector<8x256xf32>
    %861 = vector.extract_strided_slice %0 {offsets = [6, 0], sizes = [1, 256], strides = [1, 1]} : vector<9x256xf32> to vector<1x256xf32>
    %862 = vector.broadcast %861 : vector<1x256xf32> to vector<8x256xf32>
    %863 = arith.mulf %860, %862 : vector<8x256xf32>
    %c240_i32_298 = arith.constant 240 : i32
    %864 = tpu.dynamic_rotate %835 by %c240_i32_298 dim 1 : vector<8x256xf32>, i32 -> vector<8x256xf32>
    %865 = vector.extract_strided_slice %0 {offsets = [7, 0], sizes = [1, 256], strides = [1, 1]} : vector<9x256xf32> to vector<1x256xf32>
    %866 = vector.broadcast %865 : vector<1x256xf32> to vector<8x256xf32>
    %867 = arith.mulf %864, %866 : vector<8x256xf32>
    %c239_i32_299 = arith.constant 239 : i32
    %868 = tpu.dynamic_rotate %835 by %c239_i32_299 dim 1 : vector<8x256xf32>, i32 -> vector<8x256xf32>
    %869 = vector.extract_strided_slice %0 {offsets = [8, 0], sizes = [1, 256], strides = [1, 1]} : vector<9x256xf32> to vector<1x256xf32>
    %870 = vector.broadcast %869 : vector<1x256xf32> to vector<8x256xf32>
    %871 = arith.mulf %868, %870 : vector<8x256xf32>
    %872 = tpu.concatenate %843, %847, %851, %855, %835, %859, %863, %867, %871 in 0 : vector<8x256xf32>, vector<8x256xf32>, vector<8x256xf32>, vector<8x256xf32>, vector<8x256xf32>, vector<8x256xf32>, vector<8x256xf32>, vector<8x256xf32>, vector<8x256xf32> -> vector<72x256xf32>
    %cst_300 = arith.constant dense<0.000000e+00> : vector<8x256xf32>
    %873 = tpu.matmul %837, %872, %cst_300 {dimension_numbers = #tpu.dot_dimension_numbers<[1], [0], [0], [1], [0, 0, 1, 1], [], []>} : vector<8x72xf32>, vector<72x256xf32>, vector<8x256xf32> -> vector<8x256xf32>
    %874 = vector.broadcast %839 : vector<8x1xf32> to vector<8x256xf32>
    %875 = arith.addf %873, %874 : vector<8x256xf32>
    %876 = arith.addf %875, %665 : vector<8x256xf32>
    %c17_i32_301 = arith.constant 17 : i32
    %877 = tpu.dynamic_rotate %876 by %c17_i32_301 dim 1 : vector<8x256xf32>, i32 -> vector<8x256xf32>
    %878 = vector.extract_strided_slice %0 {offsets = [0, 0], sizes = [1, 256], strides = [1, 1]} : vector<9x256xf32> to vector<1x256xf32>
    %879 = vector.broadcast %878 : vector<1x256xf32> to vector<8x256xf32>
    %880 = arith.mulf %877, %879 : vector<8x256xf32>
    %c16_i32_302 = arith.constant 16 : i32
    %881 = tpu.dynamic_rotate %876 by %c16_i32_302 dim 1 : vector<8x256xf32>, i32 -> vector<8x256xf32>
    %882 = vector.extract_strided_slice %0 {offsets = [1, 0], sizes = [1, 256], strides = [1, 1]} : vector<9x256xf32> to vector<1x256xf32>
    %883 = vector.broadcast %882 : vector<1x256xf32> to vector<8x256xf32>
    %884 = arith.mulf %881, %883 : vector<8x256xf32>
    %c15_i32_303 = arith.constant 15 : i32
    %885 = tpu.dynamic_rotate %876 by %c15_i32_303 dim 1 : vector<8x256xf32>, i32 -> vector<8x256xf32>
    %886 = vector.extract_strided_slice %0 {offsets = [2, 0], sizes = [1, 256], strides = [1, 1]} : vector<9x256xf32> to vector<1x256xf32>
    %887 = vector.broadcast %886 : vector<1x256xf32> to vector<8x256xf32>
    %888 = arith.mulf %885, %887 : vector<8x256xf32>
    %c1_i32_304 = arith.constant 1 : i32
    %889 = tpu.dynamic_rotate %876 by %c1_i32_304 dim 1 : vector<8x256xf32>, i32 -> vector<8x256xf32>
    %890 = vector.extract_strided_slice %0 {offsets = [3, 0], sizes = [1, 256], strides = [1, 1]} : vector<9x256xf32> to vector<1x256xf32>
    %891 = vector.broadcast %890 : vector<1x256xf32> to vector<8x256xf32>
    %892 = arith.mulf %889, %891 : vector<8x256xf32>
    %c255_i32_305 = arith.constant 255 : i32
    %893 = tpu.dynamic_rotate %876 by %c255_i32_305 dim 1 : vector<8x256xf32>, i32 -> vector<8x256xf32>
    %894 = vector.extract_strided_slice %0 {offsets = [5, 0], sizes = [1, 256], strides = [1, 1]} : vector<9x256xf32> to vector<1x256xf32>
    %895 = vector.broadcast %894 : vector<1x256xf32> to vector<8x256xf32>
    %896 = arith.mulf %893, %895 : vector<8x256xf32>
    %c241_i32_306 = arith.constant 241 : i32
    %897 = tpu.dynamic_rotate %876 by %c241_i32_306 dim 1 : vector<8x256xf32>, i32 -> vector<8x256xf32>
    %898 = vector.extract_strided_slice %0 {offsets = [6, 0], sizes = [1, 256], strides = [1, 1]} : vector<9x256xf32> to vector<1x256xf32>
    %899 = vector.broadcast %898 : vector<1x256xf32> to vector<8x256xf32>
    %900 = arith.mulf %897, %899 : vector<8x256xf32>
    %c240_i32_307 = arith.constant 240 : i32
    %901 = tpu.dynamic_rotate %876 by %c240_i32_307 dim 1 : vector<8x256xf32>, i32 -> vector<8x256xf32>
    %902 = vector.extract_strided_slice %0 {offsets = [7, 0], sizes = [1, 256], strides = [1, 1]} : vector<9x256xf32> to vector<1x256xf32>
    %903 = vector.broadcast %902 : vector<1x256xf32> to vector<8x256xf32>
    %904 = arith.mulf %901, %903 : vector<8x256xf32>
    %c239_i32_308 = arith.constant 239 : i32
    %905 = tpu.dynamic_rotate %876 by %c239_i32_308 dim 1 : vector<8x256xf32>, i32 -> vector<8x256xf32>
    %906 = vector.extract_strided_slice %0 {offsets = [8, 0], sizes = [1, 256], strides = [1, 1]} : vector<9x256xf32> to vector<1x256xf32>
    %907 = vector.broadcast %906 : vector<1x256xf32> to vector<8x256xf32>
    %908 = arith.mulf %905, %907 : vector<8x256xf32>
    %909 = tpu.concatenate %880, %884, %888, %892, %876, %896, %900, %904, %908 in 0 : vector<8x256xf32>, vector<8x256xf32>, vector<8x256xf32>, vector<8x256xf32>, vector<8x256xf32>, vector<8x256xf32>, vector<8x256xf32>, vector<8x256xf32>, vector<8x256xf32> -> vector<72x256xf32>
    %cst_309 = arith.constant dense<0.000000e+00> : vector<2x256xf32>
    %910 = tpu.matmul %8, %909, %cst_309 {dimension_numbers = #tpu.dot_dimension_numbers<[1], [0], [0], [1], [0, 0, 1, 1], [], []>} : vector<2x72xf32>, vector<72x256xf32>, vector<2x256xf32> -> vector<2x256xf32>
    %911 = vector.broadcast %9 : vector<2x1xf32> to vector<2x256xf32>
    %912 = arith.addf %910, %911 : vector<2x256xf32>
    %913 = arith.subf %912, %629 : vector<2x256xf32>
    %cst_310 = arith.constant 5.000000e-01 : f32
    %914 = vector.broadcast %cst_310 : f32 to vector<2x256xf32>
    %915 = arith.mulf %914, %913 : vector<2x256xf32>
    %916 = arith.addf %626, %915 : vector<2x256xf32>
    %cst_311 = arith.constant 5.000000e-01 : f32
    %917 = vector.broadcast %cst_311 : f32 to vector<2x256xf32>
    %918 = arith.mulf %917, %916 : vector<2x256xf32>
    %919 = arith.subf %629, %918 : vector<2x256xf32>
    %c0_312 = arith.constant 0 : index
    %c0_313 = arith.constant 0 : index
    %920 = vector.load %arg12[%c0_312, %c0_313] : memref<2x256xf32, #tpu.memory_space<vmem>>, vector<2x256xf32>
    tpu.vector_store %arg12[%c0_312, %c0_313], %919 {strides = array<i32>} : memref<2x256xf32, #tpu.memory_space<vmem>>, vector<2x256xf32>,
    return
  }
  func.func @transform_0(%arg0: i32) -> (i32, i32) {
    %c0_i32 = arith.constant 0 : i32
    %c0_i32_0 = arith.constant 0 : i32
    return %c0_i32, %arg0 : i32, i32
  }
  func.func @transform_1(%arg0: i32) -> (i32, i32) {
    %c0_i32 = arith.constant 0 : i32
    %c0_i32_0 = arith.constant 0 : i32
    return %c0_i32, %arg0 : i32, i32
  }
  func.func @transform_2(%arg0: i32) -> (i32, i32) {
    %c0_i32 = arith.constant 0 : i32
    %c0_i32_0 = arith.constant 0 : i32
    %c0_i32_1 = arith.constant 0 : i32
    return %c0_i32, %c0_i32_0 : i32, i32
  }
  func.func @transform_3(%arg0: i32) -> (i32, i32, i32) {
    %c0_i32 = arith.constant 0 : i32
    %c0_i32_0 = arith.constant 0 : i32
    %c0_i32_1 = arith.constant 0 : i32
    return %arg0, %c0_i32, %c0_i32_0 : i32, i32, i32
  }
  func.func @transform_4(%arg0: i32) -> (i32, i32, i32) {
    %c0_i32 = arith.constant 0 : i32
    %c0_i32_0 = arith.constant 0 : i32
    %c0_i32_1 = arith.constant 0 : i32
    return %arg0, %c0_i32, %c0_i32_0 : i32, i32, i32
  }
  func.func @transform_5(%arg0: i32) -> (i32, i32) {
    %c0_i32 = arith.constant 0 : i32
    %c0_i32_0 = arith.constant 0 : i32
    %c0_i32_1 = arith.constant 0 : i32
    return %c0_i32, %c0_i32_0 : i32, i32
  }
  func.func @transform_6(%arg0: i32) -> (i32, i32) {
    %c0_i32 = arith.constant 0 : i32
    %c0_i32_0 = arith.constant 0 : i32
    %c0_i32_1 = arith.constant 0 : i32
    return %c0_i32, %c0_i32_0 : i32, i32
  }
  func.func @transform_7(%arg0: i32) -> (i32, i32, i32) {
    %c0_i32 = arith.constant 0 : i32
    %c0_i32_0 = arith.constant 0 : i32
    %c0_i32_1 = arith.constant 0 : i32
    %c0_i32_2 = arith.constant 0 : i32
    return %c0_i32, %c0_i32_0, %c0_i32_1 : i32, i32, i32
  }
  func.func @transform_8(%arg0: i32) -> (i32, i32, i32) {
    %c0_i32 = arith.constant 0 : i32
    %c0_i32_0 = arith.constant 0 : i32
    %c0_i32_1 = arith.constant 0 : i32
    %c0_i32_2 = arith.constant 0 : i32
    return %c0_i32, %c0_i32_0, %c0_i32_1 : i32, i32, i32
  }
  func.func @transform_9(%arg0: i32) -> (i32, i32) {
    %c0_i32 = arith.constant 0 : i32
    %c0_i32_0 = arith.constant 0 : i32
    %c0_i32_1 = arith.constant 0 : i32
    return %c0_i32, %c0_i32_0 : i32, i32
  }
  func.func @transform_10(%arg0: i32) -> (i32, i32) {
    %c0_i32 = arith.constant 0 : i32
    %c0_i32_0 = arith.constant 0 : i32
    %c0_i32_1 = arith.constant 0 : i32
    return %c0_i32, %c0_i32_0 : i32, i32
  }
  func.func @transform_11(%arg0: i32) -> (i32, i32) {
    %c0_i32 = arith.constant 0 : i32
    %c0_i32_0 = arith.constant 0 : i32
    return %c0_i32, %arg0 : i32, i32
  }
}

</mosaic_0001>

<llo_original>
// kernel: mul.55
$region0: #{mul.55}
  #allocation4 [shape = 's32[1]{0}', space=sflag, size = 0x4, scoped, tag = 'scoped memory for mul.55']
  %s0 = inlined_call_operand.hbm [shape: f32[2,16,16], index: 0, kind: input, shape index: {}, may-alias: {0,1}]
  %s1 = inlined_call_operand.hbm [shape: f32[2,16,16], index: 1, kind: input, shape index: {}, may-alias: {0,1}]
  %s2 = inlined_call_operand.vmem [shape: f32[2,16,16], index: 2, kind: output, shape index: {}]
  $region1: #{mul.55} parent=0
    #allocation0 [shape = 'u8[16384]{0}', space=vmem, size = 0x4000, scoped, tag = 'operand span for operand 0, may alias with: [0, 1]']
    #allocation1 [shape = 's32[1]{0}', space=sflag, size = 0x4, scoped, tag = 'scoped memory for mul.55']
    #allocation2 [shape = 'u8[16384]{0}', space=vmem, size = 0x4000, scoped, tag = 'operand span for operand 1, may alias with: [0, 1]']
    #allocation3 [shape = 's32[1]{0}', space=sflag, size = 0x4, scoped, tag = 'scoped memory for mul.55']
    %3 = vsyncpa [#allocation1], 0
    %4 = vsyncpa [#allocation3], 0
    %s6 = ssub.s32 512, 512
    %7 = vsyncadd [#allocation1], %s6
    %s8 = sshll.u32 [#allocation0], 4
    %s9 = int_to_ptr.vmem [resolvable:$true] %s8
    %14 = dma.hbm_to_vmem [thread:$0]  %s0, 512, %s9, [#allocation1], 128, 128, 8
    %s16 = ssub.s32 512, 512
    %17 = vsyncadd [#allocation3], %s16
    %s18 = sshll.u32 [#allocation2], 4
    %s19 = int_to_ptr.vmem [resolvable:$true] %s18
    %24 = dma.hbm_to_vmem [thread:$0]  %s1, 512, %s19, [#allocation3], 128, 128, 8
    %25 = dma.done [#allocation1], 512
    %26 = dma.done [#allocation3], 512
    %v27 = vld [vmem:[#allocation0] sm:$0xff]
    %v28 = vld [vmem:[#allocation2] sm:$0xff]
    %29 = xla_tuple %v27, %v28
    %30 = xla_tuple %29
    %v31 = vmul.f32 %v27, %v28
    %32 = xla_tuple %v31
    %33 = vst [vmem:[%s2] sm:$0xff] %v31
    %s34 = scalar_lea.vmem [#allocation0], 16
    %v35 = vld [vmem:[%s34] sm:$0xff]
    %s36 = scalar_lea.vmem [#allocation2], 16
    %v37 = vld [vmem:[%s36] sm:$0xff]
    %38 = xla_tuple %v35, %v37
    %39 = xla_tuple %38
    %v40 = vmul.f32 %v35, %v37
    %41 = xla_tuple %v40
    %s42 = scalar_lea.vmem %s2, 16
    %43 = vst [vmem:[%s42] sm:$0xff] %v40
    %s44 = scalar_lea.vmem [#allocation0], 8
    %v45 = vld [vmem:[%s44] sm:$0xff]
    %s46 = scalar_lea.vmem [#allocation2], 8
    %v47 = vld [vmem:[%s46] sm:$0xff]
    %48 = xla_tuple %v45, %v47
    %49 = xla_tuple %48
    %v50 = vmul.f32 %v45, %v47
    %51 = xla_tuple %v50
    %s52 = scalar_lea.vmem %s2, 8
    %53 = vst [vmem:[%s52] sm:$0xff] %v50
    %s54 = scalar_lea.vmem [#allocation0], 24
    %v55 = vld [vmem:[%s54] sm:$0xff]
    %s56 = scalar_lea.vmem [#allocation2], 24
    %v57 = vld [vmem:[%s56] sm:$0xff]
    %58 = xla_tuple %v55, %v57
    %59 = xla_tuple %58
    %v60 = vmul.f32 %v55, %v57
    %61 = xla_tuple %v60
    %s62 = scalar_lea.vmem %s2, 24
    %63 = vst [vmem:[%s62] sm:$0xff] %v60
    %64 = vsyncpa [#allocation1], 1
    %65 = vsyncpa [#allocation3], 1

// kernel: mul.57
$region0: #{mul.57}
  %s0 = inlined_call_operand.vmem [shape: f32[2,16,16], index: 0, kind: input, shape index: {}]
  %s1 = inlined_call_operand.vmem [shape: f32[2,256], index: 1, kind: output, shape index: {}]
  $region1: #{mul.57} parent=0
    #allocation0 [shape = 'u8[8192]{0}', space=vmem, size = 0x2000, scoped, tag = 'scoped mem for output reshape']
    %v2 = vld [vmem:[%s0] ss:$8 sm:$0xf]
    %vm3 = vcmask 130048
    %4 = vst.msk [vmem:[#allocation0] ss:$8 sm:$0x3] %vm3, %v2
    %s5 = scalar_lea.vmem [#allocation0], 4294967281
    %6 = vst.msk [vmem:[%s5] ss:$8 sm:$0xc] %vm3, %v2
    %s7 = scalar_lea.vmem %s0, 7
    %s8 = smov 3
    %v9 = vld [vmem:[%s7] ss:$16 sm:%s8]
    %s10 = scalar_lea.vmem %s0, 4294967279
    %s11 = smov 12
    %v12 = vld [vmem:[%s10] ss:$16 sm:%s11]
    %vm13 = vcmask 1043458
    %v14 = vsel %vm13, %v12, %v9
    %15 = vrot.lane.b32.xlu0 %v14, 112
    %v16 = vpop.permute.xlu0 %15
    %vm17 = vcmask 1048448
    %18 = vst.msk [vmem:[#allocation0] sm:$0x3] %vm17, %v16
    %s19 = scalar_lea.vmem [#allocation0], 6
    %20 = vst.msk [vmem:[%s19] sm:$0xc] %vm17, %v16
    %s21 = scalar_lea.vmem %s0, 6
    %s22 = smov 3
    %v23 = vld [vmem:[%s21] ss:$16 sm:%s22]
    %s24 = scalar_lea.vmem %s0, 4294967278
    %s25 = smov 12
    %v26 = vld [vmem:[%s24] ss:$16 sm:%s25]
    %vm27 = vcmask 1043458
    %v28 = vsel %vm27, %v26, %v23
    %29 = vrot.lane.b32.xlu0 %v28, 96
    %v30 = vpop.permute.xlu0 %29
    %vm31 = vcmask 917248
    %32 = vst.msk [vmem:[#allocation0] sm:$0x3] %vm31, %v30
    %s33 = scalar_lea.vmem [#allocation0], 6
    %34 = vst.msk [vmem:[%s33] sm:$0xc] %vm31, %v30
    %s35 = scalar_lea.vmem %s0, 5
    %s36 = smov 3
    %v37 = vld [vmem:[%s35] ss:$16 sm:%s36]
    %s38 = scalar_lea.vmem %s0, 4294967277
    %s39 = smov 12
    %v40 = vld [vmem:[%s38] ss:$16 sm:%s39]
    %vm41 = vcmask 1043458
    %v42 = vsel %vm41, %v40, %v37
    %43 = vrot.lane.b32.xlu0 %v42, 80
    %v44 = vpop.permute.xlu0 %43
    %vm45 = vcmask 786048
    %46 = vst.msk [vmem:[#allocation0] sm:$0x3] %vm45, %v44
    %s47 = scalar_lea.vmem [#allocation0], 6
    %48 = vst.msk [vmem:[%s47] sm:$0xc] %vm45, %v44
    %s49 = scalar_lea.vmem %s0, 4
    %s50 = smov 3
    %v51 = vld [vmem:[%s49] ss:$16 sm:%s50]
    %s52 = scalar_lea.vmem %s0, 4294967276
    %s53 = smov 12
    %v54 = vld [vmem:[%s52] ss:$16 sm:%s53]
    %vm55 = vcmask 1043458
    %v56 = vsel %vm55, %v54, %v51
    %57 = vrot.lane.b32.xlu0 %v56, 64
    %v58 = vpop.permute.xlu0 %57
    %vm59 = vcmask 654848
    %60 = vst.msk [vmem:[#allocation0] sm:$0x3] %vm59, %v58
    %s61 = scalar_lea.vmem [#allocation0], 6
    %62 = vst.msk [vmem:[%s61] sm:$0xc] %vm59, %v58
    %s63 = scalar_lea.vmem %s0, 3
    %s64 = smov 3
    %v65 = vld [vmem:[%s63] ss:$16 sm:%s64]
    %s66 = scalar_lea.vmem %s0, 4294967275
    %s67 = smov 12
    %v68 = vld [vmem:[%s66] ss:$16 sm:%s67]
    %vm69 = vcmask 1043458
    %v70 = vsel %vm69, %v68, %v65
    %71 = vrot.lane.b32.xlu0 %v70, 48
    %v72 = vpop.permute.xlu0 %71
    %vm73 = vcmask 523648
    %74 = vst.msk [vmem:[#allocation0] sm:$0x3] %vm73, %v72
    %s75 = scalar_lea.vmem [#allocation0], 6
    %76 = vst.msk [vmem:[%s75] sm:$0xc] %vm73, %v72
    %s77 = scalar_lea.vmem %s0, 2
    %s78 = smov 3
    %v79 = vld [vmem:[%s77] ss:$16 sm:%s78]
    %s80 = scalar_lea.vmem %s0, 4294967274
    %s81 = smov 12
    %v82 = vld [vmem:[%s80] ss:$16 sm:%s81]
    %vm83 = vcmask 1043458
    %v84 = vsel %vm83, %v82, %v79
    %85 = vrot.lane.b32.xlu0 %v84, 32
    %v86 = vpop.permute.xlu0 %85
    %vm87 = vcmask 392448
    %88 = vst.msk [vmem:[#allocation0] sm:$0x3] %vm87, %v86
    %s89 = scalar_lea.vmem [#allocation0], 6
    %90 = vst.msk [vmem:[%s89] sm:$0xc] %vm87, %v86
    %s91 = scalar_lea.vmem %s0, 1
    %s92 = smov 3
    %v93 = vld [vmem:[%s91] ss:$16 sm:%s92]
    %s94 = scalar_lea.vmem %s0, 4294967273
    %s95 = smov 12
    %v96 = vld [vmem:[%s94] ss:$16 sm:%s95]
    %vm97 = vcmask 1043458
    %v98 = vsel %vm97, %v96, %v93
    %99 = vrot.lane.b32.xlu0 %v98, 16
    %v100 = vpop.permute.xlu0 %99
    %vm101 = vcmask 261248
    %102 = vst.msk [vmem:[#allocation0] sm:$0x3] %vm101, %v100
    %s103 = scalar_lea.vmem [#allocation0], 6
    %104 = vst.msk [vmem:[%s103] sm:$0xc] %vm101, %v100
    %s106 = sshllo.u32 0, 2
    %v108 = vld [vmem:[#allocation0] sm:%s106]
    %s109 = sshllo.u32 0, 2
    %110 = vst [vmem:[%s1] sm:%s109] %v108
    %s111 = scalar_lea.vmem [#allocation0], 8
    %v112 = vld [vmem:[%s111] sm:%s106]
    %s113 = sshllo.u32 0, 2
    %s114 = scalar_lea.vmem %s1, 2
    %115 = vst [vmem:[%s114] sm:%s113] %v112

// kernel: custom-call.1
$region0: #{custom-call.1}
  %s0 = inlined_call_operand.vmem [shape: c64[2,16,16], index: 0, kind: input, shape index: {}]
  %s1 = inlined_call_operand.vmem [shape: f32[2,16,16], index: 1, kind: output, shape index: {}]
  %s2 = scalar_lea.vmem %s0, 32
  %v3 = vld [vmem:[%s2] sm:$0xff]
  %4 = vst [vmem:[%s1] sm:$0xff] %v3
  %s5 = scalar_lea.vmem %s1, 8
  %s6 = scalar_lea.vmem %s2, 8
  %v7 = vld [vmem:[%s6] sm:$0xff]
  %8 = vst [vmem:[%s5] sm:$0xff] %v7
  %s9 = scalar_lea.vmem %s1, 16
  %s10 = scalar_lea.vmem %s2, 16
  %v11 = vld [vmem:[%s10] sm:$0xff]
  %12 = vst [vmem:[%s9] sm:$0xff] %v11
  %s13 = scalar_lea.vmem %s1, 24
  %s14 = scalar_lea.vmem %s2, 24
  %v15 = vld [vmem:[%s14] sm:$0xff]
  %16 = vst [vmem:[%s13] sm:$0xff] %v15

// kernel: custom-call
$region0: #{custom-call}
  %s0 = inlined_call_operand.vmem [shape: c64[2,16,16], index: 0, kind: input, shape index: {}]
  %s1 = inlined_call_operand.vmem [shape: f32[2,16,16], index: 1, kind: output, shape index: {}]
  %v2 = vld [vmem:[%s0] sm:$0xff]
  %3 = vst [vmem:[%s1] sm:$0xff] %v2
  %s4 = scalar_lea.vmem %s1, 8
  %s5 = scalar_lea.vmem %s0, 8
  %v6 = vld [vmem:[%s5] sm:$0xff]
  %7 = vst [vmem:[%s4] sm:$0xff] %v6
  %s8 = scalar_lea.vmem %s1, 16
  %s9 = scalar_lea.vmem %s0, 16
  %v10 = vld [vmem:[%s9] sm:$0xff]
  %11 = vst [vmem:[%s8] sm:$0xff] %v10
  %s12 = scalar_lea.vmem %s1, 24
  %s13 = scalar_lea.vmem %s0, 24
  %v14 = vld [vmem:[%s13] sm:$0xff]
  %15 = vst [vmem:[%s12] sm:$0xff] %v14

// kernel: deep_unfolding_pallas.1
$region0: #{deep_unfolding_pallas.1}
  #allocation0 [shape = 'u32[]', space=smem, size = 0x4, offset = 0x4, fixed_abs, tag = 'smem constant byte address 0x4 - core index']
  #allocation1 [shape = 'u32[144,128]{1,0:T(1,128)}', space=vmem, size = 0x12000, scoped, tag = 'internal scratch']
  %s0 = inlined_call_operand.vmem [shape: f32[2,512], index: 0, kind: input, shape index: {}, may-alias: {0,11}]
  %s1 = inlined_call_operand.vmem [shape: f32[2,512], index: 1, kind: input, shape index: {}]
  %s2 = inlined_call_operand.vmem [shape: f32[9,256], index: 2, kind: input, shape index: {}]
  %s3 = inlined_call_operand.vmem [shape: f32[2,256,256], index: 3, kind: input, shape index: {}]
  %s4 = inlined_call_operand.vmem [shape: f32[2,256,256], index: 4, kind: input, shape index: {}]
  %s5 = inlined_call_operand.vmem [shape: f32[8,18], index: 5, kind: input, shape index: {}]
  %s6 = inlined_call_operand.vmem [shape: f32[8,1], index: 6, kind: input, shape index: {}]
  %s7 = inlined_call_operand.vmem [shape: f32[5,8,72], index: 7, kind: input, shape index: {}]
  %s8 = inlined_call_operand.vmem [shape: f32[5,8,1], index: 8, kind: input, shape index: {}]
  %s9 = inlined_call_operand.vmem [shape: f32[2,72], index: 9, kind: input, shape index: {}]
  %s10 = inlined_call_operand.vmem [shape: f32[2,1], index: 10, kind: input, shape index: {}]
  %s11 = inlined_call_operand.vmem [shape: f32[2,512], index: 11, kind: output, shape index: {}, may-alias: {0,11}]
  %s12 = sld [smem:[#allocation0]]
  $region77: #{deep_unfolding_pallas.1} parent=0
    _
  %s14 = ssub.s32 1, %s12
  %s15 = scalar_select 0, %s14, %s12
  loop: start=0, step=1, limit=4
  $region2: #{deep_unfolding_pallas.1} parent=0 // loop_pre_header
    _
  $region3: #{deep_unfolding_pallas.1} parent=0 // loop_header
    %s17 = sphi 0, %s21
    %p18 = scmp.ge.s32.totalorder %s17, 4
    %s27 = sphi 0, %s29
    %s30 = sphi 0, %s27
    %s31 = sphi 0, %s30
    %s47 = sphi 0, %s31
    %s53 = sphi 0, %s55
    %s56 = sphi 0, %s53
    %s57 = sphi 0, %s56
    %s73 = sphi 0, %s57
    %s77 = sphi 0, %s77
    %s79 = sphi 0, %s77
    %s80 = sphi 0, %s79
    %s94 = sphi 0, %s80
    %s100 = sphi 0, %s102
    %s103 = sphi 0, %s100
    %s104 = sphi 0, %s103
    %s120 = sphi 0, %s104
    %s126 = sphi 0, %s128
    %s129 = sphi 0, %s126
    %s130 = sphi 0, %s129
    %s146 = sphi 0, %s130
    %s150 = sphi 0, %s150
    %s152 = sphi 0, %s150
    %s153 = sphi 0, %s152
    %s167 = sphi 0, %s153
    %s171 = sphi 0, %s171
    %s173 = sphi 0, %s171
    %s174 = sphi 0, %s173
    %s188 = sphi 0, %s174
    %s192 = sphi 0, %s192
    %s194 = sphi 0, %s192
    %s195 = sphi 0, %s194
    %s209 = sphi 0, %s195
    %s213 = sphi 0, %s213
    %s215 = sphi 0, %s213
    %s216 = sphi 0, %s215
    %s230 = sphi 0, %s216
    %s234 = sphi 0, %s234
    %s236 = sphi 0, %s234
    %s237 = sphi 0, %s236
    %s251 = sphi 0, %s237
    %s255 = sphi 0, %s255
    %s257 = sphi 0, %s255
    %s258 = sphi 0, %s257
    %s272 = sphi 0, %s258
    %s278 = sphi 0, %s280
    %s281 = sphi 0, %s278
    %s282 = sphi 0, %s281
    %s298 = sphi 0, %s282
  $region4: #{deep_unfolding_pallas.1} parent=0 // loop_header_branch
    %20 = sbr.rel (%p18) target = $region8
  $region5: #{deep_unfolding_pallas.1} parent=0 // loop_body
    %s22 = ssub.s32 %s17, 1
    %s23 = ssub.s32 %s17, 2
    %s24 = sadd.s32 %s17, 1
    %s25 = ssub.s32 %s17, %s24
    %p26 = scmp.eq.s32.totalorder %s25, 0
    %s28 = sadd.s32 %s27, 1
    %s29 = scalar_select %p26, %s27, %s28
    %p32 = pneg %p26
    %p33 = scmp.eq.s32.totalorder %s17, 1
    %p34 = por %p32, %p33
    %p35 = scmp.ne.s32.totalorder %s27, %s30
    %p36 = scmp.eq.s32.totalorder %s17, 0
    %p37 = por %p35, %p36
    %p38 = scmp.ne.s32.totalorder %s27, %s30
    %p39 = scmp.eq.s32.totalorder %s22, 1
    %p40 = por %p38, %p39
    %p41 = scmp.ne.s32.totalorder %s30, %s31
    %p42 = scmp.eq.s32.totalorder %s22, 0
    %p43 = por %p41, %p42
    %p44 = scmp.ne.s32.totalorder %s30, %s31
    %p45 = scmp.eq.s32.totalorder %s23, 1
    %p46 = por %p44, %p45
    %p48 = scmp.ne.s32.totalorder %s31, %s47
    %p49 = scmp.eq.s32.totalorder %s23, 0
    %p50 = por %p48, %p49
    %s51 = ssub.s32 %s17, %s24
    %p52 = scmp.eq.s32.totalorder %s51, 0
    %s54 = sadd.s32 %s53, 1
    %s55 = scalar_select %p52, %s53, %s54
    %p58 = pneg %p52
    %p59 = scmp.eq.s32.totalorder %s17, 1
    %p60 = por %p58, %p59
    %p61 = scmp.ne.s32.totalorder %s53, %s56
    %p62 = scmp.eq.s32.totalorder %s17, 0
    %p63 = por %p61, %p62
    %p64 = scmp.ne.s32.totalorder %s53, %s56
    %p65 = scmp.eq.s32.totalorder %s22, 1
    %p66 = por %p64, %p65
    %p67 = scmp.ne.s32.totalorder %s56, %s57
    %p68 = scmp.eq.s32.totalorder %s22, 0
    %p69 = por %p67, %p68
    %p70 = scmp.ne.s32.totalorder %s56, %s57
    %p71 = scmp.eq.s32.totalorder %s23, 1
    %p72 = por %p70, %p71
    %p74 = scmp.ne.s32.totalorder %s57, %s73
    %p75 = scmp.eq.s32.totalorder %s23, 0
    %p76 = por %p74, %p75
    %s78 = sadd.s32 %s77, 1
    %p81 = scmp.eq.s32.totalorder %s17, 1
    %p82 = scmp.ne.s32.totalorder %s77, %s79
    %p83 = scmp.eq.s32.totalorder %s17, 0
    %p84 = por %p82, %p83
    %p85 = scmp.ne.s32.totalorder %s77, %s79
    %p86 = scmp.eq.s32.totalorder %s22, 1
    %p87 = por %p85, %p86
    %p88 = scmp.ne.s32.totalorder %s79, %s80
    %p89 = scmp.eq.s32.totalorder %s22, 0
    %p90 = por %p88, %p89
    %p91 = scmp.ne.s32.totalorder %s79, %s80
    %p92 = scmp.eq.s32.totalorder %s23, 1
    %p93 = por %p91, %p92
    %p95 = scmp.ne.s32.totalorder %s80, %s94
    %p96 = scmp.eq.s32.totalorder %s23, 0
    %p97 = por %p95, %p96
    %s98 = ssub.s32 %s17, %s24
    %p99 = scmp.eq.s32.totalorder %s98, 0
    %s101 = sadd.s32 %s100, 1
    %s102 = scalar_select %p99, %s100, %s101
    %p105 = pneg %p99
    %p106 = scmp.eq.s32.totalorder %s17, 1
    %p107 = por %p105, %p106
    %p108 = scmp.ne.s32.totalorder %s100, %s103
    %p109 = scmp.eq.s32.totalorder %s17, 0
    %p110 = por %p108, %p109
    %p111 = scmp.ne.s32.totalorder %s100, %s103
    %p112 = scmp.eq.s32.totalorder %s22, 1
    %p113 = por %p111, %p112
    %p114 = scmp.ne.s32.totalorder %s103, %s104
    %p115 = scmp.eq.s32.totalorder %s22, 0
    %p116 = por %p114, %p115
    %p117 = scmp.ne.s32.totalorder %s103, %s104
    %p118 = scmp.eq.s32.totalorder %s23, 1
    %p119 = por %p117, %p118
    %p121 = scmp.ne.s32.totalorder %s104, %s120
    %p122 = scmp.eq.s32.totalorder %s23, 0
    %p123 = por %p121, %p122
    %s124 = ssub.s32 %s17, %s24
    %p125 = scmp.eq.s32.totalorder %s124, 0
    %s127 = sadd.s32 %s126, 1
    %s128 = scalar_select %p125, %s126, %s127
    %p131 = pneg %p125
    %p132 = scmp.eq.s32.totalorder %s17, 1
    %p133 = por %p131, %p132
    %p134 = scmp.ne.s32.totalorder %s126, %s129
    %p135 = scmp.eq.s32.totalorder %s17, 0
    %p136 = por %p134, %p135
    %p137 = scmp.ne.s32.totalorder %s126, %s129
    %p138 = scmp.eq.s32.totalorder %s22, 1
    %p139 = por %p137, %p138
    %p140 = scmp.ne.s32.totalorder %s129, %s130
    %p141 = scmp.eq.s32.totalorder %s22, 0
    %p142 = por %p140, %p141
    %p143 = scmp.ne.s32.totalorder %s129, %s130
    %p144 = scmp.eq.s32.totalorder %s23, 1
    %p145 = por %p143, %p144
    %p147 = scmp.ne.s32.totalorder %s130, %s146
    %p148 = scmp.eq.s32.totalorder %s23, 0
    %p149 = por %p147, %p148
    %s151 = sadd.s32 %s150, 1
    %p154 = scmp.eq.s32.totalorder %s17, 1
    %p155 = scmp.ne.s32.totalorder %s150, %s152
    %p156 = scmp.eq.s32.totalorder %s17, 0
    %p157 = por %p155, %p156
    %p158 = scmp.ne.s32.totalorder %s150, %s152
    %p159 = scmp.eq.s32.totalorder %s22, 1
    %p160 = por %p158, %p159
    %p161 = scmp.ne.s32.totalorder %s152, %s153
    %p162 = scmp.eq.s32.totalorder %s22, 0
    %p163 = por %p161, %p162
    %p164 = scmp.ne.s32.totalorder %s152, %s153
    %p165 = scmp.eq.s32.totalorder %s23, 1
    %p166 = por %p164, %p165
    %p168 = scmp.ne.s32.totalorder %s153, %s167
    %p169 = scmp.eq.s32.totalorder %s23, 0
    %p170 = por %p168, %p169
    %s172 = sadd.s32 %s171, 1
    %p175 = scmp.eq.s32.totalorder %s17, 1
    %p176 = scmp.ne.s32.totalorder %s171, %s173
    %p177 = scmp.eq.s32.totalorder %s17, 0
    %p178 = por %p176, %p177
    %p179 = scmp.ne.s32.totalorder %s171, %s173
    %p180 = scmp.eq.s32.totalorder %s22, 1
    %p181 = por %p179, %p180
    %p182 = scmp.ne.s32.totalorder %s173, %s174
    %p183 = scmp.eq.s32.totalorder %s22, 0
    %p184 = por %p182, %p183
    %p185 = scmp.ne.s32.totalorder %s173, %s174
    %p186 = scmp.eq.s32.totalorder %s23, 1
    %p187 = por %p185, %p186
    %p189 = scmp.ne.s32.totalorder %s174, %s188
    %p190 = scmp.eq.s32.totalorder %s23, 0
    %p191 = por %p189, %p190
    %s193 = sadd.s32 %s192, 1
    %p196 = scmp.eq.s32.totalorder %s17, 1
    %p197 = scmp.ne.s32.totalorder %s192, %s194
    %p198 = scmp.eq.s32.totalorder %s17, 0
    %p199 = por %p197, %p198
    %p200 = scmp.ne.s32.totalorder %s192, %s194
    %p201 = scmp.eq.s32.totalorder %s22, 1
    %p202 = por %p200, %p201
    %p203 = scmp.ne.s32.totalorder %s194, %s195
    %p204 = scmp.eq.s32.totalorder %s22, 0
    %p205 = por %p203, %p204
    %p206 = scmp.ne.s32.totalorder %s194, %s195
    %p207 = scmp.eq.s32.totalorder %s23, 1
    %p208 = por %p206, %p207
    %p210 = scmp.ne.s32.totalorder %s195, %s209
    %p211 = scmp.eq.s32.totalorder %s23, 0
    %p212 = por %p210, %p211
    %s214 = sadd.s32 %s213, 1
    %p217 = scmp.eq.s32.totalorder %s17, 1
    %p218 = scmp.ne.s32.totalorder %s213, %s215
    %p219 = scmp.eq.s32.totalorder %s17, 0
    %p220 = por %p218, %p219
    %p221 = scmp.ne.s32.totalorder %s213, %s215
    %p222 = scmp.eq.s32.totalorder %s22, 1
    %p223 = por %p221, %p222
    %p224 = scmp.ne.s32.totalorder %s215, %s216
    %p225 = scmp.eq.s32.totalorder %s22, 0
    %p226 = por %p224, %p225
    %p227 = scmp.ne.s32.totalorder %s215, %s216
    %p228 = scmp.eq.s32.totalorder %s23, 1
    %p229 = por %p227, %p228
    %p231 = scmp.ne.s32.totalorder %s216, %s230
    %p232 = scmp.eq.s32.totalorder %s23, 0
    %p233 = por %p231, %p232
    %s235 = sadd.s32 %s234, 1
    %p238 = scmp.eq.s32.totalorder %s17, 1
    %p239 = scmp.ne.s32.totalorder %s234, %s236
    %p240 = scmp.eq.s32.totalorder %s17, 0
    %p241 = por %p239, %p240
    %p242 = scmp.ne.s32.totalorder %s234, %s236
    %p243 = scmp.eq.s32.totalorder %s22, 1
    %p244 = por %p242, %p243
    %p245 = scmp.ne.s32.totalorder %s236, %s237
    %p246 = scmp.eq.s32.totalorder %s22, 0
    %p247 = por %p245, %p246
    %p248 = scmp.ne.s32.totalorder %s236, %s237
    %p249 = scmp.eq.s32.totalorder %s23, 1
    %p250 = por %p248, %p249
    %p252 = scmp.ne.s32.totalorder %s237, %s251
    %p253 = scmp.eq.s32.totalorder %s23, 0
    %p254 = por %p252, %p253
    %s256 = sadd.s32 %s255, 1
    %p259 = scmp.eq.s32.totalorder %s17, 1
    %p260 = scmp.ne.s32.totalorder %s255, %s257
    %p261 = scmp.eq.s32.totalorder %s17, 0
    %p262 = por %p260, %p261
    %p263 = scmp.ne.s32.totalorder %s255, %s257
    %p264 = scmp.eq.s32.totalorder %s22, 1
    %p265 = por %p263, %p264
    %p266 = scmp.ne.s32.totalorder %s257, %s258
    %p267 = scmp.eq.s32.totalorder %s22, 0
    %p268 = por %p266, %p267
    %p269 = scmp.ne.s32.totalorder %s257, %s258
    %p270 = scmp.eq.s32.totalorder %s23, 1
    %p271 = por %p269, %p270
    %p273 = scmp.ne.s32.totalorder %s258, %s272
    %p274 = scmp.eq.s32.totalorder %s23, 0
    %p275 = por %p273, %p274
    %s276 = ssub.s32 %s17, %s24
    %p277 = scmp.eq.s32.totalorder %s276, 0
    %s279 = sadd.s32 %s278, 1
    %s280 = scalar_select %p277, %s278, %s279
    %p283 = pneg %p277
    %p284 = scmp.eq.s32.totalorder %s17, 1
    %p285 = por %p283, %p284
    %p286 = scmp.ne.s32.totalorder %s278, %s281
    %p287 = scmp.eq.s32.totalorder %s17, 0
    %p288 = por %p286, %p287
    %p289 = scmp.ne.s32.totalorder %s278, %s281
    %p290 = scmp.eq.s32.totalorder %s22, 1
    %p291 = por %p289, %p290
    %p292 = scmp.ne.s32.totalorder %s281, %s282
    %p293 = scmp.eq.s32.totalorder %s22, 0
    %p294 = por %p292, %p293
    %p295 = scmp.ne.s32.totalorder %s281, %s282
    %p296 = scmp.eq.s32.totalorder %s23, 1
    %p297 = por %p295, %p296
    %p299 = scmp.ne.s32.totalorder %s282, %s298
    %p300 = scmp.eq.s32.totalorder %s23, 0
    %p301 = por %p299, %p300
    %p302 = scmp.le.s32.totalorder 1, %s17
    %p303 = scmp.lt.s32.totalorder %s17, 3
    %p304 = pnand %p302, %p303
    %p305 = pneg %p304
    // Predicated region
    $region9: #{deep_unfolding_pallas.1} parent=5 // pred_check
      _
    $region10: #{deep_unfolding_pallas.1} parent=5 // pred_check_branch
      %307 = sbr.rel (%p304) target = $region12
    $region11: #{deep_unfolding_pallas.1} parent=5 // pred_region
      %s308 = ssub.s32 %s17, 1
      // Predicated region
      $region13: #{deep_unfolding_pallas.1} parent=11 // pred_check
        %p309 = pneg %p90
      $region14: #{deep_unfolding_pallas.1} parent=11 // pred_check_branch
        %311 = sbr.rel (%p309) target = $region16
      $region15: #{deep_unfolding_pallas.1} parent=11 // pred_region
        _
      $region16: #{deep_unfolding_pallas.1} parent=11 // pred_fallthru
        _
      // Predicated region
      $region17: #{deep_unfolding_pallas.1} parent=11 // pred_check
        %p312 = pneg %p163
      $region18: #{deep_unfolding_pallas.1} parent=11 // pred_check_branch
        %314 = sbr.rel (%p312) target = $region20
      $region19: #{deep_unfolding_pallas.1} parent=11 // pred_region
        _
      $region20: #{deep_unfolding_pallas.1} parent=11 // pred_fallthru
        _
      // Predicated region
      $region21: #{deep_unfolding_pallas.1} parent=11 // pred_check
        %p315 = pneg %p184
      $region22: #{deep_unfolding_pallas.1} parent=11 // pred_check_branch
        %317 = sbr.rel (%p315) target = $region24
      $region23: #{deep_unfolding_pallas.1} parent=11 // pred_region
        _
      $region24: #{deep_unfolding_pallas.1} parent=11 // pred_fallthru
        _
      // Predicated region
      $region25: #{deep_unfolding_pallas.1} parent=11 // pred_check
        %p318 = pneg %p205
      $region26: #{deep_unfolding_pallas.1} parent=11 // pred_check_branch
        %320 = sbr.rel (%p318) target = $region28
      $region27: #{deep_unfolding_pallas.1} parent=11 // pred_region
        _
      $region28: #{deep_unfolding_pallas.1} parent=11 // pred_fallthru
        _
      // Predicated region
      $region29: #{deep_unfolding_pallas.1} parent=11 // pred_check
        %p321 = pneg %p226
      $region30: #{deep_unfolding_pallas.1} parent=11 // pred_check_branch
        %323 = sbr.rel (%p321) target = $region32
      $region31: #{deep_unfolding_pallas.1} parent=11 // pred_region
        _
      $region32: #{deep_unfolding_pallas.1} parent=11 // pred_fallthru
        _
      // Predicated region
      $region33: #{deep_unfolding_pallas.1} parent=11 // pred_check
        %p324 = pneg %p247
      $region34: #{deep_unfolding_pallas.1} parent=11 // pred_check_branch
        %326 = sbr.rel (%p324) target = $region36
      $region35: #{deep_unfolding_pallas.1} parent=11 // pred_region
        _
      $region36: #{deep_unfolding_pallas.1} parent=11 // pred_fallthru
        _
      // Predicated region
      $region37: #{deep_unfolding_pallas.1} parent=11 // pred_check
        %p327 = pneg %p268
      $region38: #{deep_unfolding_pallas.1} parent=11 // pred_check_branch
        %329 = sbr.rel (%p327) target = $region40
      $region39: #{deep_unfolding_pallas.1} parent=11 // pred_region
        _
      $region40: #{deep_unfolding_pallas.1} parent=11 // pred_fallthru
        _
    $region12: #{deep_unfolding_pallas.1} parent=5 // pred_fallthru
      _
    %p330 = scmp.lt.s32.totalorder %s17, 2
    // Predicated region
    $region41: #{deep_unfolding_pallas.1} parent=5 // pred_check
      %p331 = pneg %p330
    $region42: #{deep_unfolding_pallas.1} parent=5 // pred_check_branch
      %333 = sbr.rel (%p331) target = $region44
    $region43: #{deep_unfolding_pallas.1} parent=5 // pred_region
      // Predicated region
      $region45: #{deep_unfolding_pallas.1} parent=43 // pred_check
        %p334 = pneg %p37
      $region46: #{deep_unfolding_pallas.1} parent=43 // pred_check_branch
        %336 = sbr.rel (%p334) target = $region48
      $region47: #{deep_unfolding_pallas.1} parent=43 // pred_region
        %s337 = smul.u32 2, %s17
        %p338 = scmp.lt.s32.totalorder %s337, 3
        %s339 = scalar_select %p338, %s337, 3
        %s340 = smul.addr %s339, 2
        %s341 = scalar_lea.vmem %s0, %s340
        %s342 = smul.u32 2, %s17
      $region48: #{deep_unfolding_pallas.1} parent=43 // pred_fallthru
        _
      // Predicated region
      $region49: #{deep_unfolding_pallas.1} parent=43 // pred_check
        %p343 = pneg %p63
      $region50: #{deep_unfolding_pallas.1} parent=43 // pred_check_branch
        %345 = sbr.rel (%p343) target = $region52
      $region51: #{deep_unfolding_pallas.1} parent=43 // pred_region
        %s346 = smul.u32 2, %s17
        %p347 = scmp.lt.s32.totalorder %s346, 3
        %s348 = scalar_select %p347, %s346, 3
        %s349 = smul.addr %s348, 2
        %s350 = scalar_lea.vmem %s1, %s349
        %s351 = smul.u32 2, %s17
      $region52: #{deep_unfolding_pallas.1} parent=43 // pred_fallthru
        _
      // Predicated region
      $region53: #{deep_unfolding_pallas.1} parent=43 // pred_check
        %p352 = pneg %p110
      $region54: #{deep_unfolding_pallas.1} parent=43 // pred_check_branch
        %354 = sbr.rel (%p352) target = $region56
      $region55: #{deep_unfolding_pallas.1} parent=43 // pred_region
        %p355 = scmp.lt.s32.totalorder %s17, 1
        %s356 = scalar_select %p355, %s17, 1
        %s357 = smul.addr %s356, 64
        %s358 = smul.addr %s357, 8
        %s359 = scalar_lea.vmem %s3, %s358
      $region56: #{deep_unfolding_pallas.1} parent=43 // pred_fallthru
        _
      // Predicated region
      $region57: #{deep_unfolding_pallas.1} parent=43 // pred_check
        %p360 = pneg %p136
      $region58: #{deep_unfolding_pallas.1} parent=43 // pred_check_branch
        %362 = sbr.rel (%p360) target = $region60
      $region59: #{deep_unfolding_pallas.1} parent=43 // pred_region
        %p363 = scmp.lt.s32.totalorder %s17, 1
        %s364 = scalar_select %p363, %s17, 1
        %s365 = smul.addr %s364, 64
        %s366 = smul.addr %s365, 8
        %s367 = scalar_lea.vmem %s4, %s366
      $region60: #{deep_unfolding_pallas.1} parent=43 // pred_fallthru
        _
    $region44: #{deep_unfolding_pallas.1} parent=5 // pred_fallthru
      _
    %p368 = scmp.le.s32.totalorder 1, %s17
    %p369 = scmp.lt.s32.totalorder %s17, 3
    %p370 = pnand %p368, %p369
    %p371 = pneg %p370
    // Predicated region
    $region61: #{deep_unfolding_pallas.1} parent=5 // pred_check
      _
    $region62: #{deep_unfolding_pallas.1} parent=5 // pred_check_branch
      %373 = sbr.rel (%p370) target = $region64
    $region63: #{deep_unfolding_pallas.1} parent=5 // pred_region
      %s374 = ssub.s32 %s17, 1
      %s375 = smul.u32 2, %s22
      %p376 = scmp.lt.s32.totalorder %s375, 3
      %s377 = scalar_select %p376, %s375, 3
      %s378 = smul.addr %s377, 2
      %s379 = scalar_lea.vmem %s0, %s378
      %p380 = pneg %p43
      %p381 = pneg %p40
      %s382 = smul.u32 2, %s22
      %p383 = scmp.lt.s32.totalorder %s382, 3
      %s384 = scalar_select %p383, %s382, 3
      %s385 = smul.addr %s384, 2
      %s386 = scalar_lea.vmem %s1, %s385
      %p387 = pneg %p69
      %p388 = pneg %p66
      %p389 = pneg %p90
      %p390 = pneg %p87
      %p391 = scmp.lt.s32.totalorder %s22, 1
      %s392 = scalar_select %p391, %s22, 1
      %s393 = smul.addr %s392, 64
      %s394 = smul.addr %s393, 8
      %s395 = scalar_lea.vmem %s3, %s394
      %p396 = pneg %p116
      %p397 = pneg %p113
      %p398 = scmp.lt.s32.totalorder %s22, 1
      %s399 = scalar_select %p398, %s22, 1
      %s400 = smul.addr %s399, 64
      %s401 = smul.addr %s400, 8
      %s402 = scalar_lea.vmem %s4, %s401
      %p403 = pneg %p142
      %p404 = pneg %p139
      %p405 = pneg %p163
      %p406 = pneg %p160
      %p407 = pneg %p184
      %p408 = pneg %p181
      %p409 = pneg %p205
      %p410 = pneg %p202
      %p411 = pneg %p226
      %p412 = pneg %p223
      %p413 = pneg %p247
      %p414 = pneg %p244
      %p415 = pneg %p268
      %p416 = pneg %p265
      %p417 = pneg %p294
      %p418 = pneg %p291
      %s419 = smul.u32 2, %s22
      %p420 = scmp.lt.s32.totalorder %s419, 3
      %s421 = scalar_select %p420, %s419, 3
      %s422 = smul.addr %s421, 2
      %s423 = scalar_lea.vmem %s11, %s422
      %s424 = smul.u32 2, %s22
      %p425 = scmp.lt.s32.totalorder %s424, 3
      %s426 = scalar_select %p425, %s424, 3
      %s427 = smul.addr %s426, 2
      %s428 = scalar_lea.vmem %s0, %s427
      %s429 = smul.u32 2, %s22
      %s430 = smul.u32 2, %s22
      %p431 = scmp.lt.s32.totalorder %s430, 3
      %s432 = scalar_select %p431, %s430, 3
      %s433 = smul.addr %s432, 2
      %s434 = scalar_lea.vmem %s1, %s433
      %s435 = smul.u32 2, %s22
      %p436 = scmp.lt.s32.totalorder %s22, 1
      %s437 = scalar_select %p436, %s22, 1
      %s438 = smul.addr %s437, 64
      %s439 = smul.addr %s438, 8
      %s440 = scalar_lea.vmem %s3, %s439
      %p441 = scmp.lt.s32.totalorder %s22, 1
      %s442 = scalar_select %p441, %s22, 1
      %s443 = smul.addr %s442, 64
      %s444 = smul.addr %s443, 8
      %s445 = scalar_lea.vmem %s4, %s444
      %s446 = smul.u32 2, %s22
      %p447 = scmp.lt.s32.totalorder %s446, 3
      %s448 = scalar_select %p447, %s446, 3
      %s449 = smul.addr %s448, 2
      %s450 = scalar_lea.vmem %s11, %s449
      %s451 = smul.u32 2, %s22
      %v452 = vld [vmem:[%s2] sm:$0xff]
      %v453 = vld [vmem:[%s2 + $0x8] sm:$0xff]
      %v454 = vld [vmem:[%s2 + $0x10] sm:$0x1]
      %v455 = vld [vmem:[%s2 + $0x18] sm:$0x1]
      %v456 = vld [vmem:[%s440] sm:$0xff]
      %v457 = vld [vmem:[%s440 + $0x8] sm:$0xff]
      %v458 = vld [vmem:[%s440 + $0x10] sm:$0xff]
      %v459 = vld [vmem:[%s440 + $0x18] sm:$0xff]
      %v460 = vld [vmem:[%s440 + $0x20] sm:$0xff]
      %v461 = vld [vmem:[%s440 + $0x28] sm:$0xff]
      %v462 = vld [vmem:[%s440 + $0x30] sm:$0xff]
      %v463 = vld [vmem:[%s440 + $0x38] sm:$0xff]
      %v464 = vld [vmem:[%s440 + $0x40] sm:$0xff]
      %v465 = vld [vmem:[%s440 + $0x48] sm:$0xff]
      %v466 = vld [vmem:[%s440 + $0x50] sm:$0xff]
      %v467 = vld [vmem:[%s440 + $0x58] sm:$0xff]
      %v468 = vld [vmem:[%s440 + $0x60] sm:$0xff]
      %v469 = vld [vmem:[%s440 + $0x68] sm:$0xff]
      %v470 = vld [vmem:[%s440 + $0x70] sm:$0xff]
      %v471 = vld [vmem:[%s440 + $0x78] sm:$0xff]
      %v472 = vld [vmem:[%s440 + $0x80] sm:$0xff]
      %v473 = vld [vmem:[%s440 + $0x88] sm:$0xff]
      %v474 = vld [vmem:[%s440 + $0x90] sm:$0xff]
      %v475 = vld [vmem:[%s440 + $0x98] sm:$0xff]
      %v476 = vld [vmem:[%s440 + $0xa0] sm:$0xff]
      %v477 = vld [vmem:[%s440 + $0xa8] sm:$0xff]
      %v478 = vld [vmem:[%s440 + $0xb0] sm:$0xff]
      %v479 = vld [vmem:[%s440 + $0xb8] sm:$0xff]
      %v480 = vld [vmem:[%s440 + $0xc0] sm:$0xff]
      %v481 = vld [vmem:[%s440 + $0xc8] sm:$0xff]
      %v482 = vld [vmem:[%s440 + $0xd0] sm:$0xff]
      %v483 = vld [vmem:[%s440 + $0xd8] sm:$0xff]
      %v484 = vld [vmem:[%s440 + $0xe0] sm:$0xff]
      %v485 = vld [vmem:[%s440 + $0xe8] sm:$0xff]
      %v486 = vld [vmem:[%s440 + $0xf0] sm:$0xff]
      %v487 = vld [vmem:[%s440 + $0xf8] sm:$0xff]
      %v488 = vld [vmem:[%s440 + $0x100] sm:$0xff]
      %v489 = vld [vmem:[%s440 + $0x108] sm:$0xff]
      %v490 = vld [vmem:[%s440 + $0x110] sm:$0xff]
      %v491 = vld [vmem:[%s440 + $0x118] sm:$0xff]
      %v492 = vld [vmem:[%s440 + $0x120] sm:$0xff]
      %v493 = vld [vmem:[%s440 + $0x128] sm:$0xff]
      %v494 = vld [vmem:[%s440 + $0x130] sm:$0xff]
      %v495 = vld [vmem:[%s440 + $0x138] sm:$0xff]
      %v496 = vld [vmem:[%s440 + $0x140] sm:$0xff]
      %v497 = vld [vmem:[%s440 + $0x148] sm:$0xff]
      %v498 = vld [vmem:[%s440 + $0x150] sm:$0xff]
      %v499 = vld [vmem:[%s440 + $0x158] sm:$0xff]
      %v500 = vld [vmem:[%s440 + $0x160] sm:$0xff]
      %v501 = vld [vmem:[%s440 + $0x168] sm:$0xff]
      %v502 = vld [vmem:[%s440 + $0x170] sm:$0xff]
      %v503 = vld [vmem:[%s440 + $0x178] sm:$0xff]
      %v504 = vld [vmem:[%s440 + $0x180] sm:$0xff]
      %v505 = vld [vmem:[%s440 + $0x188] sm:$0xff]
      %v506 = vld [vmem:[%s440 + $0x190] sm:$0xff]
      %v507 = vld [vmem:[%s440 + $0x198] sm:$0xff]
      %v508 = vld [vmem:[%s440 + $0x1a0] sm:$0xff]
      %v509 = vld [vmem:[%s440 + $0x1a8] sm:$0xff]
      %v510 = vld [vmem:[%s440 + $0x1b0] sm:$0xff]
      %v511 = vld [vmem:[%s440 + $0x1b8] sm:$0xff]
      %v512 = vld [vmem:[%s440 + $0x1c0] sm:$0xff]
      %v513 = vld [vmem:[%s440 + $0x1c8] sm:$0xff]
      %v514 = vld [vmem:[%s440 + $0x1d0] sm:$0xff]
      %v515 = vld [vmem:[%s440 + $0x1d8] sm:$0xff]
      %v516 = vld [vmem:[%s440 + $0x1e0] sm:$0xff]
      %v517 = vld [vmem:[%s440 + $0x1e8] sm:$0xff]
      %v518 = vld [vmem:[%s440 + $0x1f0] sm:$0xff]
      %v519 = vld [vmem:[%s440 + $0x1f8] sm:$0xff]
      %v520 = vld [vmem:[%s445] sm:$0xff]
      %v521 = vld [vmem:[%s445 + $0x8] sm:$0xff]
      %v522 = vld [vmem:[%s445 + $0x10] sm:$0xff]
      %v523 = vld [vmem:[%s445 + $0x18] sm:$0xff]
      %v524 = vld [vmem:[%s445 + $0x20] sm:$0xff]
      %v525 = vld [vmem:[%s445 + $0x28] sm:$0xff]
      %v526 = vld [vmem:[%s445 + $0x30] sm:$0xff]
      %v527 = vld [vmem:[%s445 + $0x38] sm:$0xff]
      %v528 = vld [vmem:[%s445 + $0x40] sm:$0xff]
      %v529 = vld [vmem:[%s445 + $0x48] sm:$0xff]
      %v530 = vld [vmem:[%s445 + $0x50] sm:$0xff]
      %v531 = vld [vmem:[%s445 + $0x58] sm:$0xff]
      %v532 = vld [vmem:[%s445 + $0x60] sm:$0xff]
      %v533 = vld [vmem:[%s445 + $0x68] sm:$0xff]
      %v534 = vld [vmem:[%s445 + $0x70] sm:$0xff]
      %v535 = vld [vmem:[%s445 + $0x78] sm:$0xff]
      %v536 = vld [vmem:[%s445 + $0x80] sm:$0xff]
      %v537 = vld [vmem:[%s445 + $0x88] sm:$0xff]
      %v538 = vld [vmem:[%s445 + $0x90] sm:$0xff]
      %v539 = vld [vmem:[%s445 + $0x98] sm:$0xff]
      %v540 = vld [vmem:[%s445 + $0xa0] sm:$0xff]
      %v541 = vld [vmem:[%s445 + $0xa8] sm:$0xff]
      %v542 = vld [vmem:[%s445 + $0xb0] sm:$0xff]
      %v543 = vld [vmem:[%s445 + $0xb8] sm:$0xff]
      %v544 = vld [vmem:[%s445 + $0xc0] sm:$0xff]
      %v545 = vld [vmem:[%s445 + $0xc8] sm:$0xff]
      %v546 = vld [vmem:[%s445 + $0xd0] sm:$0xff]
      %v547 = vld [vmem:[%s445 + $0xd8] sm:$0xff]
      %v548 = vld [vmem:[%s445 + $0xe0] sm:$0xff]
      %v549 = vld [vmem:[%s445 + $0xe8] sm:$0xff]
      %v550 = vld [vmem:[%s445 + $0xf0] sm:$0xff]
      %v551 = vld [vmem:[%s445 + $0xf8] sm:$0xff]
      %v552 = vld [vmem:[%s445 + $0x100] sm:$0xff]
      %v553 = vld [vmem:[%s445 + $0x108] sm:$0xff]
      %v554 = vld [vmem:[%s445 + $0x110] sm:$0xff]
      %v555 = vld [vmem:[%s445 + $0x118] sm:$0xff]
      %v556 = vld [vmem:[%s445 + $0x120] sm:$0xff]
      %v557 = vld [vmem:[%s445 + $0x128] sm:$0xff]
      %v558 = vld [vmem:[%s445 + $0x130] sm:$0xff]
      %v559 = vld [vmem:[%s445 + $0x138] sm:$0xff]
      %v560 = vld [vmem:[%s445 + $0x140] sm:$0xff]
      %v561 = vld [vmem:[%s445 + $0x148] sm:$0xff]
      %v562 = vld [vmem:[%s445 + $0x150] sm:$0xff]
      %v563 = vld [vmem:[%s445 + $0x158] sm:$0xff]
      %v564 = vld [vmem:[%s445 + $0x160] sm:$0xff]
      %v565 = vld [vmem:[%s445 + $0x168] sm:$0xff]
      %v566 = vld [vmem:[%s445 + $0x170] sm:$0xff]
      %v567 = vld [vmem:[%s445 + $0x178] sm:$0xff]
      %v568 = vld [vmem:[%s445 + $0x180] sm:$0xff]
      %v569 = vld [vmem:[%s445 + $0x188] sm:$0xff]
      %v570 = vld [vmem:[%s445 + $0x190] sm:$0xff]
      %v571 = vld [vmem:[%s445 + $0x198] sm:$0xff]
      %v572 = vld [vmem:[%s445 + $0x1a0] sm:$0xff]
      %v573 = vld [vmem:[%s445 + $0x1a8] sm:$0xff]
      %v574 = vld [vmem:[%s445 + $0x1b0] sm:$0xff]
      %v575 = vld [vmem:[%s445 + $0x1b8] sm:$0xff]
      %v576 = vld [vmem:[%s445 + $0x1c0] sm:$0xff]
      %v577 = vld [vmem:[%s445 + $0x1c8] sm:$0xff]
      %v578 = vld [vmem:[%s445 + $0x1d0] sm:$0xff]
      %v579 = vld [vmem:[%s445 + $0x1d8] sm:$0xff]
      %v580 = vld [vmem:[%s445 + $0x1e0] sm:$0xff]
      %v581 = vld [vmem:[%s445 + $0x1e8] sm:$0xff]
      %v582 = vld [vmem:[%s445 + $0x1f0] sm:$0xff]
      %v583 = vld [vmem:[%s445 + $0x1f8] sm:$0xff]
      %v584 = vld [vmem:[%s434] sm:$0xf]
      %v585 = vld [vmem:[%s5] sm:$0xff]
      %v586 = vld [vmem:[%s6] sm:$0xff]
      %v587 = vld [vmem:[%s9] sm:$0x3]
      %v588 = vld [vmem:[%s10] sm:$0x3]
      %v589 = vld [vmem:[%s428] sm:$0xf]
      %v592 = vunpack.c.l.s4 1983009808
      %v593 = vunpack.c.0.s8 %v592
      %v594 = vlaneseq
      %v595 = vshrl.u32 %v594, 7
      %v596 = vsub.s32 %v593, %v595
      %v597 = vrot.slane %v589, %v596
      %v598 = vcombine.high %v597, %v597
      %601 = vmatprep.subr.mxu0 %v457
      %602 = vmatpush1.msra.mxu0 %v456
      %603 = vmatprep.subr.mxu0 %v459
      %604 = vmatpush1.msra.mxu0 %v458
      %605 = vmatprep.subr.mxu0 %v461
      %606 = vmatpush1.msra.mxu0 %v460
      %607 = vmatprep.subr.mxu0 %v463
      %608 = vmatpush1.msra.mxu0 %v462
      %609 = vmatprep.subr.mxu0 %v465
      %610 = vmatpush1.msra.mxu0 %v464
      %611 = vmatprep.subr.mxu0 %v467
      %612 = vmatpush1.msra.mxu0 %v466
      %613 = vmatprep.subr.mxu0 %v469
      %614 = vmatpush1.msra.mxu0 %v468
      %615 = vmatprep.subr.mxu0 %v471
      %616 = vmatpush1.msra.mxu0 %v470
      %617 = vmatprep.subr.mxu0 %v473
      %618 = vmatpush1.msra.mxu0 %v472
      %619 = vmatprep.subr.mxu0 %v475
      %620 = vmatpush1.msra.mxu0 %v474
      %621 = vmatprep.subr.mxu0 %v477
      %622 = vmatpush1.msra.mxu0 %v476
      %623 = vmatprep.subr.mxu0 %v479
      %624 = vmatpush1.msra.mxu0 %v478
      %625 = vmatprep.subr.mxu0 %v481
      %626 = vmatpush1.msra.mxu0 %v480
      %627 = vmatprep.subr.mxu0 %v483
      %628 = vmatpush1.msra.mxu0 %v482
      %629 = vmatprep.subr.mxu0 %v485
      %630 = vmatpush1.msra.mxu0 %v484
      %631 = vmatprep.subr.mxu0 %v487
      %632 = vmatpush1.msra.mxu0 %v486
      %633 = vmatprep.subr.mxu0 %v489
      %634 = vmatpush1.msra.mxu0 %v488
      %635 = vmatprep.subr.mxu0 %v491
      %636 = vmatpush1.msra.mxu0 %v490
      %637 = vmatprep.subr.mxu0 %v493
      %638 = vmatpush1.msra.mxu0 %v492
      %639 = vmatprep.subr.mxu0 %v495
      %640 = vmatpush1.msra.mxu0 %v494
      %641 = vmatprep.subr.mxu0 %v497
      %642 = vmatpush1.msra.mxu0 %v496
      %643 = vmatprep.subr.mxu0 %v499
      %644 = vmatpush1.msra.mxu0 %v498
      %645 = vmatprep.subr.mxu0 %v501
      %646 = vmatpush1.msra.mxu0 %v500
      %647 = vmatprep.subr.mxu0 %v503
      %648 = vmatpush1.msra.mxu0 %v502
      %649 = vmatprep.subr.mxu0 %v505
      %650 = vmatpush1.msra.mxu0 %v504
      %651 = vmatprep.subr.mxu0 %v507
      %652 = vmatpush1.msra.mxu0 %v506
      %653 = vmatprep.subr.mxu0 %v509
      %654 = vmatpush1.msra.mxu0 %v508
      %655 = vmatprep.subr.mxu0 %v511
      %656 = vmatpush1.msra.mxu0 %v510
      %657 = vmatprep.subr.mxu0 %v513
      %658 = vmatpush1.msra.mxu0 %v512
      %659 = vmatprep.subr.mxu0 %v515
      %660 = vmatpush1.msra.mxu0 %v514
      %661 = vmatprep.subr.mxu0 %v517
      %662 = vmatpush1.msra.mxu0 %v516
      %663 = vmatprep.subr.mxu0 %v519
      %664 = vmatpush1.msra.mxu0 %v518
      %665 = vmatprep.mubr.f32.mxu0 %v598
      %666 = vmatmul.mubr.f32.gmra.mrb[0].mxu0 %v597
      %v667 = vpop.f32.mrb[0].mxu0
      %v668 = vadd.f32 0.0, %v667
      %v669 = vpop.f32.mrb[0].mxu0
      %v670 = vadd.f32 0.0, %v669
      %671 = vdwg.mxu0
      %672 = vmatprep.subr.mxu0 %v521
      %673 = vmatpush1.msra.mxu0 %v520
      %674 = vmatprep.subr.mxu0 %v523
      %675 = vmatpush1.msra.mxu0 %v522
      %676 = vmatprep.subr.mxu0 %v525
      %677 = vmatpush1.msra.mxu0 %v524
      %678 = vmatprep.subr.mxu0 %v527
      %679 = vmatpush1.msra.mxu0 %v526
      %680 = vmatprep.subr.mxu0 %v529
      %681 = vmatpush1.msra.mxu0 %v528
      %682 = vmatprep.subr.mxu0 %v531
      %683 = vmatpush1.msra.mxu0 %v530
      %684 = vmatprep.subr.mxu0 %v533
      %685 = vmatpush1.msra.mxu0 %v532
      %686 = vmatprep.subr.mxu0 %v535
      %687 = vmatpush1.msra.mxu0 %v534
      %688 = vmatprep.subr.mxu0 %v537
      %689 = vmatpush1.msra.mxu0 %v536
      %690 = vmatprep.subr.mxu0 %v539
      %691 = vmatpush1.msra.mxu0 %v538
      %692 = vmatprep.subr.mxu0 %v541
      %693 = vmatpush1.msra.mxu0 %v540
      %694 = vmatprep.subr.mxu0 %v543
      %695 = vmatpush1.msra.mxu0 %v542
      %696 = vmatprep.subr.mxu0 %v545
      %697 = vmatpush1.msra.mxu0 %v544
      %698 = vmatprep.subr.mxu0 %v547
      %699 = vmatpush1.msra.mxu0 %v546
      %700 = vmatprep.subr.mxu0 %v549
      %701 = vmatpush1.msra.mxu0 %v548
      %702 = vmatprep.subr.mxu0 %v551
      %703 = vmatpush1.msra.mxu0 %v550
      %704 = vmatprep.subr.mxu0 %v553
      %705 = vmatpush1.msra.mxu0 %v552
      %706 = vmatprep.subr.mxu0 %v555
      %707 = vmatpush1.msra.mxu0 %v554
      %708 = vmatprep.subr.mxu0 %v557
      %709 = vmatpush1.msra.mxu0 %v556
      %710 = vmatprep.subr.mxu0 %v559
      %711 = vmatpush1.msra.mxu0 %v558
      %712 = vmatprep.subr.mxu0 %v561
      %713 = vmatpush1.msra.mxu0 %v560
      %714 = vmatprep.subr.mxu0 %v563
      %715 = vmatpush1.msra.mxu0 %v562
      %716 = vmatprep.subr.mxu0 %v565
      %717 = vmatpush1.msra.mxu0 %v564
      %718 = vmatprep.subr.mxu0 %v567
      %719 = vmatpush1.msra.mxu0 %v566
      %720 = vmatprep.subr.mxu0 %v569
      %721 = vmatpush1.msra.mxu0 %v568
      %722 = vmatprep.subr.mxu0 %v571
      %723 = vmatpush1.msra.mxu0 %v570
      %724 = vmatprep.subr.mxu0 %v573
      %725 = vmatpush1.msra.mxu0 %v572
      %726 = vmatprep.subr.mxu0 %v575
      %727 = vmatpush1.msra.mxu0 %v574
      %728 = vmatprep.subr.mxu0 %v577
      %729 = vmatpush1.msra.mxu0 %v576
      %730 = vmatprep.subr.mxu0 %v579
      %731 = vmatpush1.msra.mxu0 %v578
      %732 = vmatprep.subr.mxu0 %v581
      %733 = vmatpush1.msra.mxu0 %v580
      %734 = vmatprep.subr.mxu0 %v583
      %735 = vmatpush1.msra.mxu0 %v582
      %736 = vmatprep.mubr.f32.mxu0 %v598
      %737 = vmatmul.mubr.f32.gmra.mrb[0].mxu0 %v597
      %v738 = vpop.f32.mrb[0].mxu0
      %v739 = vadd.f32 0.0, %v738
      %v740 = vpop.f32.mrb[0].mxu0
      %v741 = vadd.f32 0.0, %v740
      %742 = vdwg.mxu0
      %v745 = vrot.slane %v739, 1
      %v746 = vrot.slane %v741, 1
      %v749 = vsub.f32 %v668, %v745
      %v750 = vsub.f32 %v670, %v746
      %v751 = vrot.slane %v739, 7
      %v752 = vrot.slane %v741, 7
      %v755 = vadd.f32 %v668, %v751
      %v756 = vadd.f32 %v670, %v752
      %vm757 = vcmask 1040384
      %v758 = vsel %vm757, %v749, %v755
      %v759 = vsel %vm757, %v750, %v756
      %v762 = vunpack.c.l.s4 1983009808
      %v763 = vunpack.c.0.s8 %v762
      %v764 = vlaneseq
      %v765 = vshrl.u32 %v764, 7
      %v766 = vsub.s32 %v763, %v765
      %v767 = vrot.slane %v584, %v766
      %v768 = vcombine.high %v767, %v767
      %v771 = vsub.f32 %v758, %v767
      %v772 = vsub.f32 %v759, %v768
      %v773 = vmul.f32 %v771, 0.5
      %v774 = vmul.f32 %v772, 0.5
      %v777 = vcombine.low %v773, %v774
      %v779 = vunpack.c.l.s4 1983009808
      %v780 = vunpack.c.0.s8 %v779
      %v781 = vlaneseq
      %v782 = vshrl.u32 %v781, 7
      %v783 = vsub.s32 %v780, %v782
      %v784 = vrot.slane %v777, %v783
      %v786 = vsub.f32 %v589, %v784
      %v789 = vunpack.c.l.s4 1983009808
      %v790 = vunpack.c.0.s8 %v789
      %v791 = vlaneseq
      %v792 = vshrl.u32 %v791, 7
      %v793 = vsub.s32 %v790, %v792
      %v794 = vrot.slane %v786, %v793
      %v795 = vcombine.high %v794, %v794
      %798 = vrot.lane.b32.xlu0 %v794, 17
      %v799 = vpop.permute.xlu0 %798
      %800 = vrot.lane.b32.xlu0 %v795, 17
      %v801 = vpop.permute.xlu0 %800
      %v802 = vlaneseq
      %v803 = vand.u32 %v802, 127
      %vm804 = vcmp.lt.s32.totalorder %v803, 17
      %v805 = vsel %vm804, %v799, %v801
      %v806 = vsel %vm804, %v801, %v799
      %v807 = vlaneseq
      %v808 = vshrl.u32 %v807, 7
      %v809 = vsub.s32 0, %v808
      %v810 = vrot.slane %v452, %v809
      %v811 = vlaneseq
      %v812 = vshrl.u32 %v811, 7
      %v813 = vsub.s32 0, %v812
      %v814 = vrot.slane %v453, %v813
      %v815 = vmul.f32 %v806, %v810
      %v816 = vmul.f32 %v805, %v814
      %817 = vrot.lane.b32.xlu0 %v794, 16
      %v818 = vpop.permute.xlu0 %817
      %819 = vrot.lane.b32.xlu0 %v795, 16
      %v820 = vpop.permute.xlu0 %819
      %vm821 = vcmp.lt.s32.totalorder %v803, 16
      %v822 = vsel %vm821, %v818, %v820
      %v823 = vsel %vm821, %v820, %v818
      %v824 = vlaneseq
      %v825 = vshrl.u32 %v824, 7
      %v826 = vsub.s32 1, %v825
      %v827 = vrot.slane %v452, %v826
      %v828 = vlaneseq
      %v829 = vshrl.u32 %v828, 7
      %v830 = vsub.s32 1, %v829
      %v831 = vrot.slane %v453, %v830
      %v832 = vmul.f32 %v823, %v827
      %v833 = vmul.f32 %v822, %v831
      %834 = vrot.lane.b32.xlu0 %v794, 15
      %v835 = vpop.permute.xlu0 %834
      %836 = vrot.lane.b32.xlu0 %v795, 15
      %v837 = vpop.permute.xlu0 %836
      %vm838 = vcmp.lt.s32.totalorder %v803, 15
      %v839 = vsel %vm838, %v835, %v837
      %v840 = vsel %vm838, %v837, %v835
      %v841 = vlaneseq
      %v842 = vshrl.u32 %v841, 7
      %v843 = vsub.s32 2, %v842
      %v844 = vrot.slane %v452, %v843
      %v845 = vlaneseq
      %v846 = vshrl.u32 %v845, 7
      %v847 = vsub.s32 2, %v846
      %v848 = vrot.slane %v453, %v847
      %v849 = vmul.f32 %v840, %v844
      %v850 = vmul.f32 %v839, %v848
      %851 = vrot.lane.b32.xlu0 %v794, 1
      %v852 = vpop.permute.xlu0 %851
      %853 = vrot.lane.b32.xlu0 %v795, 1
      %v854 = vpop.permute.xlu0 %853
      %vm855 = vcmp.lt.s32.totalorder %v803, 1
      %v856 = vsel %vm855, %v852, %v854
      %v857 = vsel %vm855, %v854, %v852
      %v858 = vlaneseq
      %v859 = vshrl.u32 %v858, 7
      %v860 = vsub.s32 3, %v859
      %v861 = vrot.slane %v452, %v860
      %v862 = vlaneseq
      %v863 = vshrl.u32 %v862, 7
      %v864 = vsub.s32 3, %v863
      %v865 = vrot.slane %v453, %v864
      %v866 = vmul.f32 %v857, %v861
      %v867 = vmul.f32 %v856, %v865
      %868 = vrot.lane.b32.xlu0 %v794, 127
      %v869 = vpop.permute.xlu0 %868
      %870 = vrot.lane.b32.xlu0 %v795, 127
      %v871 = vpop.permute.xlu0 %870
      %vm872 = vcmp.lt.s32.totalorder %v803, 127
      %v873 = vsel %vm872, %v869, %v871
      %v874 = vsel %vm872, %v871, %v869
      %v875 = vlaneseq
      %v876 = vshrl.u32 %v875, 7
      %v877 = vsub.s32 5, %v876
      %v878 = vrot.slane %v452, %v877
      %v879 = vlaneseq
      %v880 = vshrl.u32 %v879, 7
      %v881 = vsub.s32 5, %v880
      %v882 = vrot.slane %v453, %v881
      %v883 = vmul.f32 %v873, %v878
      %v884 = vmul.f32 %v874, %v882
      %885 = vrot.lane.b32.xlu0 %v794, 113
      %v886 = vpop.permute.xlu0 %885
      %887 = vrot.lane.b32.xlu0 %v795, 113
      %v888 = vpop.permute.xlu0 %887
      %vm889 = vcmp.lt.s32.totalorder %v803, 113
      %v890 = vsel %vm889, %v886, %v888
      %v891 = vsel %vm889, %v888, %v886
      %v892 = vlaneseq
      %v893 = vshrl.u32 %v892, 7
      %v894 = vsub.s32 6, %v893
      %v895 = vrot.slane %v452, %v894
      %v896 = vlaneseq
      %v897 = vshrl.u32 %v896, 7
      %v898 = vsub.s32 6, %v897
      %v899 = vrot.slane %v453, %v898
      %v900 = vmul.f32 %v890, %v895
      %v901 = vmul.f32 %v891, %v899
      %902 = vrot.lane.b32.xlu0 %v794, 112
      %v903 = vpop.permute.xlu0 %902
      %904 = vrot.lane.b32.xlu0 %v795, 112
      %v905 = vpop.permute.xlu0 %904
      %vm906 = vcmp.lt.s32.totalorder %v803, 112
      %v907 = vsel %vm906, %v903, %v905
      %v908 = vsel %vm906, %v905, %v903
      %v909 = vlaneseq
      %v910 = vshrl.u32 %v909, 7
      %v911 = vsub.s32 7, %v910
      %v912 = vrot.slane %v452, %v911
      %v913 = vlaneseq
      %v914 = vshrl.u32 %v913, 7
      %v915 = vsub.s32 7, %v914
      %v916 = vrot.slane %v453, %v915
      %v917 = vmul.f32 %v907, %v912
      %v918 = vmul.f32 %v908, %v916
      %919 = vrot.lane.b32.xlu0 %v794, 111
      %v920 = vpop.permute.xlu0 %919
      %921 = vrot.lane.b32.xlu0 %v795, 111
      %v922 = vpop.permute.xlu0 %921
      %vm923 = vcmp.lt.s32.totalorder %v803, 111
      %v924 = vsel %vm923, %v920, %v922
      %v925 = vsel %vm923, %v922, %v920
      %v926 = vlaneseq
      %v927 = vshrl.u32 %v926, 7
      %v928 = vsub.s32 0, %v927
      %v929 = vrot.slane %v454, %v928
      %v930 = vlaneseq
      %v931 = vshrl.u32 %v930, 7
      %v932 = vsub.s32 0, %v931
      %v933 = vrot.slane %v455, %v932
      %v934 = vmul.f32 %v924, %v929
      %v935 = vmul.f32 %v925, %v933
      %v938 = vrot.slane %v832, 6
      %v939 = vrot.slane %v833, 6
      %v944 = vrot.slane %v849, 4
      %v945 = vrot.slane %v850, 4
      %v950 = vrot.slane %v866, 2
      %v951 = vrot.slane %v867, 2
      %v956 = vrot.slane %v883, 6
      %v957 = vrot.slane %v884, 6
      %v962 = vrot.slane %v900, 4
      %v963 = vrot.slane %v901, 4
      %v968 = vrot.slane %v917, 2
      %v969 = vrot.slane %v918, 2
      %vm972 = vcmask 1041408
      %v973 = vsel %vm972, %v815, %v938
      %v974 = vsel %vm972, %v816, %v939
      %vm975 = vcmask 1043456
      %v976 = vsel %vm975, %v973, %v944
      %v977 = vsel %vm975, %v974, %v945
      %vm978 = vcmask 1045504
      %v979 = vsel %vm978, %v976, %v950
      %v980 = vsel %vm978, %v977, %v951
      %v981 = vsel %vm972, %v794, %v956
      %v982 = vsel %vm972, %v795, %v957
      %v983 = vsel %vm975, %v981, %v962
      %v984 = vsel %vm975, %v982, %v963
      %v985 = vsel %vm978, %v983, %v968
      %v986 = vsel %vm978, %v984, %v969
      %988 = vset.pattern.permute.xlu0 0
      %989 = vperm.xlu0 %988, %v586
      %v990 = vpop.permute.xlu0 %989
      %vm992 = vcmask 146432
      %v994 = vsel %vm992, %v585, 0
      %v997 = vsel %vm972, %v934, 0
      %v1000 = vsel %vm972, %v935, 0
      %1002 = vmatprep.subr.mxu0 %v980
      %1003 = vmatpush1.msra.mxu0 %v979
      %1004 = vmatprep.subr.mxu0 %v986
      %1005 = vmatpush1.msra.mxu0 %v985
      %1006 = vmatprep.subr.mxu0 %v1000
      %1007 = vmatpush1.msra.mxu0 %v997
      %1008 = vmatprep.subr.mxu0 0.0
      %1009 = vmatpush1.msra.mxu0 0.0
      %1010 = vmatprep.subr.mxu0 0.0
      %1011 = vmatpush1.msra.mxu0 0.0
      %1012 = vmatprep.subr.mxu0 0.0
      %1013 = vmatpush1.msra.mxu0 0.0
      %1014 = vmatprep.subr.mxu0 0.0
      %1015 = vmatpush1.msra.mxu0 0.0
      %1016 = vmatprep.subr.mxu0 0.0
      %1017 = vmatpush1.msra.mxu0 0.0
      %1018 = vmatprep.subr.mxu0 0.0
      %1019 = vmatpush1.msra.mxu0 0.0
      %1020 = vmatprep.subr.mxu0 0.0
      %1021 = vmatpush1.msra.mxu0 0.0
      %1022 = vmatprep.subr.mxu0 0.0
      %1023 = vmatpush1.msra.mxu0 0.0
      %1024 = vmatprep.subr.mxu0 0.0
      %1025 = vmatpush1.msra.mxu0 0.0
      %1026 = vmatprep.subr.mxu0 0.0
      %1027 = vmatpush1.msra.mxu0 0.0
      %1028 = vmatprep.subr.mxu0 0.0
      %1029 = vmatpush1.msra.mxu0 0.0
      %1030 = vmatprep.subr.mxu0 0.0
      %1031 = vmatpush1.msra.mxu0 0.0
      %1032 = vmatprep.subr.mxu0 0.0
      %1033 = vmatpush1.msra.mxu0 0.0
      %1034 = vmatprep.subr.mxu0 0.0
      %1035 = vmatpush1.msra.mxu0 0.0
      %1036 = vmatprep.subr.mxu0 0.0
      %1037 = vmatpush1.msra.mxu0 0.0
      %1038 = vmatprep.subr.mxu0 0.0
      %1039 = vmatpush1.msra.mxu0 0.0
      %1040 = vmatprep.subr.mxu0 0.0
      %1041 = vmatpush1.msra.mxu0 0.0
      %1042 = vmatprep.subr.mxu0 0.0
      %1043 = vmatpush1.msra.mxu0 0.0
      %1044 = vmatprep.subr.mxu0 0.0
      %1045 = vmatpush1.msra.mxu0 0.0
      %1046 = vmatprep.subr.mxu0 0.0
      %1047 = vmatpush1.msra.mxu0 0.0
      %1048 = vmatprep.subr.mxu0 0.0
      %1049 = vmatpush1.msra.mxu0 0.0
      %1050 = vmatprep.subr.mxu0 0.0
      %1051 = vmatpush1.msra.mxu0 0.0
      %1052 = vmatprep.subr.mxu0 0.0
      %1053 = vmatpush1.msra.mxu0 0.0
      %1054 = vmatprep.subr.mxu0 0.0
      %1055 = vmatpush1.msra.mxu0 0.0
      %1056 = vmatprep.subr.mxu0 0.0
      %1057 = vmatpush1.msra.mxu0 0.0
      %1058 = vmatprep.subr.mxu0 0.0
      %1059 = vmatpush1.msra.mxu0 0.0
      %1060 = vmatprep.subr.mxu0 0.0
      %1061 = vmatpush1.msra.mxu0 0.0
      %1062 = vmatprep.subr.mxu0 0.0
      %1063 = vmatpush1.msra.mxu0 0.0
      %1064 = vmatprep.subr.mxu0 0.0
      %1065 = vmatpush1.msra.mxu0 0.0
      %1066 = vmatprep.mubr.f32.mxu0 0.0
      %1067 = vmatmul.mubr.f32.gmra.mrb[0].mxu0 %v994
      %v1068 = vpop.f32.mrb[0].mxu0
      %v1069 = vadd.f32 %v990, %v1068
      %v1070 = vpop.f32.mrb[0].mxu0
      %v1071 = vadd.f32 %v990, %v1070
      %1072 = vdwg.mxu0
      %v1073 = vld [vmem:[%s7] sm:$0xff]
      %v1074 = vld [vmem:[%s8] sm:$0xff]
      %1075 = vrot.lane.b32.xlu0 %v1069, 17
      %v1076 = vpop.permute.xlu0 %1075
      %1077 = vrot.lane.b32.xlu0 %v1071, 17
      %v1078 = vpop.permute.xlu0 %1077
      %v1079 = vsel %vm804, %v1076, %v1078
      %v1080 = vsel %vm804, %v1078, %v1076
      %v1081 = vmul.f32 %v1080, %v810
      %v1082 = vmul.f32 %v1079, %v814
      %1083 = vrot.lane.b32.xlu0 %v1069, 16
      %v1084 = vpop.permute.xlu0 %1083
      %1085 = vrot.lane.b32.xlu0 %v1071, 16
      %v1086 = vpop.permute.xlu0 %1085
      %v1087 = vsel %vm821, %v1084, %v1086
      %v1088 = vsel %vm821, %v1086, %v1084
      %v1089 = vmul.f32 %v1088, %v827
      %v1090 = vmul.f32 %v1087, %v831
      %1091 = vrot.lane.b32.xlu0 %v1069, 15
      %v1092 = vpop.permute.xlu0 %1091
      %1093 = vrot.lane.b32.xlu0 %v1071, 15
      %v1094 = vpop.permute.xlu0 %1093
      %v1095 = vsel %vm838, %v1092, %v1094
      %v1096 = vsel %vm838, %v1094, %v1092
      %v1097 = vmul.f32 %v1096, %v844
      %v1098 = vmul.f32 %v1095, %v848
      %1099 = vrot.lane.b32.xlu0 %v1069, 1
      %v1100 = vpop.permute.xlu0 %1099
      %1101 = vrot.lane.b32.xlu0 %v1071, 1
      %v1102 = vpop.permute.xlu0 %1101
      %v1103 = vsel %vm855, %v1100, %v1102
      %v1104 = vsel %vm855, %v1102, %v1100
      %v1105 = vmul.f32 %v1104, %v861
      %v1106 = vmul.f32 %v1103, %v865
      %1107 = vrot.lane.b32.xlu0 %v1069, 127
      %v1108 = vpop.permute.xlu0 %1107
      %1109 = vrot.lane.b32.xlu0 %v1071, 127
      %v1110 = vpop.permute.xlu0 %1109
      %v1111 = vsel %vm872, %v1108, %v1110
      %v1112 = vsel %vm872, %v1110, %v1108
      %v1113 = vmul.f32 %v1111, %v878
      %v1114 = vmul.f32 %v1112, %v882
      %1115 = vrot.lane.b32.xlu0 %v1069, 113
      %v1116 = vpop.permute.xlu0 %1115
      %1117 = vrot.lane.b32.xlu0 %v1071, 113
      %v1118 = vpop.permute.xlu0 %1117
      %v1119 = vsel %vm889, %v1116, %v1118
      %v1120 = vsel %vm889, %v1118, %v1116
      %v1121 = vmul.f32 %v1119, %v895
      %v1122 = vmul.f32 %v1120, %v899
      %1123 = vrot.lane.b32.xlu0 %v1069, 112
      %v1124 = vpop.permute.xlu0 %1123
      %1125 = vrot.lane.b32.xlu0 %v1071, 112
      %v1126 = vpop.permute.xlu0 %1125
      %v1127 = vsel %vm906, %v1124, %v1126
      %v1128 = vsel %vm906, %v1126, %v1124
      %v1129 = vmul.f32 %v1127, %v912
      %v1130 = vmul.f32 %v1128, %v916
      %1131 = vrot.lane.b32.xlu0 %v1069, 111
      %v1132 = vpop.permute.xlu0 %1131
      %1133 = vrot.lane.b32.xlu0 %v1071, 111
      %v1134 = vpop.permute.xlu0 %1133
      %v1135 = vsel %vm923, %v1132, %v1134
      %v1136 = vsel %vm923, %v1134, %v1132
      %v1137 = vmul.f32 %v1135, %v929
      %v1138 = vmul.f32 %v1136, %v933
      %1140 = vset.pattern.permute.xlu0 0
      %1141 = vperm.xlu0 %1140, %v1074
      %v1142 = vpop.permute.xlu0 %1141
      %vm1144 = vcmask 588800
      %v1146 = vsel %vm1144, %v1073, 0
      %1148 = vmatprep.subr.mxu0 %v1082
      %1149 = vmatpush1.msra.mxu0 %v1081
      %1150 = vmatprep.subr.mxu0 %v1090
      %1151 = vmatpush1.msra.mxu0 %v1089
      %1152 = vmatprep.subr.mxu0 %v1098
      %1153 = vmatpush1.msra.mxu0 %v1097
      %1154 = vmatprep.subr.mxu0 %v1106
      %1155 = vmatpush1.msra.mxu0 %v1105
      %1156 = vmatprep.subr.mxu0 %v1071
      %1157 = vmatpush1.msra.mxu0 %v1069
      %1158 = vmatprep.subr.mxu0 %v1114
      %1159 = vmatpush1.msra.mxu0 %v1113
      %1160 = vmatprep.subr.mxu0 %v1122
      %1161 = vmatpush1.msra.mxu0 %v1121
      %1162 = vmatprep.subr.mxu0 %v1130
      %1163 = vmatpush1.msra.mxu0 %v1129
      %1164 = vmatprep.subr.mxu0 %v1138
      %1165 = vmatpush1.msra.mxu0 %v1137
      %1166 = vmatprep.subr.mxu0 0.0
      %1167 = vmatpush1.msra.mxu0 0.0
      %1168 = vmatprep.subr.mxu0 0.0
      %1169 = vmatpush1.msra.mxu0 0.0
      %1170 = vmatprep.subr.mxu0 0.0
      %1171 = vmatpush1.msra.mxu0 0.0
      %1172 = vmatprep.subr.mxu0 0.0
      %1173 = vmatpush1.msra.mxu0 0.0
      %1174 = vmatprep.subr.mxu0 0.0
      %1175 = vmatpush1.msra.mxu0 0.0
      %1176 = vmatprep.subr.mxu0 0.0
      %1177 = vmatpush1.msra.mxu0 0.0
      %1178 = vmatprep.subr.mxu0 0.0
      %1179 = vmatpush1.msra.mxu0 0.0
      %1180 = vmatprep.subr.mxu0 0.0
      %1181 = vmatpush1.msra.mxu0 0.0
      %1182 = vmatprep.subr.mxu0 0.0
      %1183 = vmatpush1.msra.mxu0 0.0
      %1184 = vmatprep.subr.mxu0 0.0
      %1185 = vmatpush1.msra.mxu0 0.0
      %1186 = vmatprep.subr.mxu0 0.0
      %1187 = vmatpush1.msra.mxu0 0.0
      %1188 = vmatprep.subr.mxu0 0.0
      %1189 = vmatpush1.msra.mxu0 0.0
      %1190 = vmatprep.subr.mxu0 0.0
      %1191 = vmatpush1.msra.mxu0 0.0
      %1192 = vmatprep.subr.mxu0 0.0
      %1193 = vmatpush1.msra.mxu0 0.0
      %1194 = vmatprep.subr.mxu0 0.0
      %1195 = vmatpush1.msra.mxu0 0.0
      %1196 = vmatprep.subr.mxu0 0.0
      %1197 = vmatpush1.msra.mxu0 0.0
      %1198 = vmatprep.subr.mxu0 0.0
      %1199 = vmatpush1.msra.mxu0 0.0
      %1200 = vmatprep.subr.mxu0 0.0
      %1201 = vmatpush1.msra.mxu0 0.0
      %1202 = vmatprep.subr.mxu0 0.0
      %1203 = vmatpush1.msra.mxu0 0.0
      %1204 = vmatprep.subr.mxu0 0.0
      %1205 = vmatpush1.msra.mxu0 0.0
      %1206 = vmatprep.subr.mxu0 0.0
      %1207 = vmatpush1.msra.mxu0 0.0
      %1208 = vmatprep.subr.mxu0 0.0
      %1209 = vmatpush1.msra.mxu0 0.0
      %1210 = vmatprep.subr.mxu0 0.0
      %1211 = vmatpush1.msra.mxu0 0.0
      %1212 = vmatprep.mubr.f32.mxu0 0.0
      %1213 = vmatmul.mubr.f32.gmra.mrb[0].mxu0 %v1146
      %v1214 = vpop.f32.mrb[0].mxu0
      %v1215 = vadd.f32 %v1142, %v1214
      %v1216 = vpop.f32.mrb[0].mxu0
      %v1217 = vadd.f32 %v1142, %v1216
      %1218 = vdwg.mxu0
      %v1219 = vmax.f32 %v1215, 0.0
      %v1220 = vmax.f32 %v1217, 0.0
      %s1221 = scalar_lea.vmem %s7, 8
      %v1222 = vld [vmem:[%s1221] sm:$0xff]
      %s1223 = scalar_lea.vmem %s8, 8
      %v1224 = vld [vmem:[%s1223] sm:$0xff]
      %1225 = vrot.lane.b32.xlu0 %v1219, 17
      %v1226 = vpop.permute.xlu0 %1225
      %1227 = vrot.lane.b32.xlu0 %v1220, 17
      %v1228 = vpop.permute.xlu0 %1227
      %v1229 = vsel %vm804, %v1226, %v1228
      %v1230 = vsel %vm804, %v1228, %v1226
      %v1231 = vmul.f32 %v1230, %v810
      %v1232 = vmul.f32 %v1229, %v814
      %1233 = vrot.lane.b32.xlu0 %v1219, 16
      %v1234 = vpop.permute.xlu0 %1233
      %1235 = vrot.lane.b32.xlu0 %v1220, 16
      %v1236 = vpop.permute.xlu0 %1235
      %v1237 = vsel %vm821, %v1234, %v1236
      %v1238 = vsel %vm821, %v1236, %v1234
      %v1239 = vmul.f32 %v1238, %v827
      %v1240 = vmul.f32 %v1237, %v831
      %1241 = vrot.lane.b32.xlu0 %v1219, 15
      %v1242 = vpop.permute.xlu0 %1241
      %1243 = vrot.lane.b32.xlu0 %v1220, 15
      %v1244 = vpop.permute.xlu0 %1243
      %v1245 = vsel %vm838, %v1242, %v1244
      %v1246 = vsel %vm838, %v1244, %v1242
      %v1247 = vmul.f32 %v1246, %v844
      %v1248 = vmul.f32 %v1245, %v848
      %1249 = vrot.lane.b32.xlu0 %v1219, 1
      %v1250 = vpop.permute.xlu0 %1249
      %1251 = vrot.lane.b32.xlu0 %v1220, 1
      %v1252 = vpop.permute.xlu0 %1251
      %v1253 = vsel %vm855, %v1250, %v1252
      %v1254 = vsel %vm855, %v1252, %v1250
      %v1255 = vmul.f32 %v1254, %v861
      %v1256 = vmul.f32 %v1253, %v865
      %1257 = vrot.lane.b32.xlu0 %v1219, 127
      %v1258 = vpop.permute.xlu0 %1257
      %1259 = vrot.lane.b32.xlu0 %v1220, 127
      %v1260 = vpop.permute.xlu0 %1259
      %v1261 = vsel %vm872, %v1258, %v1260
      %v1262 = vsel %vm872, %v1260, %v1258
      %v1263 = vmul.f32 %v1261, %v878
      %v1264 = vmul.f32 %v1262, %v882
      %1265 = vrot.lane.b32.xlu0 %v1219, 113
      %v1266 = vpop.permute.xlu0 %1265
      %1267 = vrot.lane.b32.xlu0 %v1220, 113
      %v1268 = vpop.permute.xlu0 %1267
      %v1269 = vsel %vm889, %v1266, %v1268
      %v1270 = vsel %vm889, %v1268, %v1266
      %v1271 = vmul.f32 %v1269, %v895
      %v1272 = vmul.f32 %v1270, %v899
      %1273 = vrot.lane.b32.xlu0 %v1219, 112
      %v1274 = vpop.permute.xlu0 %1273
      %1275 = vrot.lane.b32.xlu0 %v1220, 112
      %v1276 = vpop.permute.xlu0 %1275
      %v1277 = vsel %vm906, %v1274, %v1276
      %v1278 = vsel %vm906, %v1276, %v1274
      %v1279 = vmul.f32 %v1277, %v912
      %v1280 = vmul.f32 %v1278, %v916
      %1281 = vrot.lane.b32.xlu0 %v1219, 111
      %v1282 = vpop.permute.xlu0 %1281
      %1283 = vrot.lane.b32.xlu0 %v1220, 111
      %v1284 = vpop.permute.xlu0 %1283
      %v1285 = vsel %vm923, %v1282, %v1284
      %v1286 = vsel %vm923, %v1284, %v1282
      %v1287 = vmul.f32 %v1285, %v929
      %v1288 = vmul.f32 %v1286, %v933
      %1290 = vset.pattern.permute.xlu0 0
      %1291 = vperm.xlu0 %1290, %v1224
      %v1292 = vpop.permute.xlu0 %1291
      %v1295 = vsel %vm1144, %v1222, 0
      %1297 = vmatprep.subr.mxu0 %v1232
      %1298 = vmatpush1.msra.mxu0 %v1231
      %1299 = vmatprep.subr.mxu0 %v1240
      %1300 = vmatpush1.msra.mxu0 %v1239
      %1301 = vmatprep.subr.mxu0 %v1248
      %1302 = vmatpush1.msra.mxu0 %v1247
      %1303 = vmatprep.subr.mxu0 %v1256
      %1304 = vmatpush1.msra.mxu0 %v1255
      %1305 = vmatprep.subr.mxu0 %v1220
      %1306 = vmatpush1.msra.mxu0 %v1219
      %1307 = vmatprep.subr.mxu0 %v1264
      %1308 = vmatpush1.msra.mxu0 %v1263
      %1309 = vmatprep.subr.mxu0 %v1272
      %1310 = vmatpush1.msra.mxu0 %v1271
      %1311 = vmatprep.subr.mxu0 %v1280
      %1312 = vmatpush1.msra.mxu0 %v1279
      %1313 = vmatprep.subr.mxu0 %v1288
      %1314 = vmatpush1.msra.mxu0 %v1287
      %1315 = vmatprep.subr.mxu0 0.0
      %1316 = vmatpush1.msra.mxu0 0.0
      %1317 = vmatprep.subr.mxu0 0.0
      %1318 = vmatpush1.msra.mxu0 0.0
      %1319 = vmatprep.subr.mxu0 0.0
      %1320 = vmatpush1.msra.mxu0 0.0
      %1321 = vmatprep.subr.mxu0 0.0
      %1322 = vmatpush1.msra.mxu0 0.0
      %1323 = vmatprep.subr.mxu0 0.0
      %1324 = vmatpush1.msra.mxu0 0.0
      %1325 = vmatprep.subr.mxu0 0.0
      %1326 = vmatpush1.msra.mxu0 0.0
      %1327 = vmatprep.subr.mxu0 0.0
      %1328 = vmatpush1.msra.mxu0 0.0
      %1329 = vmatprep.subr.mxu0 0.0
      %1330 = vmatpush1.msra.mxu0 0.0
      %1331 = vmatprep.subr.mxu0 0.0
      %1332 = vmatpush1.msra.mxu0 0.0
      %1333 = vmatprep.subr.mxu0 0.0
      %1334 = vmatpush1.msra.mxu0 0.0
      %1335 = vmatprep.subr.mxu0 0.0
      %1336 = vmatpush1.msra.mxu0 0.0
      %1337 = vmatprep.subr.mxu0 0.0
      %1338 = vmatpush1.msra.mxu0 0.0
      %1339 = vmatprep.subr.mxu0 0.0
      %1340 = vmatpush1.msra.mxu0 0.0
      %1341 = vmatprep.subr.mxu0 0.0
      %1342 = vmatpush1.msra.mxu0 0.0
      %1343 = vmatprep.subr.mxu0 0.0
      %1344 = vmatpush1.msra.mxu0 0.0
      %1345 = vmatprep.subr.mxu0 0.0
      %1346 = vmatpush1.msra.mxu0 0.0
      %1347 = vmatprep.subr.mxu0 0.0
      %1348 = vmatpush1.msra.mxu0 0.0
      %1349 = vmatprep.subr.mxu0 0.0
      %1350 = vmatpush1.msra.mxu0 0.0
      %1351 = vmatprep.subr.mxu0 0.0
      %1352 = vmatpush1.msra.mxu0 0.0
      %1353 = vmatprep.subr.mxu0 0.0
      %1354 = vmatpush1.msra.mxu0 0.0
      %1355 = vmatprep.subr.mxu0 0.0
      %1356 = vmatpush1.msra.mxu0 0.0
      %1357 = vmatprep.subr.mxu0 0.0
      %1358 = vmatpush1.msra.mxu0 0.0
      %1359 = vmatprep.subr.mxu0 0.0
      %1360 = vmatpush1.msra.mxu0 0.0
      %1361 = vmatprep.mubr.f32.mxu0 0.0
      %1362 = vmatmul.mubr.f32.gmra.mrb[0].mxu0 %v1295
      %v1363 = vpop.f32.mrb[0].mxu0
      %v1364 = vadd.f32 %v1292, %v1363
      %v1365 = vpop.f32.mrb[0].mxu0
      %v1366 = vadd.f32 %v1292, %v1365
      %1367 = vdwg.mxu0
      %v1368 = vmul.f32 %v1364, 0.1
      %v1369 = vmul.f32 %v1366, 0.1
      %v1370 = vadd.f32 %v1368, %v1069
      %v1371 = vadd.f32 %v1369, %v1071
      %s1372 = scalar_lea.vmem %s7, 16
      %v1373 = vld [vmem:[%s1372] sm:$0xff]
      %s1374 = scalar_lea.vmem %s8, 16
      %v1375 = vld [vmem:[%s1374] sm:$0xff]
      %1376 = vrot.lane.b32.xlu0 %v1370, 17
      %v1377 = vpop.permute.xlu0 %1376
      %1378 = vrot.lane.b32.xlu0 %v1371, 17
      %v1379 = vpop.permute.xlu0 %1378
      %v1380 = vsel %vm804, %v1377, %v1379
      %v1381 = vsel %vm804, %v1379, %v1377
      %v1382 = vmul.f32 %v1381, %v810
      %v1383 = vmul.f32 %v1380, %v814
      %1384 = vrot.lane.b32.xlu0 %v1370, 16
      %v1385 = vpop.permute.xlu0 %1384
      %1386 = vrot.lane.b32.xlu0 %v1371, 16
      %v1387 = vpop.permute.xlu0 %1386
      %v1388 = vsel %vm821, %v1385, %v1387
      %v1389 = vsel %vm821, %v1387, %v1385
      %v1390 = vmul.f32 %v1389, %v827
      %v1391 = vmul.f32 %v1388, %v831
      %1392 = vrot.lane.b32.xlu0 %v1370, 15
      %v1393 = vpop.permute.xlu0 %1392
      %1394 = vrot.lane.b32.xlu0 %v1371, 15
      %v1395 = vpop.permute.xlu0 %1394
      %v1396 = vsel %vm838, %v1393, %v1395
      %v1397 = vsel %vm838, %v1395, %v1393
      %v1398 = vmul.f32 %v1397, %v844
      %v1399 = vmul.f32 %v1396, %v848
      %1400 = vrot.lane.b32.xlu0 %v1370, 1
      %v1401 = vpop.permute.xlu0 %1400
      %1402 = vrot.lane.b32.xlu0 %v1371, 1
      %v1403 = vpop.permute.xlu0 %1402
      %v1404 = vsel %vm855, %v1401, %v1403
      %v1405 = vsel %vm855, %v1403, %v1401
      %v1406 = vmul.f32 %v1405, %v861
      %v1407 = vmul.f32 %v1404, %v865
      %1408 = vrot.lane.b32.xlu0 %v1370, 127
      %v1409 = vpop.permute.xlu0 %1408
      %1410 = vrot.lane.b32.xlu0 %v1371, 127
      %v1411 = vpop.permute.xlu0 %1410
      %v1412 = vsel %vm872, %v1409, %v1411
      %v1413 = vsel %vm872, %v1411, %v1409
      %v1414 = vmul.f32 %v1412, %v878
      %v1415 = vmul.f32 %v1413, %v882
      %1416 = vrot.lane.b32.xlu0 %v1370, 113
      %v1417 = vpop.permute.xlu0 %1416
      %1418 = vrot.lane.b32.xlu0 %v1371, 113
      %v1419 = vpop.permute.xlu0 %1418
      %v1420 = vsel %vm889, %v1417, %v1419
      %v1421 = vsel %vm889, %v1419, %v1417
      %v1422 = vmul.f32 %v1420, %v895
      %v1423 = vmul.f32 %v1421, %v899
      %1424 = vrot.lane.b32.xlu0 %v1370, 112
      %v1425 = vpop.permute.xlu0 %1424
      %1426 = vrot.lane.b32.xlu0 %v1371, 112
      %v1427 = vpop.permute.xlu0 %1426
      %v1428 = vsel %vm906, %v1425, %v1427
      %v1429 = vsel %vm906, %v1427, %v1425
      %v1430 = vmul.f32 %v1428, %v912
      %v1431 = vmul.f32 %v1429, %v916
      %1432 = vrot.lane.b32.xlu0 %v1370, 111
      %v1433 = vpop.permute.xlu0 %1432
      %1434 = vrot.lane.b32.xlu0 %v1371, 111
      %v1435 = vpop.permute.xlu0 %1434
      %v1436 = vsel %vm923, %v1433, %v1435
      %v1437 = vsel %vm923, %v1435, %v1433
      %v1438 = vmul.f32 %v1436, %v929
      %v1439 = vmul.f32 %v1437, %v933
      %1441 = vset.pattern.permute.xlu0 0
      %1442 = vperm.xlu0 %1441, %v1375
      %v1443 = vpop.permute.xlu0 %1442
      %v1446 = vsel %vm1144, %v1373, 0
      %1448 = vmatprep.subr.mxu0 %v1383
      %1449 = vmatpush1.msra.mxu0 %v1382
      %1450 = vmatprep.subr.mxu0 %v1391
      %1451 = vmatpush1.msra.mxu0 %v1390
      %1452 = vmatprep.subr.mxu0 %v1399
      %1453 = vmatpush1.msra.mxu0 %v1398
      %1454 = vmatprep.subr.mxu0 %v1407
      %1455 = vmatpush1.msra.mxu0 %v1406
      %1456 = vmatprep.subr.mxu0 %v1371
      %1457 = vmatpush1.msra.mxu0 %v1370
      %1458 = vmatprep.subr.mxu0 %v1415
      %1459 = vmatpush1.msra.mxu0 %v1414
      %1460 = vmatprep.subr.mxu0 %v1423
      %1461 = vmatpush1.msra.mxu0 %v1422
      %1462 = vmatprep.subr.mxu0 %v1431
      %1463 = vmatpush1.msra.mxu0 %v1430
      %1464 = vmatprep.subr.mxu0 %v1439
      %1465 = vmatpush1.msra.mxu0 %v1438
      %1466 = vmatprep.subr.mxu0 0.0
      %1467 = vmatpush1.msra.mxu0 0.0
      %1468 = vmatprep.subr.mxu0 0.0
      %1469 = vmatpush1.msra.mxu0 0.0
      %1470 = vmatprep.subr.mxu0 0.0
      %1471 = vmatpush1.msra.mxu0 0.0
      %1472 = vmatprep.subr.mxu0 0.0
      %1473 = vmatpush1.msra.mxu0 0.0
      %1474 = vmatprep.subr.mxu0 0.0
      %1475 = vmatpush1.msra.mxu0 0.0
      %1476 = vmatprep.subr.mxu0 0.0
      %1477 = vmatpush1.msra.mxu0 0.0
      %1478 = vmatprep.subr.mxu0 0.0
      %1479 = vmatpush1.msra.mxu0 0.0
      %1480 = vmatprep.subr.mxu0 0.0
      %1481 = vmatpush1.msra.mxu0 0.0
      %1482 = vmatprep.subr.mxu0 0.0
      %1483 = vmatpush1.msra.mxu0 0.0
      %1484 = vmatprep.subr.mxu0 0.0
      %1485 = vmatpush1.msra.mxu0 0.0
      %1486 = vmatprep.subr.mxu0 0.0
      %1487 = vmatpush1.msra.mxu0 0.0
      %1488 = vmatprep.subr.mxu0 0.0
      %1489 = vmatpush1.msra.mxu0 0.0
      %1490 = vmatprep.subr.mxu0 0.0
      %1491 = vmatpush1.msra.mxu0 0.0
      %1492 = vmatprep.subr.mxu0 0.0
      %1493 = vmatpush1.msra.mxu0 0.0
      %1494 = vmatprep.subr.mxu0 0.0
      %1495 = vmatpush1.msra.mxu0 0.0
      %1496 = vmatprep.subr.mxu0 0.0
      %1497 = vmatpush1.msra.mxu0 0.0
      %1498 = vmatprep.subr.mxu0 0.0
      %1499 = vmatpush1.msra.mxu0 0.0
      %1500 = vmatprep.subr.mxu0 0.0
      %1501 = vmatpush1.msra.mxu0 0.0
      %1502 = vmatprep.subr.mxu0 0.0
      %1503 = vmatpush1.msra.mxu0 0.0
      %1504 = vmatprep.subr.mxu0 0.0
      %1505 = vmatpush1.msra.mxu0 0.0
      %1506 = vmatprep.subr.mxu0 0.0
      %1507 = vmatpush1.msra.mxu0 0.0
      %1508 = vmatprep.subr.mxu0 0.0
      %1509 = vmatpush1.msra.mxu0 0.0
      %1510 = vmatprep.subr.mxu0 0.0
      %1511 = vmatpush1.msra.mxu0 0.0
      %1512 = vmatprep.mubr.f32.mxu0 0.0
      %1513 = vmatmul.mubr.f32.gmra.mrb[0].mxu0 %v1446
      %v1514 = vpop.f32.mrb[0].mxu0
      %v1515 = vadd.f32 %v1443, %v1514
      %v1516 = vpop.f32.mrb[0].mxu0
      %v1517 = vadd.f32 %v1443, %v1516
      %1518 = vdwg.mxu0
      %v1519 = vmax.f32 %v1515, 0.0
      %v1520 = vmax.f32 %v1517, 0.0
      %s1521 = scalar_lea.vmem %s7, 24
      %v1522 = vld [vmem:[%s1521] sm:$0xff]
      %s1523 = scalar_lea.vmem %s8, 24
      %v1524 = vld [vmem:[%s1523] sm:$0xff]
      %1525 = vrot.lane.b32.xlu0 %v1519, 17
      %v1526 = vpop.permute.xlu0 %1525
      %1527 = vrot.lane.b32.xlu0 %v1520, 17
      %v1528 = vpop.permute.xlu0 %1527
      %v1529 = vsel %vm804, %v1526, %v1528
      %v1530 = vsel %vm804, %v1528, %v1526
      %v1531 = vmul.f32 %v1530, %v810
      %v1532 = vmul.f32 %v1529, %v814
      %1533 = vrot.lane.b32.xlu0 %v1519, 16
      %v1534 = vpop.permute.xlu0 %1533
      %1535 = vrot.lane.b32.xlu0 %v1520, 16
      %v1536 = vpop.permute.xlu0 %1535
      %v1537 = vsel %vm821, %v1534, %v1536
      %v1538 = vsel %vm821, %v1536, %v1534
      %v1539 = vmul.f32 %v1538, %v827
      %v1540 = vmul.f32 %v1537, %v831
      %1541 = vrot.lane.b32.xlu0 %v1519, 15
      %v1542 = vpop.permute.xlu0 %1541
      %1543 = vrot.lane.b32.xlu0 %v1520, 15
      %v1544 = vpop.permute.xlu0 %1543
      %v1545 = vsel %vm838, %v1542, %v1544
      %v1546 = vsel %vm838, %v1544, %v1542
      %v1547 = vmul.f32 %v1546, %v844
      %v1548 = vmul.f32 %v1545, %v848
      %1549 = vrot.lane.b32.xlu0 %v1519, 1
      %v1550 = vpop.permute.xlu0 %1549
      %1551 = vrot.lane.b32.xlu0 %v1520, 1
      %v1552 = vpop.permute.xlu0 %1551
      %v1553 = vsel %vm855, %v1550, %v1552
      %v1554 = vsel %vm855, %v1552, %v1550
      %v1555 = vmul.f32 %v1554, %v861
      %v1556 = vmul.f32 %v1553, %v865
      %1557 = vrot.lane.b32.xlu0 %v1519, 127
      %v1558 = vpop.permute.xlu0 %1557
      %1559 = vrot.lane.b32.xlu0 %v1520, 127
      %v1560 = vpop.permute.xlu0 %1559
      %v1561 = vsel %vm872, %v1558, %v1560
      %v1562 = vsel %vm872, %v1560, %v1558
      %v1563 = vmul.f32 %v1561, %v878
      %v1564 = vmul.f32 %v1562, %v882
      %1565 = vrot.lane.b32.xlu0 %v1519, 113
      %v1566 = vpop.permute.xlu0 %1565
      %1567 = vrot.lane.b32.xlu0 %v1520, 113
      %v1568 = vpop.permute.xlu0 %1567
      %v1569 = vsel %vm889, %v1566, %v1568
      %v1570 = vsel %vm889, %v1568, %v1566
      %v1571 = vmul.f32 %v1569, %v895
      %v1572 = vmul.f32 %v1570, %v899
      %1573 = vrot.lane.b32.xlu0 %v1519, 112
      %v1574 = vpop.permute.xlu0 %1573
      %1575 = vrot.lane.b32.xlu0 %v1520, 112
      %v1576 = vpop.permute.xlu0 %1575
      %v1577 = vsel %vm906, %v1574, %v1576
      %v1578 = vsel %vm906, %v1576, %v1574
      %v1579 = vmul.f32 %v1577, %v912
      %v1580 = vmul.f32 %v1578, %v916
      %1581 = vrot.lane.b32.xlu0 %v1519, 111
      %v1582 = vpop.permute.xlu0 %1581
      %1583 = vrot.lane.b32.xlu0 %v1520, 111
      %v1584 = vpop.permute.xlu0 %1583
      %v1585 = vsel %vm923, %v1582, %v1584
      %v1586 = vsel %vm923, %v1584, %v1582
      %v1587 = vmul.f32 %v1585, %v929
      %v1588 = vmul.f32 %v1586, %v933
      %1590 = vset.pattern.permute.xlu0 0
      %1591 = vperm.xlu0 %1590, %v1524
      %v1592 = vpop.permute.xlu0 %1591
      %v1595 = vsel %vm1144, %v1522, 0
      %1597 = vmatprep.subr.mxu0 %v1532
      %1598 = vmatpush1.msra.mxu0 %v1531
      %1599 = vmatprep.subr.mxu0 %v1540
      %1600 = vmatpush1.msra.mxu0 %v1539
      %1601 = vmatprep.subr.mxu0 %v1548
      %1602 = vmatpush1.msra.mxu0 %v1547
      %1603 = vmatprep.subr.mxu0 %v1556
      %1604 = vmatpush1.msra.mxu0 %v1555
      %1605 = vmatprep.subr.mxu0 %v1520
      %1606 = vmatpush1.msra.mxu0 %v1519
      %1607 = vmatprep.subr.mxu0 %v1564
      %1608 = vmatpush1.msra.mxu0 %v1563
      %1609 = vmatprep.subr.mxu0 %v1572
      %1610 = vmatpush1.msra.mxu0 %v1571
      %1611 = vmatprep.subr.mxu0 %v1580
      %1612 = vmatpush1.msra.mxu0 %v1579
      %1613 = vmatprep.subr.mxu0 %v1588
      %1614 = vmatpush1.msra.mxu0 %v1587
      %1615 = vmatprep.subr.mxu0 0.0
      %1616 = vmatpush1.msra.mxu0 0.0
      %1617 = vmatprep.subr.mxu0 0.0
      %1618 = vmatpush1.msra.mxu0 0.0
      %1619 = vmatprep.subr.mxu0 0.0
      %1620 = vmatpush1.msra.mxu0 0.0
      %1621 = vmatprep.subr.mxu0 0.0
      %1622 = vmatpush1.msra.mxu0 0.0
      %1623 = vmatprep.subr.mxu0 0.0
      %1624 = vmatpush1.msra.mxu0 0.0
      %1625 = vmatprep.subr.mxu0 0.0
      %1626 = vmatpush1.msra.mxu0 0.0
      %1627 = vmatprep.subr.mxu0 0.0
      %1628 = vmatpush1.msra.mxu0 0.0
      %1629 = vmatprep.subr.mxu0 0.0
      %1630 = vmatpush1.msra.mxu0 0.0
      %1631 = vmatprep.subr.mxu0 0.0
      %1632 = vmatpush1.msra.mxu0 0.0
      %1633 = vmatprep.subr.mxu0 0.0
      %1634 = vmatpush1.msra.mxu0 0.0
      %1635 = vmatprep.subr.mxu0 0.0
      %1636 = vmatpush1.msra.mxu0 0.0
      %1637 = vmatprep.subr.mxu0 0.0
      %1638 = vmatpush1.msra.mxu0 0.0
      %1639 = vmatprep.subr.mxu0 0.0
      %1640 = vmatpush1.msra.mxu0 0.0
      %1641 = vmatprep.subr.mxu0 0.0
      %1642 = vmatpush1.msra.mxu0 0.0
      %1643 = vmatprep.subr.mxu0 0.0
      %1644 = vmatpush1.msra.mxu0 0.0
      %1645 = vmatprep.subr.mxu0 0.0
      %1646 = vmatpush1.msra.mxu0 0.0
      %1647 = vmatprep.subr.mxu0 0.0
      %1648 = vmatpush1.msra.mxu0 0.0
      %1649 = vmatprep.subr.mxu0 0.0
      %1650 = vmatpush1.msra.mxu0 0.0
      %1651 = vmatprep.subr.mxu0 0.0
      %1652 = vmatpush1.msra.mxu0 0.0
      %1653 = vmatprep.subr.mxu0 0.0
      %1654 = vmatpush1.msra.mxu0 0.0
      %1655 = vmatprep.subr.mxu0 0.0
      %1656 = vmatpush1.msra.mxu0 0.0
      %1657 = vmatprep.subr.mxu0 0.0
      %1658 = vmatpush1.msra.mxu0 0.0
      %1659 = vmatprep.subr.mxu0 0.0
      %1660 = vmatpush1.msra.mxu0 0.0
      %1661 = vmatprep.mubr.f32.mxu0 0.0
      %1662 = vmatmul.mubr.f32.gmra.mrb[0].mxu0 %v1595
      %v1663 = vpop.f32.mrb[0].mxu0
      %v1664 = vadd.f32 %v1592, %v1663
      %v1665 = vpop.f32.mrb[0].mxu0
      %v1666 = vadd.f32 %v1592, %v1665
      %1667 = vdwg.mxu0
      %v1668 = vmul.f32 %v1664, 0.1
      %v1669 = vmul.f32 %v1666, 0.1
      %v1670 = vadd.f32 %v1668, %v1370
      %v1671 = vadd.f32 %v1669, %v1371
      %s1672 = scalar_lea.vmem %s7, 32
      %v1673 = vld [vmem:[%s1672] sm:$0xff]
      %s1674 = scalar_lea.vmem %s8, 32
      %v1675 = vld [vmem:[%s1674] sm:$0xff]
      %1676 = vrot.lane.b32.xlu0 %v1670, 17
      %v1677 = vpop.permute.xlu0 %1676
      %1678 = vrot.lane.b32.xlu0 %v1671, 17
      %v1679 = vpop.permute.xlu0 %1678
      %v1680 = vsel %vm804, %v1677, %v1679
      %v1681 = vsel %vm804, %v1679, %v1677
      %v1682 = vmul.f32 %v1681, %v810
      %v1683 = vmul.f32 %v1680, %v814
      %1684 = vrot.lane.b32.xlu0 %v1670, 16
      %v1685 = vpop.permute.xlu0 %1684
      %1686 = vrot.lane.b32.xlu0 %v1671, 16
      %v1687 = vpop.permute.xlu0 %1686
      %v1688 = vsel %vm821, %v1685, %v1687
      %v1689 = vsel %vm821, %v1687, %v1685
      %v1690 = vmul.f32 %v1689, %v827
      %v1691 = vmul.f32 %v1688, %v831
      %1692 = vrot.lane.b32.xlu0 %v1670, 15
      %v1693 = vpop.permute.xlu0 %1692
      %1694 = vrot.lane.b32.xlu0 %v1671, 15
      %v1695 = vpop.permute.xlu0 %1694
      %v1696 = vsel %vm838, %v1693, %v1695
      %v1697 = vsel %vm838, %v1695, %v1693
      %v1698 = vmul.f32 %v1697, %v844
      %v1699 = vmul.f32 %v1696, %v848
      %1700 = vrot.lane.b32.xlu0 %v1670, 1
      %v1701 = vpop.permute.xlu0 %1700
      %1702 = vrot.lane.b32.xlu0 %v1671, 1
      %v1703 = vpop.permute.xlu0 %1702
      %v1704 = vsel %vm855, %v1701, %v1703
      %v1705 = vsel %vm855, %v1703, %v1701
      %v1706 = vmul.f32 %v1705, %v861
      %v1707 = vmul.f32 %v1704, %v865
      %1708 = vrot.lane.b32.xlu0 %v1670, 127
      %v1709 = vpop.permute.xlu0 %1708
      %1710 = vrot.lane.b32.xlu0 %v1671, 127
      %v1711 = vpop.permute.xlu0 %1710
      %v1712 = vsel %vm872, %v1709, %v1711
      %v1713 = vsel %vm872, %v1711, %v1709
      %v1714 = vmul.f32 %v1712, %v878
      %v1715 = vmul.f32 %v1713, %v882
      %1716 = vrot.lane.b32.xlu0 %v1670, 113
      %v1717 = vpop.permute.xlu0 %1716
      %1718 = vrot.lane.b32.xlu0 %v1671, 113
      %v1719 = vpop.permute.xlu0 %1718
      %v1720 = vsel %vm889, %v1717, %v1719
      %v1721 = vsel %vm889, %v1719, %v1717
      %v1722 = vmul.f32 %v1720, %v895
      %v1723 = vmul.f32 %v1721, %v899
      %1724 = vrot.lane.b32.xlu0 %v1670, 112
      %v1725 = vpop.permute.xlu0 %1724
      %1726 = vrot.lane.b32.xlu0 %v1671, 112
      %v1727 = vpop.permute.xlu0 %1726
      %v1728 = vsel %vm906, %v1725, %v1727
      %v1729 = vsel %vm906, %v1727, %v1725
      %v1730 = vmul.f32 %v1728, %v912
      %v1731 = vmul.f32 %v1729, %v916
      %1732 = vrot.lane.b32.xlu0 %v1670, 111
      %v1733 = vpop.permute.xlu0 %1732
      %1734 = vrot.lane.b32.xlu0 %v1671, 111
      %v1735 = vpop.permute.xlu0 %1734
      %v1736 = vsel %vm923, %v1733, %v1735
      %v1737 = vsel %vm923, %v1735, %v1733
      %v1738 = vmul.f32 %v1736, %v929
      %v1739 = vmul.f32 %v1737, %v933
      %1741 = vset.pattern.permute.xlu0 0
      %1742 = vperm.xlu0 %1741, %v1675
      %v1743 = vpop.permute.xlu0 %1742
      %v1746 = vsel %vm1144, %v1673, 0
      %1748 = vmatprep.subr.mxu0 %v1683
      %1749 = vmatpush1.msra.mxu0 %v1682
      %1750 = vmatprep.subr.mxu0 %v1691
      %1751 = vmatpush1.msra.mxu0 %v1690
      %1752 = vmatprep.subr.mxu0 %v1699
      %1753 = vmatpush1.msra.mxu0 %v1698
      %1754 = vmatprep.subr.mxu0 %v1707
      %1755 = vmatpush1.msra.mxu0 %v1706
      %1756 = vmatprep.subr.mxu0 %v1671
      %1757 = vmatpush1.msra.mxu0 %v1670
      %1758 = vmatprep.subr.mxu0 %v1715
      %1759 = vmatpush1.msra.mxu0 %v1714
      %1760 = vmatprep.subr.mxu0 %v1723
      %1761 = vmatpush1.msra.mxu0 %v1722
      %1762 = vmatprep.subr.mxu0 %v1731
      %1763 = vmatpush1.msra.mxu0 %v1730
      %1764 = vmatprep.subr.mxu0 %v1739
      %1765 = vmatpush1.msra.mxu0 %v1738
      %1766 = vmatprep.subr.mxu0 0.0
      %1767 = vmatpush1.msra.mxu0 0.0
      %1768 = vmatprep.subr.mxu0 0.0
      %1769 = vmatpush1.msra.mxu0 0.0
      %1770 = vmatprep.subr.mxu0 0.0
      %1771 = vmatpush1.msra.mxu0 0.0
      %1772 = vmatprep.subr.mxu0 0.0
      %1773 = vmatpush1.msra.mxu0 0.0
      %1774 = vmatprep.subr.mxu0 0.0
      %1775 = vmatpush1.msra.mxu0 0.0
      %1776 = vmatprep.subr.mxu0 0.0
      %1777 = vmatpush1.msra.mxu0 0.0
      %1778 = vmatprep.subr.mxu0 0.0
      %1779 = vmatpush1.msra.mxu0 0.0
      %1780 = vmatprep.subr.mxu0 0.0
      %1781 = vmatpush1.msra.mxu0 0.0
      %1782 = vmatprep.subr.mxu0 0.0
      %1783 = vmatpush1.msra.mxu0 0.0
      %1784 = vmatprep.subr.mxu0 0.0
      %1785 = vmatpush1.msra.mxu0 0.0
      %1786 = vmatprep.subr.mxu0 0.0
      %1787 = vmatpush1.msra.mxu0 0.0
      %1788 = vmatprep.subr.mxu0 0.0
      %1789 = vmatpush1.msra.mxu0 0.0
      %1790 = vmatprep.subr.mxu0 0.0
      %1791 = vmatpush1.msra.mxu0 0.0
      %1792 = vmatprep.subr.mxu0 0.0
      %1793 = vmatpush1.msra.mxu0 0.0
      %1794 = vmatprep.subr.mxu0 0.0
      %1795 = vmatpush1.msra.mxu0 0.0
      %1796 = vmatprep.subr.mxu0 0.0
      %1797 = vmatpush1.msra.mxu0 0.0
      %1798 = vmatprep.subr.mxu0 0.0
      %1799 = vmatpush1.msra.mxu0 0.0
      %1800 = vmatprep.subr.mxu0 0.0
      %1801 = vmatpush1.msra.mxu0 0.0
      %1802 = vmatprep.subr.mxu0 0.0
      %1803 = vmatpush1.msra.mxu0 0.0
      %1804 = vmatprep.subr.mxu0 0.0
      %1805 = vmatpush1.msra.mxu0 0.0
      %1806 = vmatprep.subr.mxu0 0.0
      %1807 = vmatpush1.msra.mxu0 0.0
      %1808 = vmatprep.subr.mxu0 0.0
      %1809 = vmatpush1.msra.mxu0 0.0
      %1810 = vmatprep.subr.mxu0 0.0
      %1811 = vmatpush1.msra.mxu0 0.0
      %1812 = vmatprep.mubr.f32.mxu0 0.0
      %1813 = vmatmul.mubr.f32.gmra.mrb[0].mxu0 %v1746
      %v1814 = vpop.f32.mrb[0].mxu0
      %v1815 = vadd.f32 %v1743, %v1814
      %v1816 = vpop.f32.mrb[0].mxu0
      %v1817 = vadd.f32 %v1743, %v1816
      %1818 = vdwg.mxu0
      %v1819 = vadd.f32 %v1815, %v1069
      %v1820 = vadd.f32 %v1817, %v1071
      %1821 = vrot.lane.b32.xlu0 %v1819, 17
      %v1822 = vpop.permute.xlu0 %1821
      %1823 = vrot.lane.b32.xlu0 %v1820, 17
      %v1824 = vpop.permute.xlu0 %1823
      %v1825 = vsel %vm804, %v1822, %v1824
      %v1826 = vsel %vm804, %v1824, %v1822
      %v1827 = vmul.f32 %v1826, %v810
      %v1828 = vmul.f32 %v1825, %v814
      %1829 = vrot.lane.b32.xlu0 %v1819, 16
      %v1830 = vpop.permute.xlu0 %1829
      %1831 = vrot.lane.b32.xlu0 %v1820, 16
      %v1832 = vpop.permute.xlu0 %1831
      %v1833 = vsel %vm821, %v1830, %v1832
      %v1834 = vsel %vm821, %v1832, %v1830
      %v1835 = vmul.f32 %v1834, %v827
      %v1836 = vmul.f32 %v1833, %v831
      %1837 = vrot.lane.b32.xlu0 %v1819, 15
      %v1838 = vpop.permute.xlu0 %1837
      %1839 = vrot.lane.b32.xlu0 %v1820, 15
      %v1840 = vpop.permute.xlu0 %1839
      %v1841 = vsel %vm838, %v1838, %v1840
      %v1842 = vsel %vm838, %v1840, %v1838
      %v1843 = vmul.f32 %v1842, %v844
      %v1844 = vmul.f32 %v1841, %v848
      %1845 = vrot.lane.b32.xlu0 %v1819, 1
      %v1846 = vpop.permute.xlu0 %1845
      %1847 = vrot.lane.b32.xlu0 %v1820, 1
      %v1848 = vpop.permute.xlu0 %1847
      %v1849 = vsel %vm855, %v1846, %v1848
      %v1850 = vsel %vm855, %v1848, %v1846
      %v1851 = vmul.f32 %v1850, %v861
      %v1852 = vmul.f32 %v1849, %v865
      %1853 = vrot.lane.b32.xlu0 %v1819, 127
      %v1854 = vpop.permute.xlu0 %1853
      %1855 = vrot.lane.b32.xlu0 %v1820, 127
      %v1856 = vpop.permute.xlu0 %1855
      %v1857 = vsel %vm872, %v1854, %v1856
      %v1858 = vsel %vm872, %v1856, %v1854
      %v1859 = vmul.f32 %v1857, %v878
      %v1860 = vmul.f32 %v1858, %v882
      %1861 = vrot.lane.b32.xlu0 %v1819, 113
      %v1862 = vpop.permute.xlu0 %1861
      %1863 = vrot.lane.b32.xlu0 %v1820, 113
      %v1864 = vpop.permute.xlu0 %1863
      %v1865 = vsel %vm889, %v1862, %v1864
      %v1866 = vsel %vm889, %v1864, %v1862
      %v1867 = vmul.f32 %v1865, %v895
      %v1868 = vmul.f32 %v1866, %v899
      %1869 = vrot.lane.b32.xlu0 %v1819, 112
      %v1870 = vpop.permute.xlu0 %1869
      %1871 = vrot.lane.b32.xlu0 %v1820, 112
      %v1872 = vpop.permute.xlu0 %1871
      %v1873 = vsel %vm906, %v1870, %v1872
      %v1874 = vsel %vm906, %v1872, %v1870
      %v1875 = vmul.f32 %v1873, %v912
      %v1876 = vmul.f32 %v1874, %v916
      %1877 = vrot.lane.b32.xlu0 %v1819, 111
      %v1878 = vpop.permute.xlu0 %1877
      %1879 = vrot.lane.b32.xlu0 %v1820, 111
      %v1880 = vpop.permute.xlu0 %1879
      %v1881 = vsel %vm923, %v1878, %v1880
      %v1882 = vsel %vm923, %v1880, %v1878
      %v1883 = vmul.f32 %v1881, %v929
      %v1884 = vmul.f32 %v1882, %v933
      %1886 = vset.pattern.permute.xlu0 0
      %1887 = vperm.xlu0 %1886, %v588
      %v1888 = vpop.permute.xlu0 %1887
      %v1891 = vsel %vm1144, %v587, 0
      %1893 = vmatprep.subr.mxu0 %v1828
      %1894 = vmatpush1.msra.mxu0 %v1827
      %1895 = vmatprep.subr.mxu0 %v1836
      %1896 = vmatpush1.msra.mxu0 %v1835
      %1897 = vmatprep.subr.mxu0 %v1844
      %1898 = vmatpush1.msra.mxu0 %v1843
      %1899 = vmatprep.subr.mxu0 %v1852
      %1900 = vmatpush1.msra.mxu0 %v1851
      %1901 = vmatprep.subr.mxu0 %v1820
      %1902 = vmatpush1.msra.mxu0 %v1819
      %1903 = vmatprep.subr.mxu0 %v1860
      %1904 = vmatpush1.msra.mxu0 %v1859
      %1905 = vmatprep.subr.mxu0 %v1868
      %1906 = vmatpush1.msra.mxu0 %v1867
      %1907 = vmatprep.subr.mxu0 %v1876
      %1908 = vmatpush1.msra.mxu0 %v1875
      %1909 = vmatprep.subr.mxu0 %v1884
      %1910 = vmatpush1.msra.mxu0 %v1883
      %1911 = vmatprep.subr.mxu0 0.0
      %1912 = vmatpush1.msra.mxu0 0.0
      %1913 = vmatprep.subr.mxu0 0.0
      %1914 = vmatpush1.msra.mxu0 0.0
      %1915 = vmatprep.subr.mxu0 0.0
      %1916 = vmatpush1.msra.mxu0 0.0
      %1917 = vmatprep.subr.mxu0 0.0
      %1918 = vmatpush1.msra.mxu0 0.0
      %1919 = vmatprep.subr.mxu0 0.0
      %1920 = vmatpush1.msra.mxu0 0.0
      %1921 = vmatprep.subr.mxu0 0.0
      %1922 = vmatpush1.msra.mxu0 0.0
      %1923 = vmatprep.subr.mxu0 0.0
      %1924 = vmatpush1.msra.mxu0 0.0
      %1925 = vmatprep.subr.mxu0 0.0
      %1926 = vmatpush1.msra.mxu0 0.0
      %1927 = vmatprep.subr.mxu0 0.0
      %1928 = vmatpush1.msra.mxu0 0.0
      %1929 = vmatprep.subr.mxu0 0.0
      %1930 = vmatpush1.msra.mxu0 0.0
      %1931 = vmatprep.subr.mxu0 0.0
      %1932 = vmatpush1.msra.mxu0 0.0
      %1933 = vmatprep.subr.mxu0 0.0
      %1934 = vmatpush1.msra.mxu0 0.0
      %1935 = vmatprep.subr.mxu0 0.0
      %1936 = vmatpush1.msra.mxu0 0.0
      %1937 = vmatprep.subr.mxu0 0.0
      %1938 = vmatpush1.msra.mxu0 0.0
      %1939 = vmatprep.subr.mxu0 0.0
      %1940 = vmatpush1.msra.mxu0 0.0
      %1941 = vmatprep.subr.mxu0 0.0
      %1942 = vmatpush1.msra.mxu0 0.0
      %1943 = vmatprep.subr.mxu0 0.0
      %1944 = vmatpush1.msra.mxu0 0.0
      %1945 = vmatprep.subr.mxu0 0.0
      %1946 = vmatpush1.msra.mxu0 0.0
      %1947 = vmatprep.subr.mxu0 0.0
      %1948 = vmatpush1.msra.mxu0 0.0
      %1949 = vmatprep.subr.mxu0 0.0
      %1950 = vmatpush1.msra.mxu0 0.0
      %1951 = vmatprep.subr.mxu0 0.0
      %1952 = vmatpush1.msra.mxu0 0.0
      %1953 = vmatprep.subr.mxu0 0.0
      %1954 = vmatpush1.msra.mxu0 0.0
      %1955 = vmatprep.subr.mxu0 0.0
      %1956 = vmatpush1.msra.mxu0 0.0
      %1957 = vmatprep.mubr.f32.mxu0 0.0
      %1958 = vmatmul.mubr.f32.gmra.mrb[0].mxu0 %v1891
      %v1959 = vpop.f32.mrb[0].mxu0
      %v1960 = vadd.f32 %v1888, %v1959
      %v1961 = vpop.f32.mrb[0].mxu0
      %v1962 = vadd.f32 %v1888, %v1961
      %1963 = vdwg.mxu0
      %v1964 = vsub.f32 %v1960, %v794
      %v1965 = vsub.f32 %v1962, %v795
      %v1966 = vmul.f32 %v1964, 0.5
      %v1967 = vmul.f32 %v1965, 0.5
      %v1968 = vadd.f32 %v771, %v1966
      %v1969 = vadd.f32 %v772, %v1967
      %v1970 = vmul.f32 %v1968, 0.5
      %v1971 = vmul.f32 %v1969, 0.5
      %v1974 = vcombine.low %v1970, %v1971
      %v1976 = vunpack.c.l.s4 1983009808
      %v1977 = vunpack.c.0.s8 %v1976
      %v1978 = vlaneseq
      %v1979 = vshrl.u32 %v1978, 7
      %v1980 = vsub.s32 %v1977, %v1979
      %v1981 = vrot.slane %v1974, %v1980
      %v1983 = vsub.f32 %v786, %v1981
      %v1986 = vunpack.c.l.s4 1983009808
      %v1987 = vunpack.c.0.s8 %v1986
      %v1988 = vlaneseq
      %v1989 = vshrl.u32 %v1988, 7
      %v1990 = vsub.s32 %v1987, %v1989
      %v1991 = vrot.slane %v1983, %v1990
      %v1992 = vcombine.high %v1991, %v1991
      %1995 = vmatprep.subr.mxu0 %v457
      %1996 = vmatpush1.msra.mxu0 %v456
      %1997 = vmatprep.subr.mxu0 %v459
      %1998 = vmatpush1.msra.mxu0 %v458
      %1999 = vmatprep.subr.mxu0 %v461
      %2000 = vmatpush1.msra.mxu0 %v460
      %2001 = vmatprep.subr.mxu0 %v463
      %2002 = vmatpush1.msra.mxu0 %v462
      %2003 = vmatprep.subr.mxu0 %v465
      %2004 = vmatpush1.msra.mxu0 %v464
      %2005 = vmatprep.subr.mxu0 %v467
      %2006 = vmatpush1.msra.mxu0 %v466
      %2007 = vmatprep.subr.mxu0 %v469
      %2008 = vmatpush1.msra.mxu0 %v468
      %2009 = vmatprep.subr.mxu0 %v471
      %2010 = vmatpush1.msra.mxu0 %v470
      %2011 = vmatprep.subr.mxu0 %v473
      %2012 = vmatpush1.msra.mxu0 %v472
      %2013 = vmatprep.subr.mxu0 %v475
      %2014 = vmatpush1.msra.mxu0 %v474
      %2015 = vmatprep.subr.mxu0 %v477
      %2016 = vmatpush1.msra.mxu0 %v476
      %2017 = vmatprep.subr.mxu0 %v479
      %2018 = vmatpush1.msra.mxu0 %v478
      %2019 = vmatprep.subr.mxu0 %v481
      %2020 = vmatpush1.msra.mxu0 %v480
      %2021 = vmatprep.subr.mxu0 %v483
      %2022 = vmatpush1.msra.mxu0 %v482
      %2023 = vmatprep.subr.mxu0 %v485
      %2024 = vmatpush1.msra.mxu0 %v484
      %2025 = vmatprep.subr.mxu0 %v487
      %2026 = vmatpush1.msra.mxu0 %v486
      %2027 = vmatprep.subr.mxu0 %v489
      %2028 = vmatpush1.msra.mxu0 %v488
      %2029 = vmatprep.subr.mxu0 %v491
      %2030 = vmatpush1.msra.mxu0 %v490
      %2031 = vmatprep.subr.mxu0 %v493
      %2032 = vmatpush1.msra.mxu0 %v492
      %2033 = vmatprep.subr.mxu0 %v495
      %2034 = vmatpush1.msra.mxu0 %v494
      %2035 = vmatprep.subr.mxu0 %v497
      %2036 = vmatpush1.msra.mxu0 %v496
      %2037 = vmatprep.subr.mxu0 %v499
      %2038 = vmatpush1.msra.mxu0 %v498
      %2039 = vmatprep.subr.mxu0 %v501
      %2040 = vmatpush1.msra.mxu0 %v500
      %2041 = vmatprep.subr.mxu0 %v503
      %2042 = vmatpush1.msra.mxu0 %v502
      %2043 = vmatprep.subr.mxu0 %v505
      %2044 = vmatpush1.msra.mxu0 %v504
      %2045 = vmatprep.subr.mxu0 %v507
      %2046 = vmatpush1.msra.mxu0 %v506
      %2047 = vmatprep.subr.mxu0 %v509
      %2048 = vmatpush1.msra.mxu0 %v508
      %2049 = vmatprep.subr.mxu0 %v511
      %2050 = vmatpush1.msra.mxu0 %v510
      %2051 = vmatprep.subr.mxu0 %v513
      %2052 = vmatpush1.msra.mxu0 %v512
      %2053 = vmatprep.subr.mxu0 %v515
      %2054 = vmatpush1.msra.mxu0 %v514
      %2055 = vmatprep.subr.mxu0 %v517
      %2056 = vmatpush1.msra.mxu0 %v516
      %2057 = vmatprep.subr.mxu0 %v519
      %2058 = vmatpush1.msra.mxu0 %v518
      %2059 = vmatprep.mubr.f32.mxu0 %v1992
      %2060 = vmatmul.mubr.f32.gmra.mrb[0].mxu0 %v1991
      %v2061 = vpop.f32.mrb[0].mxu0
      %v2062 = vadd.f32 0.0, %v2061
      %v2063 = vpop.f32.mrb[0].mxu0
      %v2064 = vadd.f32 0.0, %v2063
      %2065 = vdwg.mxu0
      %2066 = vmatprep.subr.mxu0 %v521
      %2067 = vmatpush1.msra.mxu0 %v520
      %2068 = vmatprep.subr.mxu0 %v523
      %2069 = vmatpush1.msra.mxu0 %v522
      %2070 = vmatprep.subr.mxu0 %v525
      %2071 = vmatpush1.msra.mxu0 %v524
      %2072 = vmatprep.subr.mxu0 %v527
      %2073 = vmatpush1.msra.mxu0 %v526
      %2074 = vmatprep.subr.mxu0 %v529
      %2075 = vmatpush1.msra.mxu0 %v528
      %2076 = vmatprep.subr.mxu0 %v531
      %2077 = vmatpush1.msra.mxu0 %v530
      %2078 = vmatprep.subr.mxu0 %v533
      %2079 = vmatpush1.msra.mxu0 %v532
      %2080 = vmatprep.subr.mxu0 %v535
      %2081 = vmatpush1.msra.mxu0 %v534
      %2082 = vmatprep.subr.mxu0 %v537
      %2083 = vmatpush1.msra.mxu0 %v536
      %2084 = vmatprep.subr.mxu0 %v539
      %2085 = vmatpush1.msra.mxu0 %v538
      %2086 = vmatprep.subr.mxu0 %v541
      %2087 = vmatpush1.msra.mxu0 %v540
      %2088 = vmatprep.subr.mxu0 %v543
      %2089 = vmatpush1.msra.mxu0 %v542
      %2090 = vmatprep.subr.mxu0 %v545
      %2091 = vmatpush1.msra.mxu0 %v544
      %2092 = vmatprep.subr.mxu0 %v547
      %2093 = vmatpush1.msra.mxu0 %v546
      %2094 = vmatprep.subr.mxu0 %v549
      %2095 = vmatpush1.msra.mxu0 %v548
      %2096 = vmatprep.subr.mxu0 %v551
      %2097 = vmatpush1.msra.mxu0 %v550
      %2098 = vmatprep.subr.mxu0 %v553
      %2099 = vmatpush1.msra.mxu0 %v552
      %2100 = vmatprep.subr.mxu0 %v555
      %2101 = vmatpush1.msra.mxu0 %v554
      %2102 = vmatprep.subr.mxu0 %v557
      %2103 = vmatpush1.msra.mxu0 %v556
      %2104 = vmatprep.subr.mxu0 %v559
      %2105 = vmatpush1.msra.mxu0 %v558
      %2106 = vmatprep.subr.mxu0 %v561
      %2107 = vmatpush1.msra.mxu0 %v560
      %2108 = vmatprep.subr.mxu0 %v563
      %2109 = vmatpush1.msra.mxu0 %v562
      %2110 = vmatprep.subr.mxu0 %v565
      %2111 = vmatpush1.msra.mxu0 %v564
      %2112 = vmatprep.subr.mxu0 %v567
      %2113 = vmatpush1.msra.mxu0 %v566
      %2114 = vmatprep.subr.mxu0 %v569
      %2115 = vmatpush1.msra.mxu0 %v568
      %2116 = vmatprep.subr.mxu0 %v571
      %2117 = vmatpush1.msra.mxu0 %v570
      %2118 = vmatprep.subr.mxu0 %v573
      %2119 = vmatpush1.msra.mxu0 %v572
      %2120 = vmatprep.subr.mxu0 %v575
      %2121 = vmatpush1.msra.mxu0 %v574
      %2122 = vmatprep.subr.mxu0 %v577
      %2123 = vmatpush1.msra.mxu0 %v576
      %2124 = vmatprep.subr.mxu0 %v579
      %2125 = vmatpush1.msra.mxu0 %v578
      %2126 = vmatprep.subr.mxu0 %v581
      %2127 = vmatpush1.msra.mxu0 %v580
      %2128 = vmatprep.subr.mxu0 %v583
      %2129 = vmatpush1.msra.mxu0 %v582
      %2130 = vmatprep.mubr.f32.mxu0 %v1992
      %2131 = vmatmul.mubr.f32.gmra.mrb[0].mxu0 %v1991
      %v2132 = vpop.f32.mrb[0].mxu0
      %v2133 = vadd.f32 0.0, %v2132
      %v2134 = vpop.f32.mrb[0].mxu0
      %v2135 = vadd.f32 0.0, %v2134
      %2136 = vdwg.mxu0
      %v2139 = vrot.slane %v2133, 1
      %v2140 = vrot.slane %v2135, 1
      %v2143 = vsub.f32 %v2062, %v2139
      %v2144 = vsub.f32 %v2064, %v2140
      %v2145 = vrot.slane %v2133, 7
      %v2146 = vrot.slane %v2135, 7
      %v2149 = vadd.f32 %v2062, %v2145
      %v2150 = vadd.f32 %v2064, %v2146
      %v2151 = vsel %vm757, %v2143, %v2149
      %v2152 = vsel %vm757, %v2144, %v2150
      %v2153 = vsub.f32 %v2151, %v767
      %v2154 = vsub.f32 %v2152, %v768
      %v2155 = vmul.f32 %v2153, 0.5
      %v2156 = vmul.f32 %v2154, 0.5
      %v2159 = vcombine.low %v2155, %v2156
      %v2161 = vunpack.c.l.s4 1983009808
      %v2162 = vunpack.c.0.s8 %v2161
      %v2163 = vlaneseq
      %v2164 = vshrl.u32 %v2163, 7
      %v2165 = vsub.s32 %v2162, %v2164
      %v2166 = vrot.slane %v2159, %v2165
      %v2168 = vsub.f32 %v1983, %v2166
      %v2171 = vunpack.c.l.s4 1983009808
      %v2172 = vunpack.c.0.s8 %v2171
      %v2173 = vlaneseq
      %v2174 = vshrl.u32 %v2173, 7
      %v2175 = vsub.s32 %v2172, %v2174
      %v2176 = vrot.slane %v2168, %v2175
      %v2177 = vcombine.high %v2176, %v2176
      %2180 = vrot.lane.b32.xlu0 %v2176, 17
      %v2181 = vpop.permute.xlu0 %2180
      %2182 = vrot.lane.b32.xlu0 %v2177, 17
      %v2183 = vpop.permute.xlu0 %2182
      %v2184 = vsel %vm804, %v2181, %v2183
      %v2185 = vsel %vm804, %v2183, %v2181
      %v2186 = vmul.f32 %v2185, %v810
      %v2187 = vmul.f32 %v2184, %v814
      %2188 = vrot.lane.b32.xlu0 %v2176, 16
      %v2189 = vpop.permute.xlu0 %2188
      %2190 = vrot.lane.b32.xlu0 %v2177, 16
      %v2191 = vpop.permute.xlu0 %2190
      %v2192 = vsel %vm821, %v2189, %v2191
      %v2193 = vsel %vm821, %v2191, %v2189
      %v2194 = vmul.f32 %v2193, %v827
      %v2195 = vmul.f32 %v2192, %v831
      %2196 = vrot.lane.b32.xlu0 %v2176, 15
      %v2197 = vpop.permute.xlu0 %2196
      %2198 = vrot.lane.b32.xlu0 %v2177, 15
      %v2199 = vpop.permute.xlu0 %2198
      %v2200 = vsel %vm838, %v2197, %v2199
      %v2201 = vsel %vm838, %v2199, %v2197
      %v2202 = vmul.f32 %v2201, %v844
      %v2203 = vmul.f32 %v2200, %v848
      %2204 = vrot.lane.b32.xlu0 %v2176, 1
      %v2205 = vpop.permute.xlu0 %2204
      %2206 = vrot.lane.b32.xlu0 %v2177, 1
      %v2207 = vpop.permute.xlu0 %2206
      %v2208 = vsel %vm855, %v2205, %v2207
      %v2209 = vsel %vm855, %v2207, %v2205
      %v2210 = vmul.f32 %v2209, %v861
      %v2211 = vmul.f32 %v2208, %v865
      %2212 = vrot.lane.b32.xlu0 %v2176, 127
      %v2213 = vpop.permute.xlu0 %2212
      %2214 = vrot.lane.b32.xlu0 %v2177, 127
      %v2215 = vpop.permute.xlu0 %2214
      %v2216 = vsel %vm872, %v2213, %v2215
      %v2217 = vsel %vm872, %v2215, %v2213
      %v2218 = vmul.f32 %v2216, %v878
      %v2219 = vmul.f32 %v2217, %v882
      %2220 = vrot.lane.b32.xlu0 %v2176, 113
      %v2221 = vpop.permute.xlu0 %2220
      %2222 = vrot.lane.b32.xlu0 %v2177, 113
      %v2223 = vpop.permute.xlu0 %2222
      %v2224 = vsel %vm889, %v2221, %v2223
      %v2225 = vsel %vm889, %v2223, %v2221
      %v2226 = vmul.f32 %v2224, %v895
      %v2227 = vmul.f32 %v2225, %v899
      %2228 = vrot.lane.b32.xlu0 %v2176, 112
      %v2229 = vpop.permute.xlu0 %2228
      %2230 = vrot.lane.b32.xlu0 %v2177, 112
      %v2231 = vpop.permute.xlu0 %2230
      %v2232 = vsel %vm906, %v2229, %v2231
      %v2233 = vsel %vm906, %v2231, %v2229
      %v2234 = vmul.f32 %v2232, %v912
      %v2235 = vmul.f32 %v2233, %v916
      %2236 = vrot.lane.b32.xlu0 %v2176, 111
      %v2237 = vpop.permute.xlu0 %2236
      %2238 = vrot.lane.b32.xlu0 %v2177, 111
      %v2239 = vpop.permute.xlu0 %2238
      %v2240 = vsel %vm923, %v2237, %v2239
      %v2241 = vsel %vm923, %v2239, %v2237
      %v2242 = vmul.f32 %v2240, %v929
      %v2243 = vmul.f32 %v2241, %v933
      %v2246 = vrot.slane %v2194, 6
      %v2247 = vrot.slane %v2195, 6
      %v2252 = vrot.slane %v2202, 4
      %v2253 = vrot.slane %v2203, 4
      %v2258 = vrot.slane %v2210, 2
      %v2259 = vrot.slane %v2211, 2
      %v2264 = vrot.slane %v2218, 6
      %v2265 = vrot.slane %v2219, 6
      %v2270 = vrot.slane %v2226, 4
      %v2271 = vrot.slane %v2227, 4
      %v2276 = vrot.slane %v2234, 2
      %v2277 = vrot.slane %v2235, 2
      %v2280 = vsel %vm972, %v2186, %v2246
      %v2281 = vsel %vm972, %v2187, %v2247
      %v2282 = vsel %vm975, %v2280, %v2252
      %v2283 = vsel %vm975, %v2281, %v2253
      %v2284 = vsel %vm978, %v2282, %v2258
      %v2285 = vsel %vm978, %v2283, %v2259
      %v2286 = vsel %vm972, %v2176, %v2264
      %v2287 = vsel %vm972, %v2177, %v2265
      %v2288 = vsel %vm975, %v2286, %v2270
      %v2289 = vsel %vm975, %v2287, %v2271
      %v2290 = vsel %vm978, %v2288, %v2276
      %v2291 = vsel %vm978, %v2289, %v2277
      %v2293 = vsel %vm972, %v2242, 0
      %v2296 = vsel %vm972, %v2243, 0
      %2298 = vmatprep.subr.mxu0 %v2285
      %2299 = vmatpush1.msra.mxu0 %v2284
      %2300 = vmatprep.subr.mxu0 %v2291
      %2301 = vmatpush1.msra.mxu0 %v2290
      %2302 = vmatprep.subr.mxu0 %v2296
      %2303 = vmatpush1.msra.mxu0 %v2293
      %2304 = vmatprep.subr.mxu0 0.0
      %2305 = vmatpush1.msra.mxu0 0.0
      %2306 = vmatprep.subr.mxu0 0.0
      %2307 = vmatpush1.msra.mxu0 0.0
      %2308 = vmatprep.subr.mxu0 0.0
      %2309 = vmatpush1.msra.mxu0 0.0
      %2310 = vmatprep.subr.mxu0 0.0
      %2311 = vmatpush1.msra.mxu0 0.0
      %2312 = vmatprep.subr.mxu0 0.0
      %2313 = vmatpush1.msra.mxu0 0.0
      %2314 = vmatprep.subr.mxu0 0.0
      %2315 = vmatpush1.msra.mxu0 0.0
      %2316 = vmatprep.subr.mxu0 0.0
      %2317 = vmatpush1.msra.mxu0 0.0
      %2318 = vmatprep.subr.mxu0 0.0
      %2319 = vmatpush1.msra.mxu0 0.0
      %2320 = vmatprep.subr.mxu0 0.0
      %2321 = vmatpush1.msra.mxu0 0.0
      %2322 = vmatprep.subr.mxu0 0.0
      %2323 = vmatpush1.msra.mxu0 0.0
      %2324 = vmatprep.subr.mxu0 0.0
      %2325 = vmatpush1.msra.mxu0 0.0
      %2326 = vmatprep.subr.mxu0 0.0
      %2327 = vmatpush1.msra.mxu0 0.0
      %2328 = vmatprep.subr.mxu0 0.0
      %2329 = vmatpush1.msra.mxu0 0.0
      %2330 = vmatprep.subr.mxu0 0.0
      %2331 = vmatpush1.msra.mxu0 0.0
      %2332 = vmatprep.subr.mxu0 0.0
      %2333 = vmatpush1.msra.mxu0 0.0
      %2334 = vmatprep.subr.mxu0 0.0
      %2335 = vmatpush1.msra.mxu0 0.0
      %2336 = vmatprep.subr.mxu0 0.0
      %2337 = vmatpush1.msra.mxu0 0.0
      %2338 = vmatprep.subr.mxu0 0.0
      %2339 = vmatpush1.msra.mxu0 0.0
      %2340 = vmatprep.subr.mxu0 0.0
      %2341 = vmatpush1.msra.mxu0 0.0
      %2342 = vmatprep.subr.mxu0 0.0
      %2343 = vmatpush1.msra.mxu0 0.0
      %2344 = vmatprep.subr.mxu0 0.0
      %2345 = vmatpush1.msra.mxu0 0.0
      %2346 = vmatprep.subr.mxu0 0.0
      %2347 = vmatpush1.msra.mxu0 0.0
      %2348 = vmatprep.subr.mxu0 0.0
      %2349 = vmatpush1.msra.mxu0 0.0
      %2350 = vmatprep.subr.mxu0 0.0
      %2351 = vmatpush1.msra.mxu0 0.0
      %2352 = vmatprep.subr.mxu0 0.0
      %2353 = vmatpush1.msra.mxu0 0.0
      %2354 = vmatprep.subr.mxu0 0.0
      %2355 = vmatpush1.msra.mxu0 0.0
      %2356 = vmatprep.subr.mxu0 0.0
      %2357 = vmatpush1.msra.mxu0 0.0
      %2358 = vmatprep.subr.mxu0 0.0
      %2359 = vmatpush1.msra.mxu0 0.0
      %2360 = vmatprep.subr.mxu0 0.0
      %2361 = vmatpush1.msra.mxu0 0.0
      %2362 = vmatprep.mubr.f32.mxu0 0.0
      %2363 = vmatmul.mubr.f32.gmra.mrb[0].mxu0 %v994
      %v2364 = vpop.f32.mrb[0].mxu0
      %v2365 = vadd.f32 %v990, %v2364
      %v2366 = vpop.f32.mrb[0].mxu0
      %v2367 = vadd.f32 %v990, %v2366
      %2368 = vdwg.mxu0
      %2369 = vrot.lane.b32.xlu0 %v2365, 17
      %v2370 = vpop.permute.xlu0 %2369
      %2371 = vrot.lane.b32.xlu0 %v2367, 17
      %v2372 = vpop.permute.xlu0 %2371
      %v2373 = vsel %vm804, %v2370, %v2372
      %v2374 = vsel %vm804, %v2372, %v2370
      %v2375 = vmul.f32 %v2374, %v810
      %v2376 = vmul.f32 %v2373, %v814
      %2377 = vrot.lane.b32.xlu0 %v2365, 16
      %v2378 = vpop.permute.xlu0 %2377
      %2379 = vrot.lane.b32.xlu0 %v2367, 16
      %v2380 = vpop.permute.xlu0 %2379
      %v2381 = vsel %vm821, %v2378, %v2380
      %v2382 = vsel %vm821, %v2380, %v2378
      %v2383 = vmul.f32 %v2382, %v827
      %v2384 = vmul.f32 %v2381, %v831
      %2385 = vrot.lane.b32.xlu0 %v2365, 15
      %v2386 = vpop.permute.xlu0 %2385
      %2387 = vrot.lane.b32.xlu0 %v2367, 15
      %v2388 = vpop.permute.xlu0 %2387
      %v2389 = vsel %vm838, %v2386, %v2388
      %v2390 = vsel %vm838, %v2388, %v2386
      %v2391 = vmul.f32 %v2390, %v844
      %v2392 = vmul.f32 %v2389, %v848
      %2393 = vrot.lane.b32.xlu0 %v2365, 1
      %v2394 = vpop.permute.xlu0 %2393
      %2395 = vrot.lane.b32.xlu0 %v2367, 1
      %v2396 = vpop.permute.xlu0 %2395
      %v2397 = vsel %vm855, %v2394, %v2396
      %v2398 = vsel %vm855, %v2396, %v2394
      %v2399 = vmul.f32 %v2398, %v861
      %v2400 = vmul.f32 %v2397, %v865
      %2401 = vrot.lane.b32.xlu0 %v2365, 127
      %v2402 = vpop.permute.xlu0 %2401
      %2403 = vrot.lane.b32.xlu0 %v2367, 127
      %v2404 = vpop.permute.xlu0 %2403
      %v2405 = vsel %vm872, %v2402, %v2404
      %v2406 = vsel %vm872, %v2404, %v2402
      %v2407 = vmul.f32 %v2405, %v878
      %v2408 = vmul.f32 %v2406, %v882
      %2409 = vrot.lane.b32.xlu0 %v2365, 113
      %v2410 = vpop.permute.xlu0 %2409
      %2411 = vrot.lane.b32.xlu0 %v2367, 113
      %v2412 = vpop.permute.xlu0 %2411
      %v2413 = vsel %vm889, %v2410, %v2412
      %v2414 = vsel %vm889, %v2412, %v2410
      %v2415 = vmul.f32 %v2413, %v895
      %v2416 = vmul.f32 %v2414, %v899
      %2417 = vrot.lane.b32.xlu0 %v2365, 112
      %v2418 = vpop.permute.xlu0 %2417
      %2419 = vrot.lane.b32.xlu0 %v2367, 112
      %v2420 = vpop.permute.xlu0 %2419
      %v2421 = vsel %vm906, %v2418, %v2420
      %v2422 = vsel %vm906, %v2420, %v2418
      %v2423 = vmul.f32 %v2421, %v912
      %v2424 = vmul.f32 %v2422, %v916
      %2425 = vrot.lane.b32.xlu0 %v2365, 111
      %v2426 = vpop.permute.xlu0 %2425
      %2427 = vrot.lane.b32.xlu0 %v2367, 111
      %v2428 = vpop.permute.xlu0 %2427
      %v2429 = vsel %vm923, %v2426, %v2428
      %v2430 = vsel %vm923, %v2428, %v2426
      %v2431 = vmul.f32 %v2429, %v929
      %v2432 = vmul.f32 %v2430, %v933
      %2433 = vmatprep.subr.mxu0 %v2376
      %2434 = vmatpush1.msra.mxu0 %v2375
      %2435 = vmatprep.subr.mxu0 %v2384
      %2436 = vmatpush1.msra.mxu0 %v2383
      %2437 = vmatprep.subr.mxu0 %v2392
      %2438 = vmatpush1.msra.mxu0 %v2391
      %2439 = vmatprep.subr.mxu0 %v2400
      %2440 = vmatpush1.msra.mxu0 %v2399
      %2441 = vmatprep.subr.mxu0 %v2367
      %2442 = vmatpush1.msra.mxu0 %v2365
      %2443 = vmatprep.subr.mxu0 %v2408
      %2444 = vmatpush1.msra.mxu0 %v2407
      %2445 = vmatprep.subr.mxu0 %v2416
      %2446 = vmatpush1.msra.mxu0 %v2415
      %2447 = vmatprep.subr.mxu0 %v2424
      %2448 = vmatpush1.msra.mxu0 %v2423
      %2449 = vmatprep.subr.mxu0 %v2432
      %2450 = vmatpush1.msra.mxu0 %v2431
      %2451 = vmatprep.subr.mxu0 0.0
      %2452 = vmatpush1.msra.mxu0 0.0
      %2453 = vmatprep.subr.mxu0 0.0
      %2454 = vmatpush1.msra.mxu0 0.0
      %2455 = vmatprep.subr.mxu0 0.0
      %2456 = vmatpush1.msra.mxu0 0.0
      %2457 = vmatprep.subr.mxu0 0.0
      %2458 = vmatpush1.msra.mxu0 0.0
      %2459 = vmatprep.subr.mxu0 0.0
      %2460 = vmatpush1.msra.mxu0 0.0
      %2461 = vmatprep.subr.mxu0 0.0
      %2462 = vmatpush1.msra.mxu0 0.0
      %2463 = vmatprep.subr.mxu0 0.0
      %2464 = vmatpush1.msra.mxu0 0.0
      %2465 = vmatprep.subr.mxu0 0.0
      %2466 = vmatpush1.msra.mxu0 0.0
      %2467 = vmatprep.subr.mxu0 0.0
      %2468 = vmatpush1.msra.mxu0 0.0
      %2469 = vmatprep.subr.mxu0 0.0
      %2470 = vmatpush1.msra.mxu0 0.0
      %2471 = vmatprep.subr.mxu0 0.0
      %2472 = vmatpush1.msra.mxu0 0.0
      %2473 = vmatprep.subr.mxu0 0.0
      %2474 = vmatpush1.msra.mxu0 0.0
      %2475 = vmatprep.subr.mxu0 0.0
      %2476 = vmatpush1.msra.mxu0 0.0
      %2477 = vmatprep.subr.mxu0 0.0
      %2478 = vmatpush1.msra.mxu0 0.0
      %2479 = vmatprep.subr.mxu0 0.0
      %2480 = vmatpush1.msra.mxu0 0.0
      %2481 = vmatprep.subr.mxu0 0.0
      %2482 = vmatpush1.msra.mxu0 0.0
      %2483 = vmatprep.subr.mxu0 0.0
      %2484 = vmatpush1.msra.mxu0 0.0
      %2485 = vmatprep.subr.mxu0 0.0
      %2486 = vmatpush1.msra.mxu0 0.0
      %2487 = vmatprep.subr.mxu0 0.0
      %2488 = vmatpush1.msra.mxu0 0.0
      %2489 = vmatprep.subr.mxu0 0.0
      %2490 = vmatpush1.msra.mxu0 0.0
      %2491 = vmatprep.subr.mxu0 0.0
      %2492 = vmatpush1.msra.mxu0 0.0
      %2493 = vmatprep.subr.mxu0 0.0
      %2494 = vmatpush1.msra.mxu0 0.0
      %2495 = vmatprep.subr.mxu0 0.0
      %2496 = vmatpush1.msra.mxu0 0.0
      %2497 = vmatprep.mubr.f32.mxu0 0.0
      %2498 = vmatmul.mubr.f32.gmra.mrb[0].mxu0 %v1146
      %v2499 = vpop.f32.mrb[0].mxu0
      %v2500 = vadd.f32 %v1142, %v2499
      %v2501 = vpop.f32.mrb[0].mxu0
      %v2502 = vadd.f32 %v1142, %v2501
      %2503 = vdwg.mxu0
      %v2504 = vmax.f32 %v2500, 0.0
      %v2505 = vmax.f32 %v2502, 0.0
      %2506 = vrot.lane.b32.xlu0 %v2504, 17
      %v2507 = vpop.permute.xlu0 %2506
      %2508 = vrot.lane.b32.xlu0 %v2505, 17
      %v2509 = vpop.permute.xlu0 %2508
      %v2510 = vsel %vm804, %v2507, %v2509
      %v2511 = vsel %vm804, %v2509, %v2507
      %v2512 = vmul.f32 %v2511, %v810
      %v2513 = vmul.f32 %v2510, %v814
      %2514 = vrot.lane.b32.xlu0 %v2504, 16
      %v2515 = vpop.permute.xlu0 %2514
      %2516 = vrot.lane.b32.xlu0 %v2505, 16
      %v2517 = vpop.permute.xlu0 %2516
      %v2518 = vsel %vm821, %v2515, %v2517
      %v2519 = vsel %vm821, %v2517, %v2515
      %v2520 = vmul.f32 %v2519, %v827
      %v2521 = vmul.f32 %v2518, %v831
      %2522 = vrot.lane.b32.xlu0 %v2504, 15
      %v2523 = vpop.permute.xlu0 %2522
      %2524 = vrot.lane.b32.xlu0 %v2505, 15
      %v2525 = vpop.permute.xlu0 %2524
      %v2526 = vsel %vm838, %v2523, %v2525
      %v2527 = vsel %vm838, %v2525, %v2523
      %v2528 = vmul.f32 %v2527, %v844
      %v2529 = vmul.f32 %v2526, %v848
      %2530 = vrot.lane.b32.xlu0 %v2504, 1
      %v2531 = vpop.permute.xlu0 %2530
      %2532 = vrot.lane.b32.xlu0 %v2505, 1
      %v2533 = vpop.permute.xlu0 %2532
      %v2534 = vsel %vm855, %v2531, %v2533
      %v2535 = vsel %vm855, %v2533, %v2531
      %v2536 = vmul.f32 %v2535, %v861
      %v2537 = vmul.f32 %v2534, %v865
      %2538 = vrot.lane.b32.xlu0 %v2504, 127
      %v2539 = vpop.permute.xlu0 %2538
      %2540 = vrot.lane.b32.xlu0 %v2505, 127
      %v2541 = vpop.permute.xlu0 %2540
      %v2542 = vsel %vm872, %v2539, %v2541
      %v2543 = vsel %vm872, %v2541, %v2539
      %v2544 = vmul.f32 %v2542, %v878
      %v2545 = vmul.f32 %v2543, %v882
      %2546 = vrot.lane.b32.xlu0 %v2504, 113
      %v2547 = vpop.permute.xlu0 %2546
      %2548 = vrot.lane.b32.xlu0 %v2505, 113
      %v2549 = vpop.permute.xlu0 %2548
      %v2550 = vsel %vm889, %v2547, %v2549
      %v2551 = vsel %vm889, %v2549, %v2547
      %v2552 = vmul.f32 %v2550, %v895
      %v2553 = vmul.f32 %v2551, %v899
      %2554 = vrot.lane.b32.xlu0 %v2504, 112
      %v2555 = vpop.permute.xlu0 %2554
      %2556 = vrot.lane.b32.xlu0 %v2505, 112
      %v2557 = vpop.permute.xlu0 %2556
      %v2558 = vsel %vm906, %v2555, %v2557
      %v2559 = vsel %vm906, %v2557, %v2555
      %v2560 = vmul.f32 %v2558, %v912
      %v2561 = vmul.f32 %v2559, %v916
      %2562 = vrot.lane.b32.xlu0 %v2504, 111
      %v2563 = vpop.permute.xlu0 %2562
      %2564 = vrot.lane.b32.xlu0 %v2505, 111
      %v2565 = vpop.permute.xlu0 %2564
      %v2566 = vsel %vm923, %v2563, %v2565
      %v2567 = vsel %vm923, %v2565, %v2563
      %v2568 = vmul.f32 %v2566, %v929
      %v2569 = vmul.f32 %v2567, %v933
      %2570 = vmatprep.subr.mxu0 %v2513
      %2571 = vmatpush1.msra.mxu0 %v2512
      %2572 = vmatprep.subr.mxu0 %v2521
      %2573 = vmatpush1.msra.mxu0 %v2520
      %2574 = vmatprep.subr.mxu0 %v2529
      %2575 = vmatpush1.msra.mxu0 %v2528
      %2576 = vmatprep.subr.mxu0 %v2537
      %2577 = vmatpush1.msra.mxu0 %v2536
      %2578 = vmatprep.subr.mxu0 %v2505
      %2579 = vmatpush1.msra.mxu0 %v2504
      %2580 = vmatprep.subr.mxu0 %v2545
      %2581 = vmatpush1.msra.mxu0 %v2544
      %2582 = vmatprep.subr.mxu0 %v2553
      %2583 = vmatpush1.msra.mxu0 %v2552
      %2584 = vmatprep.subr.mxu0 %v2561
      %2585 = vmatpush1.msra.mxu0 %v2560
      %2586 = vmatprep.subr.mxu0 %v2569
      %2587 = vmatpush1.msra.mxu0 %v2568
      %2588 = vmatprep.subr.mxu0 0.0
      %2589 = vmatpush1.msra.mxu0 0.0
      %2590 = vmatprep.subr.mxu0 0.0
      %2591 = vmatpush1.msra.mxu0 0.0
      %2592 = vmatprep.subr.mxu0 0.0
      %2593 = vmatpush1.msra.mxu0 0.0
      %2594 = vmatprep.subr.mxu0 0.0
      %2595 = vmatpush1.msra.mxu0 0.0
      %2596 = vmatprep.subr.mxu0 0.0
      %2597 = vmatpush1.msra.mxu0 0.0
      %2598 = vmatprep.subr.mxu0 0.0
      %2599 = vmatpush1.msra.mxu0 0.0
      %2600 = vmatprep.subr.mxu0 0.0
      %2601 = vmatpush1.msra.mxu0 0.0
      %2602 = vmatprep.subr.mxu0 0.0
      %2603 = vmatpush1.msra.mxu0 0.0
      %2604 = vmatprep.subr.mxu0 0.0
      %2605 = vmatpush1.msra.mxu0 0.0
      %2606 = vmatprep.subr.mxu0 0.0
      %2607 = vmatpush1.msra.mxu0 0.0
      %2608 = vmatprep.subr.mxu0 0.0
      %2609 = vmatpush1.msra.mxu0 0.0
      %2610 = vmatprep.subr.mxu0 0.0
      %2611 = vmatpush1.msra.mxu0 0.0
      %2612 = vmatprep.subr.mxu0 0.0
      %2613 = vmatpush1.msra.mxu0 0.0
      %2614 = vmatprep.subr.mxu0 0.0
      %2615 = vmatpush1.msra.mxu0 0.0
      %2616 = vmatprep.subr.mxu0 0.0
      %2617 = vmatpush1.msra.mxu0 0.0
      %2618 = vmatprep.subr.mxu0 0.0
      %2619 = vmatpush1.msra.mxu0 0.0
      %2620 = vmatprep.subr.mxu0 0.0
      %2621 = vmatpush1.msra.mxu0 0.0
      %2622 = vmatprep.subr.mxu0 0.0
      %2623 = vmatpush1.msra.mxu0 0.0
      %2624 = vmatprep.subr.mxu0 0.0
      %2625 = vmatpush1.msra.mxu0 0.0
      %2626 = vmatprep.subr.mxu0 0.0
      %2627 = vmatpush1.msra.mxu0 0.0
      %2628 = vmatprep.subr.mxu0 0.0
      %2629 = vmatpush1.msra.mxu0 0.0
      %2630 = vmatprep.subr.mxu0 0.0
      %2631 = vmatpush1.msra.mxu0 0.0
      %2632 = vmatprep.subr.mxu0 0.0
      %2633 = vmatpush1.msra.mxu0 0.0
      %2634 = vmatprep.mubr.f32.mxu0 0.0
      %2635 = vmatmul.mubr.f32.gmra.mrb[0].mxu0 %v1295
      %v2636 = vpop.f32.mrb[0].mxu0
      %v2637 = vadd.f32 %v1292, %v2636
      %v2638 = vpop.f32.mrb[0].mxu0
      %v2639 = vadd.f32 %v1292, %v2638
      %2640 = vdwg.mxu0
      %v2641 = vmul.f32 %v2637, 0.1
      %v2642 = vmul.f32 %v2639, 0.1
      %v2643 = vadd.f32 %v2641, %v2365
      %v2644 = vadd.f32 %v2642, %v2367
      %2645 = vrot.lane.b32.xlu0 %v2643, 17
      %v2646 = vpop.permute.xlu0 %2645
      %2647 = vrot.lane.b32.xlu0 %v2644, 17
      %v2648 = vpop.permute.xlu0 %2647
      %v2649 = vsel %vm804, %v2646, %v2648
      %v2650 = vsel %vm804, %v2648, %v2646
      %v2651 = vmul.f32 %v2650, %v810
      %v2652 = vmul.f32 %v2649, %v814
      %2653 = vrot.lane.b32.xlu0 %v2643, 16
      %v2654 = vpop.permute.xlu0 %2653
      %2655 = vrot.lane.b32.xlu0 %v2644, 16
      %v2656 = vpop.permute.xlu0 %2655
      %v2657 = vsel %vm821, %v2654, %v2656
      %v2658 = vsel %vm821, %v2656, %v2654
      %v2659 = vmul.f32 %v2658, %v827
      %v2660 = vmul.f32 %v2657, %v831
      %2661 = vrot.lane.b32.xlu0 %v2643, 15
      %v2662 = vpop.permute.xlu0 %2661
      %2663 = vrot.lane.b32.xlu0 %v2644, 15
      %v2664 = vpop.permute.xlu0 %2663
      %v2665 = vsel %vm838, %v2662, %v2664
      %v2666 = vsel %vm838, %v2664, %v2662
      %v2667 = vmul.f32 %v2666, %v844
      %v2668 = vmul.f32 %v2665, %v848
      %2669 = vrot.lane.b32.xlu0 %v2643, 1
      %v2670 = vpop.permute.xlu0 %2669
      %2671 = vrot.lane.b32.xlu0 %v2644, 1
      %v2672 = vpop.permute.xlu0 %2671
      %v2673 = vsel %vm855, %v2670, %v2672
      %v2674 = vsel %vm855, %v2672, %v2670
      %v2675 = vmul.f32 %v2674, %v861
      %v2676 = vmul.f32 %v2673, %v865
      %2677 = vrot.lane.b32.xlu0 %v2643, 127
      %v2678 = vpop.permute.xlu0 %2677
      %2679 = vrot.lane.b32.xlu0 %v2644, 127
      %v2680 = vpop.permute.xlu0 %2679
      %v2681 = vsel %vm872, %v2678, %v2680
      %v2682 = vsel %vm872, %v2680, %v2678
      %v2683 = vmul.f32 %v2681, %v878
      %v2684 = vmul.f32 %v2682, %v882
      %2685 = vrot.lane.b32.xlu0 %v2643, 113
      %v2686 = vpop.permute.xlu0 %2685
      %2687 = vrot.lane.b32.xlu0 %v2644, 113
      %v2688 = vpop.permute.xlu0 %2687
      %v2689 = vsel %vm889, %v2686, %v2688
      %v2690 = vsel %vm889, %v2688, %v2686
      %v2691 = vmul.f32 %v2689, %v895
      %v2692 = vmul.f32 %v2690, %v899
      %2693 = vrot.lane.b32.xlu0 %v2643, 112
      %v2694 = vpop.permute.xlu0 %2693
      %2695 = vrot.lane.b32.xlu0 %v2644, 112
      %v2696 = vpop.permute.xlu0 %2695
      %v2697 = vsel %vm906, %v2694, %v2696
      %v2698 = vsel %vm906, %v2696, %v2694
      %v2699 = vmul.f32 %v2697, %v912
      %v2700 = vmul.f32 %v2698, %v916
      %2701 = vrot.lane.b32.xlu0 %v2643, 111
      %v2702 = vpop.permute.xlu0 %2701
      %2703 = vrot.lane.b32.xlu0 %v2644, 111
      %v2704 = vpop.permute.xlu0 %2703
      %v2705 = vsel %vm923, %v2702, %v2704
      %v2706 = vsel %vm923, %v2704, %v2702
      %v2707 = vmul.f32 %v2705, %v929
      %v2708 = vmul.f32 %v2706, %v933
      %2709 = vmatprep.subr.mxu0 %v2652
      %2710 = vmatpush1.msra.mxu0 %v2651
      %2711 = vmatprep.subr.mxu0 %v2660
      %2712 = vmatpush1.msra.mxu0 %v2659
      %2713 = vmatprep.subr.mxu0 %v2668
      %2714 = vmatpush1.msra.mxu0 %v2667
      %2715 = vmatprep.subr.mxu0 %v2676
      %2716 = vmatpush1.msra.mxu0 %v2675
      %2717 = vmatprep.subr.mxu0 %v2644
      %2718 = vmatpush1.msra.mxu0 %v2643
      %2719 = vmatprep.subr.mxu0 %v2684
      %2720 = vmatpush1.msra.mxu0 %v2683
      %2721 = vmatprep.subr.mxu0 %v2692
      %2722 = vmatpush1.msra.mxu0 %v2691
      %2723 = vmatprep.subr.mxu0 %v2700
      %2724 = vmatpush1.msra.mxu0 %v2699
      %2725 = vmatprep.subr.mxu0 %v2708
      %2726 = vmatpush1.msra.mxu0 %v2707
      %2727 = vmatprep.subr.mxu0 0.0
      %2728 = vmatpush1.msra.mxu0 0.0
      %2729 = vmatprep.subr.mxu0 0.0
      %2730 = vmatpush1.msra.mxu0 0.0
      %2731 = vmatprep.subr.mxu0 0.0
      %2732 = vmatpush1.msra.mxu0 0.0
      %2733 = vmatprep.subr.mxu0 0.0
      %2734 = vmatpush1.msra.mxu0 0.0
      %2735 = vmatprep.subr.mxu0 0.0
      %2736 = vmatpush1.msra.mxu0 0.0
      %2737 = vmatprep.subr.mxu0 0.0
      %2738 = vmatpush1.msra.mxu0 0.0
      %2739 = vmatprep.subr.mxu0 0.0
      %2740 = vmatpush1.msra.mxu0 0.0
      %2741 = vmatprep.subr.mxu0 0.0
      %2742 = vmatpush1.msra.mxu0 0.0
      %2743 = vmatprep.subr.mxu0 0.0
      %2744 = vmatpush1.msra.mxu0 0.0
      %2745 = vmatprep.subr.mxu0 0.0
      %2746 = vmatpush1.msra.mxu0 0.0
      %2747 = vmatprep.subr.mxu0 0.0
      %2748 = vmatpush1.msra.mxu0 0.0
      %2749 = vmatprep.subr.mxu0 0.0
      %2750 = vmatpush1.msra.mxu0 0.0
      %2751 = vmatprep.subr.mxu0 0.0
      %2752 = vmatpush1.msra.mxu0 0.0
      %2753 = vmatprep.subr.mxu0 0.0
      %2754 = vmatpush1.msra.mxu0 0.0
      %2755 = vmatprep.subr.mxu0 0.0
      %2756 = vmatpush1.msra.mxu0 0.0
      %2757 = vmatprep.subr.mxu0 0.0
      %2758 = vmatpush1.msra.mxu0 0.0
      %2759 = vmatprep.subr.mxu0 0.0
      %2760 = vmatpush1.msra.mxu0 0.0
      %2761 = vmatprep.subr.mxu0 0.0
      %2762 = vmatpush1.msra.mxu0 0.0
      %2763 = vmatprep.subr.mxu0 0.0
      %2764 = vmatpush1.msra.mxu0 0.0
      %2765 = vmatprep.subr.mxu0 0.0
      %2766 = vmatpush1.msra.mxu0 0.0
      %2767 = vmatprep.subr.mxu0 0.0
      %2768 = vmatpush1.msra.mxu0 0.0
      %2769 = vmatprep.subr.mxu0 0.0
      %2770 = vmatpush1.msra.mxu0 0.0
      %2771 = vmatprep.subr.mxu0 0.0
      %2772 = vmatpush1.msra.mxu0 0.0
      %2773 = vmatprep.mubr.f32.mxu0 0.0
      %2774 = vmatmul.mubr.f32.gmra.mrb[0].mxu0 %v1446
      %v2775 = vpop.f32.mrb[0].mxu0
      %v2776 = vadd.f32 %v1443, %v2775
      %v2777 = vpop.f32.mrb[0].mxu0
      %v2778 = vadd.f32 %v1443, %v2777
      %2779 = vdwg.mxu0
      %v2780 = vmax.f32 %v2776, 0.0
      %v2781 = vmax.f32 %v2778, 0.0
      %2782 = vrot.lane.b32.xlu0 %v2780, 17
      %v2783 = vpop.permute.xlu0 %2782
      %2784 = vrot.lane.b32.xlu0 %v2781, 17
      %v2785 = vpop.permute.xlu0 %2784
      %v2786 = vsel %vm804, %v2783, %v2785
      %v2787 = vsel %vm804, %v2785, %v2783
      %v2788 = vmul.f32 %v2787, %v810
      %v2789 = vmul.f32 %v2786, %v814
      %2790 = vrot.lane.b32.xlu0 %v2780, 16
      %v2791 = vpop.permute.xlu0 %2790
      %2792 = vrot.lane.b32.xlu0 %v2781, 16
      %v2793 = vpop.permute.xlu0 %2792
      %v2794 = vsel %vm821, %v2791, %v2793
      %v2795 = vsel %vm821, %v2793, %v2791
      %v2796 = vmul.f32 %v2795, %v827
      %v2797 = vmul.f32 %v2794, %v831
      %2798 = vrot.lane.b32.xlu0 %v2780, 15
      %v2799 = vpop.permute.xlu0 %2798
      %2800 = vrot.lane.b32.xlu0 %v2781, 15
      %v2801 = vpop.permute.xlu0 %2800
      %v2802 = vsel %vm838, %v2799, %v2801
      %v2803 = vsel %vm838, %v2801, %v2799
      %v2804 = vmul.f32 %v2803, %v844
      %v2805 = vmul.f32 %v2802, %v848
      %2806 = vrot.lane.b32.xlu0 %v2780, 1
      %v2807 = vpop.permute.xlu0 %2806
      %2808 = vrot.lane.b32.xlu0 %v2781, 1
      %v2809 = vpop.permute.xlu0 %2808
      %v2810 = vsel %vm855, %v2807, %v2809
      %v2811 = vsel %vm855, %v2809, %v2807
      %v2812 = vmul.f32 %v2811, %v861
      %v2813 = vmul.f32 %v2810, %v865
      %2814 = vrot.lane.b32.xlu0 %v2780, 127
      %v2815 = vpop.permute.xlu0 %2814
      %2816 = vrot.lane.b32.xlu0 %v2781, 127
      %v2817 = vpop.permute.xlu0 %2816
      %v2818 = vsel %vm872, %v2815, %v2817
      %v2819 = vsel %vm872, %v2817, %v2815
      %v2820 = vmul.f32 %v2818, %v878
      %v2821 = vmul.f32 %v2819, %v882
      %2822 = vrot.lane.b32.xlu0 %v2780, 113
      %v2823 = vpop.permute.xlu0 %2822
      %2824 = vrot.lane.b32.xlu0 %v2781, 113
      %v2825 = vpop.permute.xlu0 %2824
      %v2826 = vsel %vm889, %v2823, %v2825
      %v2827 = vsel %vm889, %v2825, %v2823
      %v2828 = vmul.f32 %v2826, %v895
      %v2829 = vmul.f32 %v2827, %v899
      %2830 = vrot.lane.b32.xlu0 %v2780, 112
      %v2831 = vpop.permute.xlu0 %2830
      %2832 = vrot.lane.b32.xlu0 %v2781, 112
      %v2833 = vpop.permute.xlu0 %2832
      %v2834 = vsel %vm906, %v2831, %v2833
      %v2835 = vsel %vm906, %v2833, %v2831
      %v2836 = vmul.f32 %v2834, %v912
      %v2837 = vmul.f32 %v2835, %v916
      %2838 = vrot.lane.b32.xlu0 %v2780, 111
      %v2839 = vpop.permute.xlu0 %2838
      %2840 = vrot.lane.b32.xlu0 %v2781, 111
      %v2841 = vpop.permute.xlu0 %2840
      %v2842 = vsel %vm923, %v2839, %v2841
      %v2843 = vsel %vm923, %v2841, %v2839
      %v2844 = vmul.f32 %v2842, %v929
      %v2845 = vmul.f32 %v2843, %v933
      %2846 = vmatprep.subr.mxu0 %v2789
      %2847 = vmatpush1.msra.mxu0 %v2788
      %2848 = vmatprep.subr.mxu0 %v2797
      %2849 = vmatpush1.msra.mxu0 %v2796
      %2850 = vmatprep.subr.mxu0 %v2805
      %2851 = vmatpush1.msra.mxu0 %v2804
      %2852 = vmatprep.subr.mxu0 %v2813
      %2853 = vmatpush1.msra.mxu0 %v2812
      %2854 = vmatprep.subr.mxu0 %v2781
      %2855 = vmatpush1.msra.mxu0 %v2780
      %2856 = vmatprep.subr.mxu0 %v2821
      %2857 = vmatpush1.msra.mxu0 %v2820
      %2858 = vmatprep.subr.mxu0 %v2829
      %2859 = vmatpush1.msra.mxu0 %v2828
      %2860 = vmatprep.subr.mxu0 %v2837
      %2861 = vmatpush1.msra.mxu0 %v2836
      %2862 = vmatprep.subr.mxu0 %v2845
      %2863 = vmatpush1.msra.mxu0 %v2844
      %2864 = vmatprep.subr.mxu0 0.0
      %2865 = vmatpush1.msra.mxu0 0.0
      %2866 = vmatprep.subr.mxu0 0.0
      %2867 = vmatpush1.msra.mxu0 0.0
      %2868 = vmatprep.subr.mxu0 0.0
      %2869 = vmatpush1.msra.mxu0 0.0
      %2870 = vmatprep.subr.mxu0 0.0
      %2871 = vmatpush1.msra.mxu0 0.0
      %2872 = vmatprep.subr.mxu0 0.0
      %2873 = vmatpush1.msra.mxu0 0.0
      %2874 = vmatprep.subr.mxu0 0.0
      %2875 = vmatpush1.msra.mxu0 0.0
      %2876 = vmatprep.subr.mxu0 0.0
      %2877 = vmatpush1.msra.mxu0 0.0
      %2878 = vmatprep.subr.mxu0 0.0
      %2879 = vmatpush1.msra.mxu0 0.0
      %2880 = vmatprep.subr.mxu0 0.0
      %2881 = vmatpush1.msra.mxu0 0.0
      %2882 = vmatprep.subr.mxu0 0.0
      %2883 = vmatpush1.msra.mxu0 0.0
      %2884 = vmatprep.subr.mxu0 0.0
      %2885 = vmatpush1.msra.mxu0 0.0
      %2886 = vmatprep.subr.mxu0 0.0
      %2887 = vmatpush1.msra.mxu0 0.0
      %2888 = vmatprep.subr.mxu0 0.0
      %2889 = vmatpush1.msra.mxu0 0.0
      %2890 = vmatprep.subr.mxu0 0.0
      %2891 = vmatpush1.msra.mxu0 0.0
      %2892 = vmatprep.subr.mxu0 0.0
      %2893 = vmatpush1.msra.mxu0 0.0
      %2894 = vmatprep.subr.mxu0 0.0
      %2895 = vmatpush1.msra.mxu0 0.0
      %2896 = vmatprep.subr.mxu0 0.0
      %2897 = vmatpush1.msra.mxu0 0.0
      %2898 = vmatprep.subr.mxu0 0.0
      %2899 = vmatpush1.msra.mxu0 0.0
      %2900 = vmatprep.subr.mxu0 0.0
      %2901 = vmatpush1.msra.mxu0 0.0
      %2902 = vmatprep.subr.mxu0 0.0
      %2903 = vmatpush1.msra.mxu0 0.0
      %2904 = vmatprep.subr.mxu0 0.0
      %2905 = vmatpush1.msra.mxu0 0.0
      %2906 = vmatprep.subr.mxu0 0.0
      %2907 = vmatpush1.msra.mxu0 0.0
      %2908 = vmatprep.subr.mxu0 0.0
      %2909 = vmatpush1.msra.mxu0 0.0
      %2910 = vmatprep.mubr.f32.mxu0 0.0
      %2911 = vmatmul.mubr.f32.gmra.mrb[0].mxu0 %v1595
      %v2912 = vpop.f32.mrb[0].mxu0
      %v2913 = vadd.f32 %v1592, %v2912
      %v2914 = vpop.f32.mrb[0].mxu0
      %v2915 = vadd.f32 %v1592, %v2914
      %2916 = vdwg.mxu0
      %v2917 = vmul.f32 %v2913, 0.1
      %v2918 = vmul.f32 %v2915, 0.1
      %v2919 = vadd.f32 %v2917, %v2643
      %v2920 = vadd.f32 %v2918, %v2644
      %2921 = vrot.lane.b32.xlu0 %v2919, 17
      %v2922 = vpop.permute.xlu0 %2921
      %2923 = vrot.lane.b32.xlu0 %v2920, 17
      %v2924 = vpop.permute.xlu0 %2923
      %v2925 = vsel %vm804, %v2922, %v2924
      %v2926 = vsel %vm804, %v2924, %v2922
      %v2927 = vmul.f32 %v2926, %v810
      %v2928 = vmul.f32 %v2925, %v814
      %2929 = vrot.lane.b32.xlu0 %v2919, 16
      %v2930 = vpop.permute.xlu0 %2929
      %2931 = vrot.lane.b32.xlu0 %v2920, 16
      %v2932 = vpop.permute.xlu0 %2931
      %v2933 = vsel %vm821, %v2930, %v2932
      %v2934 = vsel %vm821, %v2932, %v2930
      %v2935 = vmul.f32 %v2934, %v827
      %v2936 = vmul.f32 %v2933, %v831
      %2937 = vrot.lane.b32.xlu0 %v2919, 15
      %v2938 = vpop.permute.xlu0 %2937
      %2939 = vrot.lane.b32.xlu0 %v2920, 15
      %v2940 = vpop.permute.xlu0 %2939
      %v2941 = vsel %vm838, %v2938, %v2940
      %v2942 = vsel %vm838, %v2940, %v2938
      %v2943 = vmul.f32 %v2942, %v844
      %v2944 = vmul.f32 %v2941, %v848
      %2945 = vrot.lane.b32.xlu0 %v2919, 1
      %v2946 = vpop.permute.xlu0 %2945
      %2947 = vrot.lane.b32.xlu0 %v2920, 1
      %v2948 = vpop.permute.xlu0 %2947
      %v2949 = vsel %vm855, %v2946, %v2948
      %v2950 = vsel %vm855, %v2948, %v2946
      %v2951 = vmul.f32 %v2950, %v861
      %v2952 = vmul.f32 %v2949, %v865
      %2953 = vrot.lane.b32.xlu0 %v2919, 127
      %v2954 = vpop.permute.xlu0 %2953
      %2955 = vrot.lane.b32.xlu0 %v2920, 127
      %v2956 = vpop.permute.xlu0 %2955
      %v2957 = vsel %vm872, %v2954, %v2956
      %v2958 = vsel %vm872, %v2956, %v2954
      %v2959 = vmul.f32 %v2957, %v878
      %v2960 = vmul.f32 %v2958, %v882
      %2961 = vrot.lane.b32.xlu0 %v2919, 113
      %v2962 = vpop.permute.xlu0 %2961
      %2963 = vrot.lane.b32.xlu0 %v2920, 113
      %v2964 = vpop.permute.xlu0 %2963
      %v2965 = vsel %vm889, %v2962, %v2964
      %v2966 = vsel %vm889, %v2964, %v2962
      %v2967 = vmul.f32 %v2965, %v895
      %v2968 = vmul.f32 %v2966, %v899
      %2969 = vrot.lane.b32.xlu0 %v2919, 112
      %v2970 = vpop.permute.xlu0 %2969
      %2971 = vrot.lane.b32.xlu0 %v2920, 112
      %v2972 = vpop.permute.xlu0 %2971
      %v2973 = vsel %vm906, %v2970, %v2972
      %v2974 = vsel %vm906, %v2972, %v2970
      %v2975 = vmul.f32 %v2973, %v912
      %v2976 = vmul.f32 %v2974, %v916
      %2977 = vrot.lane.b32.xlu0 %v2919, 111
      %v2978 = vpop.permute.xlu0 %2977
      %2979 = vrot.lane.b32.xlu0 %v2920, 111
      %v2980 = vpop.permute.xlu0 %2979
      %v2981 = vsel %vm923, %v2978, %v2980
      %v2982 = vsel %vm923, %v2980, %v2978
      %v2983 = vmul.f32 %v2981, %v929
      %v2984 = vmul.f32 %v2982, %v933
      %2985 = vmatprep.subr.mxu0 %v2928
      %2986 = vmatpush1.msra.mxu0 %v2927
      %2987 = vmatprep.subr.mxu0 %v2936
      %2988 = vmatpush1.msra.mxu0 %v2935
      %2989 = vmatprep.subr.mxu0 %v2944
      %2990 = vmatpush1.msra.mxu0 %v2943
      %2991 = vmatprep.subr.mxu0 %v2952
      %2992 = vmatpush1.msra.mxu0 %v2951
      %2993 = vmatprep.subr.mxu0 %v2920
      %2994 = vmatpush1.msra.mxu0 %v2919
      %2995 = vmatprep.subr.mxu0 %v2960
      %2996 = vmatpush1.msra.mxu0 %v2959
      %2997 = vmatprep.subr.mxu0 %v2968
      %2998 = vmatpush1.msra.mxu0 %v2967
      %2999 = vmatprep.subr.mxu0 %v2976
      %3000 = vmatpush1.msra.mxu0 %v2975
      %3001 = vmatprep.subr.mxu0 %v2984
      %3002 = vmatpush1.msra.mxu0 %v2983
      %3003 = vmatprep.subr.mxu0 0.0
      %3004 = vmatpush1.msra.mxu0 0.0
      %3005 = vmatprep.subr.mxu0 0.0
      %3006 = vmatpush1.msra.mxu0 0.0
      %3007 = vmatprep.subr.mxu0 0.0
      %3008 = vmatpush1.msra.mxu0 0.0
      %3009 = vmatprep.subr.mxu0 0.0
      %3010 = vmatpush1.msra.mxu0 0.0
      %3011 = vmatprep.subr.mxu0 0.0
      %3012 = vmatpush1.msra.mxu0 0.0
      %3013 = vmatprep.subr.mxu0 0.0
      %3014 = vmatpush1.msra.mxu0 0.0
      %3015 = vmatprep.subr.mxu0 0.0
      %3016 = vmatpush1.msra.mxu0 0.0
      %3017 = vmatprep.subr.mxu0 0.0
      %3018 = vmatpush1.msra.mxu0 0.0
      %3019 = vmatprep.subr.mxu0 0.0
      %3020 = vmatpush1.msra.mxu0 0.0
      %3021 = vmatprep.subr.mxu0 0.0
      %3022 = vmatpush1.msra.mxu0 0.0
      %3023 = vmatprep.subr.mxu0 0.0
      %3024 = vmatpush1.msra.mxu0 0.0
      %3025 = vmatprep.subr.mxu0 0.0
      %3026 = vmatpush1.msra.mxu0 0.0
      %3027 = vmatprep.subr.mxu0 0.0
      %3028 = vmatpush1.msra.mxu0 0.0
      %3029 = vmatprep.subr.mxu0 0.0
      %3030 = vmatpush1.msra.mxu0 0.0
      %3031 = vmatprep.subr.mxu0 0.0
      %3032 = vmatpush1.msra.mxu0 0.0
      %3033 = vmatprep.subr.mxu0 0.0
      %3034 = vmatpush1.msra.mxu0 0.0
      %3035 = vmatprep.subr.mxu0 0.0
      %3036 = vmatpush1.msra.mxu0 0.0
      %3037 = vmatprep.subr.mxu0 0.0
      %3038 = vmatpush1.msra.mxu0 0.0
      %3039 = vmatprep.subr.mxu0 0.0
      %3040 = vmatpush1.msra.mxu0 0.0
      %3041 = vmatprep.subr.mxu0 0.0
      %3042 = vmatpush1.msra.mxu0 0.0
      %3043 = vmatprep.subr.mxu0 0.0
      %3044 = vmatpush1.msra.mxu0 0.0
      %3045 = vmatprep.subr.mxu0 0.0
      %3046 = vmatpush1.msra.mxu0 0.0
      %3047 = vmatprep.subr.mxu0 0.0
      %3048 = vmatpush1.msra.mxu0 0.0
      %3049 = vmatprep.mubr.f32.mxu0 0.0
      %3050 = vmatmul.mubr.f32.gmra.mrb[0].mxu0 %v1746
      %v3051 = vpop.f32.mrb[0].mxu0
      %v3052 = vadd.f32 %v1743, %v3051
      %v3053 = vpop.f32.mrb[0].mxu0
      %v3054 = vadd.f32 %v1743, %v3053
      %3055 = vdwg.mxu0
      %v3056 = vadd.f32 %v3052, %v2365
      %v3057 = vadd.f32 %v3054, %v2367
      %3058 = vrot.lane.b32.xlu0 %v3056, 17
      %v3059 = vpop.permute.xlu0 %3058
      %3060 = vrot.lane.b32.xlu0 %v3057, 17
      %v3061 = vpop.permute.xlu0 %3060
      %v3062 = vsel %vm804, %v3059, %v3061
      %v3063 = vsel %vm804, %v3061, %v3059
      %v3064 = vmul.f32 %v3063, %v810
      %v3065 = vmul.f32 %v3062, %v814
      %3066 = vrot.lane.b32.xlu0 %v3056, 16
      %v3067 = vpop.permute.xlu0 %3066
      %3068 = vrot.lane.b32.xlu0 %v3057, 16
      %v3069 = vpop.permute.xlu0 %3068
      %v3070 = vsel %vm821, %v3067, %v3069
      %v3071 = vsel %vm821, %v3069, %v3067
      %v3072 = vmul.f32 %v3071, %v827
      %v3073 = vmul.f32 %v3070, %v831
      %3074 = vrot.lane.b32.xlu0 %v3056, 15
      %v3075 = vpop.permute.xlu0 %3074
      %3076 = vrot.lane.b32.xlu0 %v3057, 15
      %v3077 = vpop.permute.xlu0 %3076
      %v3078 = vsel %vm838, %v3075, %v3077
      %v3079 = vsel %vm838, %v3077, %v3075
      %v3080 = vmul.f32 %v3079, %v844
      %v3081 = vmul.f32 %v3078, %v848
      %3082 = vrot.lane.b32.xlu0 %v3056, 1
      %v3083 = vpop.permute.xlu0 %3082
      %3084 = vrot.lane.b32.xlu0 %v3057, 1
      %v3085 = vpop.permute.xlu0 %3084
      %v3086 = vsel %vm855, %v3083, %v3085
      %v3087 = vsel %vm855, %v3085, %v3083
      %v3088 = vmul.f32 %v3087, %v861
      %v3089 = vmul.f32 %v3086, %v865
      %3090 = vrot.lane.b32.xlu0 %v3056, 127
      %v3091 = vpop.permute.xlu0 %3090
      %3092 = vrot.lane.b32.xlu0 %v3057, 127
      %v3093 = vpop.permute.xlu0 %3092
      %v3094 = vsel %vm872, %v3091, %v3093
      %v3095 = vsel %vm872, %v3093, %v3091
      %v3096 = vmul.f32 %v3094, %v878
      %v3097 = vmul.f32 %v3095, %v882
      %3098 = vrot.lane.b32.xlu0 %v3056, 113
      %v3099 = vpop.permute.xlu0 %3098
      %3100 = vrot.lane.b32.xlu0 %v3057, 113
      %v3101 = vpop.permute.xlu0 %3100
      %v3102 = vsel %vm889, %v3099, %v3101
      %v3103 = vsel %vm889, %v3101, %v3099
      %v3104 = vmul.f32 %v3102, %v895
      %v3105 = vmul.f32 %v3103, %v899
      %3106 = vrot.lane.b32.xlu0 %v3056, 112
      %v3107 = vpop.permute.xlu0 %3106
      %3108 = vrot.lane.b32.xlu0 %v3057, 112
      %v3109 = vpop.permute.xlu0 %3108
      %v3110 = vsel %vm906, %v3107, %v3109
      %v3111 = vsel %vm906, %v3109, %v3107
      %v3112 = vmul.f32 %v3110, %v912
      %v3113 = vmul.f32 %v3111, %v916
      %3114 = vrot.lane.b32.xlu0 %v3056, 111
      %v3115 = vpop.permute.xlu0 %3114
      %3116 = vrot.lane.b32.xlu0 %v3057, 111
      %v3117 = vpop.permute.xlu0 %3116
      %v3118 = vsel %vm923, %v3115, %v3117
      %v3119 = vsel %vm923, %v3117, %v3115
      %v3120 = vmul.f32 %v3118, %v929
      %v3121 = vmul.f32 %v3119, %v933
      %3122 = vmatprep.subr.mxu0 %v3065
      %3123 = vmatpush1.msra.mxu0 %v3064
      %3124 = vmatprep.subr.mxu0 %v3073
      %3125 = vmatpush1.msra.mxu0 %v3072
      %3126 = vmatprep.subr.mxu0 %v3081
      %3127 = vmatpush1.msra.mxu0 %v3080
      %3128 = vmatprep.subr.mxu0 %v3089
      %3129 = vmatpush1.msra.mxu0 %v3088
      %3130 = vmatprep.subr.mxu0 %v3057
      %3131 = vmatpush1.msra.mxu0 %v3056
      %3132 = vmatprep.subr.mxu0 %v3097
      %3133 = vmatpush1.msra.mxu0 %v3096
      %3134 = vmatprep.subr.mxu0 %v3105
      %3135 = vmatpush1.msra.mxu0 %v3104
      %3136 = vmatprep.subr.mxu0 %v3113
      %3137 = vmatpush1.msra.mxu0 %v3112
      %3138 = vmatprep.subr.mxu0 %v3121
      %3139 = vmatpush1.msra.mxu0 %v3120
      %3140 = vmatprep.subr.mxu0 0.0
      %3141 = vmatpush1.msra.mxu0 0.0
      %3142 = vmatprep.subr.mxu0 0.0
      %3143 = vmatpush1.msra.mxu0 0.0
      %3144 = vmatprep.subr.mxu0 0.0
      %3145 = vmatpush1.msra.mxu0 0.0
      %3146 = vmatprep.subr.mxu0 0.0
      %3147 = vmatpush1.msra.mxu0 0.0
      %3148 = vmatprep.subr.mxu0 0.0
      %3149 = vmatpush1.msra.mxu0 0.0
      %3150 = vmatprep.subr.mxu0 0.0
      %3151 = vmatpush1.msra.mxu0 0.0
      %3152 = vmatprep.subr.mxu0 0.0
      %3153 = vmatpush1.msra.mxu0 0.0
      %3154 = vmatprep.subr.mxu0 0.0
      %3155 = vmatpush1.msra.mxu0 0.0
      %3156 = vmatprep.subr.mxu0 0.0
      %3157 = vmatpush1.msra.mxu0 0.0
      %3158 = vmatprep.subr.mxu0 0.0
      %3159 = vmatpush1.msra.mxu0 0.0
      %3160 = vmatprep.subr.mxu0 0.0
      %3161 = vmatpush1.msra.mxu0 0.0
      %3162 = vmatprep.subr.mxu0 0.0
      %3163 = vmatpush1.msra.mxu0 0.0
      %3164 = vmatprep.subr.mxu0 0.0
      %3165 = vmatpush1.msra.mxu0 0.0
      %3166 = vmatprep.subr.mxu0 0.0
      %3167 = vmatpush1.msra.mxu0 0.0
      %3168 = vmatprep.subr.mxu0 0.0
      %3169 = vmatpush1.msra.mxu0 0.0
      %3170 = vmatprep.subr.mxu0 0.0
      %3171 = vmatpush1.msra.mxu0 0.0
      %3172 = vmatprep.subr.mxu0 0.0
      %3173 = vmatpush1.msra.mxu0 0.0
      %3174 = vmatprep.subr.mxu0 0.0
      %3175 = vmatpush1.msra.mxu0 0.0
      %3176 = vmatprep.subr.mxu0 0.0
      %3177 = vmatpush1.msra.mxu0 0.0
      %3178 = vmatprep.subr.mxu0 0.0
      %3179 = vmatpush1.msra.mxu0 0.0
      %3180 = vmatprep.subr.mxu0 0.0
      %3181 = vmatpush1.msra.mxu0 0.0
      %3182 = vmatprep.subr.mxu0 0.0
      %3183 = vmatpush1.msra.mxu0 0.0
      %3184 = vmatprep.subr.mxu0 0.0
      %3185 = vmatpush1.msra.mxu0 0.0
      %3186 = vmatprep.mubr.f32.mxu0 0.0
      %3187 = vmatmul.mubr.f32.gmra.mrb[0].mxu0 %v1891
      %v3188 = vpop.f32.mrb[0].mxu0
      %v3189 = vadd.f32 %v1888, %v3188
      %v3190 = vpop.f32.mrb[0].mxu0
      %v3191 = vadd.f32 %v1888, %v3190
      %3192 = vdwg.mxu0
      %v3193 = vsub.f32 %v3189, %v2176
      %v3194 = vsub.f32 %v3191, %v2177
      %v3195 = vmul.f32 %v3193, 0.5
      %v3196 = vmul.f32 %v3194, 0.5
      %v3197 = vadd.f32 %v2153, %v3195
      %v3198 = vadd.f32 %v2154, %v3196
      %v3199 = vmul.f32 %v3197, 0.5
      %v3200 = vmul.f32 %v3198, 0.5
      %v3203 = vcombine.low %v3199, %v3200
      %v3205 = vunpack.c.l.s4 1983009808
      %v3206 = vunpack.c.0.s8 %v3205
      %v3207 = vlaneseq
      %v3208 = vshrl.u32 %v3207, 7
      %v3209 = vsub.s32 %v3206, %v3208
      %v3210 = vrot.slane %v3203, %v3209
      %v3212 = vsub.f32 %v2168, %v3210
      %v3215 = vunpack.c.l.s4 1983009808
      %v3216 = vunpack.c.0.s8 %v3215
      %v3217 = vlaneseq
      %v3218 = vshrl.u32 %v3217, 7
      %v3219 = vsub.s32 %v3216, %v3218
      %v3220 = vrot.slane %v3212, %v3219
      %v3221 = vcombine.high %v3220, %v3220
      %3224 = vmatprep.subr.mxu0 %v457
      %3225 = vmatpush1.msra.mxu0 %v456
      %3226 = vmatprep.subr.mxu0 %v459
      %3227 = vmatpush1.msra.mxu0 %v458
      %3228 = vmatprep.subr.mxu0 %v461
      %3229 = vmatpush1.msra.mxu0 %v460
      %3230 = vmatprep.subr.mxu0 %v463
      %3231 = vmatpush1.msra.mxu0 %v462
      %3232 = vmatprep.subr.mxu0 %v465
      %3233 = vmatpush1.msra.mxu0 %v464
      %3234 = vmatprep.subr.mxu0 %v467
      %3235 = vmatpush1.msra.mxu0 %v466
      %3236 = vmatprep.subr.mxu0 %v469
      %3237 = vmatpush1.msra.mxu0 %v468
      %3238 = vmatprep.subr.mxu0 %v471
      %3239 = vmatpush1.msra.mxu0 %v470
      %3240 = vmatprep.subr.mxu0 %v473
      %3241 = vmatpush1.msra.mxu0 %v472
      %3242 = vmatprep.subr.mxu0 %v475
      %3243 = vmatpush1.msra.mxu0 %v474
      %3244 = vmatprep.subr.mxu0 %v477
      %3245 = vmatpush1.msra.mxu0 %v476
      %3246 = vmatprep.subr.mxu0 %v479
      %3247 = vmatpush1.msra.mxu0 %v478
      %3248 = vmatprep.subr.mxu0 %v481
      %3249 = vmatpush1.msra.mxu0 %v480
      %3250 = vmatprep.subr.mxu0 %v483
      %3251 = vmatpush1.msra.mxu0 %v482
      %3252 = vmatprep.subr.mxu0 %v485
      %3253 = vmatpush1.msra.mxu0 %v484
      %3254 = vmatprep.subr.mxu0 %v487
      %3255 = vmatpush1.msra.mxu0 %v486
      %3256 = vmatprep.subr.mxu0 %v489
      %3257 = vmatpush1.msra.mxu0 %v488
      %3258 = vmatprep.subr.mxu0 %v491
      %3259 = vmatpush1.msra.mxu0 %v490
      %3260 = vmatprep.subr.mxu0 %v493
      %3261 = vmatpush1.msra.mxu0 %v492
      %3262 = vmatprep.subr.mxu0 %v495
      %3263 = vmatpush1.msra.mxu0 %v494
      %3264 = vmatprep.subr.mxu0 %v497
      %3265 = vmatpush1.msra.mxu0 %v496
      %3266 = vmatprep.subr.mxu0 %v499
      %3267 = vmatpush1.msra.mxu0 %v498
      %3268 = vmatprep.subr.mxu0 %v501
      %3269 = vmatpush1.msra.mxu0 %v500
      %3270 = vmatprep.subr.mxu0 %v503
      %3271 = vmatpush1.msra.mxu0 %v502
      %3272 = vmatprep.subr.mxu0 %v505
      %3273 = vmatpush1.msra.mxu0 %v504
      %3274 = vmatprep.subr.mxu0 %v507
      %3275 = vmatpush1.msra.mxu0 %v506
      %3276 = vmatprep.subr.mxu0 %v509
      %3277 = vmatpush1.msra.mxu0 %v508
      %3278 = vmatprep.subr.mxu0 %v511
      %3279 = vmatpush1.msra.mxu0 %v510
      %3280 = vmatprep.subr.mxu0 %v513
      %3281 = vmatpush1.msra.mxu0 %v512
      %3282 = vmatprep.subr.mxu0 %v515
      %3283 = vmatpush1.msra.mxu0 %v514
      %3284 = vmatprep.subr.mxu0 %v517
      %3285 = vmatpush1.msra.mxu0 %v516
      %3286 = vmatprep.subr.mxu0 %v519
      %3287 = vmatpush1.msra.mxu0 %v518
      %3288 = vmatprep.mubr.f32.mxu0 %v3221
      %3289 = vmatmul.mubr.f32.gmra.mrb[0].mxu0 %v3220
      %v3290 = vpop.f32.mrb[0].mxu0
      %v3291 = vadd.f32 0.0, %v3290
      %v3292 = vpop.f32.mrb[0].mxu0
      %v3293 = vadd.f32 0.0, %v3292
      %3294 = vdwg.mxu0
      %3295 = vmatprep.subr.mxu0 %v521
      %3296 = vmatpush1.msra.mxu0 %v520
      %3297 = vmatprep.subr.mxu0 %v523
      %3298 = vmatpush1.msra.mxu0 %v522
      %3299 = vmatprep.subr.mxu0 %v525
      %3300 = vmatpush1.msra.mxu0 %v524
      %3301 = vmatprep.subr.mxu0 %v527
      %3302 = vmatpush1.msra.mxu0 %v526
      %3303 = vmatprep.subr.mxu0 %v529
      %3304 = vmatpush1.msra.mxu0 %v528
      %3305 = vmatprep.subr.mxu0 %v531
      %3306 = vmatpush1.msra.mxu0 %v530
      %3307 = vmatprep.subr.mxu0 %v533
      %3308 = vmatpush1.msra.mxu0 %v532
      %3309 = vmatprep.subr.mxu0 %v535
      %3310 = vmatpush1.msra.mxu0 %v534
      %3311 = vmatprep.subr.mxu0 %v537
      %3312 = vmatpush1.msra.mxu0 %v536
      %3313 = vmatprep.subr.mxu0 %v539
      %3314 = vmatpush1.msra.mxu0 %v538
      %3315 = vmatprep.subr.mxu0 %v541
      %3316 = vmatpush1.msra.mxu0 %v540
      %3317 = vmatprep.subr.mxu0 %v543
      %3318 = vmatpush1.msra.mxu0 %v542
      %3319 = vmatprep.subr.mxu0 %v545
      %3320 = vmatpush1.msra.mxu0 %v544
      %3321 = vmatprep.subr.mxu0 %v547
      %3322 = vmatpush1.msra.mxu0 %v546
      %3323 = vmatprep.subr.mxu0 %v549
      %3324 = vmatpush1.msra.mxu0 %v548
      %3325 = vmatprep.subr.mxu0 %v551
      %3326 = vmatpush1.msra.mxu0 %v550
      %3327 = vmatprep.subr.mxu0 %v553
      %3328 = vmatpush1.msra.mxu0 %v552
      %3329 = vmatprep.subr.mxu0 %v555
      %3330 = vmatpush1.msra.mxu0 %v554
      %3331 = vmatprep.subr.mxu0 %v557
      %3332 = vmatpush1.msra.mxu0 %v556
      %3333 = vmatprep.subr.mxu0 %v559
      %3334 = vmatpush1.msra.mxu0 %v558
      %3335 = vmatprep.subr.mxu0 %v561
      %3336 = vmatpush1.msra.mxu0 %v560
      %3337 = vmatprep.subr.mxu0 %v563
      %3338 = vmatpush1.msra.mxu0 %v562
      %3339 = vmatprep.subr.mxu0 %v565
      %3340 = vmatpush1.msra.mxu0 %v564
      %3341 = vmatprep.subr.mxu0 %v567
      %3342 = vmatpush1.msra.mxu0 %v566
      %3343 = vmatprep.subr.mxu0 %v569
      %3344 = vmatpush1.msra.mxu0 %v568
      %3345 = vmatprep.subr.mxu0 %v571
      %3346 = vmatpush1.msra.mxu0 %v570
      %3347 = vmatprep.subr.mxu0 %v573
      %3348 = vmatpush1.msra.mxu0 %v572
      %3349 = vmatprep.subr.mxu0 %v575
      %3350 = vmatpush1.msra.mxu0 %v574
      %3351 = vmatprep.subr.mxu0 %v577
      %3352 = vmatpush1.msra.mxu0 %v576
      %3353 = vmatprep.subr.mxu0 %v579
      %3354 = vmatpush1.msra.mxu0 %v578
      %3355 = vmatprep.subr.mxu0 %v581
      %3356 = vmatpush1.msra.mxu0 %v580
      %3357 = vmatprep.subr.mxu0 %v583
      %3358 = vmatpush1.msra.mxu0 %v582
      %3359 = vmatprep.mubr.f32.mxu0 %v3221
      %3360 = vmatmul.mubr.f32.gmra.mrb[0].mxu0 %v3220
      %v3361 = vpop.f32.mrb[0].mxu0
      %v3362 = vadd.f32 0.0, %v3361
      %v3363 = vpop.f32.mrb[0].mxu0
      %v3364 = vadd.f32 0.0, %v3363
      %3365 = vdwg.mxu0
      %v3368 = vrot.slane %v3362, 1
      %v3369 = vrot.slane %v3364, 1
      %v3372 = vsub.f32 %v3291, %v3368
      %v3373 = vsub.f32 %v3293, %v3369
      %v3374 = vrot.slane %v3362, 7
      %v3375 = vrot.slane %v3364, 7
      %v3378 = vadd.f32 %v3291, %v3374
      %v3379 = vadd.f32 %v3293, %v3375
      %v3380 = vsel %vm757, %v3372, %v3378
      %v3381 = vsel %vm757, %v3373, %v3379
      %v3382 = vsub.f32 %v3380, %v767
      %v3383 = vsub.f32 %v3381, %v768
      %v3384 = vmul.f32 %v3382, 0.5
      %v3385 = vmul.f32 %v3383, 0.5
      %v3388 = vcombine.low %v3384, %v3385
      %v3390 = vunpack.c.l.s4 1983009808
      %v3391 = vunpack.c.0.s8 %v3390
      %v3392 = vlaneseq
      %v3393 = vshrl.u32 %v3392, 7
      %v3394 = vsub.s32 %v3391, %v3393
      %v3395 = vrot.slane %v3388, %v3394
      %v3397 = vsub.f32 %v3212, %v3395
      %v3400 = vunpack.c.l.s4 1983009808
      %v3401 = vunpack.c.0.s8 %v3400
      %v3402 = vlaneseq
      %v3403 = vshrl.u32 %v3402, 7
      %v3404 = vsub.s32 %v3401, %v3403
      %v3405 = vrot.slane %v3397, %v3404
      %v3406 = vcombine.high %v3405, %v3405
      %3409 = vrot.lane.b32.xlu0 %v3405, 17
      %v3410 = vpop.permute.xlu0 %3409
      %3411 = vrot.lane.b32.xlu0 %v3406, 17
      %v3412 = vpop.permute.xlu0 %3411
      %v3413 = vsel %vm804, %v3410, %v3412
      %v3414 = vsel %vm804, %v3412, %v3410
      %v3415 = vmul.f32 %v3414, %v810
      %v3416 = vmul.f32 %v3413, %v814
      %3417 = vrot.lane.b32.xlu0 %v3405, 16
      %v3418 = vpop.permute.xlu0 %3417
      %3419 = vrot.lane.b32.xlu0 %v3406, 16
      %v3420 = vpop.permute.xlu0 %3419
      %v3421 = vsel %vm821, %v3418, %v3420
      %v3422 = vsel %vm821, %v3420, %v3418
      %v3423 = vmul.f32 %v3422, %v827
      %v3424 = vmul.f32 %v3421, %v831
      %3425 = vrot.lane.b32.xlu0 %v3405, 15
      %v3426 = vpop.permute.xlu0 %3425
      %3427 = vrot.lane.b32.xlu0 %v3406, 15
      %v3428 = vpop.permute.xlu0 %3427
      %v3429 = vsel %vm838, %v3426, %v3428
      %v3430 = vsel %vm838, %v3428, %v3426
      %v3431 = vmul.f32 %v3430, %v844
      %v3432 = vmul.f32 %v3429, %v848
      %3433 = vrot.lane.b32.xlu0 %v3405, 1
      %v3434 = vpop.permute.xlu0 %3433
      %3435 = vrot.lane.b32.xlu0 %v3406, 1
      %v3436 = vpop.permute.xlu0 %3435
      %v3437 = vsel %vm855, %v3434, %v3436
      %v3438 = vsel %vm855, %v3436, %v3434
      %v3439 = vmul.f32 %v3438, %v861
      %v3440 = vmul.f32 %v3437, %v865
      %3441 = vrot.lane.b32.xlu0 %v3405, 127
      %v3442 = vpop.permute.xlu0 %3441
      %3443 = vrot.lane.b32.xlu0 %v3406, 127
      %v3444 = vpop.permute.xlu0 %3443
      %v3445 = vsel %vm872, %v3442, %v3444
      %v3446 = vsel %vm872, %v3444, %v3442
      %v3447 = vmul.f32 %v3445, %v878
      %v3448 = vmul.f32 %v3446, %v882
      %3449 = vrot.lane.b32.xlu0 %v3405, 113
      %v3450 = vpop.permute.xlu0 %3449
      %3451 = vrot.lane.b32.xlu0 %v3406, 113
      %v3452 = vpop.permute.xlu0 %3451
      %v3453 = vsel %vm889, %v3450, %v3452
      %v3454 = vsel %vm889, %v3452, %v3450
      %v3455 = vmul.f32 %v3453, %v895
      %v3456 = vmul.f32 %v3454, %v899
      %3457 = vrot.lane.b32.xlu0 %v3405, 112
      %v3458 = vpop.permute.xlu0 %3457
      %3459 = vrot.lane.b32.xlu0 %v3406, 112
      %v3460 = vpop.permute.xlu0 %3459
      %v3461 = vsel %vm906, %v3458, %v3460
      %v3462 = vsel %vm906, %v3460, %v3458
      %v3463 = vmul.f32 %v3461, %v912
      %v3464 = vmul.f32 %v3462, %v916
      %3465 = vrot.lane.b32.xlu0 %v3405, 111
      %v3466 = vpop.permute.xlu0 %3465
      %3467 = vrot.lane.b32.xlu0 %v3406, 111
      %v3468 = vpop.permute.xlu0 %3467
      %v3469 = vsel %vm923, %v3466, %v3468
      %v3470 = vsel %vm923, %v3468, %v3466
      %v3471 = vmul.f32 %v3469, %v929
      %v3472 = vmul.f32 %v3470, %v933
      %v3475 = vrot.slane %v3423, 6
      %v3476 = vrot.slane %v3424, 6
      %v3481 = vrot.slane %v3431, 4
      %v3482 = vrot.slane %v3432, 4
      %v3487 = vrot.slane %v3439, 2
      %v3488 = vrot.slane %v3440, 2
      %v3493 = vrot.slane %v3447, 6
      %v3494 = vrot.slane %v3448, 6
      %v3499 = vrot.slane %v3455, 4
      %v3500 = vrot.slane %v3456, 4
      %v3505 = vrot.slane %v3463, 2
      %v3506 = vrot.slane %v3464, 2
      %v3509 = vsel %vm972, %v3415, %v3475
      %v3510 = vsel %vm972, %v3416, %v3476
      %v3511 = vsel %vm975, %v3509, %v3481
      %v3512 = vsel %vm975, %v3510, %v3482
      %v3513 = vsel %vm978, %v3511, %v3487
      %v3514 = vsel %vm978, %v3512, %v3488
      %v3515 = vsel %vm972, %v3405, %v3493
      %v3516 = vsel %vm972, %v3406, %v3494
      %v3517 = vsel %vm975, %v3515, %v3499
      %v3518 = vsel %vm975, %v3516, %v3500
      %v3519 = vsel %vm978, %v3517, %v3505
      %v3520 = vsel %vm978, %v3518, %v3506
      %v3522 = vsel %vm972, %v3471, 0
      %v3525 = vsel %vm972, %v3472, 0
      %3527 = vmatprep.subr.mxu0 %v3514
      %3528 = vmatpush1.msra.mxu0 %v3513
      %3529 = vmatprep.subr.mxu0 %v3520
      %3530 = vmatpush1.msra.mxu0 %v3519
      %3531 = vmatprep.subr.mxu0 %v3525
      %3532 = vmatpush1.msra.mxu0 %v3522
      %3533 = vmatprep.subr.mxu0 0.0
      %3534 = vmatpush1.msra.mxu0 0.0
      %3535 = vmatprep.subr.mxu0 0.0
      %3536 = vmatpush1.msra.mxu0 0.0
      %3537 = vmatprep.subr.mxu0 0.0
      %3538 = vmatpush1.msra.mxu0 0.0
      %3539 = vmatprep.subr.mxu0 0.0
      %3540 = vmatpush1.msra.mxu0 0.0
      %3541 = vmatprep.subr.mxu0 0.0
      %3542 = vmatpush1.msra.mxu0 0.0
      %3543 = vmatprep.subr.mxu0 0.0
      %3544 = vmatpush1.msra.mxu0 0.0
      %3545 = vmatprep.subr.mxu0 0.0
      %3546 = vmatpush1.msra.mxu0 0.0
      %3547 = vmatprep.subr.mxu0 0.0
      %3548 = vmatpush1.msra.mxu0 0.0
      %3549 = vmatprep.subr.mxu0 0.0
      %3550 = vmatpush1.msra.mxu0 0.0
      %3551 = vmatprep.subr.mxu0 0.0
      %3552 = vmatpush1.msra.mxu0 0.0
      %3553 = vmatprep.subr.mxu0 0.0
      %3554 = vmatpush1.msra.mxu0 0.0
      %3555 = vmatprep.subr.mxu0 0.0
      %3556 = vmatpush1.msra.mxu0 0.0
      %3557 = vmatprep.subr.mxu0 0.0
      %3558 = vmatpush1.msra.mxu0 0.0
      %3559 = vmatprep.subr.mxu0 0.0
      %3560 = vmatpush1.msra.mxu0 0.0
      %3561 = vmatprep.subr.mxu0 0.0
      %3562 = vmatpush1.msra.mxu0 0.0
      %3563 = vmatprep.subr.mxu0 0.0
      %3564 = vmatpush1.msra.mxu0 0.0
      %3565 = vmatprep.subr.mxu0 0.0
      %3566 = vmatpush1.msra.mxu0 0.0
      %3567 = vmatprep.subr.mxu0 0.0
      %3568 = vmatpush1.msra.mxu0 0.0
      %3569 = vmatprep.subr.mxu0 0.0
      %3570 = vmatpush1.msra.mxu0 0.0
      %3571 = vmatprep.subr.mxu0 0.0
      %3572 = vmatpush1.msra.mxu0 0.0
      %3573 = vmatprep.subr.mxu0 0.0
      %3574 = vmatpush1.msra.mxu0 0.0
      %3575 = vmatprep.subr.mxu0 0.0
      %3576 = vmatpush1.msra.mxu0 0.0
      %3577 = vmatprep.subr.mxu0 0.0
      %3578 = vmatpush1.msra.mxu0 0.0
      %3579 = vmatprep.subr.mxu0 0.0
      %3580 = vmatpush1.msra.mxu0 0.0
      %3581 = vmatprep.subr.mxu0 0.0
      %3582 = vmatpush1.msra.mxu0 0.0
      %3583 = vmatprep.subr.mxu0 0.0
      %3584 = vmatpush1.msra.mxu0 0.0
      %3585 = vmatprep.subr.mxu0 0.0
      %3586 = vmatpush1.msra.mxu0 0.0
      %3587 = vmatprep.subr.mxu0 0.0
      %3588 = vmatpush1.msra.mxu0 0.0
      %3589 = vmatprep.subr.mxu0 0.0
      %3590 = vmatpush1.msra.mxu0 0.0
      %3591 = vmatprep.mubr.f32.mxu0 0.0
      %3592 = vmatmul.mubr.f32.gmra.mrb[0].mxu0 %v994
      %v3593 = vpop.f32.mrb[0].mxu0
      %v3594 = vadd.f32 %v990, %v3593
      %v3595 = vpop.f32.mrb[0].mxu0
      %v3596 = vadd.f32 %v990, %v3595
      %3597 = vdwg.mxu0
      %3598 = vrot.lane.b32.xlu0 %v3594, 17
      %v3599 = vpop.permute.xlu0 %3598
      %3600 = vrot.lane.b32.xlu0 %v3596, 17
      %v3601 = vpop.permute.xlu0 %3600
      %v3602 = vsel %vm804, %v3599, %v3601
      %v3603 = vsel %vm804, %v3601, %v3599
      %v3604 = vmul.f32 %v3603, %v810
      %v3605 = vmul.f32 %v3602, %v814
      %3606 = vrot.lane.b32.xlu0 %v3594, 16
      %v3607 = vpop.permute.xlu0 %3606
      %3608 = vrot.lane.b32.xlu0 %v3596, 16
      %v3609 = vpop.permute.xlu0 %3608
      %v3610 = vsel %vm821, %v3607, %v3609
      %v3611 = vsel %vm821, %v3609, %v3607
      %v3612 = vmul.f32 %v3611, %v827
      %v3613 = vmul.f32 %v3610, %v831
      %3614 = vrot.lane.b32.xlu0 %v3594, 15
      %v3615 = vpop.permute.xlu0 %3614
      %3616 = vrot.lane.b32.xlu0 %v3596, 15
      %v3617 = vpop.permute.xlu0 %3616
      %v3618 = vsel %vm838, %v3615, %v3617
      %v3619 = vsel %vm838, %v3617, %v3615
      %v3620 = vmul.f32 %v3619, %v844
      %v3621 = vmul.f32 %v3618, %v848
      %3622 = vrot.lane.b32.xlu0 %v3594, 1
      %v3623 = vpop.permute.xlu0 %3622
      %3624 = vrot.lane.b32.xlu0 %v3596, 1
      %v3625 = vpop.permute.xlu0 %3624
      %v3626 = vsel %vm855, %v3623, %v3625
      %v3627 = vsel %vm855, %v3625, %v3623
      %v3628 = vmul.f32 %v3627, %v861
      %v3629 = vmul.f32 %v3626, %v865
      %3630 = vrot.lane.b32.xlu0 %v3594, 127
      %v3631 = vpop.permute.xlu0 %3630
      %3632 = vrot.lane.b32.xlu0 %v3596, 127
      %v3633 = vpop.permute.xlu0 %3632
      %v3634 = vsel %vm872, %v3631, %v3633
      %v3635 = vsel %vm872, %v3633, %v3631
      %v3636 = vmul.f32 %v3634, %v878
      %v3637 = vmul.f32 %v3635, %v882
      %3638 = vrot.lane.b32.xlu0 %v3594, 113
      %v3639 = vpop.permute.xlu0 %3638
      %3640 = vrot.lane.b32.xlu0 %v3596, 113
      %v3641 = vpop.permute.xlu0 %3640
      %v3642 = vsel %vm889, %v3639, %v3641
      %v3643 = vsel %vm889, %v3641, %v3639
      %v3644 = vmul.f32 %v3642, %v895
      %v3645 = vmul.f32 %v3643, %v899
      %3646 = vrot.lane.b32.xlu0 %v3594, 112
      %v3647 = vpop.permute.xlu0 %3646
      %3648 = vrot.lane.b32.xlu0 %v3596, 112
      %v3649 = vpop.permute.xlu0 %3648
      %v3650 = vsel %vm906, %v3647, %v3649
      %v3651 = vsel %vm906, %v3649, %v3647
      %v3652 = vmul.f32 %v3650, %v912
      %v3653 = vmul.f32 %v3651, %v916
      %3654 = vrot.lane.b32.xlu0 %v3594, 111
      %v3655 = vpop.permute.xlu0 %3654
      %3656 = vrot.lane.b32.xlu0 %v3596, 111
      %v3657 = vpop.permute.xlu0 %3656
      %v3658 = vsel %vm923, %v3655, %v3657
      %v3659 = vsel %vm923, %v3657, %v3655
      %v3660 = vmul.f32 %v3658, %v929
      %v3661 = vmul.f32 %v3659, %v933
      %3662 = vmatprep.subr.mxu0 %v3605
      %3663 = vmatpush1.msra.mxu0 %v3604
      %3664 = vmatprep.subr.mxu0 %v3613
      %3665 = vmatpush1.msra.mxu0 %v3612
      %3666 = vmatprep.subr.mxu0 %v3621
      %3667 = vmatpush1.msra.mxu0 %v3620
      %3668 = vmatprep.subr.mxu0 %v3629
      %3669 = vmatpush1.msra.mxu0 %v3628
      %3670 = vmatprep.subr.mxu0 %v3596
      %3671 = vmatpush1.msra.mxu0 %v3594
      %3672 = vmatprep.subr.mxu0 %v3637
      %3673 = vmatpush1.msra.mxu0 %v3636
      %3674 = vmatprep.subr.mxu0 %v3645
      %3675 = vmatpush1.msra.mxu0 %v3644
      %3676 = vmatprep.subr.mxu0 %v3653
      %3677 = vmatpush1.msra.mxu0 %v3652
      %3678 = vmatprep.subr.mxu0 %v3661
      %3679 = vmatpush1.msra.mxu0 %v3660
      %3680 = vmatprep.subr.mxu0 0.0
      %3681 = vmatpush1.msra.mxu0 0.0
      %3682 = vmatprep.subr.mxu0 0.0
      %3683 = vmatpush1.msra.mxu0 0.0
      %3684 = vmatprep.subr.mxu0 0.0
      %3685 = vmatpush1.msra.mxu0 0.0
      %3686 = vmatprep.subr.mxu0 0.0
      %3687 = vmatpush1.msra.mxu0 0.0
      %3688 = vmatprep.subr.mxu0 0.0
      %3689 = vmatpush1.msra.mxu0 0.0
      %3690 = vmatprep.subr.mxu0 0.0
      %3691 = vmatpush1.msra.mxu0 0.0
      %3692 = vmatprep.subr.mxu0 0.0
      %3693 = vmatpush1.msra.mxu0 0.0
      %3694 = vmatprep.subr.mxu0 0.0
      %3695 = vmatpush1.msra.mxu0 0.0
      %3696 = vmatprep.subr.mxu0 0.0
      %3697 = vmatpush1.msra.mxu0 0.0
      %3698 = vmatprep.subr.mxu0 0.0
      %3699 = vmatpush1.msra.mxu0 0.0
      %3700 = vmatprep.subr.mxu0 0.0
      %3701 = vmatpush1.msra.mxu0 0.0
      %3702 = vmatprep.subr.mxu0 0.0
      %3703 = vmatpush1.msra.mxu0 0.0
      %3704 = vmatprep.subr.mxu0 0.0
      %3705 = vmatpush1.msra.mxu0 0.0
      %3706 = vmatprep.subr.mxu0 0.0
      %3707 = vmatpush1.msra.mxu0 0.0
      %3708 = vmatprep.subr.mxu0 0.0
      %3709 = vmatpush1.msra.mxu0 0.0
      %3710 = vmatprep.subr.mxu0 0.0
      %3711 = vmatpush1.msra.mxu0 0.0
      %3712 = vmatprep.subr.mxu0 0.0
      %3713 = vmatpush1.msra.mxu0 0.0
      %3714 = vmatprep.subr.mxu0 0.0
      %3715 = vmatpush1.msra.mxu0 0.0
      %3716 = vmatprep.subr.mxu0 0.0
      %3717 = vmatpush1.msra.mxu0 0.0
      %3718 = vmatprep.subr.mxu0 0.0
      %3719 = vmatpush1.msra.mxu0 0.0
      %3720 = vmatprep.subr.mxu0 0.0
      %3721 = vmatpush1.msra.mxu0 0.0
      %3722 = vmatprep.subr.mxu0 0.0
      %3723 = vmatpush1.msra.mxu0 0.0
      %3724 = vmatprep.subr.mxu0 0.0
      %3725 = vmatpush1.msra.mxu0 0.0
      %3726 = vmatprep.mubr.f32.mxu0 0.0
      %3727 = vmatmul.mubr.f32.gmra.mrb[0].mxu0 %v1146
      %v3728 = vpop.f32.mrb[0].mxu0
      %v3729 = vadd.f32 %v1142, %v3728
      %v3730 = vpop.f32.mrb[0].mxu0
      %v3731 = vadd.f32 %v1142, %v3730
      %3732 = vdwg.mxu0
      %v3733 = vmax.f32 %v3729, 0.0
      %v3734 = vmax.f32 %v3731, 0.0
      %3735 = vrot.lane.b32.xlu0 %v3733, 17
      %v3736 = vpop.permute.xlu0 %3735
      %3737 = vrot.lane.b32.xlu0 %v3734, 17
      %v3738 = vpop.permute.xlu0 %3737
      %v3739 = vsel %vm804, %v3736, %v3738
      %v3740 = vsel %vm804, %v3738, %v3736
      %v3741 = vmul.f32 %v3740, %v810
      %v3742 = vmul.f32 %v3739, %v814
      %3743 = vrot.lane.b32.xlu0 %v3733, 16
      %v3744 = vpop.permute.xlu0 %3743
      %3745 = vrot.lane.b32.xlu0 %v3734, 16
      %v3746 = vpop.permute.xlu0 %3745
      %v3747 = vsel %vm821, %v3744, %v3746
      %v3748 = vsel %vm821, %v3746, %v3744
      %v3749 = vmul.f32 %v3748, %v827
      %v3750 = vmul.f32 %v3747, %v831
      %3751 = vrot.lane.b32.xlu0 %v3733, 15
      %v3752 = vpop.permute.xlu0 %3751
      %3753 = vrot.lane.b32.xlu0 %v3734, 15
      %v3754 = vpop.permute.xlu0 %3753
      %v3755 = vsel %vm838, %v3752, %v3754
      %v3756 = vsel %vm838, %v3754, %v3752
      %v3757 = vmul.f32 %v3756, %v844
      %v3758 = vmul.f32 %v3755, %v848
      %3759 = vrot.lane.b32.xlu0 %v3733, 1
      %v3760 = vpop.permute.xlu0 %3759
      %3761 = vrot.lane.b32.xlu0 %v3734, 1
      %v3762 = vpop.permute.xlu0 %3761
      %v3763 = vsel %vm855, %v3760, %v3762
      %v3764 = vsel %vm855, %v3762, %v3760
      %v3765 = vmul.f32 %v3764, %v861
      %v3766 = vmul.f32 %v3763, %v865
      %3767 = vrot.lane.b32.xlu0 %v3733, 127
      %v3768 = vpop.permute.xlu0 %3767
      %3769 = vrot.lane.b32.xlu0 %v3734, 127
      %v3770 = vpop.permute.xlu0 %3769
      %v3771 = vsel %vm872, %v3768, %v3770
      %v3772 = vsel %vm872, %v3770, %v3768
      %v3773 = vmul.f32 %v3771, %v878
      %v3774 = vmul.f32 %v3772, %v882
      %3775 = vrot.lane.b32.xlu0 %v3733, 113
      %v3776 = vpop.permute.xlu0 %3775
      %3777 = vrot.lane.b32.xlu0 %v3734, 113
      %v3778 = vpop.permute.xlu0 %3777
      %v3779 = vsel %vm889, %v3776, %v3778
      %v3780 = vsel %vm889, %v3778, %v3776
      %v3781 = vmul.f32 %v3779, %v895
      %v3782 = vmul.f32 %v3780, %v899
      %3783 = vrot.lane.b32.xlu0 %v3733, 112
      %v3784 = vpop.permute.xlu0 %3783
      %3785 = vrot.lane.b32.xlu0 %v3734, 112
      %v3786 = vpop.permute.xlu0 %3785
      %v3787 = vsel %vm906, %v3784, %v3786
      %v3788 = vsel %vm906, %v3786, %v3784
      %v3789 = vmul.f32 %v3787, %v912
      %v3790 = vmul.f32 %v3788, %v916
      %3791 = vrot.lane.b32.xlu0 %v3733, 111
      %v3792 = vpop.permute.xlu0 %3791
      %3793 = vrot.lane.b32.xlu0 %v3734, 111
      %v3794 = vpop.permute.xlu0 %3793
      %v3795 = vsel %vm923, %v3792, %v3794
      %v3796 = vsel %vm923, %v3794, %v3792
      %v3797 = vmul.f32 %v3795, %v929
      %v3798 = vmul.f32 %v3796, %v933
      %3799 = vmatprep.subr.mxu0 %v3742
      %3800 = vmatpush1.msra.mxu0 %v3741
      %3801 = vmatprep.subr.mxu0 %v3750
      %3802 = vmatpush1.msra.mxu0 %v3749
      %3803 = vmatprep.subr.mxu0 %v3758
      %3804 = vmatpush1.msra.mxu0 %v3757
      %3805 = vmatprep.subr.mxu0 %v3766
      %3806 = vmatpush1.msra.mxu0 %v3765
      %3807 = vmatprep.subr.mxu0 %v3734
      %3808 = vmatpush1.msra.mxu0 %v3733
      %3809 = vmatprep.subr.mxu0 %v3774
      %3810 = vmatpush1.msra.mxu0 %v3773
      %3811 = vmatprep.subr.mxu0 %v3782
      %3812 = vmatpush1.msra.mxu0 %v3781
      %3813 = vmatprep.subr.mxu0 %v3790
      %3814 = vmatpush1.msra.mxu0 %v3789
      %3815 = vmatprep.subr.mxu0 %v3798
      %3816 = vmatpush1.msra.mxu0 %v3797
      %3817 = vmatprep.subr.mxu0 0.0
      %3818 = vmatpush1.msra.mxu0 0.0
      %3819 = vmatprep.subr.mxu0 0.0
      %3820 = vmatpush1.msra.mxu0 0.0
      %3821 = vmatprep.subr.mxu0 0.0
      %3822 = vmatpush1.msra.mxu0 0.0
      %3823 = vmatprep.subr.mxu0 0.0
      %3824 = vmatpush1.msra.mxu0 0.0
      %3825 = vmatprep.subr.mxu0 0.0
      %3826 = vmatpush1.msra.mxu0 0.0
      %3827 = vmatprep.subr.mxu0 0.0
      %3828 = vmatpush1.msra.mxu0 0.0
      %3829 = vmatprep.subr.mxu0 0.0
      %3830 = vmatpush1.msra.mxu0 0.0
      %3831 = vmatprep.subr.mxu0 0.0
      %3832 = vmatpush1.msra.mxu0 0.0
      %3833 = vmatprep.subr.mxu0 0.0
      %3834 = vmatpush1.msra.mxu0 0.0
      %3835 = vmatprep.subr.mxu0 0.0
      %3836 = vmatpush1.msra.mxu0 0.0
      %3837 = vmatprep.subr.mxu0 0.0
      %3838 = vmatpush1.msra.mxu0 0.0
      %3839 = vmatprep.subr.mxu0 0.0
      %3840 = vmatpush1.msra.mxu0 0.0
      %3841 = vmatprep.subr.mxu0 0.0
      %3842 = vmatpush1.msra.mxu0 0.0
      %3843 = vmatprep.subr.mxu0 0.0
      %3844 = vmatpush1.msra.mxu0 0.0
      %3845 = vmatprep.subr.mxu0 0.0
      %3846 = vmatpush1.msra.mxu0 0.0
      %3847 = vmatprep.subr.mxu0 0.0
      %3848 = vmatpush1.msra.mxu0 0.0
      %3849 = vmatprep.subr.mxu0 0.0
      %3850 = vmatpush1.msra.mxu0 0.0
      %3851 = vmatprep.subr.mxu0 0.0
      %3852 = vmatpush1.msra.mxu0 0.0
      %3853 = vmatprep.subr.mxu0 0.0
      %3854 = vmatpush1.msra.mxu0 0.0
      %3855 = vmatprep.subr.mxu0 0.0
      %3856 = vmatpush1.msra.mxu0 0.0
      %3857 = vmatprep.subr.mxu0 0.0
      %3858 = vmatpush1.msra.mxu0 0.0
      %3859 = vmatprep.subr.mxu0 0.0
      %3860 = vmatpush1.msra.mxu0 0.0
      %3861 = vmatprep.subr.mxu0 0.0
      %3862 = vmatpush1.msra.mxu0 0.0
      %3863 = vmatprep.mubr.f32.mxu0 0.0
      %3864 = vmatmul.mubr.f32.gmra.mrb[0].mxu0 %v1295
      %v3865 = vpop.f32.mrb[0].mxu0
      %v3866 = vadd.f32 %v1292, %v3865
      %v3867 = vpop.f32.mrb[0].mxu0
      %v3868 = vadd.f32 %v1292, %v3867
      %3869 = vdwg.mxu0
      %v3870 = vmul.f32 %v3866, 0.1
      %v3871 = vmul.f32 %v3868, 0.1
      %v3872 = vadd.f32 %v3870, %v3594
      %v3873 = vadd.f32 %v3871, %v3596
      %3874 = vrot.lane.b32.xlu0 %v3872, 17
      %v3875 = vpop.permute.xlu0 %3874
      %3876 = vrot.lane.b32.xlu0 %v3873, 17
      %v3877 = vpop.permute.xlu0 %3876
      %v3878 = vsel %vm804, %v3875, %v3877
      %v3879 = vsel %vm804, %v3877, %v3875
      %v3880 = vmul.f32 %v3879, %v810
      %v3881 = vmul.f32 %v3878, %v814
      %3882 = vrot.lane.b32.xlu0 %v3872, 16
      %v3883 = vpop.permute.xlu0 %3882
      %3884 = vrot.lane.b32.xlu0 %v3873, 16
      %v3885 = vpop.permute.xlu0 %3884
      %v3886 = vsel %vm821, %v3883, %v3885
      %v3887 = vsel %vm821, %v3885, %v3883
      %v3888 = vmul.f32 %v3887, %v827
      %v3889 = vmul.f32 %v3886, %v831
      %3890 = vrot.lane.b32.xlu0 %v3872, 15
      %v3891 = vpop.permute.xlu0 %3890
      %3892 = vrot.lane.b32.xlu0 %v3873, 15
      %v3893 = vpop.permute.xlu0 %3892
      %v3894 = vsel %vm838, %v3891, %v3893
      %v3895 = vsel %vm838, %v3893, %v3891
      %v3896 = vmul.f32 %v3895, %v844
      %v3897 = vmul.f32 %v3894, %v848
      %3898 = vrot.lane.b32.xlu0 %v3872, 1
      %v3899 = vpop.permute.xlu0 %3898
      %3900 = vrot.lane.b32.xlu0 %v3873, 1
      %v3901 = vpop.permute.xlu0 %3900
      %v3902 = vsel %vm855, %v3899, %v3901
      %v3903 = vsel %vm855, %v3901, %v3899
      %v3904 = vmul.f32 %v3903, %v861
      %v3905 = vmul.f32 %v3902, %v865
      %3906 = vrot.lane.b32.xlu0 %v3872, 127
      %v3907 = vpop.permute.xlu0 %3906
      %3908 = vrot.lane.b32.xlu0 %v3873, 127
      %v3909 = vpop.permute.xlu0 %3908
      %v3910 = vsel %vm872, %v3907, %v3909
      %v3911 = vsel %vm872, %v3909, %v3907
      %v3912 = vmul.f32 %v3910, %v878
      %v3913 = vmul.f32 %v3911, %v882
      %3914 = vrot.lane.b32.xlu0 %v3872, 113
      %v3915 = vpop.permute.xlu0 %3914
      %3916 = vrot.lane.b32.xlu0 %v3873, 113
      %v3917 = vpop.permute.xlu0 %3916
      %v3918 = vsel %vm889, %v3915, %v3917
      %v3919 = vsel %vm889, %v3917, %v3915
      %v3920 = vmul.f32 %v3918, %v895
      %v3921 = vmul.f32 %v3919, %v899
      %3922 = vrot.lane.b32.xlu0 %v3872, 112
      %v3923 = vpop.permute.xlu0 %3922
      %3924 = vrot.lane.b32.xlu0 %v3873, 112
      %v3925 = vpop.permute.xlu0 %3924
      %v3926 = vsel %vm906, %v3923, %v3925
      %v3927 = vsel %vm906, %v3925, %v3923
      %v3928 = vmul.f32 %v3926, %v912
      %v3929 = vmul.f32 %v3927, %v916
      %3930 = vrot.lane.b32.xlu0 %v3872, 111
      %v3931 = vpop.permute.xlu0 %3930
      %3932 = vrot.lane.b32.xlu0 %v3873, 111
      %v3933 = vpop.permute.xlu0 %3932
      %v3934 = vsel %vm923, %v3931, %v3933
      %v3935 = vsel %vm923, %v3933, %v3931
      %v3936 = vmul.f32 %v3934, %v929
      %v3937 = vmul.f32 %v3935, %v933
      %3938 = vmatprep.subr.mxu0 %v3881
      %3939 = vmatpush1.msra.mxu0 %v3880
      %3940 = vmatprep.subr.mxu0 %v3889
      %3941 = vmatpush1.msra.mxu0 %v3888
      %3942 = vmatprep.subr.mxu0 %v3897
      %3943 = vmatpush1.msra.mxu0 %v3896
      %3944 = vmatprep.subr.mxu0 %v3905
      %3945 = vmatpush1.msra.mxu0 %v3904
      %3946 = vmatprep.subr.mxu0 %v3873
      %3947 = vmatpush1.msra.mxu0 %v3872
      %3948 = vmatprep.subr.mxu0 %v3913
      %3949 = vmatpush1.msra.mxu0 %v3912
      %3950 = vmatprep.subr.mxu0 %v3921
      %3951 = vmatpush1.msra.mxu0 %v3920
      %3952 = vmatprep.subr.mxu0 %v3929
      %3953 = vmatpush1.msra.mxu0 %v3928
      %3954 = vmatprep.subr.mxu0 %v3937
      %3955 = vmatpush1.msra.mxu0 %v3936
      %3956 = vmatprep.subr.mxu0 0.0
      %3957 = vmatpush1.msra.mxu0 0.0
      %3958 = vmatprep.subr.mxu0 0.0
      %3959 = vmatpush1.msra.mxu0 0.0
      %3960 = vmatprep.subr.mxu0 0.0
      %3961 = vmatpush1.msra.mxu0 0.0
      %3962 = vmatprep.subr.mxu0 0.0
      %3963 = vmatpush1.msra.mxu0 0.0
      %3964 = vmatprep.subr.mxu0 0.0
      %3965 = vmatpush1.msra.mxu0 0.0
      %3966 = vmatprep.subr.mxu0 0.0
      %3967 = vmatpush1.msra.mxu0 0.0
      %3968 = vmatprep.subr.mxu0 0.0
      %3969 = vmatpush1.msra.mxu0 0.0
      %3970 = vmatprep.subr.mxu0 0.0
      %3971 = vmatpush1.msra.mxu0 0.0
      %3972 = vmatprep.subr.mxu0 0.0
      %3973 = vmatpush1.msra.mxu0 0.0
      %3974 = vmatprep.subr.mxu0 0.0
      %3975 = vmatpush1.msra.mxu0 0.0
      %3976 = vmatprep.subr.mxu0 0.0
      %3977 = vmatpush1.msra.mxu0 0.0
      %3978 = vmatprep.subr.mxu0 0.0
      %3979 = vmatpush1.msra.mxu0 0.0
      %3980 = vmatprep.subr.mxu0 0.0
      %3981 = vmatpush1.msra.mxu0 0.0
      %3982 = vmatprep.subr.mxu0 0.0
      %3983 = vmatpush1.msra.mxu0 0.0
      %3984 = vmatprep.subr.mxu0 0.0
      %3985 = vmatpush1.msra.mxu0 0.0
      %3986 = vmatprep.subr.mxu0 0.0
      %3987 = vmatpush1.msra.mxu0 0.0
      %3988 = vmatprep.subr.mxu0 0.0
      %3989 = vmatpush1.msra.mxu0 0.0
      %3990 = vmatprep.subr.mxu0 0.0
      %3991 = vmatpush1.msra.mxu0 0.0
      %3992 = vmatprep.subr.mxu0 0.0
      %3993 = vmatpush1.msra.mxu0 0.0
      %3994 = vmatprep.subr.mxu0 0.0
      %3995 = vmatpush1.msra.mxu0 0.0
      %3996 = vmatprep.subr.mxu0 0.0
      %3997 = vmatpush1.msra.mxu0 0.0
      %3998 = vmatprep.subr.mxu0 0.0
      %3999 = vmatpush1.msra.mxu0 0.0
      %4000 = vmatprep.subr.mxu0 0.0
      %4001 = vmatpush1.msra.mxu0 0.0
      %4002 = vmatprep.mubr.f32.mxu0 0.0
      %4003 = vmatmul.mubr.f32.gmra.mrb[0].mxu0 %v1446
      %v4004 = vpop.f32.mrb[0].mxu0
      %v4005 = vadd.f32 %v1443, %v4004
      %v4006 = vpop.f32.mrb[0].mxu0
      %v4007 = vadd.f32 %v1443, %v4006
      %4008 = vdwg.mxu0
      %v4009 = vmax.f32 %v4005, 0.0
      %v4010 = vmax.f32 %v4007, 0.0
      %4011 = vrot.lane.b32.xlu0 %v4009, 17
      %v4012 = vpop.permute.xlu0 %4011
      %4013 = vrot.lane.b32.xlu0 %v4010, 17
      %v4014 = vpop.permute.xlu0 %4013
      %v4015 = vsel %vm804, %v4012, %v4014
      %v4016 = vsel %vm804, %v4014, %v4012
      %v4017 = vmul.f32 %v4016, %v810
      %v4018 = vmul.f32 %v4015, %v814
      %4019 = vrot.lane.b32.xlu0 %v4009, 16
      %v4020 = vpop.permute.xlu0 %4019
      %4021 = vrot.lane.b32.xlu0 %v4010, 16
      %v4022 = vpop.permute.xlu0 %4021
      %v4023 = vsel %vm821, %v4020, %v4022
      %v4024 = vsel %vm821, %v4022, %v4020
      %v4025 = vmul.f32 %v4024, %v827
      %v4026 = vmul.f32 %v4023, %v831
      %4027 = vrot.lane.b32.xlu0 %v4009, 15
      %v4028 = vpop.permute.xlu0 %4027
      %4029 = vrot.lane.b32.xlu0 %v4010, 15
      %v4030 = vpop.permute.xlu0 %4029
      %v4031 = vsel %vm838, %v4028, %v4030
      %v4032 = vsel %vm838, %v4030, %v4028
      %v4033 = vmul.f32 %v4032, %v844
      %v4034 = vmul.f32 %v4031, %v848
      %4035 = vrot.lane.b32.xlu0 %v4009, 1
      %v4036 = vpop.permute.xlu0 %4035
      %4037 = vrot.lane.b32.xlu0 %v4010, 1
      %v4038 = vpop.permute.xlu0 %4037
      %v4039 = vsel %vm855, %v4036, %v4038
      %v4040 = vsel %vm855, %v4038, %v4036
      %v4041 = vmul.f32 %v4040, %v861
      %v4042 = vmul.f32 %v4039, %v865
      %4043 = vrot.lane.b32.xlu0 %v4009, 127
      %v4044 = vpop.permute.xlu0 %4043
      %4045 = vrot.lane.b32.xlu0 %v4010, 127
      %v4046 = vpop.permute.xlu0 %4045
      %v4047 = vsel %vm872, %v4044, %v4046
      %v4048 = vsel %vm872, %v4046, %v4044
      %v4049 = vmul.f32 %v4047, %v878
      %v4050 = vmul.f32 %v4048, %v882
      %4051 = vrot.lane.b32.xlu0 %v4009, 113
      %v4052 = vpop.permute.xlu0 %4051
      %4053 = vrot.lane.b32.xlu0 %v4010, 113
      %v4054 = vpop.permute.xlu0 %4053
      %v4055 = vsel %vm889, %v4052, %v4054
      %v4056 = vsel %vm889, %v4054, %v4052
      %v4057 = vmul.f32 %v4055, %v895
      %v4058 = vmul.f32 %v4056, %v899
      %4059 = vrot.lane.b32.xlu0 %v4009, 112
      %v4060 = vpop.permute.xlu0 %4059
      %4061 = vrot.lane.b32.xlu0 %v4010, 112
      %v4062 = vpop.permute.xlu0 %4061
      %v4063 = vsel %vm906, %v4060, %v4062
      %v4064 = vsel %vm906, %v4062, %v4060
      %v4065 = vmul.f32 %v4063, %v912
      %v4066 = vmul.f32 %v4064, %v916
      %4067 = vrot.lane.b32.xlu0 %v4009, 111
      %v4068 = vpop.permute.xlu0 %4067
      %4069 = vrot.lane.b32.xlu0 %v4010, 111
      %v4070 = vpop.permute.xlu0 %4069
      %v4071 = vsel %vm923, %v4068, %v4070
      %v4072 = vsel %vm923, %v4070, %v4068
      %v4073 = vmul.f32 %v4071, %v929
      %v4074 = vmul.f32 %v4072, %v933
      %4075 = vmatprep.subr.mxu0 %v4018
      %4076 = vmatpush1.msra.mxu0 %v4017
      %4077 = vmatprep.subr.mxu0 %v4026
      %4078 = vmatpush1.msra.mxu0 %v4025
      %4079 = vmatprep.subr.mxu0 %v4034
      %4080 = vmatpush1.msra.mxu0 %v4033
      %4081 = vmatprep.subr.mxu0 %v4042
      %4082 = vmatpush1.msra.mxu0 %v4041
      %4083 = vmatprep.subr.mxu0 %v4010
      %4084 = vmatpush1.msra.mxu0 %v4009
      %4085 = vmatprep.subr.mxu0 %v4050
      %4086 = vmatpush1.msra.mxu0 %v4049
      %4087 = vmatprep.subr.mxu0 %v4058
      %4088 = vmatpush1.msra.mxu0 %v4057
      %4089 = vmatprep.subr.mxu0 %v4066
      %4090 = vmatpush1.msra.mxu0 %v4065
      %4091 = vmatprep.subr.mxu0 %v4074
      %4092 = vmatpush1.msra.mxu0 %v4073
      %4093 = vmatprep.subr.mxu0 0.0
      %4094 = vmatpush1.msra.mxu0 0.0
      %4095 = vmatprep.subr.mxu0 0.0
      %4096 = vmatpush1.msra.mxu0 0.0
      %4097 = vmatprep.subr.mxu0 0.0
      %4098 = vmatpush1.msra.mxu0 0.0
      %4099 = vmatprep.subr.mxu0 0.0
      %4100 = vmatpush1.msra.mxu0 0.0
      %4101 = vmatprep.subr.mxu0 0.0
      %4102 = vmatpush1.msra.mxu0 0.0
      %4103 = vmatprep.subr.mxu0 0.0
      %4104 = vmatpush1.msra.mxu0 0.0
      %4105 = vmatprep.subr.mxu0 0.0
      %4106 = vmatpush1.msra.mxu0 0.0
      %4107 = vmatprep.subr.mxu0 0.0
      %4108 = vmatpush1.msra.mxu0 0.0
      %4109 = vmatprep.subr.mxu0 0.0
      %4110 = vmatpush1.msra.mxu0 0.0
      %4111 = vmatprep.subr.mxu0 0.0
      %4112 = vmatpush1.msra.mxu0 0.0
      %4113 = vmatprep.subr.mxu0 0.0
      %4114 = vmatpush1.msra.mxu0 0.0
      %4115 = vmatprep.subr.mxu0 0.0
      %4116 = vmatpush1.msra.mxu0 0.0
      %4117 = vmatprep.subr.mxu0 0.0
      %4118 = vmatpush1.msra.mxu0 0.0
      %4119 = vmatprep.subr.mxu0 0.0
      %4120 = vmatpush1.msra.mxu0 0.0
      %4121 = vmatprep.subr.mxu0 0.0
      %4122 = vmatpush1.msra.mxu0 0.0
      %4123 = vmatprep.subr.mxu0 0.0
      %4124 = vmatpush1.msra.mxu0 0.0
      %4125 = vmatprep.subr.mxu0 0.0
      %4126 = vmatpush1.msra.mxu0 0.0
      %4127 = vmatprep.subr.mxu0 0.0
      %4128 = vmatpush1.msra.mxu0 0.0
      %4129 = vmatprep.subr.mxu0 0.0
      %4130 = vmatpush1.msra.mxu0 0.0
      %4131 = vmatprep.subr.mxu0 0.0
      %4132 = vmatpush1.msra.mxu0 0.0
      %4133 = vmatprep.subr.mxu0 0.0
      %4134 = vmatpush1.msra.mxu0 0.0
      %4135 = vmatprep.subr.mxu0 0.0
      %4136 = vmatpush1.msra.mxu0 0.0
      %4137 = vmatprep.subr.mxu0 0.0
      %4138 = vmatpush1.msra.mxu0 0.0
      %4139 = vmatprep.mubr.f32.mxu0 0.0
      %4140 = vmatmul.mubr.f32.gmra.mrb[0].mxu0 %v1595
      %v4141 = vpop.f32.mrb[0].mxu0
      %v4142 = vadd.f32 %v1592, %v4141
      %v4143 = vpop.f32.mrb[0].mxu0
      %v4144 = vadd.f32 %v1592, %v4143
      %4145 = vdwg.mxu0
      %v4146 = vmul.f32 %v4142, 0.1
      %v4147 = vmul.f32 %v4144, 0.1
      %v4148 = vadd.f32 %v4146, %v3872
      %v4149 = vadd.f32 %v4147, %v3873
      %4150 = vrot.lane.b32.xlu0 %v4148, 17
      %v4151 = vpop.permute.xlu0 %4150
      %4152 = vrot.lane.b32.xlu0 %v4149, 17
      %v4153 = vpop.permute.xlu0 %4152
      %v4154 = vsel %vm804, %v4151, %v4153
      %v4155 = vsel %vm804, %v4153, %v4151
      %v4156 = vmul.f32 %v4155, %v810
      %v4157 = vmul.f32 %v4154, %v814
      %4158 = vrot.lane.b32.xlu0 %v4148, 16
      %v4159 = vpop.permute.xlu0 %4158
      %4160 = vrot.lane.b32.xlu0 %v4149, 16
      %v4161 = vpop.permute.xlu0 %4160
      %v4162 = vsel %vm821, %v4159, %v4161
      %v4163 = vsel %vm821, %v4161, %v4159
      %v4164 = vmul.f32 %v4163, %v827
      %v4165 = vmul.f32 %v4162, %v831
      %4166 = vrot.lane.b32.xlu0 %v4148, 15
      %v4167 = vpop.permute.xlu0 %4166
      %4168 = vrot.lane.b32.xlu0 %v4149, 15
      %v4169 = vpop.permute.xlu0 %4168
      %v4170 = vsel %vm838, %v4167, %v4169
      %v4171 = vsel %vm838, %v4169, %v4167
      %v4172 = vmul.f32 %v4171, %v844
      %v4173 = vmul.f32 %v4170, %v848
      %4174 = vrot.lane.b32.xlu0 %v4148, 1
      %v4175 = vpop.permute.xlu0 %4174
      %4176 = vrot.lane.b32.xlu0 %v4149, 1
      %v4177 = vpop.permute.xlu0 %4176
      %v4178 = vsel %vm855, %v4175, %v4177
      %v4179 = vsel %vm855, %v4177, %v4175
      %v4180 = vmul.f32 %v4179, %v861
      %v4181 = vmul.f32 %v4178, %v865
      %4182 = vrot.lane.b32.xlu0 %v4148, 127
      %v4183 = vpop.permute.xlu0 %4182
      %4184 = vrot.lane.b32.xlu0 %v4149, 127
      %v4185 = vpop.permute.xlu0 %4184
      %v4186 = vsel %vm872, %v4183, %v4185
      %v4187 = vsel %vm872, %v4185, %v4183
      %v4188 = vmul.f32 %v4186, %v878
      %v4189 = vmul.f32 %v4187, %v882
      %4190 = vrot.lane.b32.xlu0 %v4148, 113
      %v4191 = vpop.permute.xlu0 %4190
      %4192 = vrot.lane.b32.xlu0 %v4149, 113
      %v4193 = vpop.permute.xlu0 %4192
      %v4194 = vsel %vm889, %v4191, %v4193
      %v4195 = vsel %vm889, %v4193, %v4191
      %v4196 = vmul.f32 %v4194, %v895
      %v4197 = vmul.f32 %v4195, %v899
      %4198 = vrot.lane.b32.xlu0 %v4148, 112
      %v4199 = vpop.permute.xlu0 %4198
      %4200 = vrot.lane.b32.xlu0 %v4149, 112
      %v4201 = vpop.permute.xlu0 %4200
      %v4202 = vsel %vm906, %v4199, %v4201
      %v4203 = vsel %vm906, %v4201, %v4199
      %v4204 = vmul.f32 %v4202, %v912
      %v4205 = vmul.f32 %v4203, %v916
      %4206 = vrot.lane.b32.xlu0 %v4148, 111
      %v4207 = vpop.permute.xlu0 %4206
      %4208 = vrot.lane.b32.xlu0 %v4149, 111
      %v4209 = vpop.permute.xlu0 %4208
      %v4210 = vsel %vm923, %v4207, %v4209
      %v4211 = vsel %vm923, %v4209, %v4207
      %v4212 = vmul.f32 %v4210, %v929
      %v4213 = vmul.f32 %v4211, %v933
      %4214 = vmatprep.subr.mxu0 %v4157
      %4215 = vmatpush1.msra.mxu0 %v4156
      %4216 = vmatprep.subr.mxu0 %v4165
      %4217 = vmatpush1.msra.mxu0 %v4164
      %4218 = vmatprep.subr.mxu0 %v4173
      %4219 = vmatpush1.msra.mxu0 %v4172
      %4220 = vmatprep.subr.mxu0 %v4181
      %4221 = vmatpush1.msra.mxu0 %v4180
      %4222 = vmatprep.subr.mxu0 %v4149
      %4223 = vmatpush1.msra.mxu0 %v4148
      %4224 = vmatprep.subr.mxu0 %v4189
      %4225 = vmatpush1.msra.mxu0 %v4188
      %4226 = vmatprep.subr.mxu0 %v4197
      %4227 = vmatpush1.msra.mxu0 %v4196
      %4228 = vmatprep.subr.mxu0 %v4205
      %4229 = vmatpush1.msra.mxu0 %v4204
      %4230 = vmatprep.subr.mxu0 %v4213
      %4231 = vmatpush1.msra.mxu0 %v4212
      %4232 = vmatprep.subr.mxu0 0.0
      %4233 = vmatpush1.msra.mxu0 0.0
      %4234 = vmatprep.subr.mxu0 0.0
      %4235 = vmatpush1.msra.mxu0 0.0
      %4236 = vmatprep.subr.mxu0 0.0
      %4237 = vmatpush1.msra.mxu0 0.0
      %4238 = vmatprep.subr.mxu0 0.0
      %4239 = vmatpush1.msra.mxu0 0.0
      %4240 = vmatprep.subr.mxu0 0.0
      %4241 = vmatpush1.msra.mxu0 0.0
      %4242 = vmatprep.subr.mxu0 0.0
      %4243 = vmatpush1.msra.mxu0 0.0
      %4244 = vmatprep.subr.mxu0 0.0
      %4245 = vmatpush1.msra.mxu0 0.0
      %4246 = vmatprep.subr.mxu0 0.0
      %4247 = vmatpush1.msra.mxu0 0.0
      %4248 = vmatprep.subr.mxu0 0.0
      %4249 = vmatpush1.msra.mxu0 0.0
      %4250 = vmatprep.subr.mxu0 0.0
      %4251 = vmatpush1.msra.mxu0 0.0
      %4252 = vmatprep.subr.mxu0 0.0
      %4253 = vmatpush1.msra.mxu0 0.0
      %4254 = vmatprep.subr.mxu0 0.0
      %4255 = vmatpush1.msra.mxu0 0.0
      %4256 = vmatprep.subr.mxu0 0.0
      %4257 = vmatpush1.msra.mxu0 0.0
      %4258 = vmatprep.subr.mxu0 0.0
      %4259 = vmatpush1.msra.mxu0 0.0
      %4260 = vmatprep.subr.mxu0 0.0
      %4261 = vmatpush1.msra.mxu0 0.0
      %4262 = vmatprep.subr.mxu0 0.0
      %4263 = vmatpush1.msra.mxu0 0.0
      %4264 = vmatprep.subr.mxu0 0.0
      %4265 = vmatpush1.msra.mxu0 0.0
      %4266 = vmatprep.subr.mxu0 0.0
      %4267 = vmatpush1.msra.mxu0 0.0
      %4268 = vmatprep.subr.mxu0 0.0
      %4269 = vmatpush1.msra.mxu0 0.0
      %4270 = vmatprep.subr.mxu0 0.0
      %4271 = vmatpush1.msra.mxu0 0.0
      %4272 = vmatprep.subr.mxu0 0.0
      %4273 = vmatpush1.msra.mxu0 0.0
      %4274 = vmatprep.subr.mxu0 0.0
      %4275 = vmatpush1.msra.mxu0 0.0
      %4276 = vmatprep.subr.mxu0 0.0
      %4277 = vmatpush1.msra.mxu0 0.0
      %4278 = vmatprep.mubr.f32.mxu0 0.0
      %4279 = vmatmul.mubr.f32.gmra.mrb[0].mxu0 %v1746
      %v4280 = vpop.f32.mrb[0].mxu0
      %v4281 = vadd.f32 %v1743, %v4280
      %v4282 = vpop.f32.mrb[0].mxu0
      %v4283 = vadd.f32 %v1743, %v4282
      %4284 = vdwg.mxu0
      %v4285 = vadd.f32 %v4281, %v3594
      %v4286 = vadd.f32 %v4283, %v3596
      %4287 = vrot.lane.b32.xlu0 %v4285, 17
      %v4288 = vpop.permute.xlu0 %4287
      %4289 = vrot.lane.b32.xlu0 %v4286, 17
      %v4290 = vpop.permute.xlu0 %4289
      %v4291 = vsel %vm804, %v4288, %v4290
      %v4292 = vsel %vm804, %v4290, %v4288
      %v4293 = vmul.f32 %v4292, %v810
      %v4294 = vmul.f32 %v4291, %v814
      %4295 = vrot.lane.b32.xlu0 %v4285, 16
      %v4296 = vpop.permute.xlu0 %4295
      %4297 = vrot.lane.b32.xlu0 %v4286, 16
      %v4298 = vpop.permute.xlu0 %4297
      %v4299 = vsel %vm821, %v4296, %v4298
      %v4300 = vsel %vm821, %v4298, %v4296
      %v4301 = vmul.f32 %v4300, %v827
      %v4302 = vmul.f32 %v4299, %v831
      %4303 = vrot.lane.b32.xlu0 %v4285, 15
      %v4304 = vpop.permute.xlu0 %4303
      %4305 = vrot.lane.b32.xlu0 %v4286, 15
      %v4306 = vpop.permute.xlu0 %4305
      %v4307 = vsel %vm838, %v4304, %v4306
      %v4308 = vsel %vm838, %v4306, %v4304
      %v4309 = vmul.f32 %v4308, %v844
      %v4310 = vmul.f32 %v4307, %v848
      %4311 = vrot.lane.b32.xlu0 %v4285, 1
      %v4312 = vpop.permute.xlu0 %4311
      %4313 = vrot.lane.b32.xlu0 %v4286, 1
      %v4314 = vpop.permute.xlu0 %4313
      %v4315 = vsel %vm855, %v4312, %v4314
      %v4316 = vsel %vm855, %v4314, %v4312
      %v4317 = vmul.f32 %v4316, %v861
      %v4318 = vmul.f32 %v4315, %v865
      %4319 = vrot.lane.b32.xlu0 %v4285, 127
      %v4320 = vpop.permute.xlu0 %4319
      %4321 = vrot.lane.b32.xlu0 %v4286, 127
      %v4322 = vpop.permute.xlu0 %4321
      %v4323 = vsel %vm872, %v4320, %v4322
      %v4324 = vsel %vm872, %v4322, %v4320
      %v4325 = vmul.f32 %v4323, %v878
      %v4326 = vmul.f32 %v4324, %v882
      %4327 = vrot.lane.b32.xlu0 %v4285, 113
      %v4328 = vpop.permute.xlu0 %4327
      %4329 = vrot.lane.b32.xlu0 %v4286, 113
      %v4330 = vpop.permute.xlu0 %4329
      %v4331 = vsel %vm889, %v4328, %v4330
      %v4332 = vsel %vm889, %v4330, %v4328
      %v4333 = vmul.f32 %v4331, %v895
      %v4334 = vmul.f32 %v4332, %v899
      %4335 = vrot.lane.b32.xlu0 %v4285, 112
      %v4336 = vpop.permute.xlu0 %4335
      %4337 = vrot.lane.b32.xlu0 %v4286, 112
      %v4338 = vpop.permute.xlu0 %4337
      %v4339 = vsel %vm906, %v4336, %v4338
      %v4340 = vsel %vm906, %v4338, %v4336
      %v4341 = vmul.f32 %v4339, %v912
      %v4342 = vmul.f32 %v4340, %v916
      %4343 = vrot.lane.b32.xlu0 %v4285, 111
      %v4344 = vpop.permute.xlu0 %4343
      %4345 = vrot.lane.b32.xlu0 %v4286, 111
      %v4346 = vpop.permute.xlu0 %4345
      %v4347 = vsel %vm923, %v4344, %v4346
      %v4348 = vsel %vm923, %v4346, %v4344
      %v4349 = vmul.f32 %v4347, %v929
      %v4350 = vmul.f32 %v4348, %v933
      %4351 = vmatprep.subr.mxu0 %v4294
      %4352 = vmatpush1.msra.mxu0 %v4293
      %4353 = vmatprep.subr.mxu0 %v4302
      %4354 = vmatpush1.msra.mxu0 %v4301
      %4355 = vmatprep.subr.mxu0 %v4310
      %4356 = vmatpush1.msra.mxu0 %v4309
      %4357 = vmatprep.subr.mxu0 %v4318
      %4358 = vmatpush1.msra.mxu0 %v4317
      %4359 = vmatprep.subr.mxu0 %v4286
      %4360 = vmatpush1.msra.mxu0 %v4285
      %4361 = vmatprep.subr.mxu0 %v4326
      %4362 = vmatpush1.msra.mxu0 %v4325
      %4363 = vmatprep.subr.mxu0 %v4334
      %4364 = vmatpush1.msra.mxu0 %v4333
      %4365 = vmatprep.subr.mxu0 %v4342
      %4366 = vmatpush1.msra.mxu0 %v4341
      %4367 = vmatprep.subr.mxu0 %v4350
      %4368 = vmatpush1.msra.mxu0 %v4349
      %4369 = vmatprep.subr.mxu0 0.0
      %4370 = vmatpush1.msra.mxu0 0.0
      %4371 = vmatprep.subr.mxu0 0.0
      %4372 = vmatpush1.msra.mxu0 0.0
      %4373 = vmatprep.subr.mxu0 0.0
      %4374 = vmatpush1.msra.mxu0 0.0
      %4375 = vmatprep.subr.mxu0 0.0
      %4376 = vmatpush1.msra.mxu0 0.0
      %4377 = vmatprep.subr.mxu0 0.0
      %4378 = vmatpush1.msra.mxu0 0.0
      %4379 = vmatprep.subr.mxu0 0.0
      %4380 = vmatpush1.msra.mxu0 0.0
      %4381 = vmatprep.subr.mxu0 0.0
      %4382 = vmatpush1.msra.mxu0 0.0
      %4383 = vmatprep.subr.mxu0 0.0
      %4384 = vmatpush1.msra.mxu0 0.0
      %4385 = vmatprep.subr.mxu0 0.0
      %4386 = vmatpush1.msra.mxu0 0.0
      %4387 = vmatprep.subr.mxu0 0.0
      %4388 = vmatpush1.msra.mxu0 0.0
      %4389 = vmatprep.subr.mxu0 0.0
      %4390 = vmatpush1.msra.mxu0 0.0
      %4391 = vmatprep.subr.mxu0 0.0
      %4392 = vmatpush1.msra.mxu0 0.0
      %4393 = vmatprep.subr.mxu0 0.0
      %4394 = vmatpush1.msra.mxu0 0.0
      %4395 = vmatprep.subr.mxu0 0.0
      %4396 = vmatpush1.msra.mxu0 0.0
      %4397 = vmatprep.subr.mxu0 0.0
      %4398 = vmatpush1.msra.mxu0 0.0
      %4399 = vmatprep.subr.mxu0 0.0
      %4400 = vmatpush1.msra.mxu0 0.0
      %4401 = vmatprep.subr.mxu0 0.0
      %4402 = vmatpush1.msra.mxu0 0.0
      %4403 = vmatprep.subr.mxu0 0.0
      %4404 = vmatpush1.msra.mxu0 0.0
      %4405 = vmatprep.subr.mxu0 0.0
      %4406 = vmatpush1.msra.mxu0 0.0
      %4407 = vmatprep.subr.mxu0 0.0
      %4408 = vmatpush1.msra.mxu0 0.0
      %4409 = vmatprep.subr.mxu0 0.0
      %4410 = vmatpush1.msra.mxu0 0.0
      %4411 = vmatprep.subr.mxu0 0.0
      %4412 = vmatpush1.msra.mxu0 0.0
      %4413 = vmatprep.subr.mxu0 0.0
      %4414 = vmatpush1.msra.mxu0 0.0
      %4415 = vmatprep.mubr.f32.mxu0 0.0
      %4416 = vmatmul.mubr.f32.gmra.mrb[0].mxu0 %v1891
      %v4417 = vpop.f32.mrb[0].mxu0
      %v4418 = vadd.f32 %v1888, %v4417
      %v4419 = vpop.f32.mrb[0].mxu0
      %v4420 = vadd.f32 %v1888, %v4419
      %4421 = vdwg.mxu0
      %v4422 = vsub.f32 %v4418, %v3405
      %v4423 = vsub.f32 %v4420, %v3406
      %v4424 = vmul.f32 %v4422, 0.5
      %v4425 = vmul.f32 %v4423, 0.5
      %v4426 = vadd.f32 %v3382, %v4424
      %v4427 = vadd.f32 %v3383, %v4425
      %v4428 = vmul.f32 %v4426, 0.5
      %v4429 = vmul.f32 %v4427, 0.5
      %v4432 = vcombine.low %v4428, %v4429
      %v4434 = vunpack.c.l.s4 1983009808
      %v4435 = vunpack.c.0.s8 %v4434
      %v4436 = vlaneseq
      %v4437 = vshrl.u32 %v4436, 7
      %v4438 = vsub.s32 %v4435, %v4437
      %v4439 = vrot.slane %v4432, %v4438
      %v4441 = vsub.f32 %v3397, %v4439
      %4442 = vst [vmem:[%s450] sm:$0xf] %v4441
      %s4443 = smul.u32 2, %s22
      %p4444 = scmp.lt.s32.totalorder %s4443, 3
      %s4445 = scalar_select %p4444, %s4443, 3
      %s4446 = smul.addr %s4445, 2
      %s4447 = scalar_lea.vmem %s11, %s4446
      // Predicated region
      $region65: #{deep_unfolding_pallas.1} parent=63 // pred_check
        %p4448 = pneg %p291
      $region66: #{deep_unfolding_pallas.1} parent=63 // pred_check_branch
        %4450 = sbr.rel (%p4448) target = $region68
      $region67: #{deep_unfolding_pallas.1} parent=63 // pred_region
        %s4451 = smul.u32 2, %s22
      $region68: #{deep_unfolding_pallas.1} parent=63 // pred_fallthru
        _
    $region64: #{deep_unfolding_pallas.1} parent=5 // pred_fallthru
      _
    %p4452 = scmp.le.s32.totalorder 2, %s17
    // Predicated region
    $region69: #{deep_unfolding_pallas.1} parent=5 // pred_check
      %p4453 = pneg %p4452
    $region70: #{deep_unfolding_pallas.1} parent=5 // pred_check_branch
      %4455 = sbr.rel (%p4453) target = $region72
    $region71: #{deep_unfolding_pallas.1} parent=5 // pred_region
      %s4456 = ssub.s32 %s17, 2
      // Predicated region
      $region73: #{deep_unfolding_pallas.1} parent=71 // pred_check
        %p4457 = pneg %p297
      $region74: #{deep_unfolding_pallas.1} parent=71 // pred_check_branch
        %4459 = sbr.rel (%p4457) target = $region76
      $region75: #{deep_unfolding_pallas.1} parent=71 // pred_region
        %s4460 = smul.u32 2, %s23
        %p4461 = scmp.lt.s32.totalorder %s4460, 3
        %s4462 = scalar_select %p4461, %s4460, 3
        %s4463 = smul.addr %s4462, 2
        %s4464 = scalar_lea.vmem %s11, %s4463
      $region76: #{deep_unfolding_pallas.1} parent=71 // pred_fallthru
        _
    $region72: #{deep_unfolding_pallas.1} parent=5 // pred_fallthru
      _
  $region6: #{deep_unfolding_pallas.1} parent=0 // loop_footer
    %s21 = sadd.s32 1, %s17
  $region7: #{deep_unfolding_pallas.1} parent=0 // loop_footer_branch
    %16 = sbr.rel target = $region3
  $region8: #{deep_unfolding_pallas.1} parent=0 // loop_exit
    _

</llo_original>
